<compile_context>
chip_gen: v7x
topology: tpu7x:2x2x1
jax: 0.10.0
libtpu: 0.0.40
codegen_flags: <defaults>
</compile_context>

<pallas_src>
import functools

import numpy as np
import jax
import jax.numpy as jnp
from jax.experimental import pallas as pl
from jax.experimental.pallas import tpu as pltpu

# TODO(synk): ConvBlock definition is not provided; assumed Conv2d(3x3, pad=1)
#             followed by LeakyReLU(0.2). ToImage assumed Conv2d(64, 3, 3x3,
#             pad=1) with no activation.
NEG_SLOPE = 0.2
IMG_COUT_PAD = 8  # to_img output channels padded 3 -> 8 (sliced back outside)


def _make_fused_kernel(H, W, TH, chan):
    """Fused forward for one (batch, row-tile) grid point."""
    Wp = W + 8                 # row width incl. 4-column halo on each side
    L = (TH + 8) * Wp          # flattened (rows, cols) extent of one tile
    PAD = Wp + 1               # flat halo so all 9 conv taps stay in-bounds
    Lpad = L + 2 * PAD

    def leaky(y):
        return jnp.where(y >= 0, y, NEG_SLOPE * y)

    def conv3x3(a_pad, w_ref, b_ref):
        # a_pad: (Lpad, Cin) bf16, flattened (rows, W+8) window with a
        # (Wp+1)-element halo at each end.  Full im2col -> one MXU matmul.
        taps = [a_pad[kh * Wp + kw: kh * Wp + kw + L, :]
                for kh in range(3) for kw in range(3)]
        patches = jnp.concatenate(taps, axis=-1)               # (L, 9*Cin)
        y = jnp.dot(patches, w_ref[...],
                    preferred_element_type=jnp.float32)        # (L, Cout) f32
        return y + b_ref[...]                                  # bias (1, Cout)

    def repad(core):
        z = jnp.zeros((PAD, core.shape[-1]), core.dtype)
        return jnp.concatenate([z, core, z], axis=0)           # (Lpad, C)

    def kernel(x_ref, mask_ref, wcat_ref, bcat_ref, w0_ref, b0_ref,
               w1_ref, b1_ref, wimg_ref, bimg_ref, f_ref, img_ref):
        t = pl.program_id(1)
        start = pl.multiple_of(t * (TH * Wp), TH * Wp)
        xin = x_ref[0, pl.ds(start, Lpad), :].astype(jnp.bfloat16)
        mask = mask_ref[0]                                     # (L, 1) f32

        # Stage 1: regression stand-in || input_encoder (both Cin=3) fused
        # into one Cout=2*chan matmul; residual merge f = F_reg + F_input
        # (LeakyReLU applied per-branch before the add, as in the reference).
        y = leaky(conv3x3(xin, wcat_ref, bcat_ref))            # (L, 2*chan)
        f = (y[:, :chan] + y[:, chan:]) * mask                 # zero halo
        a = repad(f.astype(jnp.bfloat16))

        # Stage 2: merge_decoder[0]  (chan -> 64)
        y = leaky(conv3x3(a, w0_ref, b0_ref)) * mask
        a = repad(y.astype(jnp.bfloat16))

        # Stage 3: merge_decoder[1]  (64 -> 64); this is the F_res output.
        y = leaky(conv3x3(a, w1_ref, b1_ref)) * mask
        f_ref[0] = y[4 * Wp:(TH + 4) * Wp, :].astype(f_ref.dtype)
        a = repad(y.astype(jnp.bfloat16))

        # Stage 4: to_img (64 -> 3, zero-padded to 8 lanes), no activation.
        y = conv3x3(a, wimg_ref, bimg_ref)
        img_ref[0] = y[4 * Wp:(TH + 4) * Wp, :].astype(img_ref.dtype)

    return kernel


def residual_encoder_forward(x_nhwc, params, *, tile_h=8):
    """Fused (regression stand-in + ResidualEncoder) forward, NHWC in/out."""
    N, H, W, Cin = x_nhwc.shape
    assert Cin == 3, "input must have 3 channels"
    assert W % 8 == 0, "W must be a multiple of 8 (sublane alignment)"
    TH = min(tile_h, H)
    assert H % TH == 0, "H must be divisible by the row-tile height"
    n_t = H // TH
    Wp = W + 8
    L = (TH + 8) * Wp
    PAD = Wp + 1
    chan = params["w_enc"].shape[-1]

    # Pad the tiny 3-channel input ONCE with the full 4-pixel halo and flatten
    # the spatial dims; deeper layers' zero padding is reproduced in-kernel via
    # the halo mask, so no per-layer HBM padding passes remain.
    xp = jnp.pad(x_nhwc.astype(jnp.float32), ((0, 0), (4, 4), (4, 4), (0, 0)))
    xflat = jnp.pad(xp.reshape(N, (H + 8) * Wp, 3), ((0, 0), (PAD, PAD), (0, 0)))

    # {0,1} "inside the real image" mask per row-tile (compile-time constant).
    ii = np.arange(TH + 8)
    gr = (np.arange(n_t)[:, None] * TH) + ii[None, :] - 4        # global rows
    row_ok = (gr >= 0) & (gr < H)                                # (n_t, TH+8)
    jj = np.arange(Wp)
    col_ok = (jj >= 4) & (jj < W + 4)                            # (Wp,)
    mask = (row_ok[:, :, None] & col_ok[None, None, :]).astype(np.float32)
    mask = jnp.asarray(mask.reshape(n_t, L, 1))

    # im2col-reshaped bf16 weights (resident in VMEM for the whole call).
    def w2d(w):
        kh, kw, ci, co = w.shape
        return w.reshape(kh * kw * ci, co).astype(jnp.bfloat16)

    w_cat = w2d(jnp.concatenate([params["w_reg"], params["w_enc"]], axis=-1))
    b_cat = jnp.concatenate([params["b_reg"], params["b_enc"]]).reshape(1, -1)
    w_m0 = w2d(params["w_m0"])
    b_m0 = params["b_m0"].reshape(1, -1)
    w_m1 = w2d(params["w_m1"])
    b_m1 = params["b_m1"].reshape(1, -1)
    w_img = w2d(jnp.pad(params["w_img"],
                        ((0, 0), (0, 0), (0, 0), (0, IMG_COUT_PAD - 3))))
    b_img = jnp.pad(params["b_img"], (0, IMG_COUT_PAD - 3)).reshape(1, -1)

    kernel = _make_fused_kernel(H, W, TH, chan)
    full = lambda n, t: (0, 0)

    in_specs = [
        pl.BlockSpec((1, xflat.shape[1], 3), lambda n, t: (n, 0, 0)),
        pl.BlockSpec((1, L, 1), lambda n, t: (t, 0, 0)),
        pl.BlockSpec(w_cat.shape, full), pl.BlockSpec(b_cat.shape, full),
        pl.BlockSpec(w_m0.shape, full), pl.BlockSpec(b_m0.shape, full),
        pl.BlockSpec(w_m1.shape, full), pl.BlockSpec(b_m1.shape, full),
        pl.BlockSpec(w_img.shape, full), pl.BlockSpec(b_img.shape, full),
    ]
    out_shape = (
        jax.ShapeDtypeStruct((N, H * Wp, 64), jnp.float32),
        jax.ShapeDtypeStruct((N, H * Wp, IMG_COUT_PAD), jnp.float32),
    )
    out_specs = (
        pl.BlockSpec((1, TH * Wp, 64), lambda n, t: (n, t, 0)),
        pl.BlockSpec((1, TH * Wp, IMG_COUT_PAD), lambda n, t: (n, t, 0)),
    )

    f_flat, img_flat = pl.pallas_call(
        kernel,
        out_shape=out_shape,
        grid=(N, n_t),
        in_specs=in_specs,
        out_specs=out_specs,
        compiler_params=pltpu.CompilerParams(
            dimension_semantics=("parallel", "parallel"),
            # raise the scoped-VMEM limit so larger row tiles fit on v5e/v6e;
            # stays below v7x's 64 MiB physical VMEM.
            vmem_limit_bytes=48 * 1024 * 1024),
    )(xflat, mask, w_cat, b_cat, w_m0, b_m0, w_m1, b_m1, w_img, b_img)

    # Strip the column halo / channel padding (fuses with the NCHW transpose).
    f_nhwc = f_flat.reshape(N, H, Wp, 64)[:, :, 4:4 + W, :]
    img_nhwc = img_flat.reshape(N, H, Wp, IMG_COUT_PAD)[:, :, 4:4 + W, :3]
    return img_nhwc, f_nhwc


def res_module_forward(I_input_nchw, params, *, tile_h=8, return_f=False):
    """Mirrors ResModule.forward / ResidualEncoder.forward (NCHW in/out)."""
    # TODO(synk): the NAFNet/HINet regression backbone is not provided; it is
    # replaced by a single ConvBlock stand-in (w_reg/b_reg) producing the
    # (N, chan, H, W) feature map F_regression (the return_f=True path).
    x = jnp.transpose(I_input_nchw, (0, 2, 3, 1))  # NCHW -> NHWC
    img_nhwc, f_nhwc = residual_encoder_forward(x, params, tile_h=tile_h)
    I_output = jnp.transpose(img_nhwc, (0, 3, 1, 2))
    F_res = jnp.transpose(f_nhwc, (0, 3, 1, 2))
    if return_f:
        return I_output, F_res
    return I_output


def _ref_forward(I_input_nchw, params):
    """Pure-JAX f32 reference of the same forward pass (validation only)."""
    x = jnp.transpose(I_input_nchw, (0, 2, 3, 1))
    conv = lambda v, w, b: jax.lax.conv_general_dilated(
        v, w, (1, 1), "SAME",
        dimension_numbers=("NHWC", "HWIO", "NHWC"),
        precision=jax.lax.Precision.HIGHEST) + b
    lrelu = lambda z: jnp.where(z >= 0, z, NEG_SLOPE * z)
    F_reg = lrelu(conv(x, params["w_reg"], params["b_reg"]))
    F_in = lrelu(conv(x, params["w_enc"], params["b_enc"]))
    f = F_reg + F_in
    f = lrelu(conv(f, params["w_m0"], params["b_m0"]))
    f = lrelu(conv(f, params["w_m1"], params["b_m1"]))
    img = conv(f, params["w_img"], params["b_img"])
    return jnp.transpose(img, (0, 3, 1, 2)), jnp.transpose(f, (0, 3, 1, 2))


def init_params(key, chan=32):
    ks = jax.random.split(key, 10)

    def w(k, shape, fan_in):
        return jax.random.normal(k, shape, jnp.float32) * (1.0 / jnp.sqrt(fan_in))

    return {
        # regression stand-in: 3 -> chan
        "w_reg": w(ks[0], (3, 3, 3, chan), 27), "b_reg": jnp.zeros((chan,), jnp.float32),
        # input_encoder: ConvBlock(3, chan)
        "w_enc": w(ks[1], (3, 3, 3, chan), 27), "b_enc": jnp.zeros((chan,), jnp.float32),
        # merge_decoder[0]: ConvBlock(chan, 64)
        "w_m0": w(ks[2], (3, 3, chan, 64), 9 * chan), "b_m0": jnp.zeros((64,), jnp.float32),
        # merge_decoder[1]: ConvBlock(64, 64)
        "w_m1": w(ks[3], (3, 3, 64, 64), 9 * 64), "b_m1": jnp.zeros((64,), jnp.float32),
        # to_img: 64 -> 3
        "w_img": w(ks[4], (3, 3, 64, 3), 9 * 64), "b_img": jnp.zeros((3,), jnp.float32),
    }


if __name__ == "__main__":
    key = jax.random.PRNGKey(0)
    k_param, k_input = jax.random.split(key)

    N, C, H, W = 2, 3, 16, 16
    chan = 32  # 'nafnet' branch of ResModule

    params = init_params(k_param, chan=chan)
    I_input = jax.random.normal(k_input, (N, C, H, W), jnp.float32)

    fwd = jax.jit(functools.partial(res_module_forward, tile_h=8, return_f=True))
    I_output, F_res = fwd(I_input, params)
    jax.block_until_ready((I_output, F_res))

    assert I_output.shape == (N, 3, H, W), I_output.shape
    assert F_res.shape == (N, 64, H, W), F_res.shape
    assert jnp.all(jnp.isfinite(I_output)) and jnp.all(jnp.isfinite(F_res))

    # Validate against a pure-JAX f32 reference (bf16 matmuls -> loose tol).
    img_expect, f_expect = _ref_forward(I_input, params)
    assert jnp.allclose(I_output, img_expect, rtol=5e-2, atol=5e-2), float(
        jnp.max(jnp.abs(I_output - img_expect)))
    assert jnp.allclose(F_res, f_expect, rtol=5e-2, atol=5e-2), float(
        jnp.max(jnp.abs(F_res - f_expect)))

    print("KERNEL_OK")
</pallas_src>

<mosaic_0001>
module attributes {stable_mosaic.version = 11 : i64} {
  func.func @kernel(%arg0: i32, %arg1: i32, %arg2: memref<1x626x3xf32, #tpu.memory_space<vmem>>, %arg3: memref<1x384x1xf32, #tpu.memory_space<vmem>>, %arg4: memref<27x64xbf16, #tpu.memory_space<vmem>>, %arg5: memref<1x64xf32, #tpu.memory_space<vmem>>, %arg6: memref<288x64xbf16, #tpu.memory_space<vmem>>, %arg7: memref<1x64xf32, #tpu.memory_space<vmem>>, %arg8: memref<576x64xbf16, #tpu.memory_space<vmem>>, %arg9: memref<1x64xf32, #tpu.memory_space<vmem>>, %arg10: memref<576x8xbf16, #tpu.memory_space<vmem>>, %arg11: memref<1x8xf32, #tpu.memory_space<vmem>>, %arg12: memref<1x192x64xf32, #tpu.memory_space<vmem>>, %arg13: memref<1x192x8xf32, #tpu.memory_space<vmem>>) attributes {dimension_semantics = [#tpu.dimension_semantics<parallel>, #tpu.dimension_semantics<parallel>], iteration_bounds = array<i64: 2, 2>, scalar_prefetch = 0 : i64, scratch_operands = 0 : i64, tpu.core_type = #tpu.core_type<tc>, window_params = [{transform_indices = @transform_0, window_bounds = array<i64: 1, 626, 3>}, {transform_indices = @transform_1, window_bounds = array<i64: 1, 384, 1>}, {pipeline_mode = #tpu.pipeline_mode<synchronous>, transform_indices = @transform_2, window_bounds = array<i64: 27, 64>}, {pipeline_mode = #tpu.pipeline_mode<synchronous>, transform_indices = @transform_3, window_bounds = array<i64: 1, 64>}, {pipeline_mode = #tpu.pipeline_mode<synchronous>, transform_indices = @transform_4, window_bounds = array<i64: 288, 64>}, {pipeline_mode = #tpu.pipeline_mode<synchronous>, transform_indices = @transform_5, window_bounds = array<i64: 1, 64>}, {pipeline_mode = #tpu.pipeline_mode<synchronous>, transform_indices = @transform_6, window_bounds = array<i64: 576, 64>}, {pipeline_mode = #tpu.pipeline_mode<synchronous>, transform_indices = @transform_7, window_bounds = array<i64: 1, 64>}, {pipeline_mode = #tpu.pipeline_mode<synchronous>, transform_indices = @transform_8, window_bounds = array<i64: 576, 8>}, {pipeline_mode = #tpu.pipeline_mode<synchronous>, transform_indices = @transform_9, window_bounds = array<i64: 1, 8>}, {transform_indices = @transform_10, window_bounds = array<i64: 1, 192, 64>}, {transform_indices = @transform_11, window_bounds = array<i64: 1, 192, 8>}]} {
    %c192_i32 = arith.constant 192 : i32
    %0 = arith.muli %arg1, %c192_i32 : i32
    %1 = tpu.assume_multiple %0, 192 : i32
    %c0 = arith.constant 0 : index
    %2 = arith.index_cast %1 : i32 to index
    %c0_0 = arith.constant 0 : index
    %3 = vector.load %arg2[%c0, %2, %c0_0] : memref<1x626x3xf32, #tpu.memory_space<vmem>>, vector<1x434x3xf32>
    %4 = vector.shape_cast %3 : vector<1x434x3xf32> to vector<434x3xf32>
    %5 = arith.truncf %4 : vector<434x3xf32> to vector<434x3xbf16>
    %c0_1 = arith.constant 0 : index
    %c0_2 = arith.constant 0 : index
    %c0_3 = arith.constant 0 : index
    %6 = vector.load %arg3[%c0_1, %c0_2, %c0_3] : memref<1x384x1xf32, #tpu.memory_space<vmem>>, vector<1x384x1xf32>
    %7 = vector.shape_cast %6 : vector<1x384x1xf32> to vector<384x1xf32>
    %8 = vector.extract_strided_slice %5 {offsets = [0, 0], sizes = [384, 3], strides = [1, 1]} : vector<434x3xbf16> to vector<384x3xbf16>
    %9 = vector.extract_strided_slice %5 {offsets = [1, 0], sizes = [384, 3], strides = [1, 1]} : vector<434x3xbf16> to vector<384x3xbf16>
    %10 = vector.extract_strided_slice %5 {offsets = [2, 0], sizes = [384, 3], strides = [1, 1]} : vector<434x3xbf16> to vector<384x3xbf16>
    %11 = vector.extract_strided_slice %5 {offsets = [24, 0], sizes = [384, 3], strides = [1, 1]} : vector<434x3xbf16> to vector<384x3xbf16>
    %12 = vector.extract_strided_slice %5 {offsets = [25, 0], sizes = [384, 3], strides = [1, 1]} : vector<434x3xbf16> to vector<384x3xbf16>
    %13 = vector.extract_strided_slice %5 {offsets = [26, 0], sizes = [384, 3], strides = [1, 1]} : vector<434x3xbf16> to vector<384x3xbf16>
    %14 = vector.extract_strided_slice %5 {offsets = [48, 0], sizes = [384, 3], strides = [1, 1]} : vector<434x3xbf16> to vector<384x3xbf16>
    %15 = vector.extract_strided_slice %5 {offsets = [49, 0], sizes = [384, 3], strides = [1, 1]} : vector<434x3xbf16> to vector<384x3xbf16>
    %16 = vector.extract_strided_slice %5 {offsets = [50, 0], sizes = [384, 3], strides = [1, 1]} : vector<434x3xbf16> to vector<384x3xbf16>
    %17 = tpu.concatenate %8, %9, %10, %11, %12, %13, %14, %15, %16 in 1 : vector<384x3xbf16>, vector<384x3xbf16>, vector<384x3xbf16>, vector<384x3xbf16>, vector<384x3xbf16>, vector<384x3xbf16>, vector<384x3xbf16>, vector<384x3xbf16>, vector<384x3xbf16> -> vector<384x27xbf16>
    %c0_4 = arith.constant 0 : index
    %c0_5 = arith.constant 0 : index
    %18 = vector.load %arg4[%c0_4, %c0_5] : memref<27x64xbf16, #tpu.memory_space<vmem>>, vector<27x64xbf16>
    %cst = arith.constant dense<0.000000e+00> : vector<384x64xf32>
    %19 = tpu.matmul %17, %18, %cst {dimension_numbers = #tpu.dot_dimension_numbers<[1], [0], [0], [1], [0, 0, 1, 1], [], []>} : vector<384x27xbf16>, vector<27x64xbf16>, vector<384x64xf32> -> vector<384x64xf32>
    %c0_6 = arith.constant 0 : index
    %c0_7 = arith.constant 0 : index
    %20 = vector.load %arg5[%c0_6, %c0_7] : memref<1x64xf32, #tpu.memory_space<vmem>>, vector<1x64xf32>
    %21 = vector.broadcast %20 : vector<1x64xf32> to vector<384x64xf32>
    %22 = arith.addf %19, %21 : vector<384x64xf32>
    %cst_8 = arith.constant 0.000000e+00 : f32
    %23 = vector.broadcast %cst_8 : f32 to vector<384x64xf32>
    %24 = arith.cmpf oge, %22, %23 : vector<384x64xf32>
    %cst_9 = arith.constant 2.000000e-01 : f32
    %25 = vector.broadcast %cst_9 : f32 to vector<384x64xf32>
    %26 = arith.mulf %25, %22 : vector<384x64xf32>
    %27 = arith.select %24, %22, %26 : vector<384x64xi1>, vector<384x64xf32>
    %28 = vector.extract_strided_slice %27 {offsets = [0, 0], sizes = [384, 32], strides = [1, 1]} : vector<384x64xf32> to vector<384x32xf32>
    %29 = vector.extract_strided_slice %27 {offsets = [0, 32], sizes = [384, 32], strides = [1, 1]} : vector<384x64xf32> to vector<384x32xf32>
    %30 = arith.addf %28, %29 : vector<384x32xf32>
    %31 = vector.broadcast %7 : vector<384x1xf32> to vector<384x32xf32>
    %32 = arith.mulf %30, %31 : vector<384x32xf32>
    %33 = arith.truncf %32 : vector<384x32xf32> to vector<384x32xbf16>
    %cst_10 = arith.constant 0.000000e+00 : bf16
    %34 = vector.broadcast %cst_10 : bf16 to vector<25x32xbf16>
    %35 = tpu.concatenate %34, %33, %34 in 0 : vector<25x32xbf16>, vector<384x32xbf16>, vector<25x32xbf16> -> vector<434x32xbf16>
    %36 = vector.extract_strided_slice %35 {offsets = [0, 0], sizes = [384, 32], strides = [1, 1]} : vector<434x32xbf16> to vector<384x32xbf16>
    %37 = vector.extract_strided_slice %35 {offsets = [1, 0], sizes = [384, 32], strides = [1, 1]} : vector<434x32xbf16> to vector<384x32xbf16>
    %38 = vector.extract_strided_slice %35 {offsets = [2, 0], sizes = [384, 32], strides = [1, 1]} : vector<434x32xbf16> to vector<384x32xbf16>
    %39 = vector.extract_strided_slice %35 {offsets = [24, 0], sizes = [384, 32], strides = [1, 1]} : vector<434x32xbf16> to vector<384x32xbf16>
    %40 = vector.extract_strided_slice %35 {offsets = [25, 0], sizes = [384, 32], strides = [1, 1]} : vector<434x32xbf16> to vector<384x32xbf16>
    %41 = vector.extract_strided_slice %35 {offsets = [26, 0], sizes = [384, 32], strides = [1, 1]} : vector<434x32xbf16> to vector<384x32xbf16>
    %42 = vector.extract_strided_slice %35 {offsets = [48, 0], sizes = [384, 32], strides = [1, 1]} : vector<434x32xbf16> to vector<384x32xbf16>
    %43 = vector.extract_strided_slice %35 {offsets = [49, 0], sizes = [384, 32], strides = [1, 1]} : vector<434x32xbf16> to vector<384x32xbf16>
    %44 = vector.extract_strided_slice %35 {offsets = [50, 0], sizes = [384, 32], strides = [1, 1]} : vector<434x32xbf16> to vector<384x32xbf16>
    %45 = tpu.concatenate %36, %37, %38, %39, %40, %41, %42, %43, %44 in 1 : vector<384x32xbf16>, vector<384x32xbf16>, vector<384x32xbf16>, vector<384x32xbf16>, vector<384x32xbf16>, vector<384x32xbf16>, vector<384x32xbf16>, vector<384x32xbf16>, vector<384x32xbf16> -> vector<384x288xbf16>
    %c0_11 = arith.constant 0 : index
    %c0_12 = arith.constant 0 : index
    %46 = vector.load %arg6[%c0_11, %c0_12] : memref<288x64xbf16, #tpu.memory_space<vmem>>, vector<288x64xbf16>
    %cst_13 = arith.constant dense<0.000000e+00> : vector<384x64xf32>
    %47 = tpu.matmul %45, %46, %cst_13 {dimension_numbers = #tpu.dot_dimension_numbers<[1], [0], [0], [1], [0, 0, 1, 1], [], []>} : vector<384x288xbf16>, vector<288x64xbf16>, vector<384x64xf32> -> vector<384x64xf32>
    %c0_14 = arith.constant 0 : index
    %c0_15 = arith.constant 0 : index
    %48 = vector.load %arg7[%c0_14, %c0_15] : memref<1x64xf32, #tpu.memory_space<vmem>>, vector<1x64xf32>
    %49 = vector.broadcast %48 : vector<1x64xf32> to vector<384x64xf32>
    %50 = arith.addf %47, %49 : vector<384x64xf32>
    %cst_16 = arith.constant 0.000000e+00 : f32
    %51 = vector.broadcast %cst_16 : f32 to vector<384x64xf32>
    %52 = arith.cmpf oge, %50, %51 : vector<384x64xf32>
    %cst_17 = arith.constant 2.000000e-01 : f32
    %53 = vector.broadcast %cst_17 : f32 to vector<384x64xf32>
    %54 = arith.mulf %53, %50 : vector<384x64xf32>
    %55 = arith.select %52, %50, %54 : vector<384x64xi1>, vector<384x64xf32>
    %56 = vector.broadcast %7 : vector<384x1xf32> to vector<384x64xf32>
    %57 = arith.mulf %55, %56 : vector<384x64xf32>
    %58 = arith.truncf %57 : vector<384x64xf32> to vector<384x64xbf16>
    %cst_18 = arith.constant 0.000000e+00 : bf16
    %59 = vector.broadcast %cst_18 : bf16 to vector<25x64xbf16>
    %60 = tpu.concatenate %59, %58, %59 in 0 : vector<25x64xbf16>, vector<384x64xbf16>, vector<25x64xbf16> -> vector<434x64xbf16>
    %61 = vector.extract_strided_slice %60 {offsets = [0, 0], sizes = [384, 64], strides = [1, 1]} : vector<434x64xbf16> to vector<384x64xbf16>
    %62 = vector.extract_strided_slice %60 {offsets = [1, 0], sizes = [384, 64], strides = [1, 1]} : vector<434x64xbf16> to vector<384x64xbf16>
    %63 = vector.extract_strided_slice %60 {offsets = [2, 0], sizes = [384, 64], strides = [1, 1]} : vector<434x64xbf16> to vector<384x64xbf16>
    %64 = vector.extract_strided_slice %60 {offsets = [24, 0], sizes = [384, 64], strides = [1, 1]} : vector<434x64xbf16> to vector<384x64xbf16>
    %65 = vector.extract_strided_slice %60 {offsets = [25, 0], sizes = [384, 64], strides = [1, 1]} : vector<434x64xbf16> to vector<384x64xbf16>
    %66 = vector.extract_strided_slice %60 {offsets = [26, 0], sizes = [384, 64], strides = [1, 1]} : vector<434x64xbf16> to vector<384x64xbf16>
    %67 = vector.extract_strided_slice %60 {offsets = [48, 0], sizes = [384, 64], strides = [1, 1]} : vector<434x64xbf16> to vector<384x64xbf16>
    %68 = vector.extract_strided_slice %60 {offsets = [49, 0], sizes = [384, 64], strides = [1, 1]} : vector<434x64xbf16> to vector<384x64xbf16>
    %69 = vector.extract_strided_slice %60 {offsets = [50, 0], sizes = [384, 64], strides = [1, 1]} : vector<434x64xbf16> to vector<384x64xbf16>
    %70 = tpu.concatenate %61, %62, %63, %64, %65, %66, %67, %68, %69 in 1 : vector<384x64xbf16>, vector<384x64xbf16>, vector<384x64xbf16>, vector<384x64xbf16>, vector<384x64xbf16>, vector<384x64xbf16>, vector<384x64xbf16>, vector<384x64xbf16>, vector<384x64xbf16> -> vector<384x576xbf16>
    %c0_19 = arith.constant 0 : index
    %c0_20 = arith.constant 0 : index
    %71 = vector.load %arg8[%c0_19, %c0_20] : memref<576x64xbf16, #tpu.memory_space<vmem>>, vector<576x64xbf16>
    %cst_21 = arith.constant dense<0.000000e+00> : vector<384x64xf32>
    %72 = tpu.matmul %70, %71, %cst_21 {dimension_numbers = #tpu.dot_dimension_numbers<[1], [0], [0], [1], [0, 0, 1, 1], [], []>} : vector<384x576xbf16>, vector<576x64xbf16>, vector<384x64xf32> -> vector<384x64xf32>
    %c0_22 = arith.constant 0 : index
    %c0_23 = arith.constant 0 : index
    %73 = vector.load %arg9[%c0_22, %c0_23] : memref<1x64xf32, #tpu.memory_space<vmem>>, vector<1x64xf32>
    %74 = vector.broadcast %73 : vector<1x64xf32> to vector<384x64xf32>
    %75 = arith.addf %72, %74 : vector<384x64xf32>
    %cst_24 = arith.constant 0.000000e+00 : f32
    %76 = vector.broadcast %cst_24 : f32 to vector<384x64xf32>
    %77 = arith.cmpf oge, %75, %76 : vector<384x64xf32>
    %cst_25 = arith.constant 2.000000e-01 : f32
    %78 = vector.broadcast %cst_25 : f32 to vector<384x64xf32>
    %79 = arith.mulf %78, %75 : vector<384x64xf32>
    %80 = arith.select %77, %75, %79 : vector<384x64xi1>, vector<384x64xf32>
    %81 = vector.broadcast %7 : vector<384x1xf32> to vector<384x64xf32>
    %82 = arith.mulf %80, %81 : vector<384x64xf32>
    %83 = vector.extract_strided_slice %82 {offsets = [96, 0], sizes = [192, 64], strides = [1, 1]} : vector<384x64xf32> to vector<192x64xf32>
    %c0_26 = arith.constant 0 : index
    %c0_27 = arith.constant 0 : index
    %c0_28 = arith.constant 0 : index
    %84 = vector.load %arg12[%c0_26, %c0_27, %c0_28] : memref<1x192x64xf32, #tpu.memory_space<vmem>>, vector<1x192x64xf32>
    %85 = vector.shape_cast %84 : vector<1x192x64xf32> to vector<192x64xf32>
    %86 = vector.shape_cast %83 : vector<192x64xf32> to vector<1x192x64xf32>
    tpu.vector_store %arg12[%c0_26, %c0_27, %c0_28], %86 {strides = array<i32>} : memref<1x192x64xf32, #tpu.memory_space<vmem>>, vector<1x192x64xf32>,
    %87 = arith.truncf %82 : vector<384x64xf32> to vector<384x64xbf16>
    %cst_29 = arith.constant 0.000000e+00 : bf16
    %88 = vector.broadcast %cst_29 : bf16 to vector<25x64xbf16>
    %89 = tpu.concatenate %88, %87, %88 in 0 : vector<25x64xbf16>, vector<384x64xbf16>, vector<25x64xbf16> -> vector<434x64xbf16>
    %90 = vector.extract_strided_slice %89 {offsets = [0, 0], sizes = [384, 64], strides = [1, 1]} : vector<434x64xbf16> to vector<384x64xbf16>
    %91 = vector.extract_strided_slice %89 {offsets = [1, 0], sizes = [384, 64], strides = [1, 1]} : vector<434x64xbf16> to vector<384x64xbf16>
    %92 = vector.extract_strided_slice %89 {offsets = [2, 0], sizes = [384, 64], strides = [1, 1]} : vector<434x64xbf16> to vector<384x64xbf16>
    %93 = vector.extract_strided_slice %89 {offsets = [24, 0], sizes = [384, 64], strides = [1, 1]} : vector<434x64xbf16> to vector<384x64xbf16>
    %94 = vector.extract_strided_slice %89 {offsets = [25, 0], sizes = [384, 64], strides = [1, 1]} : vector<434x64xbf16> to vector<384x64xbf16>
    %95 = vector.extract_strided_slice %89 {offsets = [26, 0], sizes = [384, 64], strides = [1, 1]} : vector<434x64xbf16> to vector<384x64xbf16>
    %96 = vector.extract_strided_slice %89 {offsets = [48, 0], sizes = [384, 64], strides = [1, 1]} : vector<434x64xbf16> to vector<384x64xbf16>
    %97 = vector.extract_strided_slice %89 {offsets = [49, 0], sizes = [384, 64], strides = [1, 1]} : vector<434x64xbf16> to vector<384x64xbf16>
    %98 = vector.extract_strided_slice %89 {offsets = [50, 0], sizes = [384, 64], strides = [1, 1]} : vector<434x64xbf16> to vector<384x64xbf16>
    %99 = tpu.concatenate %90, %91, %92, %93, %94, %95, %96, %97, %98 in 1 : vector<384x64xbf16>, vector<384x64xbf16>, vector<384x64xbf16>, vector<384x64xbf16>, vector<384x64xbf16>, vector<384x64xbf16>, vector<384x64xbf16>, vector<384x64xbf16>, vector<384x64xbf16> -> vector<384x576xbf16>
    %c0_30 = arith.constant 0 : index
    %c0_31 = arith.constant 0 : index
    %100 = vector.load %arg10[%c0_30, %c0_31] : memref<576x8xbf16, #tpu.memory_space<vmem>>, vector<576x8xbf16>
    %cst_32 = arith.constant dense<0.000000e+00> : vector<384x8xf32>
    %101 = tpu.matmul %99, %100, %cst_32 {dimension_numbers = #tpu.dot_dimension_numbers<[1], [0], [0], [1], [0, 0, 1, 1], [], []>} : vector<384x576xbf16>, vector<576x8xbf16>, vector<384x8xf32> -> vector<384x8xf32>
    %c0_33 = arith.constant 0 : index
    %c0_34 = arith.constant 0 : index
    %102 = vector.load %arg11[%c0_33, %c0_34] : memref<1x8xf32, #tpu.memory_space<vmem>>, vector<1x8xf32>
    %103 = vector.broadcast %102 : vector<1x8xf32> to vector<384x8xf32>
    %104 = arith.addf %101, %103 : vector<384x8xf32>
    %105 = vector.extract_strided_slice %104 {offsets = [96, 0], sizes = [192, 8], strides = [1, 1]} : vector<384x8xf32> to vector<192x8xf32>
    %c0_35 = arith.constant 0 : index
    %c0_36 = arith.constant 0 : index
    %c0_37 = arith.constant 0 : index
    %106 = vector.load %arg13[%c0_35, %c0_36, %c0_37] : memref<1x192x8xf32, #tpu.memory_space<vmem>>, vector<1x192x8xf32>
    %107 = vector.shape_cast %106 : vector<1x192x8xf32> to vector<192x8xf32>
    %108 = vector.shape_cast %105 : vector<192x8xf32> to vector<1x192x8xf32>
    tpu.vector_store %arg13[%c0_35, %c0_36, %c0_37], %108 {strides = array<i32>} : memref<1x192x8xf32, #tpu.memory_space<vmem>>, vector<1x192x8xf32>,
    return
  }
  func.func @transform_0(%arg0: i32, %arg1: i32) -> (i32, i32, i32) {
    %c0_i32 = arith.constant 0 : i32
    %c0_i32_0 = arith.constant 0 : i32
    %c0_i32_1 = arith.constant 0 : i32
    return %arg0, %c0_i32, %c0_i32_0 : i32, i32, i32
  }
  func.func @transform_1(%arg0: i32, %arg1: i32) -> (i32, i32, i32) {
    %c0_i32 = arith.constant 0 : i32
    %c0_i32_0 = arith.constant 0 : i32
    %c0_i32_1 = arith.constant 0 : i32
    return %arg1, %c0_i32, %c0_i32_0 : i32, i32, i32
  }
  func.func @transform_2(%arg0: i32, %arg1: i32) -> (i32, i32) {
    %c0_i32 = arith.constant 0 : i32
    %c0_i32_0 = arith.constant 0 : i32
    %c0_i32_1 = arith.constant 0 : i32
    return %c0_i32, %c0_i32_0 : i32, i32
  }
  func.func @transform_3(%arg0: i32, %arg1: i32) -> (i32, i32) {
    %c0_i32 = arith.constant 0 : i32
    %c0_i32_0 = arith.constant 0 : i32
    %c0_i32_1 = arith.constant 0 : i32
    return %c0_i32, %c0_i32_0 : i32, i32
  }
  func.func @transform_4(%arg0: i32, %arg1: i32) -> (i32, i32) {
    %c0_i32 = arith.constant 0 : i32
    %c0_i32_0 = arith.constant 0 : i32
    %c0_i32_1 = arith.constant 0 : i32
    return %c0_i32, %c0_i32_0 : i32, i32
  }
  func.func @transform_5(%arg0: i32, %arg1: i32) -> (i32, i32) {
    %c0_i32 = arith.constant 0 : i32
    %c0_i32_0 = arith.constant 0 : i32
    %c0_i32_1 = arith.constant 0 : i32
    return %c0_i32, %c0_i32_0 : i32, i32
  }
  func.func @transform_6(%arg0: i32, %arg1: i32) -> (i32, i32) {
    %c0_i32 = arith.constant 0 : i32
    %c0_i32_0 = arith.constant 0 : i32
    %c0_i32_1 = arith.constant 0 : i32
    return %c0_i32, %c0_i32_0 : i32, i32
  }
  func.func @transform_7(%arg0: i32, %arg1: i32) -> (i32, i32) {
    %c0_i32 = arith.constant 0 : i32
    %c0_i32_0 = arith.constant 0 : i32
    %c0_i32_1 = arith.constant 0 : i32
    return %c0_i32, %c0_i32_0 : i32, i32
  }
  func.func @transform_8(%arg0: i32, %arg1: i32) -> (i32, i32) {
    %c0_i32 = arith.constant 0 : i32
    %c0_i32_0 = arith.constant 0 : i32
    %c0_i32_1 = arith.constant 0 : i32
    return %c0_i32, %c0_i32_0 : i32, i32
  }
  func.func @transform_9(%arg0: i32, %arg1: i32) -> (i32, i32) {
    %c0_i32 = arith.constant 0 : i32
    %c0_i32_0 = arith.constant 0 : i32
    %c0_i32_1 = arith.constant 0 : i32
    return %c0_i32, %c0_i32_0 : i32, i32
  }
  func.func @transform_10(%arg0: i32, %arg1: i32) -> (i32, i32, i32) {
    %c0_i32 = arith.constant 0 : i32
    %c0_i32_0 = arith.constant 0 : i32
    return %arg0, %arg1, %c0_i32 : i32, i32, i32
  }
  func.func @transform_11(%arg0: i32, %arg1: i32) -> (i32, i32, i32) {
    %c0_i32 = arith.constant 0 : i32
    %c0_i32_0 = arith.constant 0 : i32
    return %arg0, %arg1, %c0_i32 : i32, i32, i32
  }
}

</mosaic_0001>

<llo_original>
// kernel: res_module_forward.1
$region0: #{res_module_forward.1}
  #allocation0 [shape = 'u32[]', space=smem, size = 0x4, offset = 0x4, fixed_abs, tag = 'smem constant byte address 0x4 - core index']
  #allocation1 [shape = 'u32[144,128]{1,0:T(1,128)}', space=vmem, size = 0x12000, scoped, tag = 'internal scratch']
  %s0 = inlined_call_operand.vmem [shape: f32[2,626,3], index: 0, kind: input, shape index: {}]
  %s1 = inlined_call_operand.vmem [shape: f32[2,384,1], index: 1, kind: input, shape index: {}]
  %s2 = inlined_call_operand.vmem [shape: bf16[27,64], index: 2, kind: input, shape index: {}]
  %s3 = inlined_call_operand.vmem [shape: f32[1,64], index: 3, kind: input, shape index: {}]
  %s4 = inlined_call_operand.vmem [shape: bf16[288,64], index: 4, kind: input, shape index: {}]
  %s5 = inlined_call_operand.vmem [shape: f32[1,64], index: 5, kind: input, shape index: {}]
  %s6 = inlined_call_operand.vmem [shape: bf16[576,64], index: 6, kind: input, shape index: {}]
  %s7 = inlined_call_operand.vmem [shape: f32[1,64], index: 7, kind: input, shape index: {}]
  %s8 = inlined_call_operand.vmem [shape: bf16[576,8], index: 8, kind: input, shape index: {}]
  %s9 = inlined_call_operand.vmem [shape: f32[1,8], index: 9, kind: input, shape index: {}]
  %s10 = inlined_call_operand.vmem [shape: f32[2,384,64], index: 10, kind: output, shape index: {0}]
  %s11 = inlined_call_operand.vmem [shape: f32[2,384,8], index: 11, kind: output, shape index: {1}]
  %12 = xla_tuple %s10, %s11
  %s13 = sld [smem:[#allocation0]]
  $region81: #{res_module_forward.1} parent=0
    _
  %s15 = ssub.s32 1, %s13
  %s16 = scalar_select 0, %s15, %s13
  loop: start=0, step=1, limit=6
  $region2: #{res_module_forward.1} parent=0 // loop_pre_header
    _
  $region3: #{res_module_forward.1} parent=0 // loop_header
    %s18 = sphi 0, %s22
    %p19 = scmp.ge.s32.totalorder %s18, 6
    %s25 = sphi 0, %s37
    %s26 = sphi 0, %s33
    %s27 = sphi 0, %s25
    %s28 = sphi 0, %s26
    %s29 = sphi 0, %s27
    %s30 = sphi 0, %s28
    %s40 = sphi 0, %s42
    %s43 = sphi 0, %s40
    %s44 = sphi 0, %s43
    %s60 = sphi 0, %s44
    %s66 = sphi 0, %s68
    %s69 = sphi 0, %s66
    %s70 = sphi 0, %s69
    %s86 = sphi 0, %s70
    %s90 = sphi 0, %s90
    %s92 = sphi 0, %s90
    %s93 = sphi 0, %s92
    %s107 = sphi 0, %s93
    %s111 = sphi 0, %s111
    %s113 = sphi 0, %s111
    %s114 = sphi 0, %s113
    %s128 = sphi 0, %s114
    %s132 = sphi 0, %s132
    %s134 = sphi 0, %s132
    %s135 = sphi 0, %s134
    %s149 = sphi 0, %s135
    %s153 = sphi 0, %s153
    %s155 = sphi 0, %s153
    %s156 = sphi 0, %s155
    %s170 = sphi 0, %s156
    %s174 = sphi 0, %s174
    %s176 = sphi 0, %s174
    %s177 = sphi 0, %s176
    %s191 = sphi 0, %s177
    %s195 = sphi 0, %s195
    %s197 = sphi 0, %s195
    %s198 = sphi 0, %s197
    %s212 = sphi 0, %s198
    %s216 = sphi 0, %s216
    %s218 = sphi 0, %s216
    %s219 = sphi 0, %s218
    %s233 = sphi 0, %s219
    %s237 = sphi 0, %s237
    %s239 = sphi 0, %s237
    %s240 = sphi 0, %s239
    %s254 = sphi 0, %s240
    %s262 = sphi 0, %s264
    %s265 = sphi 0, %s262
    %s266 = sphi 0, %s265
    %s282 = sphi 0, %s266
    %s290 = sphi 0, %s292
    %s293 = sphi 0, %s290
    %s294 = sphi 0, %s293
    %s310 = sphi 0, %s294
  $region4: #{res_module_forward.1} parent=0 // loop_header_branch
    %21 = sbr.rel (%p19) target = $region8
  $region5: #{res_module_forward.1} parent=0 // loop_body
    %s23 = ssub.s32 %s18, 1
    %s24 = ssub.s32 %s18, 2
    %s31 = sadd.s32 1, %s26
    %p32 = scmp.ge.s32.totalorder %s31, 2
    %s33 = scalar_select %p32, 0, %s31
    %s34 = sadd.s32 1, %s25
    %s35 = scalar_select %p32, %s34, %s25
    %p36 = scmp.ge.s32.totalorder %s35, 2
    %s37 = scalar_select %p36, 0, %s35
    %s38 = ssub.s32 %s25, %s37
    %p39 = scmp.eq.s32.totalorder %s38, 0
    %s41 = sadd.s32 %s40, 1
    %s42 = scalar_select %p39, %s40, %s41
    %p45 = pneg %p39
    %p46 = scmp.eq.s32.totalorder %s18, 3
    %p47 = por %p45, %p46
    %p48 = scmp.ne.s32.totalorder %s40, %s43
    %p49 = scmp.eq.s32.totalorder %s18, 0
    %p50 = por %p48, %p49
    %p51 = scmp.ne.s32.totalorder %s40, %s43
    %p52 = scmp.eq.s32.totalorder %s23, 3
    %p53 = por %p51, %p52
    %p54 = scmp.ne.s32.totalorder %s43, %s44
    %p55 = scmp.eq.s32.totalorder %s23, 0
    %p56 = por %p54, %p55
    %p57 = scmp.ne.s32.totalorder %s43, %s44
    %p58 = scmp.eq.s32.totalorder %s24, 3
    %p59 = por %p57, %p58
    %p61 = scmp.ne.s32.totalorder %s44, %s60
    %p62 = scmp.eq.s32.totalorder %s24, 0
    %p63 = por %p61, %p62
    %s64 = ssub.s32 %s26, %s33
    %p65 = scmp.eq.s32.totalorder %s64, 0
    %s67 = sadd.s32 %s66, 1
    %s68 = scalar_select %p65, %s66, %s67
    %p71 = pneg %p65
    %p72 = scmp.eq.s32.totalorder %s18, 3
    %p73 = por %p71, %p72
    %p74 = scmp.ne.s32.totalorder %s66, %s69
    %p75 = scmp.eq.s32.totalorder %s18, 0
    %p76 = por %p74, %p75
    %p77 = scmp.ne.s32.totalorder %s66, %s69
    %p78 = scmp.eq.s32.totalorder %s23, 3
    %p79 = por %p77, %p78
    %p80 = scmp.ne.s32.totalorder %s69, %s70
    %p81 = scmp.eq.s32.totalorder %s23, 0
    %p82 = por %p80, %p81
    %p83 = scmp.ne.s32.totalorder %s69, %s70
    %p84 = scmp.eq.s32.totalorder %s24, 3
    %p85 = por %p83, %p84
    %p87 = scmp.ne.s32.totalorder %s70, %s86
    %p88 = scmp.eq.s32.totalorder %s24, 0
    %p89 = por %p87, %p88
    %s91 = sadd.s32 %s90, 1
    %p94 = scmp.eq.s32.totalorder %s18, 3
    %p95 = scmp.ne.s32.totalorder %s90, %s92
    %p96 = scmp.eq.s32.totalorder %s18, 0
    %p97 = por %p95, %p96
    %p98 = scmp.ne.s32.totalorder %s90, %s92
    %p99 = scmp.eq.s32.totalorder %s23, 3
    %p100 = por %p98, %p99
    %p101 = scmp.ne.s32.totalorder %s92, %s93
    %p102 = scmp.eq.s32.totalorder %s23, 0
    %p103 = por %p101, %p102
    %p104 = scmp.ne.s32.totalorder %s92, %s93
    %p105 = scmp.eq.s32.totalorder %s24, 3
    %p106 = por %p104, %p105
    %p108 = scmp.ne.s32.totalorder %s93, %s107
    %p109 = scmp.eq.s32.totalorder %s24, 0
    %p110 = por %p108, %p109
    %s112 = sadd.s32 %s111, 1
    %p115 = scmp.eq.s32.totalorder %s18, 3
    %p116 = scmp.ne.s32.totalorder %s111, %s113
    %p117 = scmp.eq.s32.totalorder %s18, 0
    %p118 = por %p116, %p117
    %p119 = scmp.ne.s32.totalorder %s111, %s113
    %p120 = scmp.eq.s32.totalorder %s23, 3
    %p121 = por %p119, %p120
    %p122 = scmp.ne.s32.totalorder %s113, %s114
    %p123 = scmp.eq.s32.totalorder %s23, 0
    %p124 = por %p122, %p123
    %p125 = scmp.ne.s32.totalorder %s113, %s114
    %p126 = scmp.eq.s32.totalorder %s24, 3
    %p127 = por %p125, %p126
    %p129 = scmp.ne.s32.totalorder %s114, %s128
    %p130 = scmp.eq.s32.totalorder %s24, 0
    %p131 = por %p129, %p130
    %s133 = sadd.s32 %s132, 1
    %p136 = scmp.eq.s32.totalorder %s18, 3
    %p137 = scmp.ne.s32.totalorder %s132, %s134
    %p138 = scmp.eq.s32.totalorder %s18, 0
    %p139 = por %p137, %p138
    %p140 = scmp.ne.s32.totalorder %s132, %s134
    %p141 = scmp.eq.s32.totalorder %s23, 3
    %p142 = por %p140, %p141
    %p143 = scmp.ne.s32.totalorder %s134, %s135
    %p144 = scmp.eq.s32.totalorder %s23, 0
    %p145 = por %p143, %p144
    %p146 = scmp.ne.s32.totalorder %s134, %s135
    %p147 = scmp.eq.s32.totalorder %s24, 3
    %p148 = por %p146, %p147
    %p150 = scmp.ne.s32.totalorder %s135, %s149
    %p151 = scmp.eq.s32.totalorder %s24, 0
    %p152 = por %p150, %p151
    %s154 = sadd.s32 %s153, 1
    %p157 = scmp.eq.s32.totalorder %s18, 3
    %p158 = scmp.ne.s32.totalorder %s153, %s155
    %p159 = scmp.eq.s32.totalorder %s18, 0
    %p160 = por %p158, %p159
    %p161 = scmp.ne.s32.totalorder %s153, %s155
    %p162 = scmp.eq.s32.totalorder %s23, 3
    %p163 = por %p161, %p162
    %p164 = scmp.ne.s32.totalorder %s155, %s156
    %p165 = scmp.eq.s32.totalorder %s23, 0
    %p166 = por %p164, %p165
    %p167 = scmp.ne.s32.totalorder %s155, %s156
    %p168 = scmp.eq.s32.totalorder %s24, 3
    %p169 = por %p167, %p168
    %p171 = scmp.ne.s32.totalorder %s156, %s170
    %p172 = scmp.eq.s32.totalorder %s24, 0
    %p173 = por %p171, %p172
    %s175 = sadd.s32 %s174, 1
    %p178 = scmp.eq.s32.totalorder %s18, 3
    %p179 = scmp.ne.s32.totalorder %s174, %s176
    %p180 = scmp.eq.s32.totalorder %s18, 0
    %p181 = por %p179, %p180
    %p182 = scmp.ne.s32.totalorder %s174, %s176
    %p183 = scmp.eq.s32.totalorder %s23, 3
    %p184 = por %p182, %p183
    %p185 = scmp.ne.s32.totalorder %s176, %s177
    %p186 = scmp.eq.s32.totalorder %s23, 0
    %p187 = por %p185, %p186
    %p188 = scmp.ne.s32.totalorder %s176, %s177
    %p189 = scmp.eq.s32.totalorder %s24, 3
    %p190 = por %p188, %p189
    %p192 = scmp.ne.s32.totalorder %s177, %s191
    %p193 = scmp.eq.s32.totalorder %s24, 0
    %p194 = por %p192, %p193
    %s196 = sadd.s32 %s195, 1
    %p199 = scmp.eq.s32.totalorder %s18, 3
    %p200 = scmp.ne.s32.totalorder %s195, %s197
    %p201 = scmp.eq.s32.totalorder %s18, 0
    %p202 = por %p200, %p201
    %p203 = scmp.ne.s32.totalorder %s195, %s197
    %p204 = scmp.eq.s32.totalorder %s23, 3
    %p205 = por %p203, %p204
    %p206 = scmp.ne.s32.totalorder %s197, %s198
    %p207 = scmp.eq.s32.totalorder %s23, 0
    %p208 = por %p206, %p207
    %p209 = scmp.ne.s32.totalorder %s197, %s198
    %p210 = scmp.eq.s32.totalorder %s24, 3
    %p211 = por %p209, %p210
    %p213 = scmp.ne.s32.totalorder %s198, %s212
    %p214 = scmp.eq.s32.totalorder %s24, 0
    %p215 = por %p213, %p214
    %s217 = sadd.s32 %s216, 1
    %p220 = scmp.eq.s32.totalorder %s18, 3
    %p221 = scmp.ne.s32.totalorder %s216, %s218
    %p222 = scmp.eq.s32.totalorder %s18, 0
    %p223 = por %p221, %p222
    %p224 = scmp.ne.s32.totalorder %s216, %s218
    %p225 = scmp.eq.s32.totalorder %s23, 3
    %p226 = por %p224, %p225
    %p227 = scmp.ne.s32.totalorder %s218, %s219
    %p228 = scmp.eq.s32.totalorder %s23, 0
    %p229 = por %p227, %p228
    %p230 = scmp.ne.s32.totalorder %s218, %s219
    %p231 = scmp.eq.s32.totalorder %s24, 3
    %p232 = por %p230, %p231
    %p234 = scmp.ne.s32.totalorder %s219, %s233
    %p235 = scmp.eq.s32.totalorder %s24, 0
    %p236 = por %p234, %p235
    %s238 = sadd.s32 %s237, 1
    %p241 = scmp.eq.s32.totalorder %s18, 3
    %p242 = scmp.ne.s32.totalorder %s237, %s239
    %p243 = scmp.eq.s32.totalorder %s18, 0
    %p244 = por %p242, %p243
    %p245 = scmp.ne.s32.totalorder %s237, %s239
    %p246 = scmp.eq.s32.totalorder %s23, 3
    %p247 = por %p245, %p246
    %p248 = scmp.ne.s32.totalorder %s239, %s240
    %p249 = scmp.eq.s32.totalorder %s23, 0
    %p250 = por %p248, %p249
    %p251 = scmp.ne.s32.totalorder %s239, %s240
    %p252 = scmp.eq.s32.totalorder %s24, 3
    %p253 = por %p251, %p252
    %p255 = scmp.ne.s32.totalorder %s240, %s254
    %p256 = scmp.eq.s32.totalorder %s24, 0
    %p257 = por %p255, %p256
    %s258 = ssub.s32 %s25, %s37
    %s259 = ssub.s32 %s26, %s33
    %s260 = sor.u32 %s258, %s259
    %p261 = scmp.eq.s32.totalorder %s260, 0
    %s263 = sadd.s32 %s262, 1
    %s264 = scalar_select %p261, %s262, %s263
    %p267 = pneg %p261
    %p268 = scmp.eq.s32.totalorder %s18, 3
    %p269 = por %p267, %p268
    %p270 = scmp.ne.s32.totalorder %s262, %s265
    %p271 = scmp.eq.s32.totalorder %s18, 0
    %p272 = por %p270, %p271
    %p273 = scmp.ne.s32.totalorder %s262, %s265
    %p274 = scmp.eq.s32.totalorder %s23, 3
    %p275 = por %p273, %p274
    %p276 = scmp.ne.s32.totalorder %s265, %s266
    %p277 = scmp.eq.s32.totalorder %s23, 0
    %p278 = por %p276, %p277
    %p279 = scmp.ne.s32.totalorder %s265, %s266
    %p280 = scmp.eq.s32.totalorder %s24, 3
    %p281 = por %p279, %p280
    %p283 = scmp.ne.s32.totalorder %s266, %s282
    %p284 = scmp.eq.s32.totalorder %s24, 0
    %p285 = por %p283, %p284
    %s286 = ssub.s32 %s25, %s37
    %s287 = ssub.s32 %s26, %s33
    %s288 = sor.u32 %s286, %s287
    %p289 = scmp.eq.s32.totalorder %s288, 0
    %s291 = sadd.s32 %s290, 1
    %s292 = scalar_select %p289, %s290, %s291
    %p295 = pneg %p289
    %p296 = scmp.eq.s32.totalorder %s18, 3
    %p297 = por %p295, %p296
    %p298 = scmp.ne.s32.totalorder %s290, %s293
    %p299 = scmp.eq.s32.totalorder %s18, 0
    %p300 = por %p298, %p299
    %p301 = scmp.ne.s32.totalorder %s290, %s293
    %p302 = scmp.eq.s32.totalorder %s23, 3
    %p303 = por %p301, %p302
    %p304 = scmp.ne.s32.totalorder %s293, %s294
    %p305 = scmp.eq.s32.totalorder %s23, 0
    %p306 = por %p304, %p305
    %p307 = scmp.ne.s32.totalorder %s293, %s294
    %p308 = scmp.eq.s32.totalorder %s24, 3
    %p309 = por %p307, %p308
    %p311 = scmp.ne.s32.totalorder %s294, %s310
    %p312 = scmp.eq.s32.totalorder %s24, 0
    %p313 = por %p311, %p312
    %p314 = scmp.le.s32.totalorder 1, %s18
    %p315 = scmp.lt.s32.totalorder %s18, 5
    %p316 = pnand %p314, %p315
    %p317 = pneg %p316
    // Predicated region
    $region9: #{res_module_forward.1} parent=5 // pred_check
      _
    $region10: #{res_module_forward.1} parent=5 // pred_check_branch
      %319 = sbr.rel (%p316) target = $region12
    $region11: #{res_module_forward.1} parent=5 // pred_region
      %s320 = ssub.s32 %s18, 1
      // Predicated region
      $region13: #{res_module_forward.1} parent=11 // pred_check
        %p321 = pneg %p103
      $region14: #{res_module_forward.1} parent=11 // pred_check_branch
        %323 = sbr.rel (%p321) target = $region16
      $region15: #{res_module_forward.1} parent=11 // pred_region
        _
      $region16: #{res_module_forward.1} parent=11 // pred_fallthru
        _
      // Predicated region
      $region17: #{res_module_forward.1} parent=11 // pred_check
        %p324 = pneg %p124
      $region18: #{res_module_forward.1} parent=11 // pred_check_branch
        %326 = sbr.rel (%p324) target = $region20
      $region19: #{res_module_forward.1} parent=11 // pred_region
        _
      $region20: #{res_module_forward.1} parent=11 // pred_fallthru
        _
      // Predicated region
      $region21: #{res_module_forward.1} parent=11 // pred_check
        %p327 = pneg %p145
      $region22: #{res_module_forward.1} parent=11 // pred_check_branch
        %329 = sbr.rel (%p327) target = $region24
      $region23: #{res_module_forward.1} parent=11 // pred_region
        _
      $region24: #{res_module_forward.1} parent=11 // pred_fallthru
        _
      // Predicated region
      $region25: #{res_module_forward.1} parent=11 // pred_check
        %p330 = pneg %p166
      $region26: #{res_module_forward.1} parent=11 // pred_check_branch
        %332 = sbr.rel (%p330) target = $region28
      $region27: #{res_module_forward.1} parent=11 // pred_region
        _
      $region28: #{res_module_forward.1} parent=11 // pred_fallthru
        _
      // Predicated region
      $region29: #{res_module_forward.1} parent=11 // pred_check
        %p333 = pneg %p187
      $region30: #{res_module_forward.1} parent=11 // pred_check_branch
        %335 = sbr.rel (%p333) target = $region32
      $region31: #{res_module_forward.1} parent=11 // pred_region
        _
      $region32: #{res_module_forward.1} parent=11 // pred_fallthru
        _
      // Predicated region
      $region33: #{res_module_forward.1} parent=11 // pred_check
        %p336 = pneg %p208
      $region34: #{res_module_forward.1} parent=11 // pred_check_branch
        %338 = sbr.rel (%p336) target = $region36
      $region35: #{res_module_forward.1} parent=11 // pred_region
        _
      $region36: #{res_module_forward.1} parent=11 // pred_fallthru
        _
      // Predicated region
      $region37: #{res_module_forward.1} parent=11 // pred_check
        %p339 = pneg %p229
      $region38: #{res_module_forward.1} parent=11 // pred_check_branch
        %341 = sbr.rel (%p339) target = $region40
      $region39: #{res_module_forward.1} parent=11 // pred_region
        _
      $region40: #{res_module_forward.1} parent=11 // pred_fallthru
        _
      // Predicated region
      $region41: #{res_module_forward.1} parent=11 // pred_check
        %p342 = pneg %p250
      $region42: #{res_module_forward.1} parent=11 // pred_check_branch
        %344 = sbr.rel (%p342) target = $region44
      $region43: #{res_module_forward.1} parent=11 // pred_region
        _
      $region44: #{res_module_forward.1} parent=11 // pred_fallthru
        _
    $region12: #{res_module_forward.1} parent=5 // pred_fallthru
      _
    %p345 = scmp.lt.s32.totalorder %s18, 4
    // Predicated region
    $region45: #{res_module_forward.1} parent=5 // pred_check
      %p346 = pneg %p345
    $region46: #{res_module_forward.1} parent=5 // pred_check_branch
      %348 = sbr.rel (%p346) target = $region48
    $region47: #{res_module_forward.1} parent=5 // pred_region
      // Predicated region
      $region49: #{res_module_forward.1} parent=47 // pred_check
        %p349 = pneg %p50
      $region50: #{res_module_forward.1} parent=47 // pred_check_branch
        %351 = sbr.rel (%p349) target = $region52
      $region51: #{res_module_forward.1} parent=47 // pred_region
        %p352 = scmp.lt.s32.totalorder %s25, 1
        %s353 = scalar_select %p352, %s25, 1
        %s354 = smul.addr %s353, 79
        %s355 = smul.addr %s354, 8
        %s356 = scalar_lea.vmem %s0, %s355
      $region52: #{res_module_forward.1} parent=47 // pred_fallthru
        _
      // Predicated region
      $region53: #{res_module_forward.1} parent=47 // pred_check
        %p357 = pneg %p76
      $region54: #{res_module_forward.1} parent=47 // pred_check_branch
        %359 = sbr.rel (%p357) target = $region56
      $region55: #{res_module_forward.1} parent=47 // pred_region
        %p360 = scmp.lt.s32.totalorder %s26, 1
        %s361 = scalar_select %p360, %s26, 1
        %s362 = smul.addr %s361, 48
        %s363 = smul.addr %s362, 8
        %s364 = scalar_lea.vmem %s1, %s363
      $region56: #{res_module_forward.1} parent=47 // pred_fallthru
        _
    $region48: #{res_module_forward.1} parent=5 // pred_fallthru
      _
    %p365 = scmp.le.s32.totalorder 1, %s18
    %p366 = scmp.lt.s32.totalorder %s18, 5
    %p367 = pnand %p365, %p366
    %p368 = pneg %p367
    // Predicated region
    $region57: #{res_module_forward.1} parent=5 // pred_check
      _
    $region58: #{res_module_forward.1} parent=5 // pred_check_branch
      %370 = sbr.rel (%p367) target = $region60
    $region59: #{res_module_forward.1} parent=5 // pred_region
      %s371 = ssub.s32 %s18, 1
      %p372 = scmp.lt.s32.totalorder %s27, 1
      %s373 = scalar_select %p372, %s27, 1
      %s374 = smul.addr %s373, 79
      %s375 = smul.addr %s374, 8
      %s376 = scalar_lea.vmem %s0, %s375
      %p377 = pneg %p56
      %p378 = pneg %p53
      %p379 = scmp.lt.s32.totalorder %s28, 1
      %s380 = scalar_select %p379, %s28, 1
      %s381 = smul.addr %s380, 48
      %s382 = smul.addr %s381, 8
      %s383 = scalar_lea.vmem %s1, %s382
      %p384 = pneg %p82
      %p385 = pneg %p79
      %p386 = pneg %p103
      %p387 = pneg %p100
      %p388 = pneg %p124
      %p389 = pneg %p121
      %p390 = pneg %p145
      %p391 = pneg %p142
      %p392 = pneg %p166
      %p393 = pneg %p163
      %p394 = pneg %p187
      %p395 = pneg %p184
      %p396 = pneg %p208
      %p397 = pneg %p205
      %p398 = pneg %p229
      %p399 = pneg %p226
      %p400 = pneg %p250
      %p401 = pneg %p247
      %p402 = pneg %p278
      %p403 = pneg %p275
      %s404 = smul.u32 24, %s28
      %p405 = scmp.lt.s32.totalorder %s27, 1
      %s406 = scalar_select %p405, %s27, 1
      %p407 = scmp.lt.s32.totalorder %s404, 47
      %s408 = scalar_select %p407, %s404, 47
      %s409 = smul.addr %s406, 48
      %s410 = sadd.s32 %s408, %s409
      %s411 = smul.addr %s410, 8
      %s412 = scalar_lea.vmem %s10, %s411
      %p413 = pneg %p306
      %p414 = pneg %p303
      %s415 = smul.u32 24, %s28
      %p416 = scmp.lt.s32.totalorder %s27, 1
      %s417 = scalar_select %p416, %s27, 1
      %p418 = scmp.lt.s32.totalorder %s415, 47
      %s419 = scalar_select %p418, %s415, 47
      %s420 = smul.addr %s417, 48
      %s421 = sadd.s32 %s419, %s420
      %s422 = smul.addr %s421, 8
      %s423 = scalar_lea.vmem %s11, %s422
      %p424 = scmp.lt.s32.totalorder %s27, 1
      %s425 = scalar_select %p424, %s27, 1
      %s426 = smul.addr %s425, 79
      %s427 = smul.addr %s426, 8
      %s428 = scalar_lea.vmem %s0, %s427
      %p429 = scmp.lt.s32.totalorder %s28, 1
      %s430 = scalar_select %p429, %s28, 1
      %s431 = smul.addr %s430, 48
      %s432 = smul.addr %s431, 8
      %s433 = scalar_lea.vmem %s1, %s432
      %s434 = smul.u32 24, %s28
      %p435 = scmp.lt.s32.totalorder %s27, 1
      %s436 = scalar_select %p435, %s27, 1
      %p437 = scmp.lt.s32.totalorder %s434, 47
      %s438 = scalar_select %p437, %s434, 47
      %s439 = smul.addr %s436, 48
      %s440 = sadd.s32 %s438, %s439
      %s441 = smul.addr %s440, 8
      %s442 = scalar_lea.vmem %s10, %s441
      %s443 = smul.u32 24, %s28
      %s444 = smul.u32 24, %s28
      %p445 = scmp.lt.s32.totalorder %s27, 1
      %s446 = scalar_select %p445, %s27, 1
      %p447 = scmp.lt.s32.totalorder %s444, 47
      %s448 = scalar_select %p447, %s444, 47
      %s449 = smul.addr %s446, 48
      %s450 = sadd.s32 %s448, %s449
      %s451 = smul.addr %s450, 8
      %s452 = scalar_lea.vmem %s11, %s451
      %s453 = smul.u32 24, %s28
      %s455 = smul.u32 %s28, 192
      %s456 = scalar_lea.vmem %s428, %s455
      %v457 = vld [vmem:[%s456] sm:$0xff]
      %v458 = vld [vmem:[%s456 + $0x8] sm:$0xff]
      %v459 = vld [vmem:[%s456 + $0x10] sm:$0xff]
      %v460 = vld [vmem:[%s456 + $0x18] sm:$0xff]
      %v461 = vld [vmem:[%s456 + $0x20] sm:$0xff]
      %v462 = vld [vmem:[%s456 + $0x28] sm:$0xff]
      %v463 = vld [vmem:[%s456 + $0x30] sm:$0xff]
      %v464 = vld [vmem:[%s456 + $0x38] sm:$0xff]
      %v465 = vld [vmem:[%s456 + $0x40] sm:$0xff]
      %v466 = vld [vmem:[%s456 + $0x48] sm:$0xff]
      %v467 = vld [vmem:[%s456 + $0x50] sm:$0xff]
      %v468 = vld [vmem:[%s456 + $0x58] sm:$0xff]
      %v469 = vld [vmem:[%s456 + $0x60] sm:$0xff]
      %v470 = vld [vmem:[%s456 + $0x68] sm:$0xff]
      %v471 = vld [vmem:[%s456 + $0x70] sm:$0xff]
      %v472 = vld [vmem:[%s456 + $0x78] sm:$0xff]
      %v473 = vld [vmem:[%s456 + $0x80] sm:$0xff]
      %v474 = vld [vmem:[%s456 + $0x88] sm:$0xff]
      %v475 = vld [vmem:[%s456 + $0x90] sm:$0xff]
      %v476 = vld [vmem:[%s456 + $0x98] sm:$0xff]
      %v477 = vld [vmem:[%s456 + $0xa0] sm:$0xff]
      %v478 = vld [vmem:[%s456 + $0xa8] sm:$0xff]
      %v479 = vld [vmem:[%s456 + $0xb0] sm:$0xff]
      %v480 = vld [vmem:[%s456 + $0xb8] sm:$0xff]
      %v481 = vld [vmem:[%s456 + $0xc0] sm:$0xff]
      %v482 = vld [vmem:[%s456 + $0xc8] sm:$0xff]
      %v483 = vld [vmem:[%s456 + $0xd0] sm:$0xff]
      %v484 = vld [vmem:[%s456 + $0xd8] sm:$0xff]
      %v485 = vld [vmem:[%s456 + $0xe0] sm:$0xff]
      %v486 = vld [vmem:[%s456 + $0xe8] sm:$0xff]
      %v487 = vld [vmem:[%s456 + $0xf0] sm:$0xff]
      %v488 = vld [vmem:[%s456 + $0xf8] sm:$0xff]
      %v489 = vld [vmem:[%s456 + $0x100] sm:$0xff]
      %v490 = vld [vmem:[%s456 + $0x108] sm:$0xff]
      %v491 = vld [vmem:[%s456 + $0x110] sm:$0xff]
      %v492 = vld [vmem:[%s456 + $0x118] sm:$0xff]
      %v493 = vld [vmem:[%s456 + $0x120] sm:$0xff]
      %v494 = vld [vmem:[%s456 + $0x128] sm:$0xff]
      %v495 = vld [vmem:[%s456 + $0x130] sm:$0xff]
      %v496 = vld [vmem:[%s456 + $0x138] sm:$0xff]
      %v497 = vld [vmem:[%s456 + $0x140] sm:$0xff]
      %v498 = vld [vmem:[%s456 + $0x148] sm:$0xff]
      %v499 = vld [vmem:[%s456 + $0x150] sm:$0xff]
      %v500 = vld [vmem:[%s456 + $0x158] sm:$0xff]
      %v501 = vld [vmem:[%s456 + $0x160] sm:$0xff]
      %v502 = vld [vmem:[%s456 + $0x168] sm:$0xff]
      %v503 = vld [vmem:[%s456 + $0x170] sm:$0xff]
      %v504 = vld [vmem:[%s456 + $0x178] sm:$0xff]
      %v505 = vld [vmem:[%s456 + $0x180] sm:$0xff]
      %v506 = vld [vmem:[%s456 + $0x188] sm:$0xff]
      %v507 = vld [vmem:[%s456 + $0x190] sm:$0xff]
      %v508 = vld [vmem:[%s456 + $0x198] sm:$0xff]
      %v509 = vld [vmem:[%s456 + $0x1a0] sm:$0xff]
      %v510 = vld [vmem:[%s456 + $0x1a8] sm:$0xff]
      %v511 = vld [vmem:[%s456 + $0x1b0] sm:$0x3]
      %v512 = vpack.c.bf16 %v458, %v457
      %v513 = vpack.c.bf16 %v460, %v459
      %v514 = vpack.c.bf16 %v462, %v461
      %v515 = vpack.c.bf16 %v464, %v463
      %v516 = vpack.c.bf16 %v466, %v465
      %v517 = vpack.c.bf16 %v468, %v467
      %v518 = vpack.c.bf16 %v470, %v469
      %v519 = vpack.c.bf16 %v472, %v471
      %v520 = vpack.c.bf16 %v474, %v473
      %v521 = vpack.c.bf16 %v476, %v475
      %v522 = vpack.c.bf16 %v478, %v477
      %v523 = vpack.c.bf16 %v480, %v479
      %v524 = vpack.c.bf16 %v482, %v481
      %v525 = vpack.c.bf16 %v484, %v483
      %v526 = vpack.c.bf16 %v486, %v485
      %v527 = vpack.c.bf16 %v488, %v487
      %v528 = vpack.c.bf16 %v490, %v489
      %v529 = vpack.c.bf16 %v492, %v491
      %v530 = vpack.c.bf16 %v494, %v493
      %v531 = vpack.c.bf16 %v496, %v495
      %v532 = vpack.c.bf16 %v498, %v497
      %v533 = vpack.c.bf16 %v500, %v499
      %v534 = vpack.c.bf16 %v502, %v501
      %v535 = vpack.c.bf16 %v504, %v503
      %v536 = vpack.c.bf16 %v506, %v505
      %v537 = vpack.c.bf16 %v508, %v507
      %v538 = vpack.c.bf16 %v510, %v509
      %v539 = vpack.c.bf16 %v511, %v511
      %v540 = vld [vmem:[%s433] sm:$0xff]
      %v541 = vld [vmem:[%s433 + $0x8] sm:$0xff]
      %v542 = vld [vmem:[%s433 + $0x10] sm:$0xff]
      %v543 = vld [vmem:[%s433 + $0x18] sm:$0xff]
      %v544 = vld [vmem:[%s433 + $0x20] sm:$0xff]
      %v545 = vld [vmem:[%s433 + $0x28] sm:$0xff]
      %v546 = vld [vmem:[%s433 + $0x30] sm:$0xff]
      %v547 = vld [vmem:[%s433 + $0x38] sm:$0xff]
      %v548 = vld [vmem:[%s433 + $0x40] sm:$0xff]
      %v549 = vld [vmem:[%s433 + $0x48] sm:$0xff]
      %v550 = vld [vmem:[%s433 + $0x50] sm:$0xff]
      %v551 = vld [vmem:[%s433 + $0x58] sm:$0xff]
      %v552 = vld [vmem:[%s433 + $0x60] sm:$0xff]
      %v553 = vld [vmem:[%s433 + $0x68] sm:$0xff]
      %v554 = vld [vmem:[%s433 + $0x70] sm:$0xff]
      %v555 = vld [vmem:[%s433 + $0x78] sm:$0xff]
      %v556 = vld [vmem:[%s433 + $0x80] sm:$0xff]
      %v557 = vld [vmem:[%s433 + $0x88] sm:$0xff]
      %v558 = vld [vmem:[%s433 + $0x90] sm:$0xff]
      %v559 = vld [vmem:[%s433 + $0x98] sm:$0xff]
      %v560 = vld [vmem:[%s433 + $0xa0] sm:$0xff]
      %v561 = vld [vmem:[%s433 + $0xa8] sm:$0xff]
      %v562 = vld [vmem:[%s433 + $0xb0] sm:$0xff]
      %v563 = vld [vmem:[%s433 + $0xb8] sm:$0xff]
      %v564 = vld [vmem:[%s433 + $0xc0] sm:$0xff]
      %v565 = vld [vmem:[%s433 + $0xc8] sm:$0xff]
      %v566 = vld [vmem:[%s433 + $0xd0] sm:$0xff]
      %v567 = vld [vmem:[%s433 + $0xd8] sm:$0xff]
      %v568 = vld [vmem:[%s433 + $0xe0] sm:$0xff]
      %v569 = vld [vmem:[%s433 + $0xe8] sm:$0xff]
      %v570 = vld [vmem:[%s433 + $0xf0] sm:$0xff]
      %v571 = vld [vmem:[%s433 + $0xf8] sm:$0xff]
      %v572 = vld [vmem:[%s433 + $0x100] sm:$0xff]
      %v573 = vld [vmem:[%s433 + $0x108] sm:$0xff]
      %v574 = vld [vmem:[%s433 + $0x110] sm:$0xff]
      %v575 = vld [vmem:[%s433 + $0x118] sm:$0xff]
      %v576 = vld [vmem:[%s433 + $0x120] sm:$0xff]
      %v577 = vld [vmem:[%s433 + $0x128] sm:$0xff]
      %v578 = vld [vmem:[%s433 + $0x130] sm:$0xff]
      %v579 = vld [vmem:[%s433 + $0x138] sm:$0xff]
      %v580 = vld [vmem:[%s433 + $0x140] sm:$0xff]
      %v581 = vld [vmem:[%s433 + $0x148] sm:$0xff]
      %v582 = vld [vmem:[%s433 + $0x150] sm:$0xff]
      %v583 = vld [vmem:[%s433 + $0x158] sm:$0xff]
      %v584 = vld [vmem:[%s433 + $0x160] sm:$0xff]
      %v585 = vld [vmem:[%s433 + $0x168] sm:$0xff]
      %v586 = vld [vmem:[%s433 + $0x170] sm:$0xff]
      %v587 = vld [vmem:[%s433 + $0x178] sm:$0xff]
      %vm588 = vsmask.f32 7424
      %v590 = vshrl.u32 %v512, 16
      %v592 = vshll.u32 %v512, 16
      %v594 = vrot.slane %v592, 1
      %v595 = vor.u32 %v590, %v594
      %v597 = vshll.u32 %v513, 16
      %v599 = vrot.slane %v597, 1
      %v600 = vsel %vm588, %v595, %v599
      %v601 = vshrl.u32 %v513, 16
      %v603 = vor.u32 %v601, %v599
      %v605 = vshll.u32 %v514, 16
      %v607 = vrot.slane %v605, 1
      %v608 = vsel %vm588, %v603, %v607
      %v609 = vshrl.u32 %v514, 16
      %v611 = vor.u32 %v609, %v607
      %v613 = vshll.u32 %v515, 16
      %v615 = vrot.slane %v613, 1
      %v616 = vsel %vm588, %v611, %v615
      %v617 = vshrl.u32 %v515, 16
      %v619 = vor.u32 %v617, %v615
      %v621 = vshll.u32 %v516, 16
      %v623 = vrot.slane %v621, 1
      %v624 = vsel %vm588, %v619, %v623
      %v625 = vshrl.u32 %v516, 16
      %v627 = vor.u32 %v625, %v623
      %v629 = vshll.u32 %v517, 16
      %v631 = vrot.slane %v629, 1
      %v632 = vsel %vm588, %v627, %v631
      %v633 = vshrl.u32 %v517, 16
      %v635 = vor.u32 %v633, %v631
      %v637 = vshll.u32 %v518, 16
      %v639 = vrot.slane %v637, 1
      %v640 = vsel %vm588, %v635, %v639
      %v641 = vshrl.u32 %v518, 16
      %v643 = vor.u32 %v641, %v639
      %v645 = vshll.u32 %v519, 16
      %v647 = vrot.slane %v645, 1
      %v648 = vsel %vm588, %v643, %v647
      %v649 = vshrl.u32 %v519, 16
      %v651 = vor.u32 %v649, %v647
      %v653 = vshll.u32 %v520, 16
      %v655 = vrot.slane %v653, 1
      %v656 = vsel %vm588, %v651, %v655
      %v657 = vshrl.u32 %v520, 16
      %v659 = vor.u32 %v657, %v655
      %v661 = vshll.u32 %v521, 16
      %v663 = vrot.slane %v661, 1
      %v664 = vsel %vm588, %v659, %v663
      %v665 = vshrl.u32 %v521, 16
      %v667 = vor.u32 %v665, %v663
      %v669 = vshll.u32 %v522, 16
      %v671 = vrot.slane %v669, 1
      %v672 = vsel %vm588, %v667, %v671
      %v673 = vshrl.u32 %v522, 16
      %v675 = vor.u32 %v673, %v671
      %v677 = vshll.u32 %v523, 16
      %v679 = vrot.slane %v677, 1
      %v680 = vsel %vm588, %v675, %v679
      %v681 = vshrl.u32 %v523, 16
      %v683 = vor.u32 %v681, %v679
      %v685 = vshll.u32 %v524, 16
      %v687 = vrot.slane %v685, 1
      %v688 = vsel %vm588, %v683, %v687
      %v689 = vshrl.u32 %v524, 16
      %v691 = vor.u32 %v689, %v687
      %v693 = vshll.u32 %v525, 16
      %v695 = vrot.slane %v693, 1
      %v696 = vsel %vm588, %v691, %v695
      %v697 = vshrl.u32 %v525, 16
      %v699 = vor.u32 %v697, %v695
      %v701 = vshll.u32 %v526, 16
      %v703 = vrot.slane %v701, 1
      %v704 = vsel %vm588, %v699, %v703
      %v705 = vshrl.u32 %v526, 16
      %v707 = vor.u32 %v705, %v703
      %v709 = vshll.u32 %v527, 16
      %v711 = vrot.slane %v709, 1
      %v712 = vsel %vm588, %v707, %v711
      %v713 = vshrl.u32 %v527, 16
      %v715 = vor.u32 %v713, %v711
      %v717 = vshll.u32 %v528, 16
      %v719 = vrot.slane %v717, 1
      %v720 = vsel %vm588, %v715, %v719
      %v721 = vshrl.u32 %v528, 16
      %v723 = vor.u32 %v721, %v719
      %v725 = vshll.u32 %v529, 16
      %v727 = vrot.slane %v725, 1
      %v728 = vsel %vm588, %v723, %v727
      %v729 = vshrl.u32 %v529, 16
      %v731 = vor.u32 %v729, %v727
      %v733 = vshll.u32 %v530, 16
      %v735 = vrot.slane %v733, 1
      %v736 = vsel %vm588, %v731, %v735
      %v737 = vshrl.u32 %v530, 16
      %v739 = vor.u32 %v737, %v735
      %v741 = vshll.u32 %v531, 16
      %v743 = vrot.slane %v741, 1
      %v744 = vsel %vm588, %v739, %v743
      %v745 = vshrl.u32 %v531, 16
      %v747 = vor.u32 %v745, %v743
      %v749 = vshll.u32 %v532, 16
      %v751 = vrot.slane %v749, 1
      %v752 = vsel %vm588, %v747, %v751
      %v753 = vshrl.u32 %v532, 16
      %v755 = vor.u32 %v753, %v751
      %v757 = vshll.u32 %v533, 16
      %v759 = vrot.slane %v757, 1
      %v760 = vsel %vm588, %v755, %v759
      %v761 = vshrl.u32 %v533, 16
      %v763 = vor.u32 %v761, %v759
      %v765 = vshll.u32 %v534, 16
      %v767 = vrot.slane %v765, 1
      %v768 = vsel %vm588, %v763, %v767
      %v769 = vshrl.u32 %v534, 16
      %v771 = vor.u32 %v769, %v767
      %v773 = vshll.u32 %v535, 16
      %v775 = vrot.slane %v773, 1
      %v776 = vsel %vm588, %v771, %v775
      %v777 = vshrl.u32 %v535, 16
      %v779 = vor.u32 %v777, %v775
      %v781 = vshll.u32 %v536, 16
      %v783 = vrot.slane %v781, 1
      %v784 = vsel %vm588, %v779, %v783
      %785 = vrot.lane.b32.xlu0 %v600, 3
      %v786 = vpop.permute.xlu0 %785
      %787 = vrot.lane.b32.xlu0 %v608, 3
      %v788 = vpop.permute.xlu0 %787
      %789 = vrot.lane.b32.xlu0 %v616, 3
      %v790 = vpop.permute.xlu0 %789
      %791 = vrot.lane.b32.xlu0 %v624, 3
      %v792 = vpop.permute.xlu0 %791
      %793 = vrot.lane.b32.xlu0 %v632, 3
      %v794 = vpop.permute.xlu0 %793
      %795 = vrot.lane.b32.xlu0 %v640, 3
      %v796 = vpop.permute.xlu0 %795
      %797 = vrot.lane.b32.xlu0 %v648, 3
      %v798 = vpop.permute.xlu0 %797
      %799 = vrot.lane.b32.xlu0 %v656, 3
      %v800 = vpop.permute.xlu0 %799
      %801 = vrot.lane.b32.xlu0 %v664, 3
      %v802 = vpop.permute.xlu0 %801
      %803 = vrot.lane.b32.xlu0 %v672, 3
      %v804 = vpop.permute.xlu0 %803
      %805 = vrot.lane.b32.xlu0 %v680, 3
      %v806 = vpop.permute.xlu0 %805
      %807 = vrot.lane.b32.xlu0 %v688, 3
      %v808 = vpop.permute.xlu0 %807
      %809 = vrot.lane.b32.xlu0 %v696, 3
      %v810 = vpop.permute.xlu0 %809
      %811 = vrot.lane.b32.xlu0 %v704, 3
      %v812 = vpop.permute.xlu0 %811
      %813 = vrot.lane.b32.xlu0 %v712, 3
      %v814 = vpop.permute.xlu0 %813
      %815 = vrot.lane.b32.xlu0 %v720, 3
      %v816 = vpop.permute.xlu0 %815
      %817 = vrot.lane.b32.xlu0 %v728, 3
      %v818 = vpop.permute.xlu0 %817
      %819 = vrot.lane.b32.xlu0 %v736, 3
      %v820 = vpop.permute.xlu0 %819
      %821 = vrot.lane.b32.xlu0 %v744, 3
      %v822 = vpop.permute.xlu0 %821
      %823 = vrot.lane.b32.xlu0 %v752, 3
      %v824 = vpop.permute.xlu0 %823
      %825 = vrot.lane.b32.xlu0 %v760, 3
      %v826 = vpop.permute.xlu0 %825
      %827 = vrot.lane.b32.xlu0 %v768, 3
      %v828 = vpop.permute.xlu0 %827
      %829 = vrot.lane.b32.xlu0 %v776, 3
      %v830 = vpop.permute.xlu0 %829
      %831 = vrot.lane.b32.xlu0 %v784, 3
      %v832 = vpop.permute.xlu0 %831
      %vm858 = vcmask 1046528
      %v859 = vrot.slane %v512, 1
      %v860 = vrot.slane %v513, 1
      %v861 = vsel %vm858, %v859, %v860
      %v862 = vrot.slane %v514, 1
      %v863 = vsel %vm858, %v860, %v862
      %v864 = vrot.slane %v515, 1
      %v865 = vsel %vm858, %v862, %v864
      %v866 = vrot.slane %v516, 1
      %v867 = vsel %vm858, %v864, %v866
      %v868 = vrot.slane %v517, 1
      %v869 = vsel %vm858, %v866, %v868
      %v870 = vrot.slane %v518, 1
      %v871 = vsel %vm858, %v868, %v870
      %v872 = vrot.slane %v519, 1
      %v873 = vsel %vm858, %v870, %v872
      %v874 = vrot.slane %v520, 1
      %v875 = vsel %vm858, %v872, %v874
      %v876 = vrot.slane %v521, 1
      %v877 = vsel %vm858, %v874, %v876
      %v878 = vrot.slane %v522, 1
      %v879 = vsel %vm858, %v876, %v878
      %v880 = vrot.slane %v523, 1
      %v881 = vsel %vm858, %v878, %v880
      %v882 = vrot.slane %v524, 1
      %v883 = vsel %vm858, %v880, %v882
      %v884 = vrot.slane %v525, 1
      %v885 = vsel %vm858, %v882, %v884
      %v886 = vrot.slane %v526, 1
      %v887 = vsel %vm858, %v884, %v886
      %v888 = vrot.slane %v527, 1
      %v889 = vsel %vm858, %v886, %v888
      %v890 = vrot.slane %v528, 1
      %v891 = vsel %vm858, %v888, %v890
      %v892 = vrot.slane %v529, 1
      %v893 = vsel %vm858, %v890, %v892
      %v894 = vrot.slane %v530, 1
      %v895 = vsel %vm858, %v892, %v894
      %v896 = vrot.slane %v531, 1
      %v897 = vsel %vm858, %v894, %v896
      %v898 = vrot.slane %v532, 1
      %v899 = vsel %vm858, %v896, %v898
      %v900 = vrot.slane %v533, 1
      %v901 = vsel %vm858, %v898, %v900
      %v902 = vrot.slane %v534, 1
      %v903 = vsel %vm858, %v900, %v902
      %v904 = vrot.slane %v535, 1
      %v905 = vsel %vm858, %v902, %v904
      %v906 = vrot.slane %v536, 1
      %v907 = vsel %vm858, %v904, %v906
      %908 = vrot.lane.b32.xlu0 %v861, 6
      %v909 = vpop.permute.xlu0 %908
      %910 = vrot.lane.b32.xlu0 %v863, 6
      %v911 = vpop.permute.xlu0 %910
      %912 = vrot.lane.b32.xlu0 %v865, 6
      %v913 = vpop.permute.xlu0 %912
      %914 = vrot.lane.b32.xlu0 %v867, 6
      %v915 = vpop.permute.xlu0 %914
      %916 = vrot.lane.b32.xlu0 %v869, 6
      %v917 = vpop.permute.xlu0 %916
      %918 = vrot.lane.b32.xlu0 %v871, 6
      %v919 = vpop.permute.xlu0 %918
      %920 = vrot.lane.b32.xlu0 %v873, 6
      %v921 = vpop.permute.xlu0 %920
      %922 = vrot.lane.b32.xlu0 %v875, 6
      %v923 = vpop.permute.xlu0 %922
      %924 = vrot.lane.b32.xlu0 %v877, 6
      %v925 = vpop.permute.xlu0 %924
      %926 = vrot.lane.b32.xlu0 %v879, 6
      %v927 = vpop.permute.xlu0 %926
      %928 = vrot.lane.b32.xlu0 %v881, 6
      %v929 = vpop.permute.xlu0 %928
      %930 = vrot.lane.b32.xlu0 %v883, 6
      %v931 = vpop.permute.xlu0 %930
      %932 = vrot.lane.b32.xlu0 %v885, 6
      %v933 = vpop.permute.xlu0 %932
      %934 = vrot.lane.b32.xlu0 %v887, 6
      %v935 = vpop.permute.xlu0 %934
      %936 = vrot.lane.b32.xlu0 %v889, 6
      %v937 = vpop.permute.xlu0 %936
      %938 = vrot.lane.b32.xlu0 %v891, 6
      %v939 = vpop.permute.xlu0 %938
      %940 = vrot.lane.b32.xlu0 %v893, 6
      %v941 = vpop.permute.xlu0 %940
      %942 = vrot.lane.b32.xlu0 %v895, 6
      %v943 = vpop.permute.xlu0 %942
      %944 = vrot.lane.b32.xlu0 %v897, 6
      %v945 = vpop.permute.xlu0 %944
      %946 = vrot.lane.b32.xlu0 %v899, 6
      %v947 = vpop.permute.xlu0 %946
      %948 = vrot.lane.b32.xlu0 %v901, 6
      %v949 = vpop.permute.xlu0 %948
      %950 = vrot.lane.b32.xlu0 %v903, 6
      %v951 = vpop.permute.xlu0 %950
      %952 = vrot.lane.b32.xlu0 %v905, 6
      %v953 = vpop.permute.xlu0 %952
      %954 = vrot.lane.b32.xlu0 %v907, 6
      %v955 = vpop.permute.xlu0 %954
      %vm957 = vcmask 1043456
      %v958 = vrot.slane %v513, 4
      %v959 = vrot.slane %v514, 4
      %v960 = vsel %vm957, %v958, %v959
      %v961 = vrot.slane %v515, 4
      %v962 = vsel %vm957, %v959, %v961
      %v963 = vrot.slane %v516, 4
      %v964 = vsel %vm957, %v961, %v963
      %v965 = vrot.slane %v517, 4
      %v966 = vsel %vm957, %v963, %v965
      %v967 = vrot.slane %v518, 4
      %v968 = vsel %vm957, %v965, %v967
      %v969 = vrot.slane %v519, 4
      %v970 = vsel %vm957, %v967, %v969
      %v971 = vrot.slane %v520, 4
      %v972 = vsel %vm957, %v969, %v971
      %v973 = vrot.slane %v521, 4
      %v974 = vsel %vm957, %v971, %v973
      %v975 = vrot.slane %v522, 4
      %v976 = vsel %vm957, %v973, %v975
      %v977 = vrot.slane %v523, 4
      %v978 = vsel %vm957, %v975, %v977
      %v979 = vrot.slane %v524, 4
      %v980 = vsel %vm957, %v977, %v979
      %v981 = vrot.slane %v525, 4
      %v982 = vsel %vm957, %v979, %v981
      %v983 = vrot.slane %v526, 4
      %v984 = vsel %vm957, %v981, %v983
      %v985 = vrot.slane %v527, 4
      %v986 = vsel %vm957, %v983, %v985
      %v987 = vrot.slane %v528, 4
      %v988 = vsel %vm957, %v985, %v987
      %v989 = vrot.slane %v529, 4
      %v990 = vsel %vm957, %v987, %v989
      %v991 = vrot.slane %v530, 4
      %v992 = vsel %vm957, %v989, %v991
      %v993 = vrot.slane %v531, 4
      %v994 = vsel %vm957, %v991, %v993
      %v995 = vrot.slane %v532, 4
      %v996 = vsel %vm957, %v993, %v995
      %v997 = vrot.slane %v533, 4
      %v998 = vsel %vm957, %v995, %v997
      %v999 = vrot.slane %v534, 4
      %v1000 = vsel %vm957, %v997, %v999
      %v1001 = vrot.slane %v535, 4
      %v1002 = vsel %vm957, %v999, %v1001
      %v1003 = vrot.slane %v536, 4
      %v1004 = vsel %vm957, %v1001, %v1003
      %v1005 = vrot.slane %v537, 4
      %v1006 = vsel %vm957, %v1003, %v1005
      %1007 = vrot.lane.b32.xlu0 %v960, 9
      %v1008 = vpop.permute.xlu0 %1007
      %1009 = vrot.lane.b32.xlu0 %v962, 9
      %v1010 = vpop.permute.xlu0 %1009
      %1011 = vrot.lane.b32.xlu0 %v964, 9
      %v1012 = vpop.permute.xlu0 %1011
      %1013 = vrot.lane.b32.xlu0 %v966, 9
      %v1014 = vpop.permute.xlu0 %1013
      %1015 = vrot.lane.b32.xlu0 %v968, 9
      %v1016 = vpop.permute.xlu0 %1015
      %1017 = vrot.lane.b32.xlu0 %v970, 9
      %v1018 = vpop.permute.xlu0 %1017
      %1019 = vrot.lane.b32.xlu0 %v972, 9
      %v1020 = vpop.permute.xlu0 %1019
      %1021 = vrot.lane.b32.xlu0 %v974, 9
      %v1022 = vpop.permute.xlu0 %1021
      %1023 = vrot.lane.b32.xlu0 %v976, 9
      %v1024 = vpop.permute.xlu0 %1023
      %1025 = vrot.lane.b32.xlu0 %v978, 9
      %v1026 = vpop.permute.xlu0 %1025
      %1027 = vrot.lane.b32.xlu0 %v980, 9
      %v1028 = vpop.permute.xlu0 %1027
      %1029 = vrot.lane.b32.xlu0 %v982, 9
      %v1030 = vpop.permute.xlu0 %1029
      %1031 = vrot.lane.b32.xlu0 %v984, 9
      %v1032 = vpop.permute.xlu0 %1031
      %1033 = vrot.lane.b32.xlu0 %v986, 9
      %v1034 = vpop.permute.xlu0 %1033
      %1035 = vrot.lane.b32.xlu0 %v988, 9
      %v1036 = vpop.permute.xlu0 %1035
      %1037 = vrot.lane.b32.xlu0 %v990, 9
      %v1038 = vpop.permute.xlu0 %1037
      %1039 = vrot.lane.b32.xlu0 %v992, 9
      %v1040 = vpop.permute.xlu0 %1039
      %1041 = vrot.lane.b32.xlu0 %v994, 9
      %v1042 = vpop.permute.xlu0 %1041
      %1043 = vrot.lane.b32.xlu0 %v996, 9
      %v1044 = vpop.permute.xlu0 %1043
      %1045 = vrot.lane.b32.xlu0 %v998, 9
      %v1046 = vpop.permute.xlu0 %1045
      %1047 = vrot.lane.b32.xlu0 %v1000, 9
      %v1048 = vpop.permute.xlu0 %1047
      %1049 = vrot.lane.b32.xlu0 %v1002, 9
      %v1050 = vpop.permute.xlu0 %1049
      %1051 = vrot.lane.b32.xlu0 %v1004, 9
      %v1052 = vpop.permute.xlu0 %1051
      %1053 = vrot.lane.b32.xlu0 %v1006, 9
      %v1054 = vpop.permute.xlu0 %1053
      %vm1055 = vsmask.f32 3328
      %v1056 = vrot.slane %v601, 4
      %v1057 = vrot.slane %v597, 5
      %v1058 = vor.u32 %v1056, %v1057
      %v1059 = vrot.slane %v609, 4
      %v1060 = vrot.slane %v605, 5
      %v1061 = vor.u32 %v1059, %v1060
      %v1062 = vsel %vm1055, %v1058, %v1061
      %v1063 = vrot.slane %v617, 4
      %v1064 = vrot.slane %v613, 5
      %v1065 = vor.u32 %v1063, %v1064
      %v1066 = vsel %vm1055, %v1061, %v1065
      %v1067 = vrot.slane %v625, 4
      %v1068 = vrot.slane %v621, 5
      %v1069 = vor.u32 %v1067, %v1068
      %v1070 = vsel %vm1055, %v1065, %v1069
      %v1071 = vrot.slane %v633, 4
      %v1072 = vrot.slane %v629, 5
      %v1073 = vor.u32 %v1071, %v1072
      %v1074 = vsel %vm1055, %v1069, %v1073
      %v1075 = vrot.slane %v641, 4
      %v1076 = vrot.slane %v637, 5
      %v1077 = vor.u32 %v1075, %v1076
      %v1078 = vsel %vm1055, %v1073, %v1077
      %v1079 = vrot.slane %v649, 4
      %v1080 = vrot.slane %v645, 5
      %v1081 = vor.u32 %v1079, %v1080
      %v1082 = vsel %vm1055, %v1077, %v1081
      %v1083 = vrot.slane %v657, 4
      %v1084 = vrot.slane %v653, 5
      %v1085 = vor.u32 %v1083, %v1084
      %v1086 = vsel %vm1055, %v1081, %v1085
      %v1087 = vrot.slane %v665, 4
      %v1088 = vrot.slane %v661, 5
      %v1089 = vor.u32 %v1087, %v1088
      %v1090 = vsel %vm1055, %v1085, %v1089
      %v1091 = vrot.slane %v673, 4
      %v1092 = vrot.slane %v669, 5
      %v1093 = vor.u32 %v1091, %v1092
      %v1094 = vsel %vm1055, %v1089, %v1093
      %v1095 = vrot.slane %v681, 4
      %v1096 = vrot.slane %v677, 5
      %v1097 = vor.u32 %v1095, %v1096
      %v1098 = vsel %vm1055, %v1093, %v1097
      %v1099 = vrot.slane %v689, 4
      %v1100 = vrot.slane %v685, 5
      %v1101 = vor.u32 %v1099, %v1100
      %v1102 = vsel %vm1055, %v1097, %v1101
      %v1103 = vrot.slane %v697, 4
      %v1104 = vrot.slane %v693, 5
      %v1105 = vor.u32 %v1103, %v1104
      %v1106 = vsel %vm1055, %v1101, %v1105
      %v1107 = vrot.slane %v705, 4
      %v1108 = vrot.slane %v701, 5
      %v1109 = vor.u32 %v1107, %v1108
      %v1110 = vsel %vm1055, %v1105, %v1109
      %v1111 = vrot.slane %v713, 4
      %v1112 = vrot.slane %v709, 5
      %v1113 = vor.u32 %v1111, %v1112
      %v1114 = vsel %vm1055, %v1109, %v1113
      %v1115 = vrot.slane %v721, 4
      %v1116 = vrot.slane %v717, 5
      %v1117 = vor.u32 %v1115, %v1116
      %v1118 = vsel %vm1055, %v1113, %v1117
      %v1119 = vrot.slane %v729, 4
      %v1120 = vrot.slane %v725, 5
      %v1121 = vor.u32 %v1119, %v1120
      %v1122 = vsel %vm1055, %v1117, %v1121
      %v1123 = vrot.slane %v737, 4
      %v1124 = vrot.slane %v733, 5
      %v1125 = vor.u32 %v1123, %v1124
      %v1126 = vsel %vm1055, %v1121, %v1125
      %v1127 = vrot.slane %v745, 4
      %v1128 = vrot.slane %v741, 5
      %v1129 = vor.u32 %v1127, %v1128
      %v1130 = vsel %vm1055, %v1125, %v1129
      %v1131 = vrot.slane %v753, 4
      %v1132 = vrot.slane %v749, 5
      %v1133 = vor.u32 %v1131, %v1132
      %v1134 = vsel %vm1055, %v1129, %v1133
      %v1135 = vrot.slane %v761, 4
      %v1136 = vrot.slane %v757, 5
      %v1137 = vor.u32 %v1135, %v1136
      %v1138 = vsel %vm1055, %v1133, %v1137
      %v1139 = vrot.slane %v769, 4
      %v1140 = vrot.slane %v765, 5
      %v1141 = vor.u32 %v1139, %v1140
      %v1142 = vsel %vm1055, %v1137, %v1141
      %v1143 = vrot.slane %v777, 4
      %v1144 = vrot.slane %v773, 5
      %v1145 = vor.u32 %v1143, %v1144
      %v1146 = vsel %vm1055, %v1141, %v1145
      %v1147 = vshrl.u32 %v536, 16
      %v1149 = vrot.slane %v1147, 4
      %v1150 = vrot.slane %v781, 5
      %v1151 = vor.u32 %v1149, %v1150
      %v1152 = vsel %vm1055, %v1145, %v1151
      %v1154 = vshrl.u32 %v537, 16
      %v1156 = vrot.slane %v1154, 4
      %v1157 = vshll.u32 %v537, 16
      %v1159 = vrot.slane %v1157, 5
      %v1160 = vor.u32 %v1156, %v1159
      %v1161 = vsel %vm1055, %v1151, %v1160
      %1162 = vrot.lane.b32.xlu0 %v1062, 12
      %v1163 = vpop.permute.xlu0 %1162
      %1164 = vrot.lane.b32.xlu0 %v1066, 12
      %v1165 = vpop.permute.xlu0 %1164
      %1166 = vrot.lane.b32.xlu0 %v1070, 12
      %v1167 = vpop.permute.xlu0 %1166
      %1168 = vrot.lane.b32.xlu0 %v1074, 12
      %v1169 = vpop.permute.xlu0 %1168
      %1170 = vrot.lane.b32.xlu0 %v1078, 12
      %v1171 = vpop.permute.xlu0 %1170
      %1172 = vrot.lane.b32.xlu0 %v1082, 12
      %v1173 = vpop.permute.xlu0 %1172
      %1174 = vrot.lane.b32.xlu0 %v1086, 12
      %v1175 = vpop.permute.xlu0 %1174
      %1176 = vrot.lane.b32.xlu0 %v1090, 12
      %v1177 = vpop.permute.xlu0 %1176
      %1178 = vrot.lane.b32.xlu0 %v1094, 12
      %v1179 = vpop.permute.xlu0 %1178
      %1180 = vrot.lane.b32.xlu0 %v1098, 12
      %v1181 = vpop.permute.xlu0 %1180
      %1182 = vrot.lane.b32.xlu0 %v1102, 12
      %v1183 = vpop.permute.xlu0 %1182
      %1184 = vrot.lane.b32.xlu0 %v1106, 12
      %v1185 = vpop.permute.xlu0 %1184
      %1186 = vrot.lane.b32.xlu0 %v1110, 12
      %v1187 = vpop.permute.xlu0 %1186
      %1188 = vrot.lane.b32.xlu0 %v1114, 12
      %v1189 = vpop.permute.xlu0 %1188
      %1190 = vrot.lane.b32.xlu0 %v1118, 12
      %v1191 = vpop.permute.xlu0 %1190
      %1192 = vrot.lane.b32.xlu0 %v1122, 12
      %v1193 = vpop.permute.xlu0 %1192
      %1194 = vrot.lane.b32.xlu0 %v1126, 12
      %v1195 = vpop.permute.xlu0 %1194
      %1196 = vrot.lane.b32.xlu0 %v1130, 12
      %v1197 = vpop.permute.xlu0 %1196
      %1198 = vrot.lane.b32.xlu0 %v1134, 12
      %v1199 = vpop.permute.xlu0 %1198
      %1200 = vrot.lane.b32.xlu0 %v1138, 12
      %v1201 = vpop.permute.xlu0 %1200
      %1202 = vrot.lane.b32.xlu0 %v1142, 12
      %v1203 = vpop.permute.xlu0 %1202
      %1204 = vrot.lane.b32.xlu0 %v1146, 12
      %v1205 = vpop.permute.xlu0 %1204
      %1206 = vrot.lane.b32.xlu0 %v1152, 12
      %v1207 = vpop.permute.xlu0 %1206
      %1208 = vrot.lane.b32.xlu0 %v1161, 12
      %v1209 = vpop.permute.xlu0 %1208
      %vm1210 = vcmask 1042432
      %v1211 = vrot.slane %v513, 5
      %v1212 = vrot.slane %v514, 5
      %v1213 = vsel %vm1210, %v1211, %v1212
      %v1214 = vrot.slane %v515, 5
      %v1215 = vsel %vm1210, %v1212, %v1214
      %v1216 = vrot.slane %v516, 5
      %v1217 = vsel %vm1210, %v1214, %v1216
      %v1218 = vrot.slane %v517, 5
      %v1219 = vsel %vm1210, %v1216, %v1218
      %v1220 = vrot.slane %v518, 5
      %v1221 = vsel %vm1210, %v1218, %v1220
      %v1222 = vrot.slane %v519, 5
      %v1223 = vsel %vm1210, %v1220, %v1222
      %v1224 = vrot.slane %v520, 5
      %v1225 = vsel %vm1210, %v1222, %v1224
      %v1226 = vrot.slane %v521, 5
      %v1227 = vsel %vm1210, %v1224, %v1226
      %v1228 = vrot.slane %v522, 5
      %v1229 = vsel %vm1210, %v1226, %v1228
      %v1230 = vrot.slane %v523, 5
      %v1231 = vsel %vm1210, %v1228, %v1230
      %v1232 = vrot.slane %v524, 5
      %v1233 = vsel %vm1210, %v1230, %v1232
      %v1234 = vrot.slane %v525, 5
      %v1235 = vsel %vm1210, %v1232, %v1234
      %v1236 = vrot.slane %v526, 5
      %v1237 = vsel %vm1210, %v1234, %v1236
      %v1238 = vrot.slane %v527, 5
      %v1239 = vsel %vm1210, %v1236, %v1238
      %v1240 = vrot.slane %v528, 5
      %v1241 = vsel %vm1210, %v1238, %v1240
      %v1242 = vrot.slane %v529, 5
      %v1243 = vsel %vm1210, %v1240, %v1242
      %v1244 = vrot.slane %v530, 5
      %v1245 = vsel %vm1210, %v1242, %v1244
      %v1246 = vrot.slane %v531, 5
      %v1247 = vsel %vm1210, %v1244, %v1246
      %v1248 = vrot.slane %v532, 5
      %v1249 = vsel %vm1210, %v1246, %v1248
      %v1250 = vrot.slane %v533, 5
      %v1251 = vsel %vm1210, %v1248, %v1250
      %v1252 = vrot.slane %v534, 5
      %v1253 = vsel %vm1210, %v1250, %v1252
      %v1254 = vrot.slane %v535, 5
      %v1255 = vsel %vm1210, %v1252, %v1254
      %v1256 = vrot.slane %v536, 5
      %v1257 = vsel %vm1210, %v1254, %v1256
      %v1258 = vrot.slane %v537, 5
      %v1259 = vsel %vm1210, %v1256, %v1258
      %1260 = vrot.lane.b32.xlu0 %v1213, 15
      %v1261 = vpop.permute.xlu0 %1260
      %1262 = vrot.lane.b32.xlu0 %v1215, 15
      %v1263 = vpop.permute.xlu0 %1262
      %1264 = vrot.lane.b32.xlu0 %v1217, 15
      %v1265 = vpop.permute.xlu0 %1264
      %1266 = vrot.lane.b32.xlu0 %v1219, 15
      %v1267 = vpop.permute.xlu0 %1266
      %1268 = vrot.lane.b32.xlu0 %v1221, 15
      %v1269 = vpop.permute.xlu0 %1268
      %1270 = vrot.lane.b32.xlu0 %v1223, 15
      %v1271 = vpop.permute.xlu0 %1270
      %1272 = vrot.lane.b32.xlu0 %v1225, 15
      %v1273 = vpop.permute.xlu0 %1272
      %1274 = vrot.lane.b32.xlu0 %v1227, 15
      %v1275 = vpop.permute.xlu0 %1274
      %1276 = vrot.lane.b32.xlu0 %v1229, 15
      %v1277 = vpop.permute.xlu0 %1276
      %1278 = vrot.lane.b32.xlu0 %v1231, 15
      %v1279 = vpop.permute.xlu0 %1278
      %1280 = vrot.lane.b32.xlu0 %v1233, 15
      %v1281 = vpop.permute.xlu0 %1280
      %1282 = vrot.lane.b32.xlu0 %v1235, 15
      %v1283 = vpop.permute.xlu0 %1282
      %1284 = vrot.lane.b32.xlu0 %v1237, 15
      %v1285 = vpop.permute.xlu0 %1284
      %1286 = vrot.lane.b32.xlu0 %v1239, 15
      %v1287 = vpop.permute.xlu0 %1286
      %1288 = vrot.lane.b32.xlu0 %v1241, 15
      %v1289 = vpop.permute.xlu0 %1288
      %1290 = vrot.lane.b32.xlu0 %v1243, 15
      %v1291 = vpop.permute.xlu0 %1290
      %1292 = vrot.lane.b32.xlu0 %v1245, 15
      %v1293 = vpop.permute.xlu0 %1292
      %1294 = vrot.lane.b32.xlu0 %v1247, 15
      %v1295 = vpop.permute.xlu0 %1294
      %1296 = vrot.lane.b32.xlu0 %v1249, 15
      %v1297 = vpop.permute.xlu0 %1296
      %1298 = vrot.lane.b32.xlu0 %v1251, 15
      %v1299 = vpop.permute.xlu0 %1298
      %1300 = vrot.lane.b32.xlu0 %v1253, 15
      %v1301 = vpop.permute.xlu0 %1300
      %1302 = vrot.lane.b32.xlu0 %v1255, 15
      %v1303 = vpop.permute.xlu0 %1302
      %1304 = vrot.lane.b32.xlu0 %v1257, 15
      %v1305 = vpop.permute.xlu0 %1304
      %1306 = vrot.lane.b32.xlu0 %v1259, 15
      %v1307 = vpop.permute.xlu0 %1306
      %1309 = vrot.lane.b32.xlu0 %v515, 18
      %v1310 = vpop.permute.xlu0 %1309
      %1311 = vrot.lane.b32.xlu0 %v516, 18
      %v1312 = vpop.permute.xlu0 %1311
      %1313 = vrot.lane.b32.xlu0 %v517, 18
      %v1314 = vpop.permute.xlu0 %1313
      %1315 = vrot.lane.b32.xlu0 %v518, 18
      %v1316 = vpop.permute.xlu0 %1315
      %1317 = vrot.lane.b32.xlu0 %v519, 18
      %v1318 = vpop.permute.xlu0 %1317
      %1319 = vrot.lane.b32.xlu0 %v520, 18
      %v1320 = vpop.permute.xlu0 %1319
      %1321 = vrot.lane.b32.xlu0 %v521, 18
      %v1322 = vpop.permute.xlu0 %1321
      %1323 = vrot.lane.b32.xlu0 %v522, 18
      %v1324 = vpop.permute.xlu0 %1323
      %1325 = vrot.lane.b32.xlu0 %v523, 18
      %v1326 = vpop.permute.xlu0 %1325
      %1327 = vrot.lane.b32.xlu0 %v524, 18
      %v1328 = vpop.permute.xlu0 %1327
      %1329 = vrot.lane.b32.xlu0 %v525, 18
      %v1330 = vpop.permute.xlu0 %1329
      %1331 = vrot.lane.b32.xlu0 %v526, 18
      %v1332 = vpop.permute.xlu0 %1331
      %1333 = vrot.lane.b32.xlu0 %v527, 18
      %v1334 = vpop.permute.xlu0 %1333
      %1335 = vrot.lane.b32.xlu0 %v528, 18
      %v1336 = vpop.permute.xlu0 %1335
      %1337 = vrot.lane.b32.xlu0 %v529, 18
      %v1338 = vpop.permute.xlu0 %1337
      %1339 = vrot.lane.b32.xlu0 %v530, 18
      %v1340 = vpop.permute.xlu0 %1339
      %1341 = vrot.lane.b32.xlu0 %v531, 18
      %v1342 = vpop.permute.xlu0 %1341
      %1343 = vrot.lane.b32.xlu0 %v532, 18
      %v1344 = vpop.permute.xlu0 %1343
      %1345 = vrot.lane.b32.xlu0 %v533, 18
      %v1346 = vpop.permute.xlu0 %1345
      %1347 = vrot.lane.b32.xlu0 %v534, 18
      %v1348 = vpop.permute.xlu0 %1347
      %1349 = vrot.lane.b32.xlu0 %v535, 18
      %v1350 = vpop.permute.xlu0 %1349
      %1351 = vrot.lane.b32.xlu0 %v536, 18
      %v1352 = vpop.permute.xlu0 %1351
      %1353 = vrot.lane.b32.xlu0 %v537, 18
      %v1354 = vpop.permute.xlu0 %1353
      %1355 = vrot.lane.b32.xlu0 %v538, 18
      %v1356 = vpop.permute.xlu0 %1355
      %v1357 = vor.u32 %v1147, %v783
      %v1358 = vrot.slane %v1157, 1
      %v1359 = vsel %vm588, %v1357, %v1358
      %v1360 = vor.u32 %v1154, %v1358
      %v1362 = vshll.u32 %v538, 16
      %v1364 = vrot.slane %v1362, 1
      %v1365 = vsel %vm588, %v1360, %v1364
      %v1366 = vshrl.u32 %v538, 16
      %v1368 = vor.u32 %v1366, %v1364
      %v1370 = vshll.u32 %v539, 16
      %v1372 = vrot.slane %v1370, 1
      %v1373 = vsel %vm588, %v1368, %v1372
      %1374 = vrot.lane.b32.xlu0 %v624, 21
      %v1375 = vpop.permute.xlu0 %1374
      %1376 = vrot.lane.b32.xlu0 %v632, 21
      %v1377 = vpop.permute.xlu0 %1376
      %1378 = vrot.lane.b32.xlu0 %v640, 21
      %v1379 = vpop.permute.xlu0 %1378
      %1380 = vrot.lane.b32.xlu0 %v648, 21
      %v1381 = vpop.permute.xlu0 %1380
      %1382 = vrot.lane.b32.xlu0 %v656, 21
      %v1383 = vpop.permute.xlu0 %1382
      %1384 = vrot.lane.b32.xlu0 %v664, 21
      %v1385 = vpop.permute.xlu0 %1384
      %1386 = vrot.lane.b32.xlu0 %v672, 21
      %v1387 = vpop.permute.xlu0 %1386
      %1388 = vrot.lane.b32.xlu0 %v680, 21
      %v1389 = vpop.permute.xlu0 %1388
      %1390 = vrot.lane.b32.xlu0 %v688, 21
      %v1391 = vpop.permute.xlu0 %1390
      %1392 = vrot.lane.b32.xlu0 %v696, 21
      %v1393 = vpop.permute.xlu0 %1392
      %1394 = vrot.lane.b32.xlu0 %v704, 21
      %v1395 = vpop.permute.xlu0 %1394
      %1396 = vrot.lane.b32.xlu0 %v712, 21
      %v1397 = vpop.permute.xlu0 %1396
      %1398 = vrot.lane.b32.xlu0 %v720, 21
      %v1399 = vpop.permute.xlu0 %1398
      %1400 = vrot.lane.b32.xlu0 %v728, 21
      %v1401 = vpop.permute.xlu0 %1400
      %1402 = vrot.lane.b32.xlu0 %v736, 21
      %v1403 = vpop.permute.xlu0 %1402
      %1404 = vrot.lane.b32.xlu0 %v744, 21
      %v1405 = vpop.permute.xlu0 %1404
      %1406 = vrot.lane.b32.xlu0 %v752, 21
      %v1407 = vpop.permute.xlu0 %1406
      %1408 = vrot.lane.b32.xlu0 %v760, 21
      %v1409 = vpop.permute.xlu0 %1408
      %1410 = vrot.lane.b32.xlu0 %v768, 21
      %v1411 = vpop.permute.xlu0 %1410
      %1412 = vrot.lane.b32.xlu0 %v776, 21
      %v1413 = vpop.permute.xlu0 %1412
      %1414 = vrot.lane.b32.xlu0 %v784, 21
      %v1415 = vpop.permute.xlu0 %1414
      %1416 = vrot.lane.b32.xlu0 %v1359, 21
      %v1417 = vpop.permute.xlu0 %1416
      %1418 = vrot.lane.b32.xlu0 %v1365, 21
      %v1419 = vpop.permute.xlu0 %1418
      %1420 = vrot.lane.b32.xlu0 %v1373, 21
      %v1421 = vpop.permute.xlu0 %1420
      %v1423 = vrot.slane %v537, 1
      %v1424 = vsel %vm858, %v906, %v1423
      %v1425 = vrot.slane %v538, 1
      %v1426 = vsel %vm858, %v1423, %v1425
      %v1427 = vrot.slane %v539, 1
      %v1428 = vsel %vm858, %v1425, %v1427
      %1429 = vrot.lane.b32.xlu0 %v867, 24
      %v1430 = vpop.permute.xlu0 %1429
      %1431 = vrot.lane.b32.xlu0 %v869, 24
      %v1432 = vpop.permute.xlu0 %1431
      %1433 = vrot.lane.b32.xlu0 %v871, 24
      %v1434 = vpop.permute.xlu0 %1433
      %1435 = vrot.lane.b32.xlu0 %v873, 24
      %v1436 = vpop.permute.xlu0 %1435
      %1437 = vrot.lane.b32.xlu0 %v875, 24
      %v1438 = vpop.permute.xlu0 %1437
      %1439 = vrot.lane.b32.xlu0 %v877, 24
      %v1440 = vpop.permute.xlu0 %1439
      %1441 = vrot.lane.b32.xlu0 %v879, 24
      %v1442 = vpop.permute.xlu0 %1441
      %1443 = vrot.lane.b32.xlu0 %v881, 24
      %v1444 = vpop.permute.xlu0 %1443
      %1445 = vrot.lane.b32.xlu0 %v883, 24
      %v1446 = vpop.permute.xlu0 %1445
      %1447 = vrot.lane.b32.xlu0 %v885, 24
      %v1448 = vpop.permute.xlu0 %1447
      %1449 = vrot.lane.b32.xlu0 %v887, 24
      %v1450 = vpop.permute.xlu0 %1449
      %1451 = vrot.lane.b32.xlu0 %v889, 24
      %v1452 = vpop.permute.xlu0 %1451
      %1453 = vrot.lane.b32.xlu0 %v891, 24
      %v1454 = vpop.permute.xlu0 %1453
      %1455 = vrot.lane.b32.xlu0 %v893, 24
      %v1456 = vpop.permute.xlu0 %1455
      %1457 = vrot.lane.b32.xlu0 %v895, 24
      %v1458 = vpop.permute.xlu0 %1457
      %1459 = vrot.lane.b32.xlu0 %v897, 24
      %v1460 = vpop.permute.xlu0 %1459
      %1461 = vrot.lane.b32.xlu0 %v899, 24
      %v1462 = vpop.permute.xlu0 %1461
      %1463 = vrot.lane.b32.xlu0 %v901, 24
      %v1464 = vpop.permute.xlu0 %1463
      %1465 = vrot.lane.b32.xlu0 %v903, 24
      %v1466 = vpop.permute.xlu0 %1465
      %1467 = vrot.lane.b32.xlu0 %v905, 24
      %v1468 = vpop.permute.xlu0 %1467
      %1469 = vrot.lane.b32.xlu0 %v907, 24
      %v1470 = vpop.permute.xlu0 %1469
      %1471 = vrot.lane.b32.xlu0 %v1424, 24
      %v1472 = vpop.permute.xlu0 %1471
      %1473 = vrot.lane.b32.xlu0 %v1426, 24
      %v1474 = vpop.permute.xlu0 %1473
      %1475 = vrot.lane.b32.xlu0 %v1428, 24
      %v1476 = vpop.permute.xlu0 %1475
      %vm1477 = vcmask 23552
      %v1479 = vsel %vm1477, %v512, %v786
      %v1481 = vsel %vm1477, %v513, %v788
      %v1483 = vsel %vm1477, %v514, %v790
      %v1485 = vsel %vm1477, %v515, %v792
      %v1487 = vsel %vm1477, %v516, %v794
      %v1489 = vsel %vm1477, %v517, %v796
      %v1491 = vsel %vm1477, %v518, %v798
      %v1493 = vsel %vm1477, %v519, %v800
      %v1495 = vsel %vm1477, %v520, %v802
      %v1497 = vsel %vm1477, %v521, %v804
      %v1499 = vsel %vm1477, %v522, %v806
      %v1501 = vsel %vm1477, %v523, %v808
      %v1503 = vsel %vm1477, %v524, %v810
      %v1505 = vsel %vm1477, %v525, %v812
      %v1507 = vsel %vm1477, %v526, %v814
      %v1509 = vsel %vm1477, %v527, %v816
      %v1511 = vsel %vm1477, %v528, %v818
      %v1513 = vsel %vm1477, %v529, %v820
      %v1515 = vsel %vm1477, %v530, %v822
      %v1517 = vsel %vm1477, %v531, %v824
      %v1519 = vsel %vm1477, %v532, %v826
      %v1521 = vsel %vm1477, %v533, %v828
      %v1523 = vsel %vm1477, %v534, %v830
      %v1525 = vsel %vm1477, %v535, %v832
      %vm1526 = vcmask 48128
      %v1528 = vsel %vm1526, %v1479, %v909
      %v1530 = vsel %vm1526, %v1481, %v911
      %v1532 = vsel %vm1526, %v1483, %v913
      %v1534 = vsel %vm1526, %v1485, %v915
      %v1536 = vsel %vm1526, %v1487, %v917
      %v1538 = vsel %vm1526, %v1489, %v919
      %v1540 = vsel %vm1526, %v1491, %v921
      %v1542 = vsel %vm1526, %v1493, %v923
      %v1544 = vsel %vm1526, %v1495, %v925
      %v1546 = vsel %vm1526, %v1497, %v927
      %v1548 = vsel %vm1526, %v1499, %v929
      %v1550 = vsel %vm1526, %v1501, %v931
      %v1552 = vsel %vm1526, %v1503, %v933
      %v1554 = vsel %vm1526, %v1505, %v935
      %v1556 = vsel %vm1526, %v1507, %v937
      %v1558 = vsel %vm1526, %v1509, %v939
      %v1560 = vsel %vm1526, %v1511, %v941
      %v1562 = vsel %vm1526, %v1513, %v943
      %v1564 = vsel %vm1526, %v1515, %v945
      %v1566 = vsel %vm1526, %v1517, %v947
      %v1568 = vsel %vm1526, %v1519, %v949
      %v1570 = vsel %vm1526, %v1521, %v951
      %v1572 = vsel %vm1526, %v1523, %v953
      %v1574 = vsel %vm1526, %v1525, %v955
      %vm1575 = vcmask 72704
      %v1577 = vsel %vm1575, %v1528, %v1008
      %v1579 = vsel %vm1575, %v1530, %v1010
      %v1581 = vsel %vm1575, %v1532, %v1012
      %v1583 = vsel %vm1575, %v1534, %v1014
      %v1585 = vsel %vm1575, %v1536, %v1016
      %v1587 = vsel %vm1575, %v1538, %v1018
      %v1589 = vsel %vm1575, %v1540, %v1020
      %v1591 = vsel %vm1575, %v1542, %v1022
      %v1593 = vsel %vm1575, %v1544, %v1024
      %v1595 = vsel %vm1575, %v1546, %v1026
      %v1597 = vsel %vm1575, %v1548, %v1028
      %v1599 = vsel %vm1575, %v1550, %v1030
      %v1601 = vsel %vm1575, %v1552, %v1032
      %v1603 = vsel %vm1575, %v1554, %v1034
      %v1605 = vsel %vm1575, %v1556, %v1036
      %v1607 = vsel %vm1575, %v1558, %v1038
      %v1609 = vsel %vm1575, %v1560, %v1040
      %v1611 = vsel %vm1575, %v1562, %v1042
      %v1613 = vsel %vm1575, %v1564, %v1044
      %v1615 = vsel %vm1575, %v1566, %v1046
      %v1617 = vsel %vm1575, %v1568, %v1048
      %v1619 = vsel %vm1575, %v1570, %v1050
      %v1621 = vsel %vm1575, %v1572, %v1052
      %v1623 = vsel %vm1575, %v1574, %v1054
      %vm1624 = vcmask 97280
      %v1626 = vsel %vm1624, %v1577, %v1163
      %v1628 = vsel %vm1624, %v1579, %v1165
      %v1630 = vsel %vm1624, %v1581, %v1167
      %v1632 = vsel %vm1624, %v1583, %v1169
      %v1634 = vsel %vm1624, %v1585, %v1171
      %v1636 = vsel %vm1624, %v1587, %v1173
      %v1638 = vsel %vm1624, %v1589, %v1175
      %v1640 = vsel %vm1624, %v1591, %v1177
      %v1642 = vsel %vm1624, %v1593, %v1179
      %v1644 = vsel %vm1624, %v1595, %v1181
      %v1646 = vsel %vm1624, %v1597, %v1183
      %v1648 = vsel %vm1624, %v1599, %v1185
      %v1650 = vsel %vm1624, %v1601, %v1187
      %v1652 = vsel %vm1624, %v1603, %v1189
      %v1654 = vsel %vm1624, %v1605, %v1191
      %v1656 = vsel %vm1624, %v1607, %v1193
      %v1658 = vsel %vm1624, %v1609, %v1195
      %v1660 = vsel %vm1624, %v1611, %v1197
      %v1662 = vsel %vm1624, %v1613, %v1199
      %v1664 = vsel %vm1624, %v1615, %v1201
      %v1666 = vsel %vm1624, %v1617, %v1203
      %v1668 = vsel %vm1624, %v1619, %v1205
      %v1670 = vsel %vm1624, %v1621, %v1207
      %v1672 = vsel %vm1624, %v1623, %v1209
      %vm1673 = vcmask 121856
      %v1675 = vsel %vm1673, %v1626, %v1261
      %v1677 = vsel %vm1673, %v1628, %v1263
      %v1679 = vsel %vm1673, %v1630, %v1265
      %v1681 = vsel %vm1673, %v1632, %v1267
      %v1683 = vsel %vm1673, %v1634, %v1269
      %v1685 = vsel %vm1673, %v1636, %v1271
      %v1687 = vsel %vm1673, %v1638, %v1273
      %v1689 = vsel %vm1673, %v1640, %v1275
      %v1691 = vsel %vm1673, %v1642, %v1277
      %v1693 = vsel %vm1673, %v1644, %v1279
      %v1695 = vsel %vm1673, %v1646, %v1281
      %v1697 = vsel %vm1673, %v1648, %v1283
      %v1699 = vsel %vm1673, %v1650, %v1285
      %v1701 = vsel %vm1673, %v1652, %v1287
      %v1703 = vsel %vm1673, %v1654, %v1289
      %v1705 = vsel %vm1673, %v1656, %v1291
      %v1707 = vsel %vm1673, %v1658, %v1293
      %v1709 = vsel %vm1673, %v1660, %v1295
      %v1711 = vsel %vm1673, %v1662, %v1297
      %v1713 = vsel %vm1673, %v1664, %v1299
      %v1715 = vsel %vm1673, %v1666, %v1301
      %v1717 = vsel %vm1673, %v1668, %v1303
      %v1719 = vsel %vm1673, %v1670, %v1305
      %v1721 = vsel %vm1673, %v1672, %v1307
      %vm1722 = vcmask 146432
      %v1724 = vsel %vm1722, %v1675, %v1310
      %v1726 = vsel %vm1722, %v1677, %v1312
      %v1728 = vsel %vm1722, %v1679, %v1314
      %v1730 = vsel %vm1722, %v1681, %v1316
      %v1732 = vsel %vm1722, %v1683, %v1318
      %v1734 = vsel %vm1722, %v1685, %v1320
      %v1736 = vsel %vm1722, %v1687, %v1322
      %v1738 = vsel %vm1722, %v1689, %v1324
      %v1740 = vsel %vm1722, %v1691, %v1326
      %v1742 = vsel %vm1722, %v1693, %v1328
      %v1744 = vsel %vm1722, %v1695, %v1330
      %v1746 = vsel %vm1722, %v1697, %v1332
      %v1748 = vsel %vm1722, %v1699, %v1334
      %v1750 = vsel %vm1722, %v1701, %v1336
      %v1752 = vsel %vm1722, %v1703, %v1338
      %v1754 = vsel %vm1722, %v1705, %v1340
      %v1756 = vsel %vm1722, %v1707, %v1342
      %v1758 = vsel %vm1722, %v1709, %v1344
      %v1760 = vsel %vm1722, %v1711, %v1346
      %v1762 = vsel %vm1722, %v1713, %v1348
      %v1764 = vsel %vm1722, %v1715, %v1350
      %v1766 = vsel %vm1722, %v1717, %v1352
      %v1768 = vsel %vm1722, %v1719, %v1354
      %v1770 = vsel %vm1722, %v1721, %v1356
      %vm1771 = vcmask 171008
      %v1773 = vsel %vm1771, %v1724, %v1375
      %v1775 = vsel %vm1771, %v1726, %v1377
      %v1777 = vsel %vm1771, %v1728, %v1379
      %v1779 = vsel %vm1771, %v1730, %v1381
      %v1781 = vsel %vm1771, %v1732, %v1383
      %v1783 = vsel %vm1771, %v1734, %v1385
      %v1785 = vsel %vm1771, %v1736, %v1387
      %v1787 = vsel %vm1771, %v1738, %v1389
      %v1789 = vsel %vm1771, %v1740, %v1391
      %v1791 = vsel %vm1771, %v1742, %v1393
      %v1793 = vsel %vm1771, %v1744, %v1395
      %v1795 = vsel %vm1771, %v1746, %v1397
      %v1797 = vsel %vm1771, %v1748, %v1399
      %v1799 = vsel %vm1771, %v1750, %v1401
      %v1801 = vsel %vm1771, %v1752, %v1403
      %v1803 = vsel %vm1771, %v1754, %v1405
      %v1805 = vsel %vm1771, %v1756, %v1407
      %v1807 = vsel %vm1771, %v1758, %v1409
      %v1809 = vsel %vm1771, %v1760, %v1411
      %v1811 = vsel %vm1771, %v1762, %v1413
      %v1813 = vsel %vm1771, %v1764, %v1415
      %v1815 = vsel %vm1771, %v1766, %v1417
      %v1817 = vsel %vm1771, %v1768, %v1419
      %v1819 = vsel %vm1771, %v1770, %v1421
      %vm1820 = vcmask 195584
      %v1822 = vsel %vm1820, %v1773, %v1430
      %v1824 = vsel %vm1820, %v1775, %v1432
      %v1826 = vsel %vm1820, %v1777, %v1434
      %v1828 = vsel %vm1820, %v1779, %v1436
      %v1830 = vsel %vm1820, %v1781, %v1438
      %v1832 = vsel %vm1820, %v1783, %v1440
      %v1834 = vsel %vm1820, %v1785, %v1442
      %v1836 = vsel %vm1820, %v1787, %v1444
      %v1838 = vsel %vm1820, %v1789, %v1446
      %v1840 = vsel %vm1820, %v1791, %v1448
      %v1842 = vsel %vm1820, %v1793, %v1450
      %v1844 = vsel %vm1820, %v1795, %v1452
      %v1846 = vsel %vm1820, %v1797, %v1454
      %v1848 = vsel %vm1820, %v1799, %v1456
      %v1850 = vsel %vm1820, %v1801, %v1458
      %v1852 = vsel %vm1820, %v1803, %v1460
      %v1854 = vsel %vm1820, %v1805, %v1462
      %v1856 = vsel %vm1820, %v1807, %v1464
      %v1858 = vsel %vm1820, %v1809, %v1466
      %v1860 = vsel %vm1820, %v1811, %v1468
      %v1862 = vsel %vm1820, %v1813, %v1470
      %v1864 = vsel %vm1820, %v1815, %v1472
      %v1866 = vsel %vm1820, %v1817, %v1474
      %v1868 = vsel %vm1820, %v1819, %v1476
      %v1869 = vld [vmem:[%s2] sm:$0xf]
      %v1870 = vld [vmem:[%s2 + $0x4] sm:$0xf]
      %v1871 = vld [vmem:[%s2 + $0x8] sm:$0xf]
      %v1872 = vld [vmem:[%s2 + $0xc] sm:$0x3]
      %v1873 = vld [vmem:[%s3] sm:$0x1]
      %v1875 = vlaneseq
      %v1876 = vshrl.u32 %v1875, 7
      %v1877 = vsub.s32 0, %v1876
      %v1878 = vrot.slane %v1873, %v1877
      %v1884 = vunpack.c.l.b16 %v1869
      %v1885 = vunpack.c.l.b16 %v1870
      %v1886 = vunpack.c.l.b16 %v1871
      %v1887 = vunpack.c.l.b16 %v1872
      %v1888 = vpack.c.b16 %v1885, %v1884
      %v1889 = vpack.c.b16 %v1887, %v1886
      %vm1891 = vcmask 220160
      %v1892 = vsel %vm1891, %v1822, 0
      %v1894 = vsel %vm1891, %v1824, 0
      %v1896 = vsel %vm1891, %v1826, 0
      %v1898 = vsel %vm1891, %v1828, 0
      %v1900 = vsel %vm1891, %v1830, 0
      %v1902 = vsel %vm1891, %v1832, 0
      %v1904 = vsel %vm1891, %v1834, 0
      %v1906 = vsel %vm1891, %v1836, 0
      %v1908 = vsel %vm1891, %v1838, 0
      %v1910 = vsel %vm1891, %v1840, 0
      %v1912 = vsel %vm1891, %v1842, 0
      %v1914 = vsel %vm1891, %v1844, 0
      %v1916 = vsel %vm1891, %v1846, 0
      %v1918 = vsel %vm1891, %v1848, 0
      %v1920 = vsel %vm1891, %v1850, 0
      %v1922 = vsel %vm1891, %v1852, 0
      %v1924 = vsel %vm1891, %v1854, 0
      %v1926 = vsel %vm1891, %v1856, 0
      %v1928 = vsel %vm1891, %v1858, 0
      %v1930 = vsel %vm1891, %v1860, 0
      %v1932 = vsel %vm1891, %v1862, 0
      %v1934 = vsel %vm1891, %v1864, 0
      %v1936 = vsel %vm1891, %v1866, 0
      %v1938 = vsel %vm1891, %v1868, 0
      %vm1940 = vcmask 1044480
      %vm1941 = vcmask 1045504
      %v1942 = vsel %vm1940, 4294967295, 65535
      %v1943 = vsel %vm1941, %v1942, 0
      %v1945 = vand.u32 %v1889, %v1943
      %1947 = vmatprep.subr.bf16.mxu0 0
      %1948 = vmatpush1.bf16.msra.mxu0 %v1888
      %1949 = vmatprep.subr.bf16.mxu0 0
      %1950 = vmatpush1.bf16.msra.mxu0 %v1945
      %1951 = vmatprep.subr.bf16.mxu0 0
      %1952 = vmatpush1.bf16.msra.mxu0 0
      %1953 = vmatprep.subr.bf16.mxu0 0
      %1954 = vmatpush1.bf16.msra.mxu0 0
      %1955 = vmatprep.subr.bf16.mxu0 0
      %1956 = vmatpush1.bf16.msra.mxu0 0
      %1957 = vmatprep.subr.bf16.mxu0 0
      %1958 = vmatpush1.bf16.msra.mxu0 0
      %1959 = vmatprep.subr.bf16.mxu0 0
      %1960 = vmatpush1.bf16.msra.mxu0 0
      %1961 = vmatprep.subr.bf16.mxu0 0
      %1962 = vmatpush1.bf16.msra.mxu0 0
      %1963 = vmatprep.subr.bf16.mxu0 0
      %1964 = vmatpush1.bf16.msra.mxu0 0
      %1965 = vmatprep.subr.bf16.mxu0 0
      %1966 = vmatpush1.bf16.msra.mxu0 0
      %1967 = vmatprep.subr.bf16.mxu0 0
      %1968 = vmatpush1.bf16.msra.mxu0 0
      %1969 = vmatprep.subr.bf16.mxu0 0
      %1970 = vmatpush1.bf16.msra.mxu0 0
      %1971 = vmatprep.subr.bf16.mxu0 0
      %1972 = vmatpush1.bf16.msra.mxu0 0
      %1973 = vmatprep.subr.bf16.mxu0 0
      %1974 = vmatpush1.bf16.msra.mxu0 0
      %1975 = vmatprep.subr.bf16.mxu0 0
      %1976 = vmatpush1.bf16.msra.mxu0 0
      %1977 = vmatprep.subr.bf16.mxu0 0
      %1978 = vmatpush1.bf16.msra.mxu0 0
      %1979 = vmatprep.mubr.bf16.mxu0 0
      %1980 = vmatmul.mubr.bf16.gmra.mrb[0].mxu0 %v1892
      %v1981 = vpop.f32.mrb[0].mxu0
      %v1982 = vadd.f32 %v1878, %v1981
      %v1983 = vpop.f32.mrb[0].mxu0
      %v1984 = vpop.f32.mrb[0].mxu0
      %v1985 = vadd.f32 %v1878, %v1984
      %v1986 = vpop.f32.mrb[0].mxu0
      %1987 = vmatprep.mubr.bf16.mxu0 0
      %1988 = vmatmul.mubr.bf16.gmra.mrb[0].mxu0 %v1894
      %v1989 = vpop.f32.mrb[0].mxu0
      %v1990 = vadd.f32 %v1878, %v1989
      %v1991 = vpop.f32.mrb[0].mxu0
      %v1992 = vpop.f32.mrb[0].mxu0
      %v1993 = vadd.f32 %v1878, %v1992
      %v1994 = vpop.f32.mrb[0].mxu0
      %1995 = vmatprep.mubr.bf16.mxu0 0
      %1996 = vmatmul.mubr.bf16.gmra.mrb[0].mxu0 %v1896
      %v1997 = vpop.f32.mrb[0].mxu0
      %v1998 = vadd.f32 %v1878, %v1997
      %v1999 = vpop.f32.mrb[0].mxu0
      %v2000 = vpop.f32.mrb[0].mxu0
      %v2001 = vadd.f32 %v1878, %v2000
      %v2002 = vpop.f32.mrb[0].mxu0
      %2003 = vmatprep.mubr.bf16.mxu0 0
      %2004 = vmatmul.mubr.bf16.gmra.mrb[0].mxu0 %v1898
      %v2005 = vpop.f32.mrb[0].mxu0
      %v2006 = vadd.f32 %v1878, %v2005
      %v2007 = vpop.f32.mrb[0].mxu0
      %v2008 = vpop.f32.mrb[0].mxu0
      %v2009 = vadd.f32 %v1878, %v2008
      %v2010 = vpop.f32.mrb[0].mxu0
      %2011 = vmatprep.mubr.bf16.mxu0 0
      %2012 = vmatmul.mubr.bf16.gmra.mrb[0].mxu0 %v1900
      %v2013 = vpop.f32.mrb[0].mxu0
      %v2014 = vadd.f32 %v1878, %v2013
      %v2015 = vpop.f32.mrb[0].mxu0
      %v2016 = vpop.f32.mrb[0].mxu0
      %v2017 = vadd.f32 %v1878, %v2016
      %v2018 = vpop.f32.mrb[0].mxu0
      %2019 = vmatprep.mubr.bf16.mxu0 0
      %2020 = vmatmul.mubr.bf16.gmra.mrb[0].mxu0 %v1902
      %v2021 = vpop.f32.mrb[0].mxu0
      %v2022 = vadd.f32 %v1878, %v2021
      %v2023 = vpop.f32.mrb[0].mxu0
      %v2024 = vpop.f32.mrb[0].mxu0
      %v2025 = vadd.f32 %v1878, %v2024
      %v2026 = vpop.f32.mrb[0].mxu0
      %2027 = vmatprep.mubr.bf16.mxu0 0
      %2028 = vmatmul.mubr.bf16.gmra.mrb[0].mxu0 %v1904
      %v2029 = vpop.f32.mrb[0].mxu0
      %v2030 = vadd.f32 %v1878, %v2029
      %v2031 = vpop.f32.mrb[0].mxu0
      %v2032 = vpop.f32.mrb[0].mxu0
      %v2033 = vadd.f32 %v1878, %v2032
      %v2034 = vpop.f32.mrb[0].mxu0
      %2035 = vmatprep.mubr.bf16.mxu0 0
      %2036 = vmatmul.mubr.bf16.gmra.mrb[0].mxu0 %v1906
      %v2037 = vpop.f32.mrb[0].mxu0
      %v2038 = vadd.f32 %v1878, %v2037
      %v2039 = vpop.f32.mrb[0].mxu0
      %v2040 = vpop.f32.mrb[0].mxu0
      %v2041 = vadd.f32 %v1878, %v2040
      %v2042 = vpop.f32.mrb[0].mxu0
      %2043 = vmatprep.mubr.bf16.mxu0 0
      %2044 = vmatmul.mubr.bf16.gmra.mrb[0].mxu0 %v1908
      %v2045 = vpop.f32.mrb[0].mxu0
      %v2046 = vadd.f32 %v1878, %v2045
      %v2047 = vpop.f32.mrb[0].mxu0
      %v2048 = vpop.f32.mrb[0].mxu0
      %v2049 = vadd.f32 %v1878, %v2048
      %v2050 = vpop.f32.mrb[0].mxu0
      %2051 = vmatprep.mubr.bf16.mxu0 0
      %2052 = vmatmul.mubr.bf16.gmra.mrb[0].mxu0 %v1910
      %v2053 = vpop.f32.mrb[0].mxu0
      %v2054 = vadd.f32 %v1878, %v2053
      %v2055 = vpop.f32.mrb[0].mxu0
      %v2056 = vpop.f32.mrb[0].mxu0
      %v2057 = vadd.f32 %v1878, %v2056
      %v2058 = vpop.f32.mrb[0].mxu0
      %2059 = vmatprep.mubr.bf16.mxu0 0
      %2060 = vmatmul.mubr.bf16.gmra.mrb[0].mxu0 %v1912
      %v2061 = vpop.f32.mrb[0].mxu0
      %v2062 = vadd.f32 %v1878, %v2061
      %v2063 = vpop.f32.mrb[0].mxu0
      %v2064 = vpop.f32.mrb[0].mxu0
      %v2065 = vadd.f32 %v1878, %v2064
      %v2066 = vpop.f32.mrb[0].mxu0
      %2067 = vmatprep.mubr.bf16.mxu0 0
      %2068 = vmatmul.mubr.bf16.gmra.mrb[0].mxu0 %v1914
      %v2069 = vpop.f32.mrb[0].mxu0
      %v2070 = vadd.f32 %v1878, %v2069
      %v2071 = vpop.f32.mrb[0].mxu0
      %v2072 = vpop.f32.mrb[0].mxu0
      %v2073 = vadd.f32 %v1878, %v2072
      %v2074 = vpop.f32.mrb[0].mxu0
      %2075 = vmatprep.mubr.bf16.mxu0 0
      %2076 = vmatmul.mubr.bf16.gmra.mrb[0].mxu0 %v1916
      %v2077 = vpop.f32.mrb[0].mxu0
      %v2078 = vadd.f32 %v1878, %v2077
      %v2079 = vpop.f32.mrb[0].mxu0
      %v2080 = vpop.f32.mrb[0].mxu0
      %v2081 = vadd.f32 %v1878, %v2080
      %v2082 = vpop.f32.mrb[0].mxu0
      %2083 = vmatprep.mubr.bf16.mxu0 0
      %2084 = vmatmul.mubr.bf16.gmra.mrb[0].mxu0 %v1918
      %v2085 = vpop.f32.mrb[0].mxu0
      %v2086 = vadd.f32 %v1878, %v2085
      %v2087 = vpop.f32.mrb[0].mxu0
      %v2088 = vpop.f32.mrb[0].mxu0
      %v2089 = vadd.f32 %v1878, %v2088
      %v2090 = vpop.f32.mrb[0].mxu0
      %2091 = vmatprep.mubr.bf16.mxu0 0
      %2092 = vmatmul.mubr.bf16.gmra.mrb[0].mxu0 %v1920
      %v2093 = vpop.f32.mrb[0].mxu0
      %v2094 = vadd.f32 %v1878, %v2093
      %v2095 = vpop.f32.mrb[0].mxu0
      %v2096 = vpop.f32.mrb[0].mxu0
      %v2097 = vadd.f32 %v1878, %v2096
      %v2098 = vpop.f32.mrb[0].mxu0
      %2099 = vmatprep.mubr.bf16.mxu0 0
      %2100 = vmatmul.mubr.bf16.gmra.mrb[0].mxu0 %v1922
      %v2101 = vpop.f32.mrb[0].mxu0
      %v2102 = vadd.f32 %v1878, %v2101
      %v2103 = vpop.f32.mrb[0].mxu0
      %v2104 = vpop.f32.mrb[0].mxu0
      %v2105 = vadd.f32 %v1878, %v2104
      %v2106 = vpop.f32.mrb[0].mxu0
      %2107 = vmatprep.mubr.bf16.mxu0 0
      %2108 = vmatmul.mubr.bf16.gmra.mrb[0].mxu0 %v1924
      %v2109 = vpop.f32.mrb[0].mxu0
      %v2110 = vadd.f32 %v1878, %v2109
      %v2111 = vpop.f32.mrb[0].mxu0
      %v2112 = vpop.f32.mrb[0].mxu0
      %v2113 = vadd.f32 %v1878, %v2112
      %v2114 = vpop.f32.mrb[0].mxu0
      %2115 = vmatprep.mubr.bf16.mxu0 0
      %2116 = vmatmul.mubr.bf16.gmra.mrb[0].mxu0 %v1926
      %v2117 = vpop.f32.mrb[0].mxu0
      %v2118 = vadd.f32 %v1878, %v2117
      %v2119 = vpop.f32.mrb[0].mxu0
      %v2120 = vpop.f32.mrb[0].mxu0
      %v2121 = vadd.f32 %v1878, %v2120
      %v2122 = vpop.f32.mrb[0].mxu0
      %2123 = vmatprep.mubr.bf16.mxu0 0
      %2124 = vmatmul.mubr.bf16.gmra.mrb[0].mxu0 %v1928
      %v2125 = vpop.f32.mrb[0].mxu0
      %v2126 = vadd.f32 %v1878, %v2125
      %v2127 = vpop.f32.mrb[0].mxu0
      %v2128 = vpop.f32.mrb[0].mxu0
      %v2129 = vadd.f32 %v1878, %v2128
      %v2130 = vpop.f32.mrb[0].mxu0
      %2131 = vmatprep.mubr.bf16.mxu0 0
      %2132 = vmatmul.mubr.bf16.gmra.mrb[0].mxu0 %v1930
      %v2133 = vpop.f32.mrb[0].mxu0
      %v2134 = vadd.f32 %v1878, %v2133
      %v2135 = vpop.f32.mrb[0].mxu0
      %v2136 = vpop.f32.mrb[0].mxu0
      %v2137 = vadd.f32 %v1878, %v2136
      %v2138 = vpop.f32.mrb[0].mxu0
      %2139 = vmatprep.mubr.bf16.mxu0 0
      %2140 = vmatmul.mubr.bf16.gmra.mrb[0].mxu0 %v1932
      %v2141 = vpop.f32.mrb[0].mxu0
      %v2142 = vadd.f32 %v1878, %v2141
      %v2143 = vpop.f32.mrb[0].mxu0
      %v2144 = vpop.f32.mrb[0].mxu0
      %v2145 = vadd.f32 %v1878, %v2144
      %v2146 = vpop.f32.mrb[0].mxu0
      %2147 = vmatprep.mubr.bf16.mxu0 0
      %2148 = vmatmul.mubr.bf16.gmra.mrb[0].mxu0 %v1934
      %v2149 = vpop.f32.mrb[0].mxu0
      %v2150 = vadd.f32 %v1878, %v2149
      %v2151 = vpop.f32.mrb[0].mxu0
      %v2152 = vpop.f32.mrb[0].mxu0
      %v2153 = vadd.f32 %v1878, %v2152
      %v2154 = vpop.f32.mrb[0].mxu0
      %2155 = vmatprep.mubr.bf16.mxu0 0
      %2156 = vmatmul.mubr.bf16.gmra.mrb[0].mxu0 %v1936
      %v2157 = vpop.f32.mrb[0].mxu0
      %v2158 = vadd.f32 %v1878, %v2157
      %v2159 = vpop.f32.mrb[0].mxu0
      %v2160 = vpop.f32.mrb[0].mxu0
      %v2161 = vadd.f32 %v1878, %v2160
      %v2162 = vpop.f32.mrb[0].mxu0
      %2163 = vmatprep.mubr.bf16.mxu0 0
      %2164 = vmatmul.mubr.bf16.gmra.mrb[0].mxu0 %v1938
      %v2165 = vpop.f32.mrb[0].mxu0
      %v2166 = vadd.f32 %v1878, %v2165
      %v2167 = vpop.f32.mrb[0].mxu0
      %v2168 = vpop.f32.mrb[0].mxu0
      %v2169 = vadd.f32 %v1878, %v2168
      %v2170 = vpop.f32.mrb[0].mxu0
      %2171 = vdwg.mxu0
      %vm2172 = vcmp.ge.f32.partialorder %v1982, 0.0
      %vm2173 = vcmp.ge.f32.partialorder %v1985, 0.0
      %vm2174 = vcmp.ge.f32.partialorder %v1990, 0.0
      %vm2175 = vcmp.ge.f32.partialorder %v1993, 0.0
      %vm2176 = vcmp.ge.f32.partialorder %v1998, 0.0
      %vm2177 = vcmp.ge.f32.partialorder %v2001, 0.0
      %vm2178 = vcmp.ge.f32.partialorder %v2006, 0.0
      %vm2179 = vcmp.ge.f32.partialorder %v2009, 0.0
      %vm2180 = vcmp.ge.f32.partialorder %v2014, 0.0
      %vm2181 = vcmp.ge.f32.partialorder %v2017, 0.0
      %vm2182 = vcmp.ge.f32.partialorder %v2022, 0.0
      %vm2183 = vcmp.ge.f32.partialorder %v2025, 0.0
      %vm2184 = vcmp.ge.f32.partialorder %v2030, 0.0
      %vm2185 = vcmp.ge.f32.partialorder %v2033, 0.0
      %vm2186 = vcmp.ge.f32.partialorder %v2038, 0.0
      %vm2187 = vcmp.ge.f32.partialorder %v2041, 0.0
      %vm2188 = vcmp.ge.f32.partialorder %v2046, 0.0
      %vm2189 = vcmp.ge.f32.partialorder %v2049, 0.0
      %vm2190 = vcmp.ge.f32.partialorder %v2054, 0.0
      %vm2191 = vcmp.ge.f32.partialorder %v2057, 0.0
      %vm2192 = vcmp.ge.f32.partialorder %v2062, 0.0
      %vm2193 = vcmp.ge.f32.partialorder %v2065, 0.0
      %vm2194 = vcmp.ge.f32.partialorder %v2070, 0.0
      %vm2195 = vcmp.ge.f32.partialorder %v2073, 0.0
      %vm2196 = vcmp.ge.f32.partialorder %v2078, 0.0
      %vm2197 = vcmp.ge.f32.partialorder %v2081, 0.0
      %vm2198 = vcmp.ge.f32.partialorder %v2086, 0.0
      %vm2199 = vcmp.ge.f32.partialorder %v2089, 0.0
      %vm2200 = vcmp.ge.f32.partialorder %v2094, 0.0
      %vm2201 = vcmp.ge.f32.partialorder %v2097, 0.0
      %vm2202 = vcmp.ge.f32.partialorder %v2102, 0.0
      %vm2203 = vcmp.ge.f32.partialorder %v2105, 0.0
      %vm2204 = vcmp.ge.f32.partialorder %v2110, 0.0
      %vm2205 = vcmp.ge.f32.partialorder %v2113, 0.0
      %vm2206 = vcmp.ge.f32.partialorder %v2118, 0.0
      %vm2207 = vcmp.ge.f32.partialorder %v2121, 0.0
      %vm2208 = vcmp.ge.f32.partialorder %v2126, 0.0
      %vm2209 = vcmp.ge.f32.partialorder %v2129, 0.0
      %vm2210 = vcmp.ge.f32.partialorder %v2134, 0.0
      %vm2211 = vcmp.ge.f32.partialorder %v2137, 0.0
      %vm2212 = vcmp.ge.f32.partialorder %v2142, 0.0
      %vm2213 = vcmp.ge.f32.partialorder %v2145, 0.0
      %vm2214 = vcmp.ge.f32.partialorder %v2150, 0.0
      %vm2215 = vcmp.ge.f32.partialorder %v2153, 0.0
      %vm2216 = vcmp.ge.f32.partialorder %v2158, 0.0
      %vm2217 = vcmp.ge.f32.partialorder %v2161, 0.0
      %vm2218 = vcmp.ge.f32.partialorder %v2166, 0.0
      %vm2219 = vcmp.ge.f32.partialorder %v2169, 0.0
      %v2220 = vmul.f32 %v1982, 0.2
      %v2221 = vmul.f32 %v1985, 0.2
      %v2222 = vmul.f32 %v1990, 0.2
      %v2223 = vmul.f32 %v1993, 0.2
      %v2224 = vmul.f32 %v1998, 0.2
      %v2225 = vmul.f32 %v2001, 0.2
      %v2226 = vmul.f32 %v2006, 0.2
      %v2227 = vmul.f32 %v2009, 0.2
      %v2228 = vmul.f32 %v2014, 0.2
      %v2229 = vmul.f32 %v2017, 0.2
      %v2230 = vmul.f32 %v2022, 0.2
      %v2231 = vmul.f32 %v2025, 0.2
      %v2232 = vmul.f32 %v2030, 0.2
      %v2233 = vmul.f32 %v2033, 0.2
      %v2234 = vmul.f32 %v2038, 0.2
      %v2235 = vmul.f32 %v2041, 0.2
      %v2236 = vmul.f32 %v2046, 0.2
      %v2237 = vmul.f32 %v2049, 0.2
      %v2238 = vmul.f32 %v2054, 0.2
      %v2239 = vmul.f32 %v2057, 0.2
      %v2240 = vmul.f32 %v2062, 0.2
      %v2241 = vmul.f32 %v2065, 0.2
      %v2242 = vmul.f32 %v2070, 0.2
      %v2243 = vmul.f32 %v2073, 0.2
      %v2244 = vmul.f32 %v2078, 0.2
      %v2245 = vmul.f32 %v2081, 0.2
      %v2246 = vmul.f32 %v2086, 0.2
      %v2247 = vmul.f32 %v2089, 0.2
      %v2248 = vmul.f32 %v2094, 0.2
      %v2249 = vmul.f32 %v2097, 0.2
      %v2250 = vmul.f32 %v2102, 0.2
      %v2251 = vmul.f32 %v2105, 0.2
      %v2252 = vmul.f32 %v2110, 0.2
      %v2253 = vmul.f32 %v2113, 0.2
      %v2254 = vmul.f32 %v2118, 0.2
      %v2255 = vmul.f32 %v2121, 0.2
      %v2256 = vmul.f32 %v2126, 0.2
      %v2257 = vmul.f32 %v2129, 0.2
      %v2258 = vmul.f32 %v2134, 0.2
      %v2259 = vmul.f32 %v2137, 0.2
      %v2260 = vmul.f32 %v2142, 0.2
      %v2261 = vmul.f32 %v2145, 0.2
      %v2262 = vmul.f32 %v2150, 0.2
      %v2263 = vmul.f32 %v2153, 0.2
      %v2264 = vmul.f32 %v2158, 0.2
      %v2265 = vmul.f32 %v2161, 0.2
      %v2266 = vmul.f32 %v2166, 0.2
      %v2267 = vmul.f32 %v2169, 0.2
      %v2268 = vsel %vm2172, %v1982, %v2220
      %v2269 = vsel %vm2173, %v1985, %v2221
      %v2270 = vsel %vm2174, %v1990, %v2222
      %v2271 = vsel %vm2175, %v1993, %v2223
      %v2272 = vsel %vm2176, %v1998, %v2224
      %v2273 = vsel %vm2177, %v2001, %v2225
      %v2274 = vsel %vm2178, %v2006, %v2226
      %v2275 = vsel %vm2179, %v2009, %v2227
      %v2276 = vsel %vm2180, %v2014, %v2228
      %v2277 = vsel %vm2181, %v2017, %v2229
      %v2278 = vsel %vm2182, %v2022, %v2230
      %v2279 = vsel %vm2183, %v2025, %v2231
      %v2280 = vsel %vm2184, %v2030, %v2232
      %v2281 = vsel %vm2185, %v2033, %v2233
      %v2282 = vsel %vm2186, %v2038, %v2234
      %v2283 = vsel %vm2187, %v2041, %v2235
      %v2284 = vsel %vm2188, %v2046, %v2236
      %v2285 = vsel %vm2189, %v2049, %v2237
      %v2286 = vsel %vm2190, %v2054, %v2238
      %v2287 = vsel %vm2191, %v2057, %v2239
      %v2288 = vsel %vm2192, %v2062, %v2240
      %v2289 = vsel %vm2193, %v2065, %v2241
      %v2290 = vsel %vm2194, %v2070, %v2242
      %v2291 = vsel %vm2195, %v2073, %v2243
      %v2292 = vsel %vm2196, %v2078, %v2244
      %v2293 = vsel %vm2197, %v2081, %v2245
      %v2294 = vsel %vm2198, %v2086, %v2246
      %v2295 = vsel %vm2199, %v2089, %v2247
      %v2296 = vsel %vm2200, %v2094, %v2248
      %v2297 = vsel %vm2201, %v2097, %v2249
      %v2298 = vsel %vm2202, %v2102, %v2250
      %v2299 = vsel %vm2203, %v2105, %v2251
      %v2300 = vsel %vm2204, %v2110, %v2252
      %v2301 = vsel %vm2205, %v2113, %v2253
      %v2302 = vsel %vm2206, %v2118, %v2254
      %v2303 = vsel %vm2207, %v2121, %v2255
      %v2304 = vsel %vm2208, %v2126, %v2256
      %v2305 = vsel %vm2209, %v2129, %v2257
      %v2306 = vsel %vm2210, %v2134, %v2258
      %v2307 = vsel %vm2211, %v2137, %v2259
      %v2308 = vsel %vm2212, %v2142, %v2260
      %v2309 = vsel %vm2213, %v2145, %v2261
      %v2310 = vsel %vm2214, %v2150, %v2262
      %v2311 = vsel %vm2215, %v2153, %v2263
      %v2312 = vsel %vm2216, %v2158, %v2264
      %v2313 = vsel %vm2217, %v2161, %v2265
      %v2314 = vsel %vm2218, %v2166, %v2266
      %v2315 = vsel %vm2219, %v2169, %v2267
      %2364 = vrot.lane.b32.xlu0 %v2268, 96
      %v2365 = vpop.permute.xlu0 %2364
      %2366 = vrot.lane.b32.xlu0 %v2269, 96
      %v2367 = vpop.permute.xlu0 %2366
      %2368 = vrot.lane.b32.xlu0 %v2270, 96
      %v2369 = vpop.permute.xlu0 %2368
      %2370 = vrot.lane.b32.xlu0 %v2271, 96
      %v2371 = vpop.permute.xlu0 %2370
      %2372 = vrot.lane.b32.xlu0 %v2272, 96
      %v2373 = vpop.permute.xlu0 %2372
      %2374 = vrot.lane.b32.xlu0 %v2273, 96
      %v2375 = vpop.permute.xlu0 %2374
      %2376 = vrot.lane.b32.xlu0 %v2274, 96
      %v2377 = vpop.permute.xlu0 %2376
      %2378 = vrot.lane.b32.xlu0 %v2275, 96
      %v2379 = vpop.permute.xlu0 %2378
      %2380 = vrot.lane.b32.xlu0 %v2276, 96
      %v2381 = vpop.permute.xlu0 %2380
      %2382 = vrot.lane.b32.xlu0 %v2277, 96
      %v2383 = vpop.permute.xlu0 %2382
      %2384 = vrot.lane.b32.xlu0 %v2278, 96
      %v2385 = vpop.permute.xlu0 %2384
      %2386 = vrot.lane.b32.xlu0 %v2279, 96
      %v2387 = vpop.permute.xlu0 %2386
      %2388 = vrot.lane.b32.xlu0 %v2280, 96
      %v2389 = vpop.permute.xlu0 %2388
      %2390 = vrot.lane.b32.xlu0 %v2281, 96
      %v2391 = vpop.permute.xlu0 %2390
      %2392 = vrot.lane.b32.xlu0 %v2282, 96
      %v2393 = vpop.permute.xlu0 %2392
      %2394 = vrot.lane.b32.xlu0 %v2283, 96
      %v2395 = vpop.permute.xlu0 %2394
      %2396 = vrot.lane.b32.xlu0 %v2284, 96
      %v2397 = vpop.permute.xlu0 %2396
      %2398 = vrot.lane.b32.xlu0 %v2285, 96
      %v2399 = vpop.permute.xlu0 %2398
      %2400 = vrot.lane.b32.xlu0 %v2286, 96
      %v2401 = vpop.permute.xlu0 %2400
      %2402 = vrot.lane.b32.xlu0 %v2287, 96
      %v2403 = vpop.permute.xlu0 %2402
      %2404 = vrot.lane.b32.xlu0 %v2288, 96
      %v2405 = vpop.permute.xlu0 %2404
      %2406 = vrot.lane.b32.xlu0 %v2289, 96
      %v2407 = vpop.permute.xlu0 %2406
      %2408 = vrot.lane.b32.xlu0 %v2290, 96
      %v2409 = vpop.permute.xlu0 %2408
      %2410 = vrot.lane.b32.xlu0 %v2291, 96
      %v2411 = vpop.permute.xlu0 %2410
      %2412 = vrot.lane.b32.xlu0 %v2292, 96
      %v2413 = vpop.permute.xlu0 %2412
      %2414 = vrot.lane.b32.xlu0 %v2293, 96
      %v2415 = vpop.permute.xlu0 %2414
      %2416 = vrot.lane.b32.xlu0 %v2294, 96
      %v2417 = vpop.permute.xlu0 %2416
      %2418 = vrot.lane.b32.xlu0 %v2295, 96
      %v2419 = vpop.permute.xlu0 %2418
      %2420 = vrot.lane.b32.xlu0 %v2296, 96
      %v2421 = vpop.permute.xlu0 %2420
      %2422 = vrot.lane.b32.xlu0 %v2297, 96
      %v2423 = vpop.permute.xlu0 %2422
      %2424 = vrot.lane.b32.xlu0 %v2298, 96
      %v2425 = vpop.permute.xlu0 %2424
      %2426 = vrot.lane.b32.xlu0 %v2299, 96
      %v2427 = vpop.permute.xlu0 %2426
      %2428 = vrot.lane.b32.xlu0 %v2300, 96
      %v2429 = vpop.permute.xlu0 %2428
      %2430 = vrot.lane.b32.xlu0 %v2301, 96
      %v2431 = vpop.permute.xlu0 %2430
      %2432 = vrot.lane.b32.xlu0 %v2302, 96
      %v2433 = vpop.permute.xlu0 %2432
      %2434 = vrot.lane.b32.xlu0 %v2303, 96
      %v2435 = vpop.permute.xlu0 %2434
      %2436 = vrot.lane.b32.xlu0 %v2304, 96
      %v2437 = vpop.permute.xlu0 %2436
      %2438 = vrot.lane.b32.xlu0 %v2305, 96
      %v2439 = vpop.permute.xlu0 %2438
      %2440 = vrot.lane.b32.xlu0 %v2306, 96
      %v2441 = vpop.permute.xlu0 %2440
      %2442 = vrot.lane.b32.xlu0 %v2307, 96
      %v2443 = vpop.permute.xlu0 %2442
      %2444 = vrot.lane.b32.xlu0 %v2308, 96
      %v2445 = vpop.permute.xlu0 %2444
      %2446 = vrot.lane.b32.xlu0 %v2309, 96
      %v2447 = vpop.permute.xlu0 %2446
      %2448 = vrot.lane.b32.xlu0 %v2310, 96
      %v2449 = vpop.permute.xlu0 %2448
      %2450 = vrot.lane.b32.xlu0 %v2311, 96
      %v2451 = vpop.permute.xlu0 %2450
      %2452 = vrot.lane.b32.xlu0 %v2312, 96
      %v2453 = vpop.permute.xlu0 %2452
      %2454 = vrot.lane.b32.xlu0 %v2313, 96
      %v2455 = vpop.permute.xlu0 %2454
      %2456 = vrot.lane.b32.xlu0 %v2314, 96
      %v2457 = vpop.permute.xlu0 %2456
      %2458 = vrot.lane.b32.xlu0 %v2315, 96
      %v2459 = vpop.permute.xlu0 %2458
      %v2508 = vadd.f32 %v2268, %v2365
      %v2509 = vadd.f32 %v2269, %v2367
      %v2510 = vadd.f32 %v2270, %v2369
      %v2511 = vadd.f32 %v2271, %v2371
      %v2512 = vadd.f32 %v2272, %v2373
      %v2513 = vadd.f32 %v2273, %v2375
      %v2514 = vadd.f32 %v2274, %v2377
      %v2515 = vadd.f32 %v2275, %v2379
      %v2516 = vadd.f32 %v2276, %v2381
      %v2517 = vadd.f32 %v2277, %v2383
      %v2518 = vadd.f32 %v2278, %v2385
      %v2519 = vadd.f32 %v2279, %v2387
      %v2520 = vadd.f32 %v2280, %v2389
      %v2521 = vadd.f32 %v2281, %v2391
      %v2522 = vadd.f32 %v2282, %v2393
      %v2523 = vadd.f32 %v2283, %v2395
      %v2524 = vadd.f32 %v2284, %v2397
      %v2525 = vadd.f32 %v2285, %v2399
      %v2526 = vadd.f32 %v2286, %v2401
      %v2527 = vadd.f32 %v2287, %v2403
      %v2528 = vadd.f32 %v2288, %v2405
      %v2529 = vadd.f32 %v2289, %v2407
      %v2530 = vadd.f32 %v2290, %v2409
      %v2531 = vadd.f32 %v2291, %v2411
      %v2532 = vadd.f32 %v2292, %v2413
      %v2533 = vadd.f32 %v2293, %v2415
      %v2534 = vadd.f32 %v2294, %v2417
      %v2535 = vadd.f32 %v2295, %v2419
      %v2536 = vadd.f32 %v2296, %v2421
      %v2537 = vadd.f32 %v2297, %v2423
      %v2538 = vadd.f32 %v2298, %v2425
      %v2539 = vadd.f32 %v2299, %v2427
      %v2540 = vadd.f32 %v2300, %v2429
      %v2541 = vadd.f32 %v2301, %v2431
      %v2542 = vadd.f32 %v2302, %v2433
      %v2543 = vadd.f32 %v2303, %v2435
      %v2544 = vadd.f32 %v2304, %v2437
      %v2545 = vadd.f32 %v2305, %v2439
      %v2546 = vadd.f32 %v2306, %v2441
      %v2547 = vadd.f32 %v2307, %v2443
      %v2548 = vadd.f32 %v2308, %v2445
      %v2549 = vadd.f32 %v2309, %v2447
      %v2550 = vadd.f32 %v2310, %v2449
      %v2551 = vadd.f32 %v2311, %v2451
      %v2552 = vadd.f32 %v2312, %v2453
      %v2553 = vadd.f32 %v2313, %v2455
      %v2554 = vadd.f32 %v2314, %v2457
      %v2555 = vadd.f32 %v2315, %v2459
      %2557 = vset.pattern.permute.xlu0 0
      %2558 = vperm.xlu0 %2557, %v540
      %v2559 = vpop.permute.xlu0 %2558
      %2562 = vset.pattern.permute.xlu0 0
      %2563 = vperm.xlu0 %2562, %v541
      %v2564 = vpop.permute.xlu0 %2563
      %2567 = vset.pattern.permute.xlu0 0
      %2568 = vperm.xlu0 %2567, %v542
      %v2569 = vpop.permute.xlu0 %2568
      %2572 = vset.pattern.permute.xlu0 0
      %2573 = vperm.xlu0 %2572, %v543
      %v2574 = vpop.permute.xlu0 %2573
      %2577 = vset.pattern.permute.xlu0 0
      %2578 = vperm.xlu0 %2577, %v544
      %v2579 = vpop.permute.xlu0 %2578
      %2582 = vset.pattern.permute.xlu0 0
      %2583 = vperm.xlu0 %2582, %v545
      %v2584 = vpop.permute.xlu0 %2583
      %2587 = vset.pattern.permute.xlu0 0
      %2588 = vperm.xlu0 %2587, %v546
      %v2589 = vpop.permute.xlu0 %2588
      %2592 = vset.pattern.permute.xlu0 0
      %2593 = vperm.xlu0 %2592, %v547
      %v2594 = vpop.permute.xlu0 %2593
      %2597 = vset.pattern.permute.xlu0 0
      %2598 = vperm.xlu0 %2597, %v548
      %v2599 = vpop.permute.xlu0 %2598
      %2602 = vset.pattern.permute.xlu0 0
      %2603 = vperm.xlu0 %2602, %v549
      %v2604 = vpop.permute.xlu0 %2603
      %2607 = vset.pattern.permute.xlu0 0
      %2608 = vperm.xlu0 %2607, %v550
      %v2609 = vpop.permute.xlu0 %2608
      %2612 = vset.pattern.permute.xlu0 0
      %2613 = vperm.xlu0 %2612, %v551
      %v2614 = vpop.permute.xlu0 %2613
      %2617 = vset.pattern.permute.xlu0 0
      %2618 = vperm.xlu0 %2617, %v552
      %v2619 = vpop.permute.xlu0 %2618
      %2622 = vset.pattern.permute.xlu0 0
      %2623 = vperm.xlu0 %2622, %v553
      %v2624 = vpop.permute.xlu0 %2623
      %2627 = vset.pattern.permute.xlu0 0
      %2628 = vperm.xlu0 %2627, %v554
      %v2629 = vpop.permute.xlu0 %2628
      %2632 = vset.pattern.permute.xlu0 0
      %2633 = vperm.xlu0 %2632, %v555
      %v2634 = vpop.permute.xlu0 %2633
      %2637 = vset.pattern.permute.xlu0 0
      %2638 = vperm.xlu0 %2637, %v556
      %v2639 = vpop.permute.xlu0 %2638
      %2642 = vset.pattern.permute.xlu0 0
      %2643 = vperm.xlu0 %2642, %v557
      %v2644 = vpop.permute.xlu0 %2643
      %2647 = vset.pattern.permute.xlu0 0
      %2648 = vperm.xlu0 %2647, %v558
      %v2649 = vpop.permute.xlu0 %2648
      %2652 = vset.pattern.permute.xlu0 0
      %2653 = vperm.xlu0 %2652, %v559
      %v2654 = vpop.permute.xlu0 %2653
      %2657 = vset.pattern.permute.xlu0 0
      %2658 = vperm.xlu0 %2657, %v560
      %v2659 = vpop.permute.xlu0 %2658
      %2662 = vset.pattern.permute.xlu0 0
      %2663 = vperm.xlu0 %2662, %v561
      %v2664 = vpop.permute.xlu0 %2663
      %2667 = vset.pattern.permute.xlu0 0
      %2668 = vperm.xlu0 %2667, %v562
      %v2669 = vpop.permute.xlu0 %2668
      %2672 = vset.pattern.permute.xlu0 0
      %2673 = vperm.xlu0 %2672, %v563
      %v2674 = vpop.permute.xlu0 %2673
      %2677 = vset.pattern.permute.xlu0 0
      %2678 = vperm.xlu0 %2677, %v564
      %v2679 = vpop.permute.xlu0 %2678
      %2682 = vset.pattern.permute.xlu0 0
      %2683 = vperm.xlu0 %2682, %v565
      %v2684 = vpop.permute.xlu0 %2683
      %2687 = vset.pattern.permute.xlu0 0
      %2688 = vperm.xlu0 %2687, %v566
      %v2689 = vpop.permute.xlu0 %2688
      %2692 = vset.pattern.permute.xlu0 0
      %2693 = vperm.xlu0 %2692, %v567
      %v2694 = vpop.permute.xlu0 %2693
      %2697 = vset.pattern.permute.xlu0 0
      %2698 = vperm.xlu0 %2697, %v568
      %v2699 = vpop.permute.xlu0 %2698
      %2702 = vset.pattern.permute.xlu0 0
      %2703 = vperm.xlu0 %2702, %v569
      %v2704 = vpop.permute.xlu0 %2703
      %2707 = vset.pattern.permute.xlu0 0
      %2708 = vperm.xlu0 %2707, %v570
      %v2709 = vpop.permute.xlu0 %2708
      %2712 = vset.pattern.permute.xlu0 0
      %2713 = vperm.xlu0 %2712, %v571
      %v2714 = vpop.permute.xlu0 %2713
      %2717 = vset.pattern.permute.xlu0 0
      %2718 = vperm.xlu0 %2717, %v572
      %v2719 = vpop.permute.xlu0 %2718
      %2722 = vset.pattern.permute.xlu0 0
      %2723 = vperm.xlu0 %2722, %v573
      %v2724 = vpop.permute.xlu0 %2723
      %2727 = vset.pattern.permute.xlu0 0
      %2728 = vperm.xlu0 %2727, %v574
      %v2729 = vpop.permute.xlu0 %2728
      %2732 = vset.pattern.permute.xlu0 0
      %2733 = vperm.xlu0 %2732, %v575
      %v2734 = vpop.permute.xlu0 %2733
      %2737 = vset.pattern.permute.xlu0 0
      %2738 = vperm.xlu0 %2737, %v576
      %v2739 = vpop.permute.xlu0 %2738
      %2742 = vset.pattern.permute.xlu0 0
      %2743 = vperm.xlu0 %2742, %v577
      %v2744 = vpop.permute.xlu0 %2743
      %2747 = vset.pattern.permute.xlu0 0
      %2748 = vperm.xlu0 %2747, %v578
      %v2749 = vpop.permute.xlu0 %2748
      %2752 = vset.pattern.permute.xlu0 0
      %2753 = vperm.xlu0 %2752, %v579
      %v2754 = vpop.permute.xlu0 %2753
      %2757 = vset.pattern.permute.xlu0 0
      %2758 = vperm.xlu0 %2757, %v580
      %v2759 = vpop.permute.xlu0 %2758
      %2762 = vset.pattern.permute.xlu0 0
      %2763 = vperm.xlu0 %2762, %v581
      %v2764 = vpop.permute.xlu0 %2763
      %2767 = vset.pattern.permute.xlu0 0
      %2768 = vperm.xlu0 %2767, %v582
      %v2769 = vpop.permute.xlu0 %2768
      %2772 = vset.pattern.permute.xlu0 0
      %2773 = vperm.xlu0 %2772, %v583
      %v2774 = vpop.permute.xlu0 %2773
      %2777 = vset.pattern.permute.xlu0 0
      %2778 = vperm.xlu0 %2777, %v584
      %v2779 = vpop.permute.xlu0 %2778
      %2782 = vset.pattern.permute.xlu0 0
      %2783 = vperm.xlu0 %2782, %v585
      %v2784 = vpop.permute.xlu0 %2783
      %2787 = vset.pattern.permute.xlu0 0
      %2788 = vperm.xlu0 %2787, %v586
      %v2789 = vpop.permute.xlu0 %2788
      %2792 = vset.pattern.permute.xlu0 0
      %2793 = vperm.xlu0 %2792, %v587
      %v2794 = vpop.permute.xlu0 %2793
      %v2796 = vmul.f32 %v2508, %v2559
      %v2797 = vmul.f32 %v2509, %v2564
      %v2798 = vmul.f32 %v2510, %v2569
      %v2799 = vmul.f32 %v2511, %v2574
      %v2800 = vmul.f32 %v2512, %v2579
      %v2801 = vmul.f32 %v2513, %v2584
      %v2802 = vmul.f32 %v2514, %v2589
      %v2803 = vmul.f32 %v2515, %v2594
      %v2804 = vmul.f32 %v2516, %v2599
      %v2805 = vmul.f32 %v2517, %v2604
      %v2806 = vmul.f32 %v2518, %v2609
      %v2807 = vmul.f32 %v2519, %v2614
      %v2808 = vmul.f32 %v2520, %v2619
      %v2809 = vmul.f32 %v2521, %v2624
      %v2810 = vmul.f32 %v2522, %v2629
      %v2811 = vmul.f32 %v2523, %v2634
      %v2812 = vmul.f32 %v2524, %v2639
      %v2813 = vmul.f32 %v2525, %v2644
      %v2814 = vmul.f32 %v2526, %v2649
      %v2815 = vmul.f32 %v2527, %v2654
      %v2816 = vmul.f32 %v2528, %v2659
      %v2817 = vmul.f32 %v2529, %v2664
      %v2818 = vmul.f32 %v2530, %v2669
      %v2819 = vmul.f32 %v2531, %v2674
      %v2820 = vmul.f32 %v2532, %v2679
      %v2821 = vmul.f32 %v2533, %v2684
      %v2822 = vmul.f32 %v2534, %v2689
      %v2823 = vmul.f32 %v2535, %v2694
      %v2824 = vmul.f32 %v2536, %v2699
      %v2825 = vmul.f32 %v2537, %v2704
      %v2826 = vmul.f32 %v2538, %v2709
      %v2827 = vmul.f32 %v2539, %v2714
      %v2828 = vmul.f32 %v2540, %v2719
      %v2829 = vmul.f32 %v2541, %v2724
      %v2830 = vmul.f32 %v2542, %v2729
      %v2831 = vmul.f32 %v2543, %v2734
      %v2832 = vmul.f32 %v2544, %v2739
      %v2833 = vmul.f32 %v2545, %v2744
      %v2834 = vmul.f32 %v2546, %v2749
      %v2835 = vmul.f32 %v2547, %v2754
      %v2836 = vmul.f32 %v2548, %v2759
      %v2837 = vmul.f32 %v2549, %v2764
      %v2838 = vmul.f32 %v2550, %v2769
      %v2839 = vmul.f32 %v2551, %v2774
      %v2840 = vmul.f32 %v2552, %v2779
      %v2841 = vmul.f32 %v2553, %v2784
      %v2842 = vmul.f32 %v2554, %v2789
      %v2843 = vmul.f32 %v2555, %v2794
      %v2844 = vpack.c.bf16 %v2797, %v2796
      %v2845 = vpack.c.bf16 %v2799, %v2798
      %v2846 = vpack.c.bf16 %v2801, %v2800
      %v2847 = vpack.c.bf16 %v2803, %v2802
      %v2848 = vpack.c.bf16 %v2805, %v2804
      %v2849 = vpack.c.bf16 %v2807, %v2806
      %v2850 = vpack.c.bf16 %v2809, %v2808
      %v2851 = vpack.c.bf16 %v2811, %v2810
      %v2852 = vpack.c.bf16 %v2813, %v2812
      %v2853 = vpack.c.bf16 %v2815, %v2814
      %v2854 = vpack.c.bf16 %v2817, %v2816
      %v2855 = vpack.c.bf16 %v2819, %v2818
      %v2856 = vpack.c.bf16 %v2821, %v2820
      %v2857 = vpack.c.bf16 %v2823, %v2822
      %v2858 = vpack.c.bf16 %v2825, %v2824
      %v2859 = vpack.c.bf16 %v2827, %v2826
      %v2860 = vpack.c.bf16 %v2829, %v2828
      %v2861 = vpack.c.bf16 %v2831, %v2830
      %v2862 = vpack.c.bf16 %v2833, %v2832
      %v2863 = vpack.c.bf16 %v2835, %v2834
      %v2864 = vpack.c.bf16 %v2837, %v2836
      %v2865 = vpack.c.bf16 %v2839, %v2838
      %v2866 = vpack.c.bf16 %v2841, %v2840
      %v2867 = vpack.c.bf16 %v2843, %v2842
      %vm2868 = vsmask.f32 4352
      %v2870 = vshrl.u32 %v2844, 16
      %v2872 = vrot.slane %v2870, 3
      %v2873 = vshll.u32 %v2844, 16
      %v2875 = vrot.slane %v2873, 4
      %v2876 = vor.u32 %v2872, %v2875
      %v2878 = vshrl.u32 %v2845, 16
      %v2880 = vrot.slane %v2878, 3
      %v2881 = vshll.u32 %v2845, 16
      %v2883 = vrot.slane %v2881, 4
      %v2884 = vor.u32 %v2880, %v2883
      %v2885 = vsel %vm2868, %v2876, %v2884
      %v2887 = vshrl.u32 %v2846, 16
      %v2889 = vrot.slane %v2887, 3
      %v2890 = vshll.u32 %v2846, 16
      %v2892 = vrot.slane %v2890, 4
      %v2893 = vor.u32 %v2889, %v2892
      %v2894 = vsel %vm2868, %v2884, %v2893
      %v2896 = vshrl.u32 %v2847, 16
      %v2898 = vrot.slane %v2896, 3
      %v2899 = vshll.u32 %v2847, 16
      %v2901 = vrot.slane %v2899, 4
      %v2902 = vor.u32 %v2898, %v2901
      %v2903 = vsel %vm2868, %v2893, %v2902
      %v2905 = vshrl.u32 %v2848, 16
      %v2907 = vrot.slane %v2905, 3
      %v2908 = vshll.u32 %v2848, 16
      %v2910 = vrot.slane %v2908, 4
      %v2911 = vor.u32 %v2907, %v2910
      %v2912 = vsel %vm2868, %v2902, %v2911
      %v2914 = vshrl.u32 %v2849, 16
      %v2916 = vrot.slane %v2914, 3
      %v2917 = vshll.u32 %v2849, 16
      %v2919 = vrot.slane %v2917, 4
      %v2920 = vor.u32 %v2916, %v2919
      %v2921 = vsel %vm2868, %v2911, %v2920
      %v2923 = vshrl.u32 %v2850, 16
      %v2925 = vrot.slane %v2923, 3
      %v2926 = vshll.u32 %v2850, 16
      %v2928 = vrot.slane %v2926, 4
      %v2929 = vor.u32 %v2925, %v2928
      %v2930 = vsel %vm2868, %v2920, %v2929
      %v2932 = vshrl.u32 %v2851, 16
      %v2934 = vrot.slane %v2932, 3
      %v2935 = vshll.u32 %v2851, 16
      %v2937 = vrot.slane %v2935, 4
      %v2938 = vor.u32 %v2934, %v2937
      %v2939 = vsel %vm2868, %v2929, %v2938
      %v2941 = vshrl.u32 %v2852, 16
      %v2943 = vrot.slane %v2941, 3
      %v2944 = vshll.u32 %v2852, 16
      %v2946 = vrot.slane %v2944, 4
      %v2947 = vor.u32 %v2943, %v2946
      %v2948 = vsel %vm2868, %v2938, %v2947
      %v2950 = vshrl.u32 %v2853, 16
      %v2952 = vrot.slane %v2950, 3
      %v2953 = vshll.u32 %v2853, 16
      %v2955 = vrot.slane %v2953, 4
      %v2956 = vor.u32 %v2952, %v2955
      %v2957 = vsel %vm2868, %v2947, %v2956
      %v2959 = vshrl.u32 %v2854, 16
      %v2961 = vrot.slane %v2959, 3
      %v2962 = vshll.u32 %v2854, 16
      %v2964 = vrot.slane %v2962, 4
      %v2965 = vor.u32 %v2961, %v2964
      %v2966 = vsel %vm2868, %v2956, %v2965
      %v2968 = vshrl.u32 %v2855, 16
      %v2970 = vrot.slane %v2968, 3
      %v2971 = vshll.u32 %v2855, 16
      %v2973 = vrot.slane %v2971, 4
      %v2974 = vor.u32 %v2970, %v2973
      %v2975 = vsel %vm2868, %v2965, %v2974
      %v2977 = vshrl.u32 %v2856, 16
      %v2979 = vrot.slane %v2977, 3
      %v2980 = vshll.u32 %v2856, 16
      %v2982 = vrot.slane %v2980, 4
      %v2983 = vor.u32 %v2979, %v2982
      %v2984 = vsel %vm2868, %v2974, %v2983
      %v2986 = vshrl.u32 %v2857, 16
      %v2988 = vrot.slane %v2986, 3
      %v2989 = vshll.u32 %v2857, 16
      %v2991 = vrot.slane %v2989, 4
      %v2992 = vor.u32 %v2988, %v2991
      %v2993 = vsel %vm2868, %v2983, %v2992
      %v2995 = vshrl.u32 %v2858, 16
      %v2997 = vrot.slane %v2995, 3
      %v2998 = vshll.u32 %v2858, 16
      %v3000 = vrot.slane %v2998, 4
      %v3001 = vor.u32 %v2997, %v3000
      %v3002 = vsel %vm2868, %v2992, %v3001
      %v3004 = vshrl.u32 %v2859, 16
      %v3006 = vrot.slane %v3004, 3
      %v3007 = vshll.u32 %v2859, 16
      %v3009 = vrot.slane %v3007, 4
      %v3010 = vor.u32 %v3006, %v3009
      %v3011 = vsel %vm2868, %v3001, %v3010
      %v3013 = vshrl.u32 %v2860, 16
      %v3015 = vrot.slane %v3013, 3
      %v3016 = vshll.u32 %v2860, 16
      %v3018 = vrot.slane %v3016, 4
      %v3019 = vor.u32 %v3015, %v3018
      %v3020 = vsel %vm2868, %v3010, %v3019
      %v3022 = vshrl.u32 %v2861, 16
      %v3024 = vrot.slane %v3022, 3
      %v3025 = vshll.u32 %v2861, 16
      %v3027 = vrot.slane %v3025, 4
      %v3028 = vor.u32 %v3024, %v3027
      %v3029 = vsel %vm2868, %v3019, %v3028
      %v3031 = vshrl.u32 %v2862, 16
      %v3033 = vrot.slane %v3031, 3
      %v3034 = vshll.u32 %v2862, 16
      %v3036 = vrot.slane %v3034, 4
      %v3037 = vor.u32 %v3033, %v3036
      %v3038 = vsel %vm2868, %v3028, %v3037
      %v3040 = vshrl.u32 %v2863, 16
      %v3042 = vrot.slane %v3040, 3
      %v3043 = vshll.u32 %v2863, 16
      %v3045 = vrot.slane %v3043, 4
      %v3046 = vor.u32 %v3042, %v3045
      %v3047 = vsel %vm2868, %v3037, %v3046
      %v3049 = vshrl.u32 %v2864, 16
      %v3051 = vrot.slane %v3049, 3
      %v3052 = vshll.u32 %v2864, 16
      %v3054 = vrot.slane %v3052, 4
      %v3055 = vor.u32 %v3051, %v3054
      %v3056 = vsel %vm2868, %v3046, %v3055
      %v3058 = vshrl.u32 %v2865, 16
      %v3060 = vrot.slane %v3058, 3
      %v3061 = vshll.u32 %v2865, 16
      %v3063 = vrot.slane %v3061, 4
      %v3064 = vor.u32 %v3060, %v3063
      %v3065 = vsel %vm2868, %v3055, %v3064
      %v3067 = vshrl.u32 %v2866, 16
      %v3069 = vrot.slane %v3067, 3
      %v3070 = vshll.u32 %v2866, 16
      %v3072 = vrot.slane %v3070, 4
      %v3073 = vor.u32 %v3069, %v3072
      %v3074 = vsel %vm2868, %v3064, %v3073
      %v3076 = vshrl.u32 %v2867, 16
      %v3078 = vrot.slane %v3076, 3
      %v3079 = vshll.u32 %v2867, 16
      %v3081 = vrot.slane %v3079, 4
      %v3082 = vor.u32 %v3078, %v3081
      %v3083 = vsel %vm2868, %v3073, %v3082
      %vm3086 = vcmask 1044480
      %vm3087 = vmand %vm3086, %vm2868
      %v3088 = vsel %vm3087, 0, %v2876
      %v3089 = vsel %vm3087, %v3082, 0
      %v3091 = vshrl.u32 0, 16
      %v3093 = vshll.u32 0, 16
      %v3095 = vrot.slane %v3093, 1
      %v3096 = vor.u32 %v3091, %v3095
      %v3098 = vshll.u32 %v3088, 16
      %v3100 = vrot.slane %v3098, 1
      %v3101 = vsel %vm588, %v3096, %v3100
      %v3102 = vshrl.u32 %v3088, 16
      %v3104 = vor.u32 %v3102, %v3100
      %v3106 = vshll.u32 %v2885, 16
      %v3108 = vrot.slane %v3106, 1
      %v3109 = vsel %vm588, %v3104, %v3108
      %v3110 = vshrl.u32 %v2885, 16
      %v3112 = vor.u32 %v3110, %v3108
      %v3114 = vshll.u32 %v2894, 16
      %v3116 = vrot.slane %v3114, 1
      %v3117 = vsel %vm588, %v3112, %v3116
      %v3118 = vshrl.u32 %v2894, 16
      %v3120 = vor.u32 %v3118, %v3116
      %v3122 = vshll.u32 %v2903, 16
      %v3124 = vrot.slane %v3122, 1
      %v3125 = vsel %vm588, %v3120, %v3124
      %v3126 = vshrl.u32 %v2903, 16
      %v3128 = vor.u32 %v3126, %v3124
      %v3130 = vshll.u32 %v2912, 16
      %v3132 = vrot.slane %v3130, 1
      %v3133 = vsel %vm588, %v3128, %v3132
      %v3134 = vshrl.u32 %v2912, 16
      %v3136 = vor.u32 %v3134, %v3132
      %v3138 = vshll.u32 %v2921, 16
      %v3140 = vrot.slane %v3138, 1
      %v3141 = vsel %vm588, %v3136, %v3140
      %v3142 = vshrl.u32 %v2921, 16
      %v3144 = vor.u32 %v3142, %v3140
      %v3146 = vshll.u32 %v2930, 16
      %v3148 = vrot.slane %v3146, 1
      %v3149 = vsel %vm588, %v3144, %v3148
      %v3150 = vshrl.u32 %v2930, 16
      %v3152 = vor.u32 %v3150, %v3148
      %v3154 = vshll.u32 %v2939, 16
      %v3156 = vrot.slane %v3154, 1
      %v3157 = vsel %vm588, %v3152, %v3156
      %v3158 = vshrl.u32 %v2939, 16
      %v3160 = vor.u32 %v3158, %v3156
      %v3162 = vshll.u32 %v2948, 16
      %v3164 = vrot.slane %v3162, 1
      %v3165 = vsel %vm588, %v3160, %v3164
      %v3166 = vshrl.u32 %v2948, 16
      %v3168 = vor.u32 %v3166, %v3164
      %v3170 = vshll.u32 %v2957, 16
      %v3172 = vrot.slane %v3170, 1
      %v3173 = vsel %vm588, %v3168, %v3172
      %v3174 = vshrl.u32 %v2957, 16
      %v3176 = vor.u32 %v3174, %v3172
      %v3178 = vshll.u32 %v2966, 16
      %v3180 = vrot.slane %v3178, 1
      %v3181 = vsel %vm588, %v3176, %v3180
      %v3182 = vshrl.u32 %v2966, 16
      %v3184 = vor.u32 %v3182, %v3180
      %v3186 = vshll.u32 %v2975, 16
      %v3188 = vrot.slane %v3186, 1
      %v3189 = vsel %vm588, %v3184, %v3188
      %v3190 = vshrl.u32 %v2975, 16
      %v3192 = vor.u32 %v3190, %v3188
      %v3194 = vshll.u32 %v2984, 16
      %v3196 = vrot.slane %v3194, 1
      %v3197 = vsel %vm588, %v3192, %v3196
      %v3198 = vshrl.u32 %v2984, 16
      %v3200 = vor.u32 %v3198, %v3196
      %v3202 = vshll.u32 %v2993, 16
      %v3204 = vrot.slane %v3202, 1
      %v3205 = vsel %vm588, %v3200, %v3204
      %v3206 = vshrl.u32 %v2993, 16
      %v3208 = vor.u32 %v3206, %v3204
      %v3210 = vshll.u32 %v3002, 16
      %v3212 = vrot.slane %v3210, 1
      %v3213 = vsel %vm588, %v3208, %v3212
      %v3214 = vshrl.u32 %v3002, 16
      %v3216 = vor.u32 %v3214, %v3212
      %v3218 = vshll.u32 %v3011, 16
      %v3220 = vrot.slane %v3218, 1
      %v3221 = vsel %vm588, %v3216, %v3220
      %v3222 = vshrl.u32 %v3011, 16
      %v3224 = vor.u32 %v3222, %v3220
      %v3226 = vshll.u32 %v3020, 16
      %v3228 = vrot.slane %v3226, 1
      %v3229 = vsel %vm588, %v3224, %v3228
      %v3230 = vshrl.u32 %v3020, 16
      %v3232 = vor.u32 %v3230, %v3228
      %v3234 = vshll.u32 %v3029, 16
      %v3236 = vrot.slane %v3234, 1
      %v3237 = vsel %vm588, %v3232, %v3236
      %v3238 = vshrl.u32 %v3029, 16
      %v3240 = vor.u32 %v3238, %v3236
      %v3242 = vshll.u32 %v3038, 16
      %v3244 = vrot.slane %v3242, 1
      %v3245 = vsel %vm588, %v3240, %v3244
      %v3246 = vshrl.u32 %v3038, 16
      %v3248 = vor.u32 %v3246, %v3244
      %v3250 = vshll.u32 %v3047, 16
      %v3252 = vrot.slane %v3250, 1
      %v3253 = vsel %vm588, %v3248, %v3252
      %v3254 = vshrl.u32 %v3047, 16
      %v3256 = vor.u32 %v3254, %v3252
      %v3258 = vshll.u32 %v3056, 16
      %v3260 = vrot.slane %v3258, 1
      %v3261 = vsel %vm588, %v3256, %v3260
      %v3262 = vshrl.u32 %v3056, 16
      %v3264 = vor.u32 %v3262, %v3260
      %v3266 = vshll.u32 %v3065, 16
      %v3268 = vrot.slane %v3266, 1
      %v3269 = vsel %vm588, %v3264, %v3268
      %v3270 = vshrl.u32 %v3065, 16
      %v3272 = vor.u32 %v3270, %v3268
      %v3274 = vshll.u32 %v3074, 16
      %v3276 = vrot.slane %v3274, 1
      %v3277 = vsel %vm588, %v3272, %v3276
      %v3278 = vshrl.u32 %v3074, 16
      %v3280 = vor.u32 %v3278, %v3276
      %v3282 = vshll.u32 %v3083, 16
      %v3284 = vrot.slane %v3282, 1
      %v3285 = vsel %vm588, %v3280, %v3284
      %3286 = vrot.lane.b32.xlu0 %v3101, 32
      %v3287 = vpop.permute.xlu0 %3286
      %3288 = vrot.lane.b32.xlu0 %v3109, 32
      %v3289 = vpop.permute.xlu0 %3288
      %3290 = vrot.lane.b32.xlu0 %v3117, 32
      %v3291 = vpop.permute.xlu0 %3290
      %3292 = vrot.lane.b32.xlu0 %v3125, 32
      %v3293 = vpop.permute.xlu0 %3292
      %3294 = vrot.lane.b32.xlu0 %v3133, 32
      %v3295 = vpop.permute.xlu0 %3294
      %3296 = vrot.lane.b32.xlu0 %v3141, 32
      %v3297 = vpop.permute.xlu0 %3296
      %3298 = vrot.lane.b32.xlu0 %v3149, 32
      %v3299 = vpop.permute.xlu0 %3298
      %3300 = vrot.lane.b32.xlu0 %v3157, 32
      %v3301 = vpop.permute.xlu0 %3300
      %3302 = vrot.lane.b32.xlu0 %v3165, 32
      %v3303 = vpop.permute.xlu0 %3302
      %3304 = vrot.lane.b32.xlu0 %v3173, 32
      %v3305 = vpop.permute.xlu0 %3304
      %3306 = vrot.lane.b32.xlu0 %v3181, 32
      %v3307 = vpop.permute.xlu0 %3306
      %3308 = vrot.lane.b32.xlu0 %v3189, 32
      %v3309 = vpop.permute.xlu0 %3308
      %3310 = vrot.lane.b32.xlu0 %v3197, 32
      %v3311 = vpop.permute.xlu0 %3310
      %3312 = vrot.lane.b32.xlu0 %v3205, 32
      %v3313 = vpop.permute.xlu0 %3312
      %3314 = vrot.lane.b32.xlu0 %v3213, 32
      %v3315 = vpop.permute.xlu0 %3314
      %3316 = vrot.lane.b32.xlu0 %v3221, 32
      %v3317 = vpop.permute.xlu0 %3316
      %3318 = vrot.lane.b32.xlu0 %v3229, 32
      %v3319 = vpop.permute.xlu0 %3318
      %3320 = vrot.lane.b32.xlu0 %v3237, 32
      %v3321 = vpop.permute.xlu0 %3320
      %3322 = vrot.lane.b32.xlu0 %v3245, 32
      %v3323 = vpop.permute.xlu0 %3322
      %3324 = vrot.lane.b32.xlu0 %v3253, 32
      %v3325 = vpop.permute.xlu0 %3324
      %3326 = vrot.lane.b32.xlu0 %v3261, 32
      %v3327 = vpop.permute.xlu0 %3326
      %3328 = vrot.lane.b32.xlu0 %v3269, 32
      %v3329 = vpop.permute.xlu0 %3328
      %3330 = vrot.lane.b32.xlu0 %v3277, 32
      %v3331 = vpop.permute.xlu0 %3330
      %3332 = vrot.lane.b32.xlu0 %v3285, 32
      %v3333 = vpop.permute.xlu0 %3332
      %v3336 = vrot.slane 0, 1
      %v3337 = vrot.slane %v3088, 1
      %v3338 = vsel %vm858, %v3336, %v3337
      %v3339 = vrot.slane %v2885, 1
      %v3340 = vsel %vm858, %v3337, %v3339
      %v3341 = vrot.slane %v2894, 1
      %v3342 = vsel %vm858, %v3339, %v3341
      %v3343 = vrot.slane %v2903, 1
      %v3344 = vsel %vm858, %v3341, %v3343
      %v3345 = vrot.slane %v2912, 1
      %v3346 = vsel %vm858, %v3343, %v3345
      %v3347 = vrot.slane %v2921, 1
      %v3348 = vsel %vm858, %v3345, %v3347
      %v3349 = vrot.slane %v2930, 1
      %v3350 = vsel %vm858, %v3347, %v3349
      %v3351 = vrot.slane %v2939, 1
      %v3352 = vsel %vm858, %v3349, %v3351
      %v3353 = vrot.slane %v2948, 1
      %v3354 = vsel %vm858, %v3351, %v3353
      %v3355 = vrot.slane %v2957, 1
      %v3356 = vsel %vm858, %v3353, %v3355
      %v3357 = vrot.slane %v2966, 1
      %v3358 = vsel %vm858, %v3355, %v3357
      %v3359 = vrot.slane %v2975, 1
      %v3360 = vsel %vm858, %v3357, %v3359
      %v3361 = vrot.slane %v2984, 1
      %v3362 = vsel %vm858, %v3359, %v3361
      %v3363 = vrot.slane %v2993, 1
      %v3364 = vsel %vm858, %v3361, %v3363
      %v3365 = vrot.slane %v3002, 1
      %v3366 = vsel %vm858, %v3363, %v3365
      %v3367 = vrot.slane %v3011, 1
      %v3368 = vsel %vm858, %v3365, %v3367
      %v3369 = vrot.slane %v3020, 1
      %v3370 = vsel %vm858, %v3367, %v3369
      %v3371 = vrot.slane %v3029, 1
      %v3372 = vsel %vm858, %v3369, %v3371
      %v3373 = vrot.slane %v3038, 1
      %v3374 = vsel %vm858, %v3371, %v3373
      %v3375 = vrot.slane %v3047, 1
      %v3376 = vsel %vm858, %v3373, %v3375
      %v3377 = vrot.slane %v3056, 1
      %v3378 = vsel %vm858, %v3375, %v3377
      %v3379 = vrot.slane %v3065, 1
      %v3380 = vsel %vm858, %v3377, %v3379
      %v3381 = vrot.slane %v3074, 1
      %v3382 = vsel %vm858, %v3379, %v3381
      %v3383 = vrot.slane %v3083, 1
      %v3384 = vsel %vm858, %v3381, %v3383
      %3385 = vrot.lane.b32.xlu0 %v3338, 64
      %v3386 = vpop.permute.xlu0 %3385
      %3387 = vrot.lane.b32.xlu0 %v3340, 64
      %v3388 = vpop.permute.xlu0 %3387
      %3389 = vrot.lane.b32.xlu0 %v3342, 64
      %v3390 = vpop.permute.xlu0 %3389
      %3391 = vrot.lane.b32.xlu0 %v3344, 64
      %v3392 = vpop.permute.xlu0 %3391
      %3393 = vrot.lane.b32.xlu0 %v3346, 64
      %v3394 = vpop.permute.xlu0 %3393
      %3395 = vrot.lane.b32.xlu0 %v3348, 64
      %v3396 = vpop.permute.xlu0 %3395
      %3397 = vrot.lane.b32.xlu0 %v3350, 64
      %v3398 = vpop.permute.xlu0 %3397
      %3399 = vrot.lane.b32.xlu0 %v3352, 64
      %v3400 = vpop.permute.xlu0 %3399
      %3401 = vrot.lane.b32.xlu0 %v3354, 64
      %v3402 = vpop.permute.xlu0 %3401
      %3403 = vrot.lane.b32.xlu0 %v3356, 64
      %v3404 = vpop.permute.xlu0 %3403
      %3405 = vrot.lane.b32.xlu0 %v3358, 64
      %v3406 = vpop.permute.xlu0 %3405
      %3407 = vrot.lane.b32.xlu0 %v3360, 64
      %v3408 = vpop.permute.xlu0 %3407
      %3409 = vrot.lane.b32.xlu0 %v3362, 64
      %v3410 = vpop.permute.xlu0 %3409
      %3411 = vrot.lane.b32.xlu0 %v3364, 64
      %v3412 = vpop.permute.xlu0 %3411
      %3413 = vrot.lane.b32.xlu0 %v3366, 64
      %v3414 = vpop.permute.xlu0 %3413
      %3415 = vrot.lane.b32.xlu0 %v3368, 64
      %v3416 = vpop.permute.xlu0 %3415
      %3417 = vrot.lane.b32.xlu0 %v3370, 64
      %v3418 = vpop.permute.xlu0 %3417
      %3419 = vrot.lane.b32.xlu0 %v3372, 64
      %v3420 = vpop.permute.xlu0 %3419
      %3421 = vrot.lane.b32.xlu0 %v3374, 64
      %v3422 = vpop.permute.xlu0 %3421
      %3423 = vrot.lane.b32.xlu0 %v3376, 64
      %v3424 = vpop.permute.xlu0 %3423
      %3425 = vrot.lane.b32.xlu0 %v3378, 64
      %v3426 = vpop.permute.xlu0 %3425
      %3427 = vrot.lane.b32.xlu0 %v3380, 64
      %v3428 = vpop.permute.xlu0 %3427
      %3429 = vrot.lane.b32.xlu0 %v3382, 64
      %v3430 = vpop.permute.xlu0 %3429
      %3431 = vrot.lane.b32.xlu0 %v3384, 64
      %v3432 = vpop.permute.xlu0 %3431
      %v3434 = vrot.slane %v3088, 4
      %v3435 = vrot.slane %v2885, 4
      %v3436 = vsel %vm957, %v3434, %v3435
      %v3437 = vrot.slane %v2894, 4
      %v3438 = vsel %vm957, %v3435, %v3437
      %v3439 = vrot.slane %v2903, 4
      %v3440 = vsel %vm957, %v3437, %v3439
      %v3441 = vrot.slane %v2912, 4
      %v3442 = vsel %vm957, %v3439, %v3441
      %v3443 = vrot.slane %v2921, 4
      %v3444 = vsel %vm957, %v3441, %v3443
      %v3445 = vrot.slane %v2930, 4
      %v3446 = vsel %vm957, %v3443, %v3445
      %v3447 = vrot.slane %v2939, 4
      %v3448 = vsel %vm957, %v3445, %v3447
      %v3449 = vrot.slane %v2948, 4
      %v3450 = vsel %vm957, %v3447, %v3449
      %v3451 = vrot.slane %v2957, 4
      %v3452 = vsel %vm957, %v3449, %v3451
      %v3453 = vrot.slane %v2966, 4
      %v3454 = vsel %vm957, %v3451, %v3453
      %v3455 = vrot.slane %v2975, 4
      %v3456 = vsel %vm957, %v3453, %v3455
      %v3457 = vrot.slane %v2984, 4
      %v3458 = vsel %vm957, %v3455, %v3457
      %v3459 = vrot.slane %v2993, 4
      %v3460 = vsel %vm957, %v3457, %v3459
      %v3461 = vrot.slane %v3002, 4
      %v3462 = vsel %vm957, %v3459, %v3461
      %v3463 = vrot.slane %v3011, 4
      %v3464 = vsel %vm957, %v3461, %v3463
      %v3465 = vrot.slane %v3020, 4
      %v3466 = vsel %vm957, %v3463, %v3465
      %v3467 = vrot.slane %v3029, 4
      %v3468 = vsel %vm957, %v3465, %v3467
      %v3469 = vrot.slane %v3038, 4
      %v3470 = vsel %vm957, %v3467, %v3469
      %v3471 = vrot.slane %v3047, 4
      %v3472 = vsel %vm957, %v3469, %v3471
      %v3473 = vrot.slane %v3056, 4
      %v3474 = vsel %vm957, %v3471, %v3473
      %v3475 = vrot.slane %v3065, 4
      %v3476 = vsel %vm957, %v3473, %v3475
      %v3477 = vrot.slane %v3074, 4
      %v3478 = vsel %vm957, %v3475, %v3477
      %v3479 = vrot.slane %v3083, 4
      %v3480 = vsel %vm957, %v3477, %v3479
      %v3481 = vrot.slane %v3089, 4
      %v3482 = vsel %vm957, %v3479, %v3481
      %3483 = vrot.lane.b32.xlu0 %v3436, 96
      %v3484 = vpop.permute.xlu0 %3483
      %3485 = vrot.lane.b32.xlu0 %v3438, 96
      %v3486 = vpop.permute.xlu0 %3485
      %3487 = vrot.lane.b32.xlu0 %v3440, 96
      %v3488 = vpop.permute.xlu0 %3487
      %3489 = vrot.lane.b32.xlu0 %v3442, 96
      %v3490 = vpop.permute.xlu0 %3489
      %3491 = vrot.lane.b32.xlu0 %v3444, 96
      %v3492 = vpop.permute.xlu0 %3491
      %3493 = vrot.lane.b32.xlu0 %v3446, 96
      %v3494 = vpop.permute.xlu0 %3493
      %3495 = vrot.lane.b32.xlu0 %v3448, 96
      %v3496 = vpop.permute.xlu0 %3495
      %3497 = vrot.lane.b32.xlu0 %v3450, 96
      %v3498 = vpop.permute.xlu0 %3497
      %3499 = vrot.lane.b32.xlu0 %v3452, 96
      %v3500 = vpop.permute.xlu0 %3499
      %3501 = vrot.lane.b32.xlu0 %v3454, 96
      %v3502 = vpop.permute.xlu0 %3501
      %3503 = vrot.lane.b32.xlu0 %v3456, 96
      %v3504 = vpop.permute.xlu0 %3503
      %3505 = vrot.lane.b32.xlu0 %v3458, 96
      %v3506 = vpop.permute.xlu0 %3505
      %3507 = vrot.lane.b32.xlu0 %v3460, 96
      %v3508 = vpop.permute.xlu0 %3507
      %3509 = vrot.lane.b32.xlu0 %v3462, 96
      %v3510 = vpop.permute.xlu0 %3509
      %3511 = vrot.lane.b32.xlu0 %v3464, 96
      %v3512 = vpop.permute.xlu0 %3511
      %3513 = vrot.lane.b32.xlu0 %v3466, 96
      %v3514 = vpop.permute.xlu0 %3513
      %3515 = vrot.lane.b32.xlu0 %v3468, 96
      %v3516 = vpop.permute.xlu0 %3515
      %3517 = vrot.lane.b32.xlu0 %v3470, 96
      %v3518 = vpop.permute.xlu0 %3517
      %3519 = vrot.lane.b32.xlu0 %v3472, 96
      %v3520 = vpop.permute.xlu0 %3519
      %3521 = vrot.lane.b32.xlu0 %v3474, 96
      %v3522 = vpop.permute.xlu0 %3521
      %3523 = vrot.lane.b32.xlu0 %v3476, 96
      %v3524 = vpop.permute.xlu0 %3523
      %3525 = vrot.lane.b32.xlu0 %v3478, 96
      %v3526 = vpop.permute.xlu0 %3525
      %3527 = vrot.lane.b32.xlu0 %v3480, 96
      %v3528 = vpop.permute.xlu0 %3527
      %3529 = vrot.lane.b32.xlu0 %v3482, 96
      %v3530 = vpop.permute.xlu0 %3529
      %v3531 = vrot.slane %v3102, 4
      %v3532 = vrot.slane %v3098, 5
      %v3533 = vor.u32 %v3531, %v3532
      %v3534 = vrot.slane %v3110, 4
      %v3535 = vrot.slane %v3106, 5
      %v3536 = vor.u32 %v3534, %v3535
      %v3537 = vsel %vm1055, %v3533, %v3536
      %v3538 = vrot.slane %v3118, 4
      %v3539 = vrot.slane %v3114, 5
      %v3540 = vor.u32 %v3538, %v3539
      %v3541 = vsel %vm1055, %v3536, %v3540
      %v3542 = vrot.slane %v3126, 4
      %v3543 = vrot.slane %v3122, 5
      %v3544 = vor.u32 %v3542, %v3543
      %v3545 = vsel %vm1055, %v3540, %v3544
      %v3546 = vrot.slane %v3134, 4
      %v3547 = vrot.slane %v3130, 5
      %v3548 = vor.u32 %v3546, %v3547
      %v3549 = vsel %vm1055, %v3544, %v3548
      %v3550 = vrot.slane %v3142, 4
      %v3551 = vrot.slane %v3138, 5
      %v3552 = vor.u32 %v3550, %v3551
      %v3553 = vsel %vm1055, %v3548, %v3552
      %v3554 = vrot.slane %v3150, 4
      %v3555 = vrot.slane %v3146, 5
      %v3556 = vor.u32 %v3554, %v3555
      %v3557 = vsel %vm1055, %v3552, %v3556
      %v3558 = vrot.slane %v3158, 4
      %v3559 = vrot.slane %v3154, 5
      %v3560 = vor.u32 %v3558, %v3559
      %v3561 = vsel %vm1055, %v3556, %v3560
      %v3562 = vrot.slane %v3166, 4
      %v3563 = vrot.slane %v3162, 5
      %v3564 = vor.u32 %v3562, %v3563
      %v3565 = vsel %vm1055, %v3560, %v3564
      %v3566 = vrot.slane %v3174, 4
      %v3567 = vrot.slane %v3170, 5
      %v3568 = vor.u32 %v3566, %v3567
      %v3569 = vsel %vm1055, %v3564, %v3568
      %v3570 = vrot.slane %v3182, 4
      %v3571 = vrot.slane %v3178, 5
      %v3572 = vor.u32 %v3570, %v3571
      %v3573 = vsel %vm1055, %v3568, %v3572
      %v3574 = vrot.slane %v3190, 4
      %v3575 = vrot.slane %v3186, 5
      %v3576 = vor.u32 %v3574, %v3575
      %v3577 = vsel %vm1055, %v3572, %v3576
      %v3578 = vrot.slane %v3198, 4
      %v3579 = vrot.slane %v3194, 5
      %v3580 = vor.u32 %v3578, %v3579
      %v3581 = vsel %vm1055, %v3576, %v3580
      %v3582 = vrot.slane %v3206, 4
      %v3583 = vrot.slane %v3202, 5
      %v3584 = vor.u32 %v3582, %v3583
      %v3585 = vsel %vm1055, %v3580, %v3584
      %v3586 = vrot.slane %v3214, 4
      %v3587 = vrot.slane %v3210, 5
      %v3588 = vor.u32 %v3586, %v3587
      %v3589 = vsel %vm1055, %v3584, %v3588
      %v3590 = vrot.slane %v3222, 4
      %v3591 = vrot.slane %v3218, 5
      %v3592 = vor.u32 %v3590, %v3591
      %v3593 = vsel %vm1055, %v3588, %v3592
      %v3594 = vrot.slane %v3230, 4
      %v3595 = vrot.slane %v3226, 5
      %v3596 = vor.u32 %v3594, %v3595
      %v3597 = vsel %vm1055, %v3592, %v3596
      %v3598 = vrot.slane %v3238, 4
      %v3599 = vrot.slane %v3234, 5
      %v3600 = vor.u32 %v3598, %v3599
      %v3601 = vsel %vm1055, %v3596, %v3600
      %v3602 = vrot.slane %v3246, 4
      %v3603 = vrot.slane %v3242, 5
      %v3604 = vor.u32 %v3602, %v3603
      %v3605 = vsel %vm1055, %v3600, %v3604
      %v3606 = vrot.slane %v3254, 4
      %v3607 = vrot.slane %v3250, 5
      %v3608 = vor.u32 %v3606, %v3607
      %v3609 = vsel %vm1055, %v3604, %v3608
      %v3610 = vrot.slane %v3262, 4
      %v3611 = vrot.slane %v3258, 5
      %v3612 = vor.u32 %v3610, %v3611
      %v3613 = vsel %vm1055, %v3608, %v3612
      %v3614 = vrot.slane %v3270, 4
      %v3615 = vrot.slane %v3266, 5
      %v3616 = vor.u32 %v3614, %v3615
      %v3617 = vsel %vm1055, %v3612, %v3616
      %v3618 = vrot.slane %v3278, 4
      %v3619 = vrot.slane %v3274, 5
      %v3620 = vor.u32 %v3618, %v3619
      %v3621 = vsel %vm1055, %v3616, %v3620
      %v3622 = vshrl.u32 %v3083, 16
      %v3624 = vrot.slane %v3622, 4
      %v3625 = vrot.slane %v3282, 5
      %v3626 = vor.u32 %v3624, %v3625
      %v3627 = vsel %vm1055, %v3620, %v3626
      %v3629 = vshrl.u32 %v3089, 16
      %v3631 = vrot.slane %v3629, 4
      %v3632 = vshll.u32 %v3089, 16
      %v3634 = vrot.slane %v3632, 5
      %v3635 = vor.u32 %v3631, %v3634
      %v3636 = vsel %vm1055, %v3626, %v3635
      %v3637 = vrot.slane %v3088, 5
      %v3638 = vrot.slane %v2885, 5
      %v3639 = vsel %vm1210, %v3637, %v3638
      %v3640 = vrot.slane %v2894, 5
      %v3641 = vsel %vm1210, %v3638, %v3640
      %v3642 = vrot.slane %v2903, 5
      %v3643 = vsel %vm1210, %v3640, %v3642
      %v3644 = vrot.slane %v2912, 5
      %v3645 = vsel %vm1210, %v3642, %v3644
      %v3646 = vrot.slane %v2921, 5
      %v3647 = vsel %vm1210, %v3644, %v3646
      %v3648 = vrot.slane %v2930, 5
      %v3649 = vsel %vm1210, %v3646, %v3648
      %v3650 = vrot.slane %v2939, 5
      %v3651 = vsel %vm1210, %v3648, %v3650
      %v3652 = vrot.slane %v2948, 5
      %v3653 = vsel %vm1210, %v3650, %v3652
      %v3654 = vrot.slane %v2957, 5
      %v3655 = vsel %vm1210, %v3652, %v3654
      %v3656 = vrot.slane %v2966, 5
      %v3657 = vsel %vm1210, %v3654, %v3656
      %v3658 = vrot.slane %v2975, 5
      %v3659 = vsel %vm1210, %v3656, %v3658
      %v3660 = vrot.slane %v2984, 5
      %v3661 = vsel %vm1210, %v3658, %v3660
      %v3662 = vrot.slane %v2993, 5
      %v3663 = vsel %vm1210, %v3660, %v3662
      %v3664 = vrot.slane %v3002, 5
      %v3665 = vsel %vm1210, %v3662, %v3664
      %v3666 = vrot.slane %v3011, 5
      %v3667 = vsel %vm1210, %v3664, %v3666
      %v3668 = vrot.slane %v3020, 5
      %v3669 = vsel %vm1210, %v3666, %v3668
      %v3670 = vrot.slane %v3029, 5
      %v3671 = vsel %vm1210, %v3668, %v3670
      %v3672 = vrot.slane %v3038, 5
      %v3673 = vsel %vm1210, %v3670, %v3672
      %v3674 = vrot.slane %v3047, 5
      %v3675 = vsel %vm1210, %v3672, %v3674
      %v3676 = vrot.slane %v3056, 5
      %v3677 = vsel %vm1210, %v3674, %v3676
      %v3678 = vrot.slane %v3065, 5
      %v3679 = vsel %vm1210, %v3676, %v3678
      %v3680 = vrot.slane %v3074, 5
      %v3681 = vsel %vm1210, %v3678, %v3680
      %v3682 = vrot.slane %v3083, 5
      %v3683 = vsel %vm1210, %v3680, %v3682
      %v3684 = vrot.slane %v3089, 5
      %v3685 = vsel %vm1210, %v3682, %v3684
      %3686 = vrot.lane.b32.xlu0 %v3639, 32
      %v3687 = vpop.permute.xlu0 %3686
      %3688 = vrot.lane.b32.xlu0 %v3641, 32
      %v3689 = vpop.permute.xlu0 %3688
      %3690 = vrot.lane.b32.xlu0 %v3643, 32
      %v3691 = vpop.permute.xlu0 %3690
      %3692 = vrot.lane.b32.xlu0 %v3645, 32
      %v3693 = vpop.permute.xlu0 %3692
      %3694 = vrot.lane.b32.xlu0 %v3647, 32
      %v3695 = vpop.permute.xlu0 %3694
      %3696 = vrot.lane.b32.xlu0 %v3649, 32
      %v3697 = vpop.permute.xlu0 %3696
      %3698 = vrot.lane.b32.xlu0 %v3651, 32
      %v3699 = vpop.permute.xlu0 %3698
      %3700 = vrot.lane.b32.xlu0 %v3653, 32
      %v3701 = vpop.permute.xlu0 %3700
      %3702 = vrot.lane.b32.xlu0 %v3655, 32
      %v3703 = vpop.permute.xlu0 %3702
      %3704 = vrot.lane.b32.xlu0 %v3657, 32
      %v3705 = vpop.permute.xlu0 %3704
      %3706 = vrot.lane.b32.xlu0 %v3659, 32
      %v3707 = vpop.permute.xlu0 %3706
      %3708 = vrot.lane.b32.xlu0 %v3661, 32
      %v3709 = vpop.permute.xlu0 %3708
      %3710 = vrot.lane.b32.xlu0 %v3663, 32
      %v3711 = vpop.permute.xlu0 %3710
      %3712 = vrot.lane.b32.xlu0 %v3665, 32
      %v3713 = vpop.permute.xlu0 %3712
      %3714 = vrot.lane.b32.xlu0 %v3667, 32
      %v3715 = vpop.permute.xlu0 %3714
      %3716 = vrot.lane.b32.xlu0 %v3669, 32
      %v3717 = vpop.permute.xlu0 %3716
      %3718 = vrot.lane.b32.xlu0 %v3671, 32
      %v3719 = vpop.permute.xlu0 %3718
      %3720 = vrot.lane.b32.xlu0 %v3673, 32
      %v3721 = vpop.permute.xlu0 %3720
      %3722 = vrot.lane.b32.xlu0 %v3675, 32
      %v3723 = vpop.permute.xlu0 %3722
      %3724 = vrot.lane.b32.xlu0 %v3677, 32
      %v3725 = vpop.permute.xlu0 %3724
      %3726 = vrot.lane.b32.xlu0 %v3679, 32
      %v3727 = vpop.permute.xlu0 %3726
      %3728 = vrot.lane.b32.xlu0 %v3681, 32
      %v3729 = vpop.permute.xlu0 %3728
      %3730 = vrot.lane.b32.xlu0 %v3683, 32
      %v3731 = vpop.permute.xlu0 %3730
      %3732 = vrot.lane.b32.xlu0 %v3685, 32
      %v3733 = vpop.permute.xlu0 %3732
      %3734 = vrot.lane.b32.xlu0 %v2894, 64
      %v3735 = vpop.permute.xlu0 %3734
      %3736 = vrot.lane.b32.xlu0 %v2903, 64
      %v3737 = vpop.permute.xlu0 %3736
      %3738 = vrot.lane.b32.xlu0 %v2912, 64
      %v3739 = vpop.permute.xlu0 %3738
      %3740 = vrot.lane.b32.xlu0 %v2921, 64
      %v3741 = vpop.permute.xlu0 %3740
      %3742 = vrot.lane.b32.xlu0 %v2930, 64
      %v3743 = vpop.permute.xlu0 %3742
      %3744 = vrot.lane.b32.xlu0 %v2939, 64
      %v3745 = vpop.permute.xlu0 %3744
      %3746 = vrot.lane.b32.xlu0 %v2948, 64
      %v3747 = vpop.permute.xlu0 %3746
      %3748 = vrot.lane.b32.xlu0 %v2957, 64
      %v3749 = vpop.permute.xlu0 %3748
      %3750 = vrot.lane.b32.xlu0 %v2966, 64
      %v3751 = vpop.permute.xlu0 %3750
      %3752 = vrot.lane.b32.xlu0 %v2975, 64
      %v3753 = vpop.permute.xlu0 %3752
      %3754 = vrot.lane.b32.xlu0 %v2984, 64
      %v3755 = vpop.permute.xlu0 %3754
      %3756 = vrot.lane.b32.xlu0 %v2993, 64
      %v3757 = vpop.permute.xlu0 %3756
      %3758 = vrot.lane.b32.xlu0 %v3002, 64
      %v3759 = vpop.permute.xlu0 %3758
      %3760 = vrot.lane.b32.xlu0 %v3011, 64
      %v3761 = vpop.permute.xlu0 %3760
      %3762 = vrot.lane.b32.xlu0 %v3020, 64
      %v3763 = vpop.permute.xlu0 %3762
      %3764 = vrot.lane.b32.xlu0 %v3029, 64
      %v3765 = vpop.permute.xlu0 %3764
      %3766 = vrot.lane.b32.xlu0 %v3038, 64
      %v3767 = vpop.permute.xlu0 %3766
      %3768 = vrot.lane.b32.xlu0 %v3047, 64
      %v3769 = vpop.permute.xlu0 %3768
      %3770 = vrot.lane.b32.xlu0 %v3056, 64
      %v3771 = vpop.permute.xlu0 %3770
      %3772 = vrot.lane.b32.xlu0 %v3065, 64
      %v3773 = vpop.permute.xlu0 %3772
      %3774 = vrot.lane.b32.xlu0 %v3074, 64
      %v3775 = vpop.permute.xlu0 %3774
      %3776 = vrot.lane.b32.xlu0 %v3083, 64
      %v3777 = vpop.permute.xlu0 %3776
      %3778 = vrot.lane.b32.xlu0 %v3089, 64
      %v3779 = vpop.permute.xlu0 %3778
      %3780 = vrot.lane.b32.xlu0 0, 64
      %v3781 = vpop.permute.xlu0 %3780
      %v3782 = vor.u32 %v3622, %v3284
      %v3783 = vrot.slane %v3632, 1
      %v3784 = vsel %vm588, %v3782, %v3783
      %v3785 = vor.u32 %v3629, %v3783
      %v3786 = vsel %vm588, %v3785, %v3095
      %v3787 = vsel %vm588, %v3096, %v3095
      %3788 = vrot.lane.b32.xlu0 %v3125, 96
      %v3789 = vpop.permute.xlu0 %3788
      %3790 = vrot.lane.b32.xlu0 %v3133, 96
      %v3791 = vpop.permute.xlu0 %3790
      %3792 = vrot.lane.b32.xlu0 %v3141, 96
      %v3793 = vpop.permute.xlu0 %3792
      %3794 = vrot.lane.b32.xlu0 %v3149, 96
      %v3795 = vpop.permute.xlu0 %3794
      %3796 = vrot.lane.b32.xlu0 %v3157, 96
      %v3797 = vpop.permute.xlu0 %3796
      %3798 = vrot.lane.b32.xlu0 %v3165, 96
      %v3799 = vpop.permute.xlu0 %3798
      %3800 = vrot.lane.b32.xlu0 %v3173, 96
      %v3801 = vpop.permute.xlu0 %3800
      %3802 = vrot.lane.b32.xlu0 %v3181, 96
      %v3803 = vpop.permute.xlu0 %3802
      %3804 = vrot.lane.b32.xlu0 %v3189, 96
      %v3805 = vpop.permute.xlu0 %3804
      %3806 = vrot.lane.b32.xlu0 %v3197, 96
      %v3807 = vpop.permute.xlu0 %3806
      %3808 = vrot.lane.b32.xlu0 %v3205, 96
      %v3809 = vpop.permute.xlu0 %3808
      %3810 = vrot.lane.b32.xlu0 %v3213, 96
      %v3811 = vpop.permute.xlu0 %3810
      %3812 = vrot.lane.b32.xlu0 %v3221, 96
      %v3813 = vpop.permute.xlu0 %3812
      %3814 = vrot.lane.b32.xlu0 %v3229, 96
      %v3815 = vpop.permute.xlu0 %3814
      %3816 = vrot.lane.b32.xlu0 %v3237, 96
      %v3817 = vpop.permute.xlu0 %3816
      %3818 = vrot.lane.b32.xlu0 %v3245, 96
      %v3819 = vpop.permute.xlu0 %3818
      %3820 = vrot.lane.b32.xlu0 %v3253, 96
      %v3821 = vpop.permute.xlu0 %3820
      %3822 = vrot.lane.b32.xlu0 %v3261, 96
      %v3823 = vpop.permute.xlu0 %3822
      %3824 = vrot.lane.b32.xlu0 %v3269, 96
      %v3825 = vpop.permute.xlu0 %3824
      %3826 = vrot.lane.b32.xlu0 %v3277, 96
      %v3827 = vpop.permute.xlu0 %3826
      %3828 = vrot.lane.b32.xlu0 %v3285, 96
      %v3829 = vpop.permute.xlu0 %3828
      %3830 = vrot.lane.b32.xlu0 %v3784, 96
      %v3831 = vpop.permute.xlu0 %3830
      %3832 = vrot.lane.b32.xlu0 %v3786, 96
      %v3833 = vpop.permute.xlu0 %3832
      %3834 = vrot.lane.b32.xlu0 %v3787, 96
      %v3835 = vpop.permute.xlu0 %3834
      %v3836 = vrot.slane %v3089, 1
      %v3837 = vsel %vm858, %v3383, %v3836
      %v3838 = vsel %vm858, %v3836, %v3336
      %v3839 = vsel %vm858, %v3336, %v3336
      %vm3840 = vcmask 261120
      %v3842 = vsel %vm3840, 0, %v3287
      %v3844 = vsel %vm3840, %v3088, %v3289
      %v3846 = vsel %vm3840, %v2885, %v3291
      %v3848 = vsel %vm3840, %v2894, %v3293
      %v3850 = vsel %vm3840, %v2903, %v3295
      %v3852 = vsel %vm3840, %v2912, %v3297
      %v3854 = vsel %vm3840, %v2921, %v3299
      %v3856 = vsel %vm3840, %v2930, %v3301
      %v3858 = vsel %vm3840, %v2939, %v3303
      %v3860 = vsel %vm3840, %v2948, %v3305
      %v3862 = vsel %vm3840, %v2957, %v3307
      %v3864 = vsel %vm3840, %v2966, %v3309
      %v3866 = vsel %vm3840, %v2975, %v3311
      %v3868 = vsel %vm3840, %v2984, %v3313
      %v3870 = vsel %vm3840, %v2993, %v3315
      %v3872 = vsel %vm3840, %v3002, %v3317
      %v3874 = vsel %vm3840, %v3011, %v3319
      %v3876 = vsel %vm3840, %v3020, %v3321
      %v3878 = vsel %vm3840, %v3029, %v3323
      %v3880 = vsel %vm3840, %v3038, %v3325
      %v3882 = vsel %vm3840, %v3047, %v3327
      %v3884 = vsel %vm3840, %v3056, %v3329
      %v3886 = vsel %vm3840, %v3065, %v3331
      %v3888 = vsel %vm3840, %v3074, %v3333
      %vm3889 = vcmask 523264
      %v3891 = vsel %vm3889, %v3842, %v3386
      %v3893 = vsel %vm3889, %v3844, %v3388
      %v3895 = vsel %vm3889, %v3846, %v3390
      %v3897 = vsel %vm3889, %v3848, %v3392
      %v3899 = vsel %vm3889, %v3850, %v3394
      %v3901 = vsel %vm3889, %v3852, %v3396
      %v3903 = vsel %vm3889, %v3854, %v3398
      %v3905 = vsel %vm3889, %v3856, %v3400
      %v3907 = vsel %vm3889, %v3858, %v3402
      %v3909 = vsel %vm3889, %v3860, %v3404
      %v3911 = vsel %vm3889, %v3862, %v3406
      %v3913 = vsel %vm3889, %v3864, %v3408
      %v3915 = vsel %vm3889, %v3866, %v3410
      %v3917 = vsel %vm3889, %v3868, %v3412
      %v3919 = vsel %vm3889, %v3870, %v3414
      %v3921 = vsel %vm3889, %v3872, %v3416
      %v3923 = vsel %vm3889, %v3874, %v3418
      %v3925 = vsel %vm3889, %v3876, %v3420
      %v3927 = vsel %vm3889, %v3878, %v3422
      %v3929 = vsel %vm3889, %v3880, %v3424
      %v3931 = vsel %vm3889, %v3882, %v3426
      %v3933 = vsel %vm3889, %v3884, %v3428
      %v3935 = vsel %vm3889, %v3886, %v3430
      %v3937 = vsel %vm3889, %v3888, %v3432
      %vm3938 = vcmask 785408
      %v3940 = vsel %vm3938, %v3891, %v3484
      %v3943 = vsel %vm3938, %v3893, %v3486
      %v3946 = vsel %vm3938, %v3895, %v3488
      %v3949 = vsel %vm3938, %v3897, %v3490
      %v3952 = vsel %vm3938, %v3899, %v3492
      %v3955 = vsel %vm3938, %v3901, %v3494
      %v3958 = vsel %vm3938, %v3903, %v3496
      %v3961 = vsel %vm3938, %v3905, %v3498
      %v3964 = vsel %vm3938, %v3907, %v3500
      %v3967 = vsel %vm3938, %v3909, %v3502
      %v3970 = vsel %vm3938, %v3911, %v3504
      %v3973 = vsel %vm3938, %v3913, %v3506
      %v3976 = vsel %vm3938, %v3915, %v3508
      %v3979 = vsel %vm3938, %v3917, %v3510
      %v3982 = vsel %vm3938, %v3919, %v3512
      %v3985 = vsel %vm3938, %v3921, %v3514
      %v3988 = vsel %vm3938, %v3923, %v3516
      %v3991 = vsel %vm3938, %v3925, %v3518
      %v3994 = vsel %vm3938, %v3927, %v3520
      %v3997 = vsel %vm3938, %v3929, %v3522
      %v4000 = vsel %vm3938, %v3931, %v3524
      %v4003 = vsel %vm3938, %v3933, %v3526
      %v4006 = vsel %vm3938, %v3935, %v3528
      %v4009 = vsel %vm3938, %v3937, %v3530
      %v4013 = vsel %vm3840, %v3537, %v3687
      %v4016 = vsel %vm3840, %v3541, %v3689
      %v4019 = vsel %vm3840, %v3545, %v3691
      %v4022 = vsel %vm3840, %v3549, %v3693
      %v4025 = vsel %vm3840, %v3553, %v3695
      %v4028 = vsel %vm3840, %v3557, %v3697
      %v4031 = vsel %vm3840, %v3561, %v3699
      %v4034 = vsel %vm3840, %v3565, %v3701
      %v4037 = vsel %vm3840, %v3569, %v3703
      %v4040 = vsel %vm3840, %v3573, %v3705
      %v4043 = vsel %vm3840, %v3577, %v3707
      %v4046 = vsel %vm3840, %v3581, %v3709
      %v4049 = vsel %vm3840, %v3585, %v3711
      %v4052 = vsel %vm3840, %v3589, %v3713
      %v4055 = vsel %vm3840, %v3593, %v3715
      %v4058 = vsel %vm3840, %v3597, %v3717
      %v4061 = vsel %vm3840, %v3601, %v3719
      %v4064 = vsel %vm3840, %v3605, %v3721
      %v4067 = vsel %vm3840, %v3609, %v3723
      %v4070 = vsel %vm3840, %v3613, %v3725
      %v4073 = vsel %vm3840, %v3617, %v3727
      %v4076 = vsel %vm3840, %v3621, %v3729
      %v4079 = vsel %vm3840, %v3627, %v3731
      %v4082 = vsel %vm3840, %v3636, %v3733
      %v4084 = vsel %vm3889, %v4013, %v3735
      %v4086 = vsel %vm3889, %v4016, %v3737
      %v4088 = vsel %vm3889, %v4019, %v3739
      %v4090 = vsel %vm3889, %v4022, %v3741
      %v4092 = vsel %vm3889, %v4025, %v3743
      %v4094 = vsel %vm3889, %v4028, %v3745
      %v4096 = vsel %vm3889, %v4031, %v3747
      %v4098 = vsel %vm3889, %v4034, %v3749
      %v4100 = vsel %vm3889, %v4037, %v3751
      %v4102 = vsel %vm3889, %v4040, %v3753
      %v4104 = vsel %vm3889, %v4043, %v3755
      %v4106 = vsel %vm3889, %v4046, %v3757
      %v4108 = vsel %vm3889, %v4049, %v3759
      %v4110 = vsel %vm3889, %v4052, %v3761
      %v4112 = vsel %vm3889, %v4055, %v3763
      %v4114 = vsel %vm3889, %v4058, %v3765
      %v4116 = vsel %vm3889, %v4061, %v3767
      %v4118 = vsel %vm3889, %v4064, %v3769
      %v4120 = vsel %vm3889, %v4067, %v3771
      %v4122 = vsel %vm3889, %v4070, %v3773
      %v4124 = vsel %vm3889, %v4073, %v3775
      %v4126 = vsel %vm3889, %v4076, %v3777
      %v4128 = vsel %vm3889, %v4079, %v3779
      %v4130 = vsel %vm3889, %v4082, %v3781
      %v4132 = vsel %vm3938, %v4084, %v3789
      %v4135 = vsel %vm3938, %v4086, %v3791
      %v4138 = vsel %vm3938, %v4088, %v3793
      %v4141 = vsel %vm3938, %v4090, %v3795
      %v4144 = vsel %vm3938, %v4092, %v3797
      %v4147 = vsel %vm3938, %v4094, %v3799
      %v4150 = vsel %vm3938, %v4096, %v3801
      %v4153 = vsel %vm3938, %v4098, %v3803
      %v4156 = vsel %vm3938, %v4100, %v3805
      %v4159 = vsel %vm3938, %v4102, %v3807
      %v4162 = vsel %vm3938, %v4104, %v3809
      %v4165 = vsel %vm3938, %v4106, %v3811
      %v4168 = vsel %vm3938, %v4108, %v3813
      %v4171 = vsel %vm3938, %v4110, %v3815
      %v4174 = vsel %vm3938, %v4112, %v3817
      %v4177 = vsel %vm3938, %v4114, %v3819
      %v4180 = vsel %vm3938, %v4116, %v3821
      %v4183 = vsel %vm3938, %v4118, %v3823
      %v4186 = vsel %vm3938, %v4120, %v3825
      %v4189 = vsel %vm3938, %v4122, %v3827
      %v4192 = vsel %vm3938, %v4124, %v3829
      %v4195 = vsel %vm3938, %v4126, %v3831
      %v4198 = vsel %vm3938, %v4128, %v3833
      %v4201 = vsel %vm3938, %v4130, %v3835
      %v4203 = vld [vmem:[%s4] sm:$0xf]
      %v4204 = vld [vmem:[%s4 + $0x4] sm:$0xf]
      %v4205 = vld [vmem:[%s4 + $0x8] sm:$0xf]
      %v4206 = vld [vmem:[%s4 + $0xc] sm:$0xf]
      %v4207 = vld [vmem:[%s4 + $0x10] sm:$0xf]
      %v4208 = vld [vmem:[%s4 + $0x14] sm:$0xf]
      %v4209 = vld [vmem:[%s4 + $0x18] sm:$0xf]
      %v4210 = vld [vmem:[%s4 + $0x1c] sm:$0xf]
      %v4211 = vld [vmem:[%s4 + $0x20] sm:$0xf]
      %v4212 = vld [vmem:[%s4 + $0x24] sm:$0xf]
      %v4213 = vld [vmem:[%s4 + $0x28] sm:$0xf]
      %v4214 = vld [vmem:[%s4 + $0x2c] sm:$0xf]
      %v4215 = vld [vmem:[%s4 + $0x30] sm:$0xf]
      %v4216 = vld [vmem:[%s4 + $0x34] sm:$0xf]
      %v4217 = vld [vmem:[%s4 + $0x38] sm:$0xf]
      %v4218 = vld [vmem:[%s4 + $0x3c] sm:$0xf]
      %v4219 = vld [vmem:[%s4 + $0x40] sm:$0xf]
      %v4220 = vld [vmem:[%s4 + $0x44] sm:$0xf]
      %v4221 = vld [vmem:[%s4 + $0x48] sm:$0xf]
      %v4222 = vld [vmem:[%s4 + $0x4c] sm:$0xf]
      %v4223 = vld [vmem:[%s4 + $0x50] sm:$0xf]
      %v4224 = vld [vmem:[%s4 + $0x54] sm:$0xf]
      %v4225 = vld [vmem:[%s4 + $0x58] sm:$0xf]
      %v4226 = vld [vmem:[%s4 + $0x5c] sm:$0xf]
      %v4227 = vld [vmem:[%s4 + $0x60] sm:$0xf]
      %v4228 = vld [vmem:[%s4 + $0x64] sm:$0xf]
      %v4229 = vld [vmem:[%s4 + $0x68] sm:$0xf]
      %v4230 = vld [vmem:[%s4 + $0x6c] sm:$0xf]
      %v4231 = vld [vmem:[%s4 + $0x70] sm:$0xf]
      %v4232 = vld [vmem:[%s4 + $0x74] sm:$0xf]
      %v4233 = vld [vmem:[%s4 + $0x78] sm:$0xf]
      %v4234 = vld [vmem:[%s4 + $0x7c] sm:$0xf]
      %v4235 = vld [vmem:[%s4 + $0x80] sm:$0xf]
      %v4236 = vld [vmem:[%s4 + $0x84] sm:$0xf]
      %v4237 = vld [vmem:[%s4 + $0x88] sm:$0xf]
      %v4238 = vld [vmem:[%s4 + $0x8c] sm:$0xf]
      %v4239 = vld [vmem:[%s5] sm:$0x1]
      %v4241 = vlaneseq
      %v4242 = vshrl.u32 %v4241, 7
      %v4243 = vsub.s32 0, %v4242
      %v4244 = vrot.slane %v4239, %v4243
      %v4282 = vunpack.c.l.b16 %v4203
      %v4283 = vunpack.c.l.b16 %v4204
      %v4284 = vunpack.c.l.b16 %v4205
      %v4285 = vunpack.c.l.b16 %v4206
      %v4286 = vunpack.c.l.b16 %v4207
      %v4287 = vunpack.c.l.b16 %v4208
      %v4288 = vunpack.c.l.b16 %v4209
      %v4289 = vunpack.c.l.b16 %v4210
      %v4290 = vunpack.c.l.b16 %v4211
      %v4291 = vunpack.c.l.b16 %v4212
      %v4292 = vunpack.c.l.b16 %v4213
      %v4293 = vunpack.c.l.b16 %v4214
      %v4294 = vunpack.c.l.b16 %v4215
      %v4295 = vunpack.c.l.b16 %v4216
      %v4296 = vunpack.c.l.b16 %v4217
      %v4297 = vunpack.c.l.b16 %v4218
      %v4298 = vunpack.c.l.b16 %v4219
      %v4299 = vunpack.c.l.b16 %v4220
      %v4300 = vunpack.c.l.b16 %v4221
      %v4301 = vunpack.c.l.b16 %v4222
      %v4302 = vunpack.c.l.b16 %v4223
      %v4303 = vunpack.c.l.b16 %v4224
      %v4304 = vunpack.c.l.b16 %v4225
      %v4305 = vunpack.c.l.b16 %v4226
      %v4306 = vunpack.c.l.b16 %v4227
      %v4307 = vunpack.c.l.b16 %v4228
      %v4308 = vunpack.c.l.b16 %v4229
      %v4309 = vunpack.c.l.b16 %v4230
      %v4310 = vunpack.c.l.b16 %v4231
      %v4311 = vunpack.c.l.b16 %v4232
      %v4312 = vunpack.c.l.b16 %v4233
      %v4313 = vunpack.c.l.b16 %v4234
      %v4314 = vunpack.c.l.b16 %v4235
      %v4315 = vunpack.c.l.b16 %v4236
      %v4316 = vunpack.c.l.b16 %v4237
      %v4317 = vunpack.c.l.b16 %v4238
      %v4318 = vpack.c.b16 %v4283, %v4282
      %v4319 = vpack.c.b16 %v4285, %v4284
      %v4320 = vpack.c.b16 %v4287, %v4286
      %v4321 = vpack.c.b16 %v4289, %v4288
      %v4322 = vpack.c.b16 %v4291, %v4290
      %v4323 = vpack.c.b16 %v4293, %v4292
      %v4324 = vpack.c.b16 %v4295, %v4294
      %v4325 = vpack.c.b16 %v4297, %v4296
      %v4326 = vpack.c.b16 %v4299, %v4298
      %v4327 = vpack.c.b16 %v4301, %v4300
      %v4328 = vpack.c.b16 %v4303, %v4302
      %v4329 = vpack.c.b16 %v4305, %v4304
      %v4330 = vpack.c.b16 %v4307, %v4306
      %v4331 = vpack.c.b16 %v4309, %v4308
      %v4332 = vpack.c.b16 %v4311, %v4310
      %v4333 = vpack.c.b16 %v4313, %v4312
      %v4334 = vpack.c.b16 %v4315, %v4314
      %v4335 = vpack.c.b16 %v4317, %v4316
      %v4355 = vsel %vm3840, %v3344, 0
      %v4358 = vsel %vm3840, %v3346, 0
      %v4361 = vsel %vm3840, %v3348, 0
      %v4364 = vsel %vm3840, %v3350, 0
      %v4367 = vsel %vm3840, %v3352, 0
      %v4370 = vsel %vm3840, %v3354, 0
      %v4373 = vsel %vm3840, %v3356, 0
      %v4376 = vsel %vm3840, %v3358, 0
      %v4379 = vsel %vm3840, %v3360, 0
      %v4382 = vsel %vm3840, %v3362, 0
      %v4385 = vsel %vm3840, %v3364, 0
      %v4388 = vsel %vm3840, %v3366, 0
      %v4391 = vsel %vm3840, %v3368, 0
      %v4394 = vsel %vm3840, %v3370, 0
      %v4397 = vsel %vm3840, %v3372, 0
      %v4400 = vsel %vm3840, %v3374, 0
      %v4403 = vsel %vm3840, %v3376, 0
      %v4406 = vsel %vm3840, %v3378, 0
      %v4409 = vsel %vm3840, %v3380, 0
      %v4412 = vsel %vm3840, %v3382, 0
      %v4415 = vsel %vm3840, %v3384, 0
      %v4418 = vsel %vm3840, %v3837, 0
      %v4421 = vsel %vm3840, %v3838, 0
      %v4424 = vsel %vm3840, %v3839, 0
      %4426 = vmatprep.subr.bf16.mxu0 0
      %4427 = vmatpush1.bf16.msra.mxu0 %v4318
      %4428 = vmatprep.subr.bf16.mxu0 0
      %4429 = vmatpush1.bf16.msra.mxu0 %v4319
      %4430 = vmatprep.subr.bf16.mxu0 0
      %4431 = vmatpush1.bf16.msra.mxu0 %v4320
      %4432 = vmatprep.subr.bf16.mxu0 0
      %4433 = vmatpush1.bf16.msra.mxu0 %v4321
      %4434 = vmatprep.subr.bf16.mxu0 0
      %4435 = vmatpush1.bf16.msra.mxu0 %v4322
      %4436 = vmatprep.subr.bf16.mxu0 0
      %4437 = vmatpush1.bf16.msra.mxu0 %v4323
      %4438 = vmatprep.subr.bf16.mxu0 0
      %4439 = vmatpush1.bf16.msra.mxu0 %v4324
      %4440 = vmatprep.subr.bf16.mxu0 0
      %4441 = vmatpush1.bf16.msra.mxu0 %v4325
      %4442 = vmatprep.subr.bf16.mxu0 0
      %4443 = vmatpush1.bf16.msra.mxu0 %v4326
      %4444 = vmatprep.subr.bf16.mxu0 0
      %4445 = vmatpush1.bf16.msra.mxu0 %v4327
      %4446 = vmatprep.subr.bf16.mxu0 0
      %4447 = vmatpush1.bf16.msra.mxu0 %v4328
      %4448 = vmatprep.subr.bf16.mxu0 0
      %4449 = vmatpush1.bf16.msra.mxu0 %v4329
      %4450 = vmatprep.subr.bf16.mxu0 0
      %4451 = vmatpush1.bf16.msra.mxu0 %v4330
      %4452 = vmatprep.subr.bf16.mxu0 0
      %4453 = vmatpush1.bf16.msra.mxu0 %v4331
      %4454 = vmatprep.subr.bf16.mxu0 0
      %4455 = vmatpush1.bf16.msra.mxu0 %v4332
      %4456 = vmatprep.subr.bf16.mxu0 0
      %4457 = vmatpush1.bf16.msra.mxu0 %v4333
      %4458 = vmatprep.mubr.bf16.mxu0 %v4132
      %4459 = vmatmul.mubr.bf16.gmra.mrb[0].mxu0 %v3940
      %v4460 = vpop.f32.mrb[0].mxu0
      %v4461 = vadd.f32 %v4244, %v4460
      %v4462 = vpop.f32.mrb[0].mxu0
      %v4463 = vpop.f32.mrb[0].mxu0
      %v4464 = vadd.f32 %v4244, %v4463
      %v4465 = vpop.f32.mrb[0].mxu0
      %4466 = vmatprep.mubr.bf16.mxu0 %v4135
      %4467 = vmatmul.mubr.bf16.gmra.mrb[0].mxu0 %v3943
      %v4468 = vpop.f32.mrb[0].mxu0
      %v4469 = vadd.f32 %v4244, %v4468
      %v4470 = vpop.f32.mrb[0].mxu0
      %v4471 = vpop.f32.mrb[0].mxu0
      %v4472 = vadd.f32 %v4244, %v4471
      %v4473 = vpop.f32.mrb[0].mxu0
      %4474 = vmatprep.mubr.bf16.mxu0 %v4138
      %4475 = vmatmul.mubr.bf16.gmra.mrb[0].mxu0 %v3946
      %v4476 = vpop.f32.mrb[0].mxu0
      %v4477 = vadd.f32 %v4244, %v4476
      %v4478 = vpop.f32.mrb[0].mxu0
      %v4479 = vpop.f32.mrb[0].mxu0
      %v4480 = vadd.f32 %v4244, %v4479
      %v4481 = vpop.f32.mrb[0].mxu0
      %4482 = vmatprep.mubr.bf16.mxu0 %v4141
      %4483 = vmatmul.mubr.bf16.gmra.mrb[0].mxu0 %v3949
      %v4484 = vpop.f32.mrb[0].mxu0
      %v4485 = vadd.f32 %v4244, %v4484
      %v4486 = vpop.f32.mrb[0].mxu0
      %v4487 = vpop.f32.mrb[0].mxu0
      %v4488 = vadd.f32 %v4244, %v4487
      %v4489 = vpop.f32.mrb[0].mxu0
      %4490 = vmatprep.mubr.bf16.mxu0 %v4144
      %4491 = vmatmul.mubr.bf16.gmra.mrb[0].mxu0 %v3952
      %v4492 = vpop.f32.mrb[0].mxu0
      %v4493 = vadd.f32 %v4244, %v4492
      %v4494 = vpop.f32.mrb[0].mxu0
      %v4495 = vpop.f32.mrb[0].mxu0
      %v4496 = vadd.f32 %v4244, %v4495
      %v4497 = vpop.f32.mrb[0].mxu0
      %4498 = vmatprep.mubr.bf16.mxu0 %v4147
      %4499 = vmatmul.mubr.bf16.gmra.mrb[0].mxu0 %v3955
      %v4500 = vpop.f32.mrb[0].mxu0
      %v4501 = vadd.f32 %v4244, %v4500
      %v4502 = vpop.f32.mrb[0].mxu0
      %v4503 = vpop.f32.mrb[0].mxu0
      %v4504 = vadd.f32 %v4244, %v4503
      %v4505 = vpop.f32.mrb[0].mxu0
      %4506 = vmatprep.mubr.bf16.mxu0 %v4150
      %4507 = vmatmul.mubr.bf16.gmra.mrb[0].mxu0 %v3958
      %v4508 = vpop.f32.mrb[0].mxu0
      %v4509 = vadd.f32 %v4244, %v4508
      %v4510 = vpop.f32.mrb[0].mxu0
      %v4511 = vpop.f32.mrb[0].mxu0
      %v4512 = vadd.f32 %v4244, %v4511
      %v4513 = vpop.f32.mrb[0].mxu0
      %4514 = vmatprep.mubr.bf16.mxu0 %v4153
      %4515 = vmatmul.mubr.bf16.gmra.mrb[0].mxu0 %v3961
      %v4516 = vpop.f32.mrb[0].mxu0
      %v4517 = vadd.f32 %v4244, %v4516
      %v4518 = vpop.f32.mrb[0].mxu0
      %v4519 = vpop.f32.mrb[0].mxu0
      %v4520 = vadd.f32 %v4244, %v4519
      %v4521 = vpop.f32.mrb[0].mxu0
      %4522 = vmatprep.mubr.bf16.mxu0 %v4156
      %4523 = vmatmul.mubr.bf16.gmra.mrb[0].mxu0 %v3964
      %v4524 = vpop.f32.mrb[0].mxu0
      %v4525 = vadd.f32 %v4244, %v4524
      %v4526 = vpop.f32.mrb[0].mxu0
      %v4527 = vpop.f32.mrb[0].mxu0
      %v4528 = vadd.f32 %v4244, %v4527
      %v4529 = vpop.f32.mrb[0].mxu0
      %4530 = vmatprep.mubr.bf16.mxu0 %v4159
      %4531 = vmatmul.mubr.bf16.gmra.mrb[0].mxu0 %v3967
      %v4532 = vpop.f32.mrb[0].mxu0
      %v4533 = vadd.f32 %v4244, %v4532
      %v4534 = vpop.f32.mrb[0].mxu0
      %v4535 = vpop.f32.mrb[0].mxu0
      %v4536 = vadd.f32 %v4244, %v4535
      %v4537 = vpop.f32.mrb[0].mxu0
      %4538 = vmatprep.mubr.bf16.mxu0 %v4162
      %4539 = vmatmul.mubr.bf16.gmra.mrb[0].mxu0 %v3970
      %v4540 = vpop.f32.mrb[0].mxu0
      %v4541 = vadd.f32 %v4244, %v4540
      %v4542 = vpop.f32.mrb[0].mxu0
      %v4543 = vpop.f32.mrb[0].mxu0
      %v4544 = vadd.f32 %v4244, %v4543
      %v4545 = vpop.f32.mrb[0].mxu0
      %4546 = vmatprep.mubr.bf16.mxu0 %v4165
      %4547 = vmatmul.mubr.bf16.gmra.mrb[0].mxu0 %v3973
      %v4548 = vpop.f32.mrb[0].mxu0
      %v4549 = vadd.f32 %v4244, %v4548
      %v4550 = vpop.f32.mrb[0].mxu0
      %v4551 = vpop.f32.mrb[0].mxu0
      %v4552 = vadd.f32 %v4244, %v4551
      %v4553 = vpop.f32.mrb[0].mxu0
      %4554 = vmatprep.mubr.bf16.mxu0 %v4168
      %4555 = vmatmul.mubr.bf16.gmra.mrb[0].mxu0 %v3976
      %v4556 = vpop.f32.mrb[0].mxu0
      %v4557 = vadd.f32 %v4244, %v4556
      %v4558 = vpop.f32.mrb[0].mxu0
      %v4559 = vpop.f32.mrb[0].mxu0
      %v4560 = vadd.f32 %v4244, %v4559
      %v4561 = vpop.f32.mrb[0].mxu0
      %4562 = vmatprep.mubr.bf16.mxu0 %v4171
      %4563 = vmatmul.mubr.bf16.gmra.mrb[0].mxu0 %v3979
      %v4564 = vpop.f32.mrb[0].mxu0
      %v4565 = vadd.f32 %v4244, %v4564
      %v4566 = vpop.f32.mrb[0].mxu0
      %v4567 = vpop.f32.mrb[0].mxu0
      %v4568 = vadd.f32 %v4244, %v4567
      %v4569 = vpop.f32.mrb[0].mxu0
      %4570 = vmatprep.mubr.bf16.mxu0 %v4174
      %4571 = vmatmul.mubr.bf16.gmra.mrb[0].mxu0 %v3982
      %v4572 = vpop.f32.mrb[0].mxu0
      %v4573 = vadd.f32 %v4244, %v4572
      %v4574 = vpop.f32.mrb[0].mxu0
      %v4575 = vpop.f32.mrb[0].mxu0
      %v4576 = vadd.f32 %v4244, %v4575
      %v4577 = vpop.f32.mrb[0].mxu0
      %4578 = vmatprep.mubr.bf16.mxu0 %v4177
      %4579 = vmatmul.mubr.bf16.gmra.mrb[0].mxu0 %v3985
      %v4580 = vpop.f32.mrb[0].mxu0
      %v4581 = vadd.f32 %v4244, %v4580
      %v4582 = vpop.f32.mrb[0].mxu0
      %v4583 = vpop.f32.mrb[0].mxu0
      %v4584 = vadd.f32 %v4244, %v4583
      %v4585 = vpop.f32.mrb[0].mxu0
      %4586 = vmatprep.mubr.bf16.mxu0 %v4180
      %4587 = vmatmul.mubr.bf16.gmra.mrb[0].mxu0 %v3988
      %v4588 = vpop.f32.mrb[0].mxu0
      %v4589 = vadd.f32 %v4244, %v4588
      %v4590 = vpop.f32.mrb[0].mxu0
      %v4591 = vpop.f32.mrb[0].mxu0
      %v4592 = vadd.f32 %v4244, %v4591
      %v4593 = vpop.f32.mrb[0].mxu0
      %4594 = vmatprep.mubr.bf16.mxu0 %v4183
      %4595 = vmatmul.mubr.bf16.gmra.mrb[0].mxu0 %v3991
      %v4596 = vpop.f32.mrb[0].mxu0
      %v4597 = vadd.f32 %v4244, %v4596
      %v4598 = vpop.f32.mrb[0].mxu0
      %v4599 = vpop.f32.mrb[0].mxu0
      %v4600 = vadd.f32 %v4244, %v4599
      %v4601 = vpop.f32.mrb[0].mxu0
      %4602 = vmatprep.mubr.bf16.mxu0 %v4186
      %4603 = vmatmul.mubr.bf16.gmra.mrb[0].mxu0 %v3994
      %v4604 = vpop.f32.mrb[0].mxu0
      %v4605 = vadd.f32 %v4244, %v4604
      %v4606 = vpop.f32.mrb[0].mxu0
      %v4607 = vpop.f32.mrb[0].mxu0
      %v4608 = vadd.f32 %v4244, %v4607
      %v4609 = vpop.f32.mrb[0].mxu0
      %4610 = vmatprep.mubr.bf16.mxu0 %v4189
      %4611 = vmatmul.mubr.bf16.gmra.mrb[0].mxu0 %v3997
      %v4612 = vpop.f32.mrb[0].mxu0
      %v4613 = vadd.f32 %v4244, %v4612
      %v4614 = vpop.f32.mrb[0].mxu0
      %v4615 = vpop.f32.mrb[0].mxu0
      %v4616 = vadd.f32 %v4244, %v4615
      %v4617 = vpop.f32.mrb[0].mxu0
      %4618 = vmatprep.mubr.bf16.mxu0 %v4192
      %4619 = vmatmul.mubr.bf16.gmra.mrb[0].mxu0 %v4000
      %v4620 = vpop.f32.mrb[0].mxu0
      %v4621 = vadd.f32 %v4244, %v4620
      %v4622 = vpop.f32.mrb[0].mxu0
      %v4623 = vpop.f32.mrb[0].mxu0
      %v4624 = vadd.f32 %v4244, %v4623
      %v4625 = vpop.f32.mrb[0].mxu0
      %4626 = vmatprep.mubr.bf16.mxu0 %v4195
      %4627 = vmatmul.mubr.bf16.gmra.mrb[0].mxu0 %v4003
      %v4628 = vpop.f32.mrb[0].mxu0
      %v4629 = vadd.f32 %v4244, %v4628
      %v4630 = vpop.f32.mrb[0].mxu0
      %v4631 = vpop.f32.mrb[0].mxu0
      %v4632 = vadd.f32 %v4244, %v4631
      %v4633 = vpop.f32.mrb[0].mxu0
      %4634 = vmatprep.mubr.bf16.mxu0 %v4198
      %4635 = vmatmul.mubr.bf16.gmra.mrb[0].mxu0 %v4006
      %v4636 = vpop.f32.mrb[0].mxu0
      %v4637 = vadd.f32 %v4244, %v4636
      %v4638 = vpop.f32.mrb[0].mxu0
      %v4639 = vpop.f32.mrb[0].mxu0
      %v4640 = vadd.f32 %v4244, %v4639
      %v4641 = vpop.f32.mrb[0].mxu0
      %4642 = vmatprep.mubr.bf16.mxu0 %v4201
      %4643 = vmatmul.mubr.bf16.gmra.mrb[0].mxu0 %v4009
      %v4644 = vpop.f32.mrb[0].mxu0
      %v4645 = vadd.f32 %v4244, %v4644
      %v4646 = vpop.f32.mrb[0].mxu0
      %v4647 = vpop.f32.mrb[0].mxu0
      %v4648 = vadd.f32 %v4244, %v4647
      %v4649 = vpop.f32.mrb[0].mxu0
      %4650 = vdwg.mxu0
      %4651 = vmatprep.subr.bf16.mxu0 0
      %4652 = vmatpush1.bf16.msra.mxu0 %v4334
      %4653 = vmatprep.subr.bf16.mxu0 0
      %4654 = vmatpush1.bf16.msra.mxu0 %v4335
      %4655 = vmatprep.subr.bf16.mxu0 0
      %4656 = vmatpush1.bf16.msra.mxu0 0
      %4657 = vmatprep.subr.bf16.mxu0 0
      %4658 = vmatpush1.bf16.msra.mxu0 0
      %4659 = vmatprep.subr.bf16.mxu0 0
      %4660 = vmatpush1.bf16.msra.mxu0 0
      %4661 = vmatprep.subr.bf16.mxu0 0
      %4662 = vmatpush1.bf16.msra.mxu0 0
      %4663 = vmatprep.subr.bf16.mxu0 0
      %4664 = vmatpush1.bf16.msra.mxu0 0
      %4665 = vmatprep.subr.bf16.mxu0 0
      %4666 = vmatpush1.bf16.msra.mxu0 0
      %4667 = vmatprep.subr.bf16.mxu0 0
      %4668 = vmatpush1.bf16.msra.mxu0 0
      %4669 = vmatprep.subr.bf16.mxu0 0
      %4670 = vmatpush1.bf16.msra.mxu0 0
      %4671 = vmatprep.subr.bf16.mxu0 0
      %4672 = vmatpush1.bf16.msra.mxu0 0
      %4673 = vmatprep.subr.bf16.mxu0 0
      %4674 = vmatpush1.bf16.msra.mxu0 0
      %4675 = vmatprep.subr.bf16.mxu0 0
      %4676 = vmatpush1.bf16.msra.mxu0 0
      %4677 = vmatprep.subr.bf16.mxu0 0
      %4678 = vmatpush1.bf16.msra.mxu0 0
      %4679 = vmatprep.subr.bf16.mxu0 0
      %4680 = vmatpush1.bf16.msra.mxu0 0
      %4681 = vmatprep.subr.bf16.mxu0 0
      %4682 = vmatpush1.bf16.msra.mxu0 0
      %4683 = vmatprep.mubr.bf16.mxu0 0
      %4684 = vmatmul.mubr.bf16.gmra.mrb[0].mxu0 %v4355
      %v4685 = vpop.f32.mrb[0].mxu0
      %v4686 = vadd.f32 %v4461, %v4685
      %v4687 = vpop.f32.mrb[0].mxu0
      %v4688 = vpop.f32.mrb[0].mxu0
      %v4689 = vadd.f32 %v4464, %v4688
      %v4690 = vpop.f32.mrb[0].mxu0
      %4691 = vmatprep.mubr.bf16.mxu0 0
      %4692 = vmatmul.mubr.bf16.gmra.mrb[0].mxu0 %v4358
      %v4693 = vpop.f32.mrb[0].mxu0
      %v4694 = vadd.f32 %v4469, %v4693
      %v4695 = vpop.f32.mrb[0].mxu0
      %v4696 = vpop.f32.mrb[0].mxu0
      %v4697 = vadd.f32 %v4472, %v4696
      %v4698 = vpop.f32.mrb[0].mxu0
      %4699 = vmatprep.mubr.bf16.mxu0 0
      %4700 = vmatmul.mubr.bf16.gmra.mrb[0].mxu0 %v4361
      %v4701 = vpop.f32.mrb[0].mxu0
      %v4702 = vadd.f32 %v4477, %v4701
      %v4703 = vpop.f32.mrb[0].mxu0
      %v4704 = vpop.f32.mrb[0].mxu0
      %v4705 = vadd.f32 %v4480, %v4704
      %v4706 = vpop.f32.mrb[0].mxu0
      %4707 = vmatprep.mubr.bf16.mxu0 0
      %4708 = vmatmul.mubr.bf16.gmra.mrb[0].mxu0 %v4364
      %v4709 = vpop.f32.mrb[0].mxu0
      %v4710 = vadd.f32 %v4485, %v4709
      %v4711 = vpop.f32.mrb[0].mxu0
      %v4712 = vpop.f32.mrb[0].mxu0
      %v4713 = vadd.f32 %v4488, %v4712
      %v4714 = vpop.f32.mrb[0].mxu0
      %4715 = vmatprep.mubr.bf16.mxu0 0
      %4716 = vmatmul.mubr.bf16.gmra.mrb[0].mxu0 %v4367
      %v4717 = vpop.f32.mrb[0].mxu0
      %v4718 = vadd.f32 %v4493, %v4717
      %v4719 = vpop.f32.mrb[0].mxu0
      %v4720 = vpop.f32.mrb[0].mxu0
      %v4721 = vadd.f32 %v4496, %v4720
      %v4722 = vpop.f32.mrb[0].mxu0
      %4723 = vmatprep.mubr.bf16.mxu0 0
      %4724 = vmatmul.mubr.bf16.gmra.mrb[0].mxu0 %v4370
      %v4725 = vpop.f32.mrb[0].mxu0
      %v4726 = vadd.f32 %v4501, %v4725
      %v4727 = vpop.f32.mrb[0].mxu0
      %v4728 = vpop.f32.mrb[0].mxu0
      %v4729 = vadd.f32 %v4504, %v4728
      %v4730 = vpop.f32.mrb[0].mxu0
      %4731 = vmatprep.mubr.bf16.mxu0 0
      %4732 = vmatmul.mubr.bf16.gmra.mrb[0].mxu0 %v4373
      %v4733 = vpop.f32.mrb[0].mxu0
      %v4734 = vadd.f32 %v4509, %v4733
      %v4735 = vpop.f32.mrb[0].mxu0
      %v4736 = vpop.f32.mrb[0].mxu0
      %v4737 = vadd.f32 %v4512, %v4736
      %v4738 = vpop.f32.mrb[0].mxu0
      %4739 = vmatprep.mubr.bf16.mxu0 0
      %4740 = vmatmul.mubr.bf16.gmra.mrb[0].mxu0 %v4376
      %v4741 = vpop.f32.mrb[0].mxu0
      %v4742 = vadd.f32 %v4517, %v4741
      %v4743 = vpop.f32.mrb[0].mxu0
      %v4744 = vpop.f32.mrb[0].mxu0
      %v4745 = vadd.f32 %v4520, %v4744
      %v4746 = vpop.f32.mrb[0].mxu0
      %4747 = vmatprep.mubr.bf16.mxu0 0
      %4748 = vmatmul.mubr.bf16.gmra.mrb[0].mxu0 %v4379
      %v4749 = vpop.f32.mrb[0].mxu0
      %v4750 = vadd.f32 %v4525, %v4749
      %v4751 = vpop.f32.mrb[0].mxu0
      %v4752 = vpop.f32.mrb[0].mxu0
      %v4753 = vadd.f32 %v4528, %v4752
      %v4754 = vpop.f32.mrb[0].mxu0
      %4755 = vmatprep.mubr.bf16.mxu0 0
      %4756 = vmatmul.mubr.bf16.gmra.mrb[0].mxu0 %v4382
      %v4757 = vpop.f32.mrb[0].mxu0
      %v4758 = vadd.f32 %v4533, %v4757
      %v4759 = vpop.f32.mrb[0].mxu0
      %v4760 = vpop.f32.mrb[0].mxu0
      %v4761 = vadd.f32 %v4536, %v4760
      %v4762 = vpop.f32.mrb[0].mxu0
      %4763 = vmatprep.mubr.bf16.mxu0 0
      %4764 = vmatmul.mubr.bf16.gmra.mrb[0].mxu0 %v4385
      %v4765 = vpop.f32.mrb[0].mxu0
      %v4766 = vadd.f32 %v4541, %v4765
      %v4767 = vpop.f32.mrb[0].mxu0
      %v4768 = vpop.f32.mrb[0].mxu0
      %v4769 = vadd.f32 %v4544, %v4768
      %v4770 = vpop.f32.mrb[0].mxu0
      %4771 = vmatprep.mubr.bf16.mxu0 0
      %4772 = vmatmul.mubr.bf16.gmra.mrb[0].mxu0 %v4388
      %v4773 = vpop.f32.mrb[0].mxu0
      %v4774 = vadd.f32 %v4549, %v4773
      %v4775 = vpop.f32.mrb[0].mxu0
      %v4776 = vpop.f32.mrb[0].mxu0
      %v4777 = vadd.f32 %v4552, %v4776
      %v4778 = vpop.f32.mrb[0].mxu0
      %4779 = vmatprep.mubr.bf16.mxu0 0
      %4780 = vmatmul.mubr.bf16.gmra.mrb[0].mxu0 %v4391
      %v4781 = vpop.f32.mrb[0].mxu0
      %v4782 = vadd.f32 %v4557, %v4781
      %v4783 = vpop.f32.mrb[0].mxu0
      %v4784 = vpop.f32.mrb[0].mxu0
      %v4785 = vadd.f32 %v4560, %v4784
      %v4786 = vpop.f32.mrb[0].mxu0
      %4787 = vmatprep.mubr.bf16.mxu0 0
      %4788 = vmatmul.mubr.bf16.gmra.mrb[0].mxu0 %v4394
      %v4789 = vpop.f32.mrb[0].mxu0
      %v4790 = vadd.f32 %v4565, %v4789
      %v4791 = vpop.f32.mrb[0].mxu0
      %v4792 = vpop.f32.mrb[0].mxu0
      %v4793 = vadd.f32 %v4568, %v4792
      %v4794 = vpop.f32.mrb[0].mxu0
      %4795 = vmatprep.mubr.bf16.mxu0 0
      %4796 = vmatmul.mubr.bf16.gmra.mrb[0].mxu0 %v4397
      %v4797 = vpop.f32.mrb[0].mxu0
      %v4798 = vadd.f32 %v4573, %v4797
      %v4799 = vpop.f32.mrb[0].mxu0
      %v4800 = vpop.f32.mrb[0].mxu0
      %v4801 = vadd.f32 %v4576, %v4800
      %v4802 = vpop.f32.mrb[0].mxu0
      %4803 = vmatprep.mubr.bf16.mxu0 0
      %4804 = vmatmul.mubr.bf16.gmra.mrb[0].mxu0 %v4400
      %v4805 = vpop.f32.mrb[0].mxu0
      %v4806 = vadd.f32 %v4581, %v4805
      %v4807 = vpop.f32.mrb[0].mxu0
      %v4808 = vpop.f32.mrb[0].mxu0
      %v4809 = vadd.f32 %v4584, %v4808
      %v4810 = vpop.f32.mrb[0].mxu0
      %4811 = vmatprep.mubr.bf16.mxu0 0
      %4812 = vmatmul.mubr.bf16.gmra.mrb[0].mxu0 %v4403
      %v4813 = vpop.f32.mrb[0].mxu0
      %v4814 = vadd.f32 %v4589, %v4813
      %v4815 = vpop.f32.mrb[0].mxu0
      %v4816 = vpop.f32.mrb[0].mxu0
      %v4817 = vadd.f32 %v4592, %v4816
      %v4818 = vpop.f32.mrb[0].mxu0
      %4819 = vmatprep.mubr.bf16.mxu0 0
      %4820 = vmatmul.mubr.bf16.gmra.mrb[0].mxu0 %v4406
      %v4821 = vpop.f32.mrb[0].mxu0
      %v4822 = vadd.f32 %v4597, %v4821
      %v4823 = vpop.f32.mrb[0].mxu0
      %v4824 = vpop.f32.mrb[0].mxu0
      %v4825 = vadd.f32 %v4600, %v4824
      %v4826 = vpop.f32.mrb[0].mxu0
      %4827 = vmatprep.mubr.bf16.mxu0 0
      %4828 = vmatmul.mubr.bf16.gmra.mrb[0].mxu0 %v4409
      %v4829 = vpop.f32.mrb[0].mxu0
      %v4830 = vadd.f32 %v4605, %v4829
      %v4831 = vpop.f32.mrb[0].mxu0
      %v4832 = vpop.f32.mrb[0].mxu0
      %v4833 = vadd.f32 %v4608, %v4832
      %v4834 = vpop.f32.mrb[0].mxu0
      %4835 = vmatprep.mubr.bf16.mxu0 0
      %4836 = vmatmul.mubr.bf16.gmra.mrb[0].mxu0 %v4412
      %v4837 = vpop.f32.mrb[0].mxu0
      %v4838 = vadd.f32 %v4613, %v4837
      %v4839 = vpop.f32.mrb[0].mxu0
      %v4840 = vpop.f32.mrb[0].mxu0
      %v4841 = vadd.f32 %v4616, %v4840
      %v4842 = vpop.f32.mrb[0].mxu0
      %4843 = vmatprep.mubr.bf16.mxu0 0
      %4844 = vmatmul.mubr.bf16.gmra.mrb[0].mxu0 %v4415
      %v4845 = vpop.f32.mrb[0].mxu0
      %v4846 = vadd.f32 %v4621, %v4845
      %v4847 = vpop.f32.mrb[0].mxu0
      %v4848 = vpop.f32.mrb[0].mxu0
      %v4849 = vadd.f32 %v4624, %v4848
      %v4850 = vpop.f32.mrb[0].mxu0
      %4851 = vmatprep.mubr.bf16.mxu0 0
      %4852 = vmatmul.mubr.bf16.gmra.mrb[0].mxu0 %v4418
      %v4853 = vpop.f32.mrb[0].mxu0
      %v4854 = vadd.f32 %v4629, %v4853
      %v4855 = vpop.f32.mrb[0].mxu0
      %v4856 = vpop.f32.mrb[0].mxu0
      %v4857 = vadd.f32 %v4632, %v4856
      %v4858 = vpop.f32.mrb[0].mxu0
      %4859 = vmatprep.mubr.bf16.mxu0 0
      %4860 = vmatmul.mubr.bf16.gmra.mrb[0].mxu0 %v4421
      %v4861 = vpop.f32.mrb[0].mxu0
      %v4862 = vadd.f32 %v4637, %v4861
      %v4863 = vpop.f32.mrb[0].mxu0
      %v4864 = vpop.f32.mrb[0].mxu0
      %v4865 = vadd.f32 %v4640, %v4864
      %v4866 = vpop.f32.mrb[0].mxu0
      %4867 = vmatprep.mubr.bf16.mxu0 0
      %4868 = vmatmul.mubr.bf16.gmra.mrb[0].mxu0 %v4424
      %v4869 = vpop.f32.mrb[0].mxu0
      %v4870 = vadd.f32 %v4645, %v4869
      %v4871 = vpop.f32.mrb[0].mxu0
      %v4872 = vpop.f32.mrb[0].mxu0
      %v4873 = vadd.f32 %v4648, %v4872
      %v4874 = vpop.f32.mrb[0].mxu0
      %4875 = vdwg.mxu0
      %vm4876 = vcmp.ge.f32.partialorder %v4686, 0.0
      %vm4877 = vcmp.ge.f32.partialorder %v4689, 0.0
      %vm4878 = vcmp.ge.f32.partialorder %v4694, 0.0
      %vm4879 = vcmp.ge.f32.partialorder %v4697, 0.0
      %vm4880 = vcmp.ge.f32.partialorder %v4702, 0.0
      %vm4881 = vcmp.ge.f32.partialorder %v4705, 0.0
      %vm4882 = vcmp.ge.f32.partialorder %v4710, 0.0
      %vm4883 = vcmp.ge.f32.partialorder %v4713, 0.0
      %vm4884 = vcmp.ge.f32.partialorder %v4718, 0.0
      %vm4885 = vcmp.ge.f32.partialorder %v4721, 0.0
      %vm4886 = vcmp.ge.f32.partialorder %v4726, 0.0
      %vm4887 = vcmp.ge.f32.partialorder %v4729, 0.0
      %vm4888 = vcmp.ge.f32.partialorder %v4734, 0.0
      %vm4889 = vcmp.ge.f32.partialorder %v4737, 0.0
      %vm4890 = vcmp.ge.f32.partialorder %v4742, 0.0
      %vm4891 = vcmp.ge.f32.partialorder %v4745, 0.0
      %vm4892 = vcmp.ge.f32.partialorder %v4750, 0.0
      %vm4893 = vcmp.ge.f32.partialorder %v4753, 0.0
      %vm4894 = vcmp.ge.f32.partialorder %v4758, 0.0
      %vm4895 = vcmp.ge.f32.partialorder %v4761, 0.0
      %vm4896 = vcmp.ge.f32.partialorder %v4766, 0.0
      %vm4897 = vcmp.ge.f32.partialorder %v4769, 0.0
      %vm4898 = vcmp.ge.f32.partialorder %v4774, 0.0
      %vm4899 = vcmp.ge.f32.partialorder %v4777, 0.0
      %vm4900 = vcmp.ge.f32.partialorder %v4782, 0.0
      %vm4901 = vcmp.ge.f32.partialorder %v4785, 0.0
      %vm4902 = vcmp.ge.f32.partialorder %v4790, 0.0
      %vm4903 = vcmp.ge.f32.partialorder %v4793, 0.0
      %vm4904 = vcmp.ge.f32.partialorder %v4798, 0.0
      %vm4905 = vcmp.ge.f32.partialorder %v4801, 0.0
      %vm4906 = vcmp.ge.f32.partialorder %v4806, 0.0
      %vm4907 = vcmp.ge.f32.partialorder %v4809, 0.0
      %vm4908 = vcmp.ge.f32.partialorder %v4814, 0.0
      %vm4909 = vcmp.ge.f32.partialorder %v4817, 0.0
      %vm4910 = vcmp.ge.f32.partialorder %v4822, 0.0
      %vm4911 = vcmp.ge.f32.partialorder %v4825, 0.0
      %vm4912 = vcmp.ge.f32.partialorder %v4830, 0.0
      %vm4913 = vcmp.ge.f32.partialorder %v4833, 0.0
      %vm4914 = vcmp.ge.f32.partialorder %v4838, 0.0
      %vm4915 = vcmp.ge.f32.partialorder %v4841, 0.0
      %vm4916 = vcmp.ge.f32.partialorder %v4846, 0.0
      %vm4917 = vcmp.ge.f32.partialorder %v4849, 0.0
      %vm4918 = vcmp.ge.f32.partialorder %v4854, 0.0
      %vm4919 = vcmp.ge.f32.partialorder %v4857, 0.0
      %vm4920 = vcmp.ge.f32.partialorder %v4862, 0.0
      %vm4921 = vcmp.ge.f32.partialorder %v4865, 0.0
      %vm4922 = vcmp.ge.f32.partialorder %v4870, 0.0
      %vm4923 = vcmp.ge.f32.partialorder %v4873, 0.0
      %v4924 = vmul.f32 %v4686, 0.2
      %v4925 = vmul.f32 %v4689, 0.2
      %v4926 = vmul.f32 %v4694, 0.2
      %v4927 = vmul.f32 %v4697, 0.2
      %v4928 = vmul.f32 %v4702, 0.2
      %v4929 = vmul.f32 %v4705, 0.2
      %v4930 = vmul.f32 %v4710, 0.2
      %v4931 = vmul.f32 %v4713, 0.2
      %v4932 = vmul.f32 %v4718, 0.2
      %v4933 = vmul.f32 %v4721, 0.2
      %v4934 = vmul.f32 %v4726, 0.2
      %v4935 = vmul.f32 %v4729, 0.2
      %v4936 = vmul.f32 %v4734, 0.2
      %v4937 = vmul.f32 %v4737, 0.2
      %v4938 = vmul.f32 %v4742, 0.2
      %v4939 = vmul.f32 %v4745, 0.2
      %v4940 = vmul.f32 %v4750, 0.2
      %v4941 = vmul.f32 %v4753, 0.2
      %v4942 = vmul.f32 %v4758, 0.2
      %v4943 = vmul.f32 %v4761, 0.2
      %v4944 = vmul.f32 %v4766, 0.2
      %v4945 = vmul.f32 %v4769, 0.2
      %v4946 = vmul.f32 %v4774, 0.2
      %v4947 = vmul.f32 %v4777, 0.2
      %v4948 = vmul.f32 %v4782, 0.2
      %v4949 = vmul.f32 %v4785, 0.2
      %v4950 = vmul.f32 %v4790, 0.2
      %v4951 = vmul.f32 %v4793, 0.2
      %v4952 = vmul.f32 %v4798, 0.2
      %v4953 = vmul.f32 %v4801, 0.2
      %v4954 = vmul.f32 %v4806, 0.2
      %v4955 = vmul.f32 %v4809, 0.2
      %v4956 = vmul.f32 %v4814, 0.2
      %v4957 = vmul.f32 %v4817, 0.2
      %v4958 = vmul.f32 %v4822, 0.2
      %v4959 = vmul.f32 %v4825, 0.2
      %v4960 = vmul.f32 %v4830, 0.2
      %v4961 = vmul.f32 %v4833, 0.2
      %v4962 = vmul.f32 %v4838, 0.2
      %v4963 = vmul.f32 %v4841, 0.2
      %v4964 = vmul.f32 %v4846, 0.2
      %v4965 = vmul.f32 %v4849, 0.2
      %v4966 = vmul.f32 %v4854, 0.2
      %v4967 = vmul.f32 %v4857, 0.2
      %v4968 = vmul.f32 %v4862, 0.2
      %v4969 = vmul.f32 %v4865, 0.2
      %v4970 = vmul.f32 %v4870, 0.2
      %v4971 = vmul.f32 %v4873, 0.2
      %v4972 = vsel %vm4876, %v4686, %v4924
      %v4973 = vsel %vm4877, %v4689, %v4925
      %v4974 = vsel %vm4878, %v4694, %v4926
      %v4975 = vsel %vm4879, %v4697, %v4927
      %v4976 = vsel %vm4880, %v4702, %v4928
      %v4977 = vsel %vm4881, %v4705, %v4929
      %v4978 = vsel %vm4882, %v4710, %v4930
      %v4979 = vsel %vm4883, %v4713, %v4931
      %v4980 = vsel %vm4884, %v4718, %v4932
      %v4981 = vsel %vm4885, %v4721, %v4933
      %v4982 = vsel %vm4886, %v4726, %v4934
      %v4983 = vsel %vm4887, %v4729, %v4935
      %v4984 = vsel %vm4888, %v4734, %v4936
      %v4985 = vsel %vm4889, %v4737, %v4937
      %v4986 = vsel %vm4890, %v4742, %v4938
      %v4987 = vsel %vm4891, %v4745, %v4939
      %v4988 = vsel %vm4892, %v4750, %v4940
      %v4989 = vsel %vm4893, %v4753, %v4941
      %v4990 = vsel %vm4894, %v4758, %v4942
      %v4991 = vsel %vm4895, %v4761, %v4943
      %v4992 = vsel %vm4896, %v4766, %v4944
      %v4993 = vsel %vm4897, %v4769, %v4945
      %v4994 = vsel %vm4898, %v4774, %v4946
      %v4995 = vsel %vm4899, %v4777, %v4947
      %v4996 = vsel %vm4900, %v4782, %v4948
      %v4997 = vsel %vm4901, %v4785, %v4949
      %v4998 = vsel %vm4902, %v4790, %v4950
      %v4999 = vsel %vm4903, %v4793, %v4951
      %v5000 = vsel %vm4904, %v4798, %v4952
      %v5001 = vsel %vm4905, %v4801, %v4953
      %v5002 = vsel %vm4906, %v4806, %v4954
      %v5003 = vsel %vm4907, %v4809, %v4955
      %v5004 = vsel %vm4908, %v4814, %v4956
      %v5005 = vsel %vm4909, %v4817, %v4957
      %v5006 = vsel %vm4910, %v4822, %v4958
      %v5007 = vsel %vm4911, %v4825, %v4959
      %v5008 = vsel %vm4912, %v4830, %v4960
      %v5009 = vsel %vm4913, %v4833, %v4961
      %v5010 = vsel %vm4914, %v4838, %v4962
      %v5011 = vsel %vm4915, %v4841, %v4963
      %v5012 = vsel %vm4916, %v4846, %v4964
      %v5013 = vsel %vm4917, %v4849, %v4965
      %v5014 = vsel %vm4918, %v4854, %v4966
      %v5015 = vsel %vm4919, %v4857, %v4967
      %v5016 = vsel %vm4920, %v4862, %v4968
      %v5017 = vsel %vm4921, %v4865, %v4969
      %v5018 = vsel %vm4922, %v4870, %v4970
      %v5019 = vsel %vm4923, %v4873, %v4971
      %v5020 = vmul.f32 %v4972, %v2559
      %v5021 = vmul.f32 %v4973, %v2564
      %v5022 = vmul.f32 %v4974, %v2569
      %v5023 = vmul.f32 %v4975, %v2574
      %v5024 = vmul.f32 %v4976, %v2579
      %v5025 = vmul.f32 %v4977, %v2584
      %v5026 = vmul.f32 %v4978, %v2589
      %v5027 = vmul.f32 %v4979, %v2594
      %v5028 = vmul.f32 %v4980, %v2599
      %v5029 = vmul.f32 %v4981, %v2604
      %v5030 = vmul.f32 %v4982, %v2609
      %v5031 = vmul.f32 %v4983, %v2614
      %v5032 = vmul.f32 %v4984, %v2619
      %v5033 = vmul.f32 %v4985, %v2624
      %v5034 = vmul.f32 %v4986, %v2629
      %v5035 = vmul.f32 %v4987, %v2634
      %v5036 = vmul.f32 %v4988, %v2639
      %v5037 = vmul.f32 %v4989, %v2644
      %v5038 = vmul.f32 %v4990, %v2649
      %v5039 = vmul.f32 %v4991, %v2654
      %v5040 = vmul.f32 %v4992, %v2659
      %v5041 = vmul.f32 %v4993, %v2664
      %v5042 = vmul.f32 %v4994, %v2669
      %v5043 = vmul.f32 %v4995, %v2674
      %v5044 = vmul.f32 %v4996, %v2679
      %v5045 = vmul.f32 %v4997, %v2684
      %v5046 = vmul.f32 %v4998, %v2689
      %v5047 = vmul.f32 %v4999, %v2694
      %v5048 = vmul.f32 %v5000, %v2699
      %v5049 = vmul.f32 %v5001, %v2704
      %v5050 = vmul.f32 %v5002, %v2709
      %v5051 = vmul.f32 %v5003, %v2714
      %v5052 = vmul.f32 %v5004, %v2719
      %v5053 = vmul.f32 %v5005, %v2724
      %v5054 = vmul.f32 %v5006, %v2729
      %v5055 = vmul.f32 %v5007, %v2734
      %v5056 = vmul.f32 %v5008, %v2739
      %v5057 = vmul.f32 %v5009, %v2744
      %v5058 = vmul.f32 %v5010, %v2749
      %v5059 = vmul.f32 %v5011, %v2754
      %v5060 = vmul.f32 %v5012, %v2759
      %v5061 = vmul.f32 %v5013, %v2764
      %v5062 = vmul.f32 %v5014, %v2769
      %v5063 = vmul.f32 %v5015, %v2774
      %v5064 = vmul.f32 %v5016, %v2779
      %v5065 = vmul.f32 %v5017, %v2784
      %v5066 = vmul.f32 %v5018, %v2789
      %v5067 = vmul.f32 %v5019, %v2794
      %v5068 = vpack.c.bf16 %v5021, %v5020
      %v5069 = vpack.c.bf16 %v5023, %v5022
      %v5070 = vpack.c.bf16 %v5025, %v5024
      %v5071 = vpack.c.bf16 %v5027, %v5026
      %v5072 = vpack.c.bf16 %v5029, %v5028
      %v5073 = vpack.c.bf16 %v5031, %v5030
      %v5074 = vpack.c.bf16 %v5033, %v5032
      %v5075 = vpack.c.bf16 %v5035, %v5034
      %v5076 = vpack.c.bf16 %v5037, %v5036
      %v5077 = vpack.c.bf16 %v5039, %v5038
      %v5078 = vpack.c.bf16 %v5041, %v5040
      %v5079 = vpack.c.bf16 %v5043, %v5042
      %v5080 = vpack.c.bf16 %v5045, %v5044
      %v5081 = vpack.c.bf16 %v5047, %v5046
      %v5082 = vpack.c.bf16 %v5049, %v5048
      %v5083 = vpack.c.bf16 %v5051, %v5050
      %v5084 = vpack.c.bf16 %v5053, %v5052
      %v5085 = vpack.c.bf16 %v5055, %v5054
      %v5086 = vpack.c.bf16 %v5057, %v5056
      %v5087 = vpack.c.bf16 %v5059, %v5058
      %v5088 = vpack.c.bf16 %v5061, %v5060
      %v5089 = vpack.c.bf16 %v5063, %v5062
      %v5090 = vpack.c.bf16 %v5065, %v5064
      %v5091 = vpack.c.bf16 %v5067, %v5066
      %v5093 = vshrl.u32 %v5068, 16
      %v5095 = vrot.slane %v5093, 3
      %v5096 = vshll.u32 %v5068, 16
      %v5098 = vrot.slane %v5096, 4
      %v5099 = vor.u32 %v5095, %v5098
      %v5101 = vshrl.u32 %v5069, 16
      %v5103 = vrot.slane %v5101, 3
      %v5104 = vshll.u32 %v5069, 16
      %v5106 = vrot.slane %v5104, 4
      %v5107 = vor.u32 %v5103, %v5106
      %v5108 = vsel %vm2868, %v5099, %v5107
      %v5110 = vshrl.u32 %v5070, 16
      %v5112 = vrot.slane %v5110, 3
      %v5113 = vshll.u32 %v5070, 16
      %v5115 = vrot.slane %v5113, 4
      %v5116 = vor.u32 %v5112, %v5115
      %v5117 = vsel %vm2868, %v5107, %v5116
      %v5119 = vshrl.u32 %v5071, 16
      %v5121 = vrot.slane %v5119, 3
      %v5122 = vshll.u32 %v5071, 16
      %v5124 = vrot.slane %v5122, 4
      %v5125 = vor.u32 %v5121, %v5124
      %v5126 = vsel %vm2868, %v5116, %v5125
      %v5128 = vshrl.u32 %v5072, 16
      %v5130 = vrot.slane %v5128, 3
      %v5131 = vshll.u32 %v5072, 16
      %v5133 = vrot.slane %v5131, 4
      %v5134 = vor.u32 %v5130, %v5133
      %v5135 = vsel %vm2868, %v5125, %v5134
      %v5137 = vshrl.u32 %v5073, 16
      %v5139 = vrot.slane %v5137, 3
      %v5140 = vshll.u32 %v5073, 16
      %v5142 = vrot.slane %v5140, 4
      %v5143 = vor.u32 %v5139, %v5142
      %v5144 = vsel %vm2868, %v5134, %v5143
      %v5146 = vshrl.u32 %v5074, 16
      %v5148 = vrot.slane %v5146, 3
      %v5149 = vshll.u32 %v5074, 16
      %v5151 = vrot.slane %v5149, 4
      %v5152 = vor.u32 %v5148, %v5151
      %v5153 = vsel %vm2868, %v5143, %v5152
      %v5155 = vshrl.u32 %v5075, 16
      %v5157 = vrot.slane %v5155, 3
      %v5158 = vshll.u32 %v5075, 16
      %v5160 = vrot.slane %v5158, 4
      %v5161 = vor.u32 %v5157, %v5160
      %v5162 = vsel %vm2868, %v5152, %v5161
      %v5164 = vshrl.u32 %v5076, 16
      %v5166 = vrot.slane %v5164, 3
      %v5167 = vshll.u32 %v5076, 16
      %v5169 = vrot.slane %v5167, 4
      %v5170 = vor.u32 %v5166, %v5169
      %v5171 = vsel %vm2868, %v5161, %v5170
      %v5173 = vshrl.u32 %v5077, 16
      %v5175 = vrot.slane %v5173, 3
      %v5176 = vshll.u32 %v5077, 16
      %v5178 = vrot.slane %v5176, 4
      %v5179 = vor.u32 %v5175, %v5178
      %v5180 = vsel %vm2868, %v5170, %v5179
      %v5182 = vshrl.u32 %v5078, 16
      %v5184 = vrot.slane %v5182, 3
      %v5185 = vshll.u32 %v5078, 16
      %v5187 = vrot.slane %v5185, 4
      %v5188 = vor.u32 %v5184, %v5187
      %v5189 = vsel %vm2868, %v5179, %v5188
      %v5191 = vshrl.u32 %v5079, 16
      %v5193 = vrot.slane %v5191, 3
      %v5194 = vshll.u32 %v5079, 16
      %v5196 = vrot.slane %v5194, 4
      %v5197 = vor.u32 %v5193, %v5196
      %v5198 = vsel %vm2868, %v5188, %v5197
      %v5200 = vshrl.u32 %v5080, 16
      %v5202 = vrot.slane %v5200, 3
      %v5203 = vshll.u32 %v5080, 16
      %v5205 = vrot.slane %v5203, 4
      %v5206 = vor.u32 %v5202, %v5205
      %v5207 = vsel %vm2868, %v5197, %v5206
      %v5209 = vshrl.u32 %v5081, 16
      %v5211 = vrot.slane %v5209, 3
      %v5212 = vshll.u32 %v5081, 16
      %v5214 = vrot.slane %v5212, 4
      %v5215 = vor.u32 %v5211, %v5214
      %v5216 = vsel %vm2868, %v5206, %v5215
      %v5218 = vshrl.u32 %v5082, 16
      %v5220 = vrot.slane %v5218, 3
      %v5221 = vshll.u32 %v5082, 16
      %v5223 = vrot.slane %v5221, 4
      %v5224 = vor.u32 %v5220, %v5223
      %v5225 = vsel %vm2868, %v5215, %v5224
      %v5227 = vshrl.u32 %v5083, 16
      %v5229 = vrot.slane %v5227, 3
      %v5230 = vshll.u32 %v5083, 16
      %v5232 = vrot.slane %v5230, 4
      %v5233 = vor.u32 %v5229, %v5232
      %v5234 = vsel %vm2868, %v5224, %v5233
      %v5236 = vshrl.u32 %v5084, 16
      %v5238 = vrot.slane %v5236, 3
      %v5239 = vshll.u32 %v5084, 16
      %v5241 = vrot.slane %v5239, 4
      %v5242 = vor.u32 %v5238, %v5241
      %v5243 = vsel %vm2868, %v5233, %v5242
      %v5245 = vshrl.u32 %v5085, 16
      %v5247 = vrot.slane %v5245, 3
      %v5248 = vshll.u32 %v5085, 16
      %v5250 = vrot.slane %v5248, 4
      %v5251 = vor.u32 %v5247, %v5250
      %v5252 = vsel %vm2868, %v5242, %v5251
      %v5254 = vshrl.u32 %v5086, 16
      %v5256 = vrot.slane %v5254, 3
      %v5257 = vshll.u32 %v5086, 16
      %v5259 = vrot.slane %v5257, 4
      %v5260 = vor.u32 %v5256, %v5259
      %v5261 = vsel %vm2868, %v5251, %v5260
      %v5263 = vshrl.u32 %v5087, 16
      %v5265 = vrot.slane %v5263, 3
      %v5266 = vshll.u32 %v5087, 16
      %v5268 = vrot.slane %v5266, 4
      %v5269 = vor.u32 %v5265, %v5268
      %v5270 = vsel %vm2868, %v5260, %v5269
      %v5272 = vshrl.u32 %v5088, 16
      %v5274 = vrot.slane %v5272, 3
      %v5275 = vshll.u32 %v5088, 16
      %v5277 = vrot.slane %v5275, 4
      %v5278 = vor.u32 %v5274, %v5277
      %v5279 = vsel %vm2868, %v5269, %v5278
      %v5281 = vshrl.u32 %v5089, 16
      %v5283 = vrot.slane %v5281, 3
      %v5284 = vshll.u32 %v5089, 16
      %v5286 = vrot.slane %v5284, 4
      %v5287 = vor.u32 %v5283, %v5286
      %v5288 = vsel %vm2868, %v5278, %v5287
      %v5290 = vshrl.u32 %v5090, 16
      %v5292 = vrot.slane %v5290, 3
      %v5293 = vshll.u32 %v5090, 16
      %v5295 = vrot.slane %v5293, 4
      %v5296 = vor.u32 %v5292, %v5295
      %v5297 = vsel %vm2868, %v5287, %v5296
      %v5299 = vshrl.u32 %v5091, 16
      %v5301 = vrot.slane %v5299, 3
      %v5302 = vshll.u32 %v5091, 16
      %v5304 = vrot.slane %v5302, 4
      %v5305 = vor.u32 %v5301, %v5304
      %v5306 = vsel %vm2868, %v5296, %v5305
      %v5309 = vsel %vm3087, 0, %v5099
      %v5310 = vsel %vm3087, %v5305, 0
      %v5312 = vshll.u32 %v5309, 16
      %v5314 = vrot.slane %v5312, 1
      %v5315 = vsel %vm588, %v3096, %v5314
      %v5316 = vshrl.u32 %v5309, 16
      %v5318 = vor.u32 %v5316, %v5314
      %v5320 = vshll.u32 %v5108, 16
      %v5322 = vrot.slane %v5320, 1
      %v5323 = vsel %vm588, %v5318, %v5322
      %v5324 = vshrl.u32 %v5108, 16
      %v5326 = vor.u32 %v5324, %v5322
      %v5328 = vshll.u32 %v5117, 16
      %v5330 = vrot.slane %v5328, 1
      %v5331 = vsel %vm588, %v5326, %v5330
      %v5332 = vshrl.u32 %v5117, 16
      %v5334 = vor.u32 %v5332, %v5330
      %v5336 = vshll.u32 %v5126, 16
      %v5338 = vrot.slane %v5336, 1
      %v5339 = vsel %vm588, %v5334, %v5338
      %v5340 = vshrl.u32 %v5126, 16
      %v5342 = vor.u32 %v5340, %v5338
      %v5344 = vshll.u32 %v5135, 16
      %v5346 = vrot.slane %v5344, 1
      %v5347 = vsel %vm588, %v5342, %v5346
      %v5348 = vshrl.u32 %v5135, 16
      %v5350 = vor.u32 %v5348, %v5346
      %v5352 = vshll.u32 %v5144, 16
      %v5354 = vrot.slane %v5352, 1
      %v5355 = vsel %vm588, %v5350, %v5354
      %v5356 = vshrl.u32 %v5144, 16
      %v5358 = vor.u32 %v5356, %v5354
      %v5360 = vshll.u32 %v5153, 16
      %v5362 = vrot.slane %v5360, 1
      %v5363 = vsel %vm588, %v5358, %v5362
      %v5364 = vshrl.u32 %v5153, 16
      %v5366 = vor.u32 %v5364, %v5362
      %v5368 = vshll.u32 %v5162, 16
      %v5370 = vrot.slane %v5368, 1
      %v5371 = vsel %vm588, %v5366, %v5370
      %v5372 = vshrl.u32 %v5162, 16
      %v5374 = vor.u32 %v5372, %v5370
      %v5376 = vshll.u32 %v5171, 16
      %v5378 = vrot.slane %v5376, 1
      %v5379 = vsel %vm588, %v5374, %v5378
      %v5380 = vshrl.u32 %v5171, 16
      %v5382 = vor.u32 %v5380, %v5378
      %v5384 = vshll.u32 %v5180, 16
      %v5386 = vrot.slane %v5384, 1
      %v5387 = vsel %vm588, %v5382, %v5386
      %v5388 = vshrl.u32 %v5180, 16
      %v5390 = vor.u32 %v5388, %v5386
      %v5392 = vshll.u32 %v5189, 16
      %v5394 = vrot.slane %v5392, 1
      %v5395 = vsel %vm588, %v5390, %v5394
      %v5396 = vshrl.u32 %v5189, 16
      %v5398 = vor.u32 %v5396, %v5394
      %v5400 = vshll.u32 %v5198, 16
      %v5402 = vrot.slane %v5400, 1
      %v5403 = vsel %vm588, %v5398, %v5402
      %v5404 = vshrl.u32 %v5198, 16
      %v5406 = vor.u32 %v5404, %v5402
      %v5408 = vshll.u32 %v5207, 16
      %v5410 = vrot.slane %v5408, 1
      %v5411 = vsel %vm588, %v5406, %v5410
      %v5412 = vshrl.u32 %v5207, 16
      %v5414 = vor.u32 %v5412, %v5410
      %v5416 = vshll.u32 %v5216, 16
      %v5418 = vrot.slane %v5416, 1
      %v5419 = vsel %vm588, %v5414, %v5418
      %v5420 = vshrl.u32 %v5216, 16
      %v5422 = vor.u32 %v5420, %v5418
      %v5424 = vshll.u32 %v5225, 16
      %v5426 = vrot.slane %v5424, 1
      %v5427 = vsel %vm588, %v5422, %v5426
      %v5428 = vshrl.u32 %v5225, 16
      %v5430 = vor.u32 %v5428, %v5426
      %v5432 = vshll.u32 %v5234, 16
      %v5434 = vrot.slane %v5432, 1
      %v5435 = vsel %vm588, %v5430, %v5434
      %v5436 = vshrl.u32 %v5234, 16
      %v5438 = vor.u32 %v5436, %v5434
      %v5440 = vshll.u32 %v5243, 16
      %v5442 = vrot.slane %v5440, 1
      %v5443 = vsel %vm588, %v5438, %v5442
      %v5444 = vshrl.u32 %v5243, 16
      %v5446 = vor.u32 %v5444, %v5442
      %v5448 = vshll.u32 %v5252, 16
      %v5450 = vrot.slane %v5448, 1
      %v5451 = vsel %vm588, %v5446, %v5450
      %v5452 = vshrl.u32 %v5252, 16
      %v5454 = vor.u32 %v5452, %v5450
      %v5456 = vshll.u32 %v5261, 16
      %v5458 = vrot.slane %v5456, 1
      %v5459 = vsel %vm588, %v5454, %v5458
      %v5460 = vshrl.u32 %v5261, 16
      %v5462 = vor.u32 %v5460, %v5458
      %v5464 = vshll.u32 %v5270, 16
      %v5466 = vrot.slane %v5464, 1
      %v5467 = vsel %vm588, %v5462, %v5466
      %v5468 = vshrl.u32 %v5270, 16
      %v5470 = vor.u32 %v5468, %v5466
      %v5472 = vshll.u32 %v5279, 16
      %v5474 = vrot.slane %v5472, 1
      %v5475 = vsel %vm588, %v5470, %v5474
      %v5476 = vshrl.u32 %v5279, 16
      %v5478 = vor.u32 %v5476, %v5474
      %v5480 = vshll.u32 %v5288, 16
      %v5482 = vrot.slane %v5480, 1
      %v5483 = vsel %vm588, %v5478, %v5482
      %v5484 = vshrl.u32 %v5288, 16
      %v5486 = vor.u32 %v5484, %v5482
      %v5488 = vshll.u32 %v5297, 16
      %v5490 = vrot.slane %v5488, 1
      %v5491 = vsel %vm588, %v5486, %v5490
      %v5492 = vshrl.u32 %v5297, 16
      %v5494 = vor.u32 %v5492, %v5490
      %v5496 = vshll.u32 %v5306, 16
      %v5498 = vrot.slane %v5496, 1
      %v5499 = vsel %vm588, %v5494, %v5498
      %5500 = vrot.lane.b32.xlu0 %v5315, 64
      %v5501 = vpop.permute.xlu0 %5500
      %5502 = vrot.lane.b32.xlu0 %v5323, 64
      %v5503 = vpop.permute.xlu0 %5502
      %5504 = vrot.lane.b32.xlu0 %v5331, 64
      %v5505 = vpop.permute.xlu0 %5504
      %5506 = vrot.lane.b32.xlu0 %v5339, 64
      %v5507 = vpop.permute.xlu0 %5506
      %5508 = vrot.lane.b32.xlu0 %v5347, 64
      %v5509 = vpop.permute.xlu0 %5508
      %5510 = vrot.lane.b32.xlu0 %v5355, 64
      %v5511 = vpop.permute.xlu0 %5510
      %5512 = vrot.lane.b32.xlu0 %v5363, 64
      %v5513 = vpop.permute.xlu0 %5512
      %5514 = vrot.lane.b32.xlu0 %v5371, 64
      %v5515 = vpop.permute.xlu0 %5514
      %5516 = vrot.lane.b32.xlu0 %v5379, 64
      %v5517 = vpop.permute.xlu0 %5516
      %5518 = vrot.lane.b32.xlu0 %v5387, 64
      %v5519 = vpop.permute.xlu0 %5518
      %5520 = vrot.lane.b32.xlu0 %v5395, 64
      %v5521 = vpop.permute.xlu0 %5520
      %5522 = vrot.lane.b32.xlu0 %v5403, 64
      %v5523 = vpop.permute.xlu0 %5522
      %5524 = vrot.lane.b32.xlu0 %v5411, 64
      %v5525 = vpop.permute.xlu0 %5524
      %5526 = vrot.lane.b32.xlu0 %v5419, 64
      %v5527 = vpop.permute.xlu0 %5526
      %5528 = vrot.lane.b32.xlu0 %v5427, 64
      %v5529 = vpop.permute.xlu0 %5528
      %5530 = vrot.lane.b32.xlu0 %v5435, 64
      %v5531 = vpop.permute.xlu0 %5530
      %5532 = vrot.lane.b32.xlu0 %v5443, 64
      %v5533 = vpop.permute.xlu0 %5532
      %5534 = vrot.lane.b32.xlu0 %v5451, 64
      %v5535 = vpop.permute.xlu0 %5534
      %5536 = vrot.lane.b32.xlu0 %v5459, 64
      %v5537 = vpop.permute.xlu0 %5536
      %5538 = vrot.lane.b32.xlu0 %v5467, 64
      %v5539 = vpop.permute.xlu0 %5538
      %5540 = vrot.lane.b32.xlu0 %v5475, 64
      %v5541 = vpop.permute.xlu0 %5540
      %5542 = vrot.lane.b32.xlu0 %v5483, 64
      %v5543 = vpop.permute.xlu0 %5542
      %5544 = vrot.lane.b32.xlu0 %v5491, 64
      %v5545 = vpop.permute.xlu0 %5544
      %5546 = vrot.lane.b32.xlu0 %v5499, 64
      %v5547 = vpop.permute.xlu0 %5546
      %v5549 = vrot.slane %v5309, 1
      %v5550 = vsel %vm858, %v3336, %v5549
      %v5551 = vrot.slane %v5108, 1
      %v5552 = vsel %vm858, %v5549, %v5551
      %v5553 = vrot.slane %v5117, 1
      %v5554 = vsel %vm858, %v5551, %v5553
      %v5555 = vrot.slane %v5126, 1
      %v5556 = vsel %vm858, %v5553, %v5555
      %v5557 = vrot.slane %v5135, 1
      %v5558 = vsel %vm858, %v5555, %v5557
      %v5559 = vrot.slane %v5144, 1
      %v5560 = vsel %vm858, %v5557, %v5559
      %v5561 = vrot.slane %v5153, 1
      %v5562 = vsel %vm858, %v5559, %v5561
      %v5563 = vrot.slane %v5162, 1
      %v5564 = vsel %vm858, %v5561, %v5563
      %v5565 = vrot.slane %v5171, 1
      %v5566 = vsel %vm858, %v5563, %v5565
      %v5567 = vrot.slane %v5180, 1
      %v5568 = vsel %vm858, %v5565, %v5567
      %v5569 = vrot.slane %v5189, 1
      %v5570 = vsel %vm858, %v5567, %v5569
      %v5571 = vrot.slane %v5198, 1
      %v5572 = vsel %vm858, %v5569, %v5571
      %v5573 = vrot.slane %v5207, 1
      %v5574 = vsel %vm858, %v5571, %v5573
      %v5575 = vrot.slane %v5216, 1
      %v5576 = vsel %vm858, %v5573, %v5575
      %v5577 = vrot.slane %v5225, 1
      %v5578 = vsel %vm858, %v5575, %v5577
      %v5579 = vrot.slane %v5234, 1
      %v5580 = vsel %vm858, %v5577, %v5579
      %v5581 = vrot.slane %v5243, 1
      %v5582 = vsel %vm858, %v5579, %v5581
      %v5583 = vrot.slane %v5252, 1
      %v5584 = vsel %vm858, %v5581, %v5583
      %v5585 = vrot.slane %v5261, 1
      %v5586 = vsel %vm858, %v5583, %v5585
      %v5587 = vrot.slane %v5270, 1
      %v5588 = vsel %vm858, %v5585, %v5587
      %v5589 = vrot.slane %v5279, 1
      %v5590 = vsel %vm858, %v5587, %v5589
      %v5591 = vrot.slane %v5288, 1
      %v5592 = vsel %vm858, %v5589, %v5591
      %v5593 = vrot.slane %v5297, 1
      %v5594 = vsel %vm858, %v5591, %v5593
      %v5595 = vrot.slane %v5306, 1
      %v5596 = vsel %vm858, %v5593, %v5595
      %v5598 = vrot.slane %v5309, 4
      %v5599 = vrot.slane %v5108, 4
      %v5600 = vsel %vm957, %v5598, %v5599
      %v5601 = vrot.slane %v5117, 4
      %v5602 = vsel %vm957, %v5599, %v5601
      %v5603 = vrot.slane %v5126, 4
      %v5604 = vsel %vm957, %v5601, %v5603
      %v5605 = vrot.slane %v5135, 4
      %v5606 = vsel %vm957, %v5603, %v5605
      %v5607 = vrot.slane %v5144, 4
      %v5608 = vsel %vm957, %v5605, %v5607
      %v5609 = vrot.slane %v5153, 4
      %v5610 = vsel %vm957, %v5607, %v5609
      %v5611 = vrot.slane %v5162, 4
      %v5612 = vsel %vm957, %v5609, %v5611
      %v5613 = vrot.slane %v5171, 4
      %v5614 = vsel %vm957, %v5611, %v5613
      %v5615 = vrot.slane %v5180, 4
      %v5616 = vsel %vm957, %v5613, %v5615
      %v5617 = vrot.slane %v5189, 4
      %v5618 = vsel %vm957, %v5615, %v5617
      %v5619 = vrot.slane %v5198, 4
      %v5620 = vsel %vm957, %v5617, %v5619
      %v5621 = vrot.slane %v5207, 4
      %v5622 = vsel %vm957, %v5619, %v5621
      %v5623 = vrot.slane %v5216, 4
      %v5624 = vsel %vm957, %v5621, %v5623
      %v5625 = vrot.slane %v5225, 4
      %v5626 = vsel %vm957, %v5623, %v5625
      %v5627 = vrot.slane %v5234, 4
      %v5628 = vsel %vm957, %v5625, %v5627
      %v5629 = vrot.slane %v5243, 4
      %v5630 = vsel %vm957, %v5627, %v5629
      %v5631 = vrot.slane %v5252, 4
      %v5632 = vsel %vm957, %v5629, %v5631
      %v5633 = vrot.slane %v5261, 4
      %v5634 = vsel %vm957, %v5631, %v5633
      %v5635 = vrot.slane %v5270, 4
      %v5636 = vsel %vm957, %v5633, %v5635
      %v5637 = vrot.slane %v5279, 4
      %v5638 = vsel %vm957, %v5635, %v5637
      %v5639 = vrot.slane %v5288, 4
      %v5640 = vsel %vm957, %v5637, %v5639
      %v5641 = vrot.slane %v5297, 4
      %v5642 = vsel %vm957, %v5639, %v5641
      %v5643 = vrot.slane %v5306, 4
      %v5644 = vsel %vm957, %v5641, %v5643
      %v5645 = vrot.slane %v5310, 4
      %v5646 = vsel %vm957, %v5643, %v5645
      %5647 = vrot.lane.b32.xlu0 %v5600, 64
      %v5648 = vpop.permute.xlu0 %5647
      %5649 = vrot.lane.b32.xlu0 %v5602, 64
      %v5650 = vpop.permute.xlu0 %5649
      %5651 = vrot.lane.b32.xlu0 %v5604, 64
      %v5652 = vpop.permute.xlu0 %5651
      %5653 = vrot.lane.b32.xlu0 %v5606, 64
      %v5654 = vpop.permute.xlu0 %5653
      %5655 = vrot.lane.b32.xlu0 %v5608, 64
      %v5656 = vpop.permute.xlu0 %5655
      %5657 = vrot.lane.b32.xlu0 %v5610, 64
      %v5658 = vpop.permute.xlu0 %5657
      %5659 = vrot.lane.b32.xlu0 %v5612, 64
      %v5660 = vpop.permute.xlu0 %5659
      %5661 = vrot.lane.b32.xlu0 %v5614, 64
      %v5662 = vpop.permute.xlu0 %5661
      %5663 = vrot.lane.b32.xlu0 %v5616, 64
      %v5664 = vpop.permute.xlu0 %5663
      %5665 = vrot.lane.b32.xlu0 %v5618, 64
      %v5666 = vpop.permute.xlu0 %5665
      %5667 = vrot.lane.b32.xlu0 %v5620, 64
      %v5668 = vpop.permute.xlu0 %5667
      %5669 = vrot.lane.b32.xlu0 %v5622, 64
      %v5670 = vpop.permute.xlu0 %5669
      %5671 = vrot.lane.b32.xlu0 %v5624, 64
      %v5672 = vpop.permute.xlu0 %5671
      %5673 = vrot.lane.b32.xlu0 %v5626, 64
      %v5674 = vpop.permute.xlu0 %5673
      %5675 = vrot.lane.b32.xlu0 %v5628, 64
      %v5676 = vpop.permute.xlu0 %5675
      %5677 = vrot.lane.b32.xlu0 %v5630, 64
      %v5678 = vpop.permute.xlu0 %5677
      %5679 = vrot.lane.b32.xlu0 %v5632, 64
      %v5680 = vpop.permute.xlu0 %5679
      %5681 = vrot.lane.b32.xlu0 %v5634, 64
      %v5682 = vpop.permute.xlu0 %5681
      %5683 = vrot.lane.b32.xlu0 %v5636, 64
      %v5684 = vpop.permute.xlu0 %5683
      %5685 = vrot.lane.b32.xlu0 %v5638, 64
      %v5686 = vpop.permute.xlu0 %5685
      %5687 = vrot.lane.b32.xlu0 %v5640, 64
      %v5688 = vpop.permute.xlu0 %5687
      %5689 = vrot.lane.b32.xlu0 %v5642, 64
      %v5690 = vpop.permute.xlu0 %5689
      %5691 = vrot.lane.b32.xlu0 %v5644, 64
      %v5692 = vpop.permute.xlu0 %5691
      %5693 = vrot.lane.b32.xlu0 %v5646, 64
      %v5694 = vpop.permute.xlu0 %5693
      %v5695 = vrot.slane %v5316, 4
      %v5696 = vrot.slane %v5312, 5
      %v5697 = vor.u32 %v5695, %v5696
      %v5698 = vrot.slane %v5324, 4
      %v5699 = vrot.slane %v5320, 5
      %v5700 = vor.u32 %v5698, %v5699
      %v5701 = vsel %vm1055, %v5697, %v5700
      %v5702 = vrot.slane %v5332, 4
      %v5703 = vrot.slane %v5328, 5
      %v5704 = vor.u32 %v5702, %v5703
      %v5705 = vsel %vm1055, %v5700, %v5704
      %v5706 = vrot.slane %v5340, 4
      %v5707 = vrot.slane %v5336, 5
      %v5708 = vor.u32 %v5706, %v5707
      %v5709 = vsel %vm1055, %v5704, %v5708
      %v5710 = vrot.slane %v5348, 4
      %v5711 = vrot.slane %v5344, 5
      %v5712 = vor.u32 %v5710, %v5711
      %v5713 = vsel %vm1055, %v5708, %v5712
      %v5714 = vrot.slane %v5356, 4
      %v5715 = vrot.slane %v5352, 5
      %v5716 = vor.u32 %v5714, %v5715
      %v5717 = vsel %vm1055, %v5712, %v5716
      %v5718 = vrot.slane %v5364, 4
      %v5719 = vrot.slane %v5360, 5
      %v5720 = vor.u32 %v5718, %v5719
      %v5721 = vsel %vm1055, %v5716, %v5720
      %v5722 = vrot.slane %v5372, 4
      %v5723 = vrot.slane %v5368, 5
      %v5724 = vor.u32 %v5722, %v5723
      %v5725 = vsel %vm1055, %v5720, %v5724
      %v5726 = vrot.slane %v5380, 4
      %v5727 = vrot.slane %v5376, 5
      %v5728 = vor.u32 %v5726, %v5727
      %v5729 = vsel %vm1055, %v5724, %v5728
      %v5730 = vrot.slane %v5388, 4
      %v5731 = vrot.slane %v5384, 5
      %v5732 = vor.u32 %v5730, %v5731
      %v5733 = vsel %vm1055, %v5728, %v5732
      %v5734 = vrot.slane %v5396, 4
      %v5735 = vrot.slane %v5392, 5
      %v5736 = vor.u32 %v5734, %v5735
      %v5737 = vsel %vm1055, %v5732, %v5736
      %v5738 = vrot.slane %v5404, 4
      %v5739 = vrot.slane %v5400, 5
      %v5740 = vor.u32 %v5738, %v5739
      %v5741 = vsel %vm1055, %v5736, %v5740
      %v5742 = vrot.slane %v5412, 4
      %v5743 = vrot.slane %v5408, 5
      %v5744 = vor.u32 %v5742, %v5743
      %v5745 = vsel %vm1055, %v5740, %v5744
      %v5746 = vrot.slane %v5420, 4
      %v5747 = vrot.slane %v5416, 5
      %v5748 = vor.u32 %v5746, %v5747
      %v5749 = vsel %vm1055, %v5744, %v5748
      %v5750 = vrot.slane %v5428, 4
      %v5751 = vrot.slane %v5424, 5
      %v5752 = vor.u32 %v5750, %v5751
      %v5753 = vsel %vm1055, %v5748, %v5752
      %v5754 = vrot.slane %v5436, 4
      %v5755 = vrot.slane %v5432, 5
      %v5756 = vor.u32 %v5754, %v5755
      %v5757 = vsel %vm1055, %v5752, %v5756
      %v5758 = vrot.slane %v5444, 4
      %v5759 = vrot.slane %v5440, 5
      %v5760 = vor.u32 %v5758, %v5759
      %v5761 = vsel %vm1055, %v5756, %v5760
      %v5762 = vrot.slane %v5452, 4
      %v5763 = vrot.slane %v5448, 5
      %v5764 = vor.u32 %v5762, %v5763
      %v5765 = vsel %vm1055, %v5760, %v5764
      %v5766 = vrot.slane %v5460, 4
      %v5767 = vrot.slane %v5456, 5
      %v5768 = vor.u32 %v5766, %v5767
      %v5769 = vsel %vm1055, %v5764, %v5768
      %v5770 = vrot.slane %v5468, 4
      %v5771 = vrot.slane %v5464, 5
      %v5772 = vor.u32 %v5770, %v5771
      %v5773 = vsel %vm1055, %v5768, %v5772
      %v5774 = vrot.slane %v5476, 4
      %v5775 = vrot.slane %v5472, 5
      %v5776 = vor.u32 %v5774, %v5775
      %v5777 = vsel %vm1055, %v5772, %v5776
      %v5778 = vrot.slane %v5484, 4
      %v5779 = vrot.slane %v5480, 5
      %v5780 = vor.u32 %v5778, %v5779
      %v5781 = vsel %vm1055, %v5776, %v5780
      %v5782 = vrot.slane %v5492, 4
      %v5783 = vrot.slane %v5488, 5
      %v5784 = vor.u32 %v5782, %v5783
      %v5785 = vsel %vm1055, %v5780, %v5784
      %v5786 = vshrl.u32 %v5306, 16
      %v5788 = vrot.slane %v5786, 4
      %v5789 = vrot.slane %v5496, 5
      %v5790 = vor.u32 %v5788, %v5789
      %v5791 = vsel %vm1055, %v5784, %v5790
      %v5793 = vshrl.u32 %v5310, 16
      %v5795 = vrot.slane %v5793, 4
      %v5796 = vshll.u32 %v5310, 16
      %v5798 = vrot.slane %v5796, 5
      %v5799 = vor.u32 %v5795, %v5798
      %v5800 = vsel %vm1055, %v5790, %v5799
      %v5801 = vrot.slane %v5309, 5
      %v5802 = vrot.slane %v5108, 5
      %v5803 = vsel %vm1210, %v5801, %v5802
      %v5804 = vrot.slane %v5117, 5
      %v5805 = vsel %vm1210, %v5802, %v5804
      %v5806 = vrot.slane %v5126, 5
      %v5807 = vsel %vm1210, %v5804, %v5806
      %v5808 = vrot.slane %v5135, 5
      %v5809 = vsel %vm1210, %v5806, %v5808
      %v5810 = vrot.slane %v5144, 5
      %v5811 = vsel %vm1210, %v5808, %v5810
      %v5812 = vrot.slane %v5153, 5
      %v5813 = vsel %vm1210, %v5810, %v5812
      %v5814 = vrot.slane %v5162, 5
      %v5815 = vsel %vm1210, %v5812, %v5814
      %v5816 = vrot.slane %v5171, 5
      %v5817 = vsel %vm1210, %v5814, %v5816
      %v5818 = vrot.slane %v5180, 5
      %v5819 = vsel %vm1210, %v5816, %v5818
      %v5820 = vrot.slane %v5189, 5
      %v5821 = vsel %vm1210, %v5818, %v5820
      %v5822 = vrot.slane %v5198, 5
      %v5823 = vsel %vm1210, %v5820, %v5822
      %v5824 = vrot.slane %v5207, 5
      %v5825 = vsel %vm1210, %v5822, %v5824
      %v5826 = vrot.slane %v5216, 5
      %v5827 = vsel %vm1210, %v5824, %v5826
      %v5828 = vrot.slane %v5225, 5
      %v5829 = vsel %vm1210, %v5826, %v5828
      %v5830 = vrot.slane %v5234, 5
      %v5831 = vsel %vm1210, %v5828, %v5830
      %v5832 = vrot.slane %v5243, 5
      %v5833 = vsel %vm1210, %v5830, %v5832
      %v5834 = vrot.slane %v5252, 5
      %v5835 = vsel %vm1210, %v5832, %v5834
      %v5836 = vrot.slane %v5261, 5
      %v5837 = vsel %vm1210, %v5834, %v5836
      %v5838 = vrot.slane %v5270, 5
      %v5839 = vsel %vm1210, %v5836, %v5838
      %v5840 = vrot.slane %v5279, 5
      %v5841 = vsel %vm1210, %v5838, %v5840
      %v5842 = vrot.slane %v5288, 5
      %v5843 = vsel %vm1210, %v5840, %v5842
      %v5844 = vrot.slane %v5297, 5
      %v5845 = vsel %vm1210, %v5842, %v5844
      %v5846 = vrot.slane %v5306, 5
      %v5847 = vsel %vm1210, %v5844, %v5846
      %v5848 = vrot.slane %v5310, 5
      %v5849 = vsel %vm1210, %v5846, %v5848
      %5850 = vrot.lane.b32.xlu0 %v5803, 64
      %v5851 = vpop.permute.xlu0 %5850
      %5852 = vrot.lane.b32.xlu0 %v5805, 64
      %v5853 = vpop.permute.xlu0 %5852
      %5854 = vrot.lane.b32.xlu0 %v5807, 64
      %v5855 = vpop.permute.xlu0 %5854
      %5856 = vrot.lane.b32.xlu0 %v5809, 64
      %v5857 = vpop.permute.xlu0 %5856
      %5858 = vrot.lane.b32.xlu0 %v5811, 64
      %v5859 = vpop.permute.xlu0 %5858
      %5860 = vrot.lane.b32.xlu0 %v5813, 64
      %v5861 = vpop.permute.xlu0 %5860
      %5862 = vrot.lane.b32.xlu0 %v5815, 64
      %v5863 = vpop.permute.xlu0 %5862
      %5864 = vrot.lane.b32.xlu0 %v5817, 64
      %v5865 = vpop.permute.xlu0 %5864
      %5866 = vrot.lane.b32.xlu0 %v5819, 64
      %v5867 = vpop.permute.xlu0 %5866
      %5868 = vrot.lane.b32.xlu0 %v5821, 64
      %v5869 = vpop.permute.xlu0 %5868
      %5870 = vrot.lane.b32.xlu0 %v5823, 64
      %v5871 = vpop.permute.xlu0 %5870
      %5872 = vrot.lane.b32.xlu0 %v5825, 64
      %v5873 = vpop.permute.xlu0 %5872
      %5874 = vrot.lane.b32.xlu0 %v5827, 64
      %v5875 = vpop.permute.xlu0 %5874
      %5876 = vrot.lane.b32.xlu0 %v5829, 64
      %v5877 = vpop.permute.xlu0 %5876
      %5878 = vrot.lane.b32.xlu0 %v5831, 64
      %v5879 = vpop.permute.xlu0 %5878
      %5880 = vrot.lane.b32.xlu0 %v5833, 64
      %v5881 = vpop.permute.xlu0 %5880
      %5882 = vrot.lane.b32.xlu0 %v5835, 64
      %v5883 = vpop.permute.xlu0 %5882
      %5884 = vrot.lane.b32.xlu0 %v5837, 64
      %v5885 = vpop.permute.xlu0 %5884
      %5886 = vrot.lane.b32.xlu0 %v5839, 64
      %v5887 = vpop.permute.xlu0 %5886
      %5888 = vrot.lane.b32.xlu0 %v5841, 64
      %v5889 = vpop.permute.xlu0 %5888
      %5890 = vrot.lane.b32.xlu0 %v5843, 64
      %v5891 = vpop.permute.xlu0 %5890
      %5892 = vrot.lane.b32.xlu0 %v5845, 64
      %v5893 = vpop.permute.xlu0 %5892
      %5894 = vrot.lane.b32.xlu0 %v5847, 64
      %v5895 = vpop.permute.xlu0 %5894
      %5896 = vrot.lane.b32.xlu0 %v5849, 64
      %v5897 = vpop.permute.xlu0 %5896
      %v5898 = vor.u32 %v5786, %v5498
      %v5899 = vrot.slane %v5796, 1
      %v5900 = vsel %vm588, %v5898, %v5899
      %v5901 = vor.u32 %v5793, %v5899
      %v5902 = vsel %vm588, %v5901, %v3095
      %5903 = vrot.lane.b32.xlu0 %v5900, 64
      %v5904 = vpop.permute.xlu0 %5903
      %5905 = vrot.lane.b32.xlu0 %v5902, 64
      %v5906 = vpop.permute.xlu0 %5905
      %5907 = vrot.lane.b32.xlu0 %v3787, 64
      %v5908 = vpop.permute.xlu0 %5907
      %v5909 = vrot.slane %v5310, 1
      %v5910 = vsel %vm858, %v5595, %v5909
      %v5911 = vsel %vm858, %v5909, %v3336
      %v5913 = vsel %vm3889, 0, %v5501
      %v5916 = vsel %vm3889, %v5309, %v5503
      %v5919 = vsel %vm3889, %v5108, %v5505
      %v5922 = vsel %vm3889, %v5117, %v5507
      %v5925 = vsel %vm3889, %v5126, %v5509
      %v5928 = vsel %vm3889, %v5135, %v5511
      %v5931 = vsel %vm3889, %v5144, %v5513
      %v5934 = vsel %vm3889, %v5153, %v5515
      %v5937 = vsel %vm3889, %v5162, %v5517
      %v5940 = vsel %vm3889, %v5171, %v5519
      %v5943 = vsel %vm3889, %v5180, %v5521
      %v5946 = vsel %vm3889, %v5189, %v5523
      %v5949 = vsel %vm3889, %v5198, %v5525
      %v5952 = vsel %vm3889, %v5207, %v5527
      %v5955 = vsel %vm3889, %v5216, %v5529
      %v5958 = vsel %vm3889, %v5225, %v5531
      %v5961 = vsel %vm3889, %v5234, %v5533
      %v5964 = vsel %vm3889, %v5243, %v5535
      %v5967 = vsel %vm3889, %v5252, %v5537
      %v5970 = vsel %vm3889, %v5261, %v5539
      %v5973 = vsel %vm3889, %v5270, %v5541
      %v5976 = vsel %vm3889, %v5279, %v5543
      %v5979 = vsel %vm3889, %v5288, %v5545
      %v5982 = vsel %vm3889, %v5297, %v5547
      %v5986 = vsel %vm3889, %v5550, %v5648
      %v5990 = vsel %vm3889, %v5552, %v5650
      %v5994 = vsel %vm3889, %v5554, %v5652
      %v5998 = vsel %vm3889, %v5556, %v5654
      %v6002 = vsel %vm3889, %v5558, %v5656
      %v6006 = vsel %vm3889, %v5560, %v5658
      %v6010 = vsel %vm3889, %v5562, %v5660
      %v6014 = vsel %vm3889, %v5564, %v5662
      %v6018 = vsel %vm3889, %v5566, %v5664
      %v6022 = vsel %vm3889, %v5568, %v5666
      %v6026 = vsel %vm3889, %v5570, %v5668
      %v6030 = vsel %vm3889, %v5572, %v5670
      %v6034 = vsel %vm3889, %v5574, %v5672
      %v6038 = vsel %vm3889, %v5576, %v5674
      %v6042 = vsel %vm3889, %v5578, %v5676
      %v6046 = vsel %vm3889, %v5580, %v5678
      %v6050 = vsel %vm3889, %v5582, %v5680
      %v6054 = vsel %vm3889, %v5584, %v5682
      %v6058 = vsel %vm3889, %v5586, %v5684
      %v6062 = vsel %vm3889, %v5588, %v5686
      %v6066 = vsel %vm3889, %v5590, %v5688
      %v6070 = vsel %vm3889, %v5592, %v5690
      %v6074 = vsel %vm3889, %v5594, %v5692
      %v6078 = vsel %vm3889, %v5596, %v5694
      %v6082 = vsel %vm3889, %v5701, %v5851
      %v6086 = vsel %vm3889, %v5705, %v5853
      %v6090 = vsel %vm3889, %v5709, %v5855
      %v6094 = vsel %vm3889, %v5713, %v5857
      %v6098 = vsel %vm3889, %v5717, %v5859
      %v6102 = vsel %vm3889, %v5721, %v5861
      %v6106 = vsel %vm3889, %v5725, %v5863
      %v6110 = vsel %vm3889, %v5729, %v5865
      %v6114 = vsel %vm3889, %v5733, %v5867
      %v6118 = vsel %vm3889, %v5737, %v5869
      %v6122 = vsel %vm3889, %v5741, %v5871
      %v6126 = vsel %vm3889, %v5745, %v5873
      %v6130 = vsel %vm3889, %v5749, %v5875
      %v6134 = vsel %vm3889, %v5753, %v5877
      %v6138 = vsel %vm3889, %v5757, %v5879
      %v6142 = vsel %vm3889, %v5761, %v5881
      %v6146 = vsel %vm3889, %v5765, %v5883
      %v6150 = vsel %vm3889, %v5769, %v5885
      %v6154 = vsel %vm3889, %v5773, %v5887
      %v6158 = vsel %vm3889, %v5777, %v5889
      %v6162 = vsel %vm3889, %v5781, %v5891
      %v6166 = vsel %vm3889, %v5785, %v5893
      %v6170 = vsel %vm3889, %v5791, %v5895
      %v6174 = vsel %vm3889, %v5800, %v5897
      %v6177 = vsel %vm3889, %v5306, %v5904
      %v6180 = vsel %vm3889, %v5310, %v5906
      %v6183 = vsel %vm3889, 0, %v5908
      %v6185 = vld [vmem:[%s6] sm:$0xf]
      %v6186 = vld [vmem:[%s6 + $0x4] sm:$0xf]
      %v6187 = vld [vmem:[%s6 + $0x8] sm:$0xf]
      %v6188 = vld [vmem:[%s6 + $0xc] sm:$0xf]
      %v6189 = vld [vmem:[%s6 + $0x10] sm:$0xf]
      %v6190 = vld [vmem:[%s6 + $0x14] sm:$0xf]
      %v6191 = vld [vmem:[%s6 + $0x18] sm:$0xf]
      %v6192 = vld [vmem:[%s6 + $0x1c] sm:$0xf]
      %v6193 = vld [vmem:[%s6 + $0x20] sm:$0xf]
      %v6194 = vld [vmem:[%s6 + $0x24] sm:$0xf]
      %v6195 = vld [vmem:[%s6 + $0x28] sm:$0xf]
      %v6196 = vld [vmem:[%s6 + $0x2c] sm:$0xf]
      %v6197 = vld [vmem:[%s6 + $0x30] sm:$0xf]
      %v6198 = vld [vmem:[%s6 + $0x34] sm:$0xf]
      %v6199 = vld [vmem:[%s6 + $0x38] sm:$0xf]
      %v6200 = vld [vmem:[%s6 + $0x3c] sm:$0xf]
      %v6201 = vld [vmem:[%s6 + $0x40] sm:$0xf]
      %v6202 = vld [vmem:[%s6 + $0x44] sm:$0xf]
      %v6203 = vld [vmem:[%s6 + $0x48] sm:$0xf]
      %v6204 = vld [vmem:[%s6 + $0x4c] sm:$0xf]
      %v6205 = vld [vmem:[%s6 + $0x50] sm:$0xf]
      %v6206 = vld [vmem:[%s6 + $0x54] sm:$0xf]
      %v6207 = vld [vmem:[%s6 + $0x58] sm:$0xf]
      %v6208 = vld [vmem:[%s6 + $0x5c] sm:$0xf]
      %v6209 = vld [vmem:[%s6 + $0x60] sm:$0xf]
      %v6210 = vld [vmem:[%s6 + $0x64] sm:$0xf]
      %v6211 = vld [vmem:[%s6 + $0x68] sm:$0xf]
      %v6212 = vld [vmem:[%s6 + $0x6c] sm:$0xf]
      %v6213 = vld [vmem:[%s6 + $0x70] sm:$0xf]
      %v6214 = vld [vmem:[%s6 + $0x74] sm:$0xf]
      %v6215 = vld [vmem:[%s6 + $0x78] sm:$0xf]
      %v6216 = vld [vmem:[%s6 + $0x7c] sm:$0xf]
      %v6217 = vld [vmem:[%s6 + $0x80] sm:$0xf]
      %v6218 = vld [vmem:[%s6 + $0x84] sm:$0xf]
      %v6219 = vld [vmem:[%s6 + $0x88] sm:$0xf]
      %v6220 = vld [vmem:[%s6 + $0x8c] sm:$0xf]
      %v6221 = vld [vmem:[%s6 + $0x90] sm:$0xf]
      %v6222 = vld [vmem:[%s6 + $0x94] sm:$0xf]
      %v6223 = vld [vmem:[%s6 + $0x98] sm:$0xf]
      %v6224 = vld [vmem:[%s6 + $0x9c] sm:$0xf]
      %v6225 = vld [vmem:[%s6 + $0xa0] sm:$0xf]
      %v6226 = vld [vmem:[%s6 + $0xa4] sm:$0xf]
      %v6227 = vld [vmem:[%s6 + $0xa8] sm:$0xf]
      %v6228 = vld [vmem:[%s6 + $0xac] sm:$0xf]
      %v6229 = vld [vmem:[%s6 + $0xb0] sm:$0xf]
      %v6230 = vld [vmem:[%s6 + $0xb4] sm:$0xf]
      %v6231 = vld [vmem:[%s6 + $0xb8] sm:$0xf]
      %v6232 = vld [vmem:[%s6 + $0xbc] sm:$0xf]
      %v6233 = vld [vmem:[%s6 + $0xc0] sm:$0xf]
      %v6234 = vld [vmem:[%s6 + $0xc4] sm:$0xf]
      %v6235 = vld [vmem:[%s6 + $0xc8] sm:$0xf]
      %v6236 = vld [vmem:[%s6 + $0xcc] sm:$0xf]
      %v6237 = vld [vmem:[%s6 + $0xd0] sm:$0xf]
      %v6238 = vld [vmem:[%s6 + $0xd4] sm:$0xf]
      %v6239 = vld [vmem:[%s6 + $0xd8] sm:$0xf]
      %v6240 = vld [vmem:[%s6 + $0xdc] sm:$0xf]
      %v6241 = vld [vmem:[%s6 + $0xe0] sm:$0xf]
      %v6242 = vld [vmem:[%s6 + $0xe4] sm:$0xf]
      %v6243 = vld [vmem:[%s6 + $0xe8] sm:$0xf]
      %v6244 = vld [vmem:[%s6 + $0xec] sm:$0xf]
      %v6245 = vld [vmem:[%s6 + $0xf0] sm:$0xf]
      %v6246 = vld [vmem:[%s6 + $0xf4] sm:$0xf]
      %v6247 = vld [vmem:[%s6 + $0xf8] sm:$0xf]
      %v6248 = vld [vmem:[%s6 + $0xfc] sm:$0xf]
      %v6249 = vld [vmem:[%s6 + $0x100] sm:$0xf]
      %v6250 = vld [vmem:[%s6 + $0x104] sm:$0xf]
      %v6251 = vld [vmem:[%s6 + $0x108] sm:$0xf]
      %v6252 = vld [vmem:[%s6 + $0x10c] sm:$0xf]
      %v6253 = vld [vmem:[%s6 + $0x110] sm:$0xf]
      %v6254 = vld [vmem:[%s6 + $0x114] sm:$0xf]
      %v6255 = vld [vmem:[%s6 + $0x118] sm:$0xf]
      %v6256 = vld [vmem:[%s6 + $0x11c] sm:$0xf]
      %v6257 = vld [vmem:[%s7] sm:$0x1]
      %v6259 = vlaneseq
      %v6260 = vshrl.u32 %v6259, 7
      %v6261 = vsub.s32 0, %v6260
      %v6262 = vrot.slane %v6257, %v6261
      %v6336 = vunpack.c.l.b16 %v6185
      %v6337 = vunpack.c.l.b16 %v6186
      %v6338 = vunpack.c.l.b16 %v6187
      %v6339 = vunpack.c.l.b16 %v6188
      %v6340 = vunpack.c.l.b16 %v6189
      %v6341 = vunpack.c.l.b16 %v6190
      %v6342 = vunpack.c.l.b16 %v6191
      %v6343 = vunpack.c.l.b16 %v6192
      %v6344 = vunpack.c.l.b16 %v6193
      %v6345 = vunpack.c.l.b16 %v6194
      %v6346 = vunpack.c.l.b16 %v6195
      %v6347 = vunpack.c.l.b16 %v6196
      %v6348 = vunpack.c.l.b16 %v6197
      %v6349 = vunpack.c.l.b16 %v6198
      %v6350 = vunpack.c.l.b16 %v6199
      %v6351 = vunpack.c.l.b16 %v6200
      %v6352 = vunpack.c.l.b16 %v6201
      %v6353 = vunpack.c.l.b16 %v6202
      %v6354 = vunpack.c.l.b16 %v6203
      %v6355 = vunpack.c.l.b16 %v6204
      %v6356 = vunpack.c.l.b16 %v6205
      %v6357 = vunpack.c.l.b16 %v6206
      %v6358 = vunpack.c.l.b16 %v6207
      %v6359 = vunpack.c.l.b16 %v6208
      %v6360 = vunpack.c.l.b16 %v6209
      %v6361 = vunpack.c.l.b16 %v6210
      %v6362 = vunpack.c.l.b16 %v6211
      %v6363 = vunpack.c.l.b16 %v6212
      %v6364 = vunpack.c.l.b16 %v6213
      %v6365 = vunpack.c.l.b16 %v6214
      %v6366 = vunpack.c.l.b16 %v6215
      %v6367 = vunpack.c.l.b16 %v6216
      %v6368 = vunpack.c.l.b16 %v6217
      %v6369 = vunpack.c.l.b16 %v6218
      %v6370 = vunpack.c.l.b16 %v6219
      %v6371 = vunpack.c.l.b16 %v6220
      %v6372 = vunpack.c.l.b16 %v6221
      %v6373 = vunpack.c.l.b16 %v6222
      %v6374 = vunpack.c.l.b16 %v6223
      %v6375 = vunpack.c.l.b16 %v6224
      %v6376 = vunpack.c.l.b16 %v6225
      %v6377 = vunpack.c.l.b16 %v6226
      %v6378 = vunpack.c.l.b16 %v6227
      %v6379 = vunpack.c.l.b16 %v6228
      %v6380 = vunpack.c.l.b16 %v6229
      %v6381 = vunpack.c.l.b16 %v6230
      %v6382 = vunpack.c.l.b16 %v6231
      %v6383 = vunpack.c.l.b16 %v6232
      %v6384 = vunpack.c.l.b16 %v6233
      %v6385 = vunpack.c.l.b16 %v6234
      %v6386 = vunpack.c.l.b16 %v6235
      %v6387 = vunpack.c.l.b16 %v6236
      %v6388 = vunpack.c.l.b16 %v6237
      %v6389 = vunpack.c.l.b16 %v6238
      %v6390 = vunpack.c.l.b16 %v6239
      %v6391 = vunpack.c.l.b16 %v6240
      %v6392 = vunpack.c.l.b16 %v6241
      %v6393 = vunpack.c.l.b16 %v6242
      %v6394 = vunpack.c.l.b16 %v6243
      %v6395 = vunpack.c.l.b16 %v6244
      %v6396 = vunpack.c.l.b16 %v6245
      %v6397 = vunpack.c.l.b16 %v6246
      %v6398 = vunpack.c.l.b16 %v6247
      %v6399 = vunpack.c.l.b16 %v6248
      %v6400 = vunpack.c.l.b16 %v6249
      %v6401 = vunpack.c.l.b16 %v6250
      %v6402 = vunpack.c.l.b16 %v6251
      %v6403 = vunpack.c.l.b16 %v6252
      %v6404 = vunpack.c.l.b16 %v6253
      %v6405 = vunpack.c.l.b16 %v6254
      %v6406 = vunpack.c.l.b16 %v6255
      %v6407 = vunpack.c.l.b16 %v6256
      %v6408 = vpack.c.b16 %v6337, %v6336
      %v6409 = vpack.c.b16 %v6339, %v6338
      %v6410 = vpack.c.b16 %v6341, %v6340
      %v6411 = vpack.c.b16 %v6343, %v6342
      %v6412 = vpack.c.b16 %v6345, %v6344
      %v6413 = vpack.c.b16 %v6347, %v6346
      %v6414 = vpack.c.b16 %v6349, %v6348
      %v6415 = vpack.c.b16 %v6351, %v6350
      %v6416 = vpack.c.b16 %v6353, %v6352
      %v6417 = vpack.c.b16 %v6355, %v6354
      %v6418 = vpack.c.b16 %v6357, %v6356
      %v6419 = vpack.c.b16 %v6359, %v6358
      %v6420 = vpack.c.b16 %v6361, %v6360
      %v6421 = vpack.c.b16 %v6363, %v6362
      %v6422 = vpack.c.b16 %v6365, %v6364
      %v6423 = vpack.c.b16 %v6367, %v6366
      %v6424 = vpack.c.b16 %v6369, %v6368
      %v6425 = vpack.c.b16 %v6371, %v6370
      %v6426 = vpack.c.b16 %v6373, %v6372
      %v6427 = vpack.c.b16 %v6375, %v6374
      %v6428 = vpack.c.b16 %v6377, %v6376
      %v6429 = vpack.c.b16 %v6379, %v6378
      %v6430 = vpack.c.b16 %v6381, %v6380
      %v6431 = vpack.c.b16 %v6383, %v6382
      %v6432 = vpack.c.b16 %v6385, %v6384
      %v6433 = vpack.c.b16 %v6387, %v6386
      %v6434 = vpack.c.b16 %v6389, %v6388
      %v6435 = vpack.c.b16 %v6391, %v6390
      %v6436 = vpack.c.b16 %v6393, %v6392
      %v6437 = vpack.c.b16 %v6395, %v6394
      %v6438 = vpack.c.b16 %v6397, %v6396
      %v6439 = vpack.c.b16 %v6399, %v6398
      %v6440 = vpack.c.b16 %v6401, %v6400
      %v6441 = vpack.c.b16 %v6403, %v6402
      %v6442 = vpack.c.b16 %v6405, %v6404
      %v6443 = vpack.c.b16 %v6407, %v6406
      %v6480 = vsel %vm3889, %v5556, 0
      %v6482 = vsel %vm3889, %v5558, 0
      %v6484 = vsel %vm3889, %v5560, 0
      %v6486 = vsel %vm3889, %v5562, 0
      %v6488 = vsel %vm3889, %v5564, 0
      %v6490 = vsel %vm3889, %v5566, 0
      %v6492 = vsel %vm3889, %v5568, 0
      %v6494 = vsel %vm3889, %v5570, 0
      %v6496 = vsel %vm3889, %v5572, 0
      %v6498 = vsel %vm3889, %v5574, 0
      %v6500 = vsel %vm3889, %v5576, 0
      %v6502 = vsel %vm3889, %v5578, 0
      %v6504 = vsel %vm3889, %v5580, 0
      %v6506 = vsel %vm3889, %v5582, 0
      %v6508 = vsel %vm3889, %v5584, 0
      %v6510 = vsel %vm3889, %v5586, 0
      %v6512 = vsel %vm3889, %v5588, 0
      %v6514 = vsel %vm3889, %v5590, 0
      %v6516 = vsel %vm3889, %v5592, 0
      %v6518 = vsel %vm3889, %v5594, 0
      %v6520 = vsel %vm3889, %v5596, 0
      %v6523 = vsel %vm3889, %v5910, 0
      %v6526 = vsel %vm3889, %v5911, 0
      %v6528 = vsel %vm3889, %v3839, 0
      %6530 = vmatprep.subr.bf16.mxu0 0
      %6531 = vmatpush1.bf16.msra.mxu0 %v6408
      %6532 = vmatprep.subr.bf16.mxu0 0
      %6533 = vmatpush1.bf16.msra.mxu0 %v6409
      %6534 = vmatprep.subr.bf16.mxu0 0
      %6535 = vmatpush1.bf16.msra.mxu0 %v6410
      %6536 = vmatprep.subr.bf16.mxu0 0
      %6537 = vmatpush1.bf16.msra.mxu0 %v6411
      %6538 = vmatprep.subr.bf16.mxu0 0
      %6539 = vmatpush1.bf16.msra.mxu0 %v6412
      %6540 = vmatprep.subr.bf16.mxu0 0
      %6541 = vmatpush1.bf16.msra.mxu0 %v6413
      %6542 = vmatprep.subr.bf16.mxu0 0
      %6543 = vmatpush1.bf16.msra.mxu0 %v6414
      %6544 = vmatprep.subr.bf16.mxu0 0
      %6545 = vmatpush1.bf16.msra.mxu0 %v6415
      %6546 = vmatprep.subr.bf16.mxu0 0
      %6547 = vmatpush1.bf16.msra.mxu0 %v6416
      %6548 = vmatprep.subr.bf16.mxu0 0
      %6549 = vmatpush1.bf16.msra.mxu0 %v6417
      %6550 = vmatprep.subr.bf16.mxu0 0
      %6551 = vmatpush1.bf16.msra.mxu0 %v6418
      %6552 = vmatprep.subr.bf16.mxu0 0
      %6553 = vmatpush1.bf16.msra.mxu0 %v6419
      %6554 = vmatprep.subr.bf16.mxu0 0
      %6555 = vmatpush1.bf16.msra.mxu0 %v6420
      %6556 = vmatprep.subr.bf16.mxu0 0
      %6557 = vmatpush1.bf16.msra.mxu0 %v6421
      %6558 = vmatprep.subr.bf16.mxu0 0
      %6559 = vmatpush1.bf16.msra.mxu0 %v6422
      %6560 = vmatprep.subr.bf16.mxu0 0
      %6561 = vmatpush1.bf16.msra.mxu0 %v6423
      %6562 = vmatprep.mubr.bf16.mxu0 %v5986
      %6563 = vmatmul.mubr.bf16.gmra.mrb[0].mxu0 %v5913
      %v6564 = vpop.f32.mrb[0].mxu0
      %v6565 = vadd.f32 %v6262, %v6564
      %v6566 = vpop.f32.mrb[0].mxu0
      %v6567 = vpop.f32.mrb[0].mxu0
      %v6568 = vadd.f32 %v6262, %v6567
      %v6569 = vpop.f32.mrb[0].mxu0
      %6570 = vmatprep.mubr.bf16.mxu0 %v5990
      %6571 = vmatmul.mubr.bf16.gmra.mrb[0].mxu0 %v5916
      %v6572 = vpop.f32.mrb[0].mxu0
      %v6573 = vadd.f32 %v6262, %v6572
      %v6574 = vpop.f32.mrb[0].mxu0
      %v6575 = vpop.f32.mrb[0].mxu0
      %v6576 = vadd.f32 %v6262, %v6575
      %v6577 = vpop.f32.mrb[0].mxu0
      %6578 = vmatprep.mubr.bf16.mxu0 %v5994
      %6579 = vmatmul.mubr.bf16.gmra.mrb[0].mxu0 %v5919
      %v6580 = vpop.f32.mrb[0].mxu0
      %v6581 = vadd.f32 %v6262, %v6580
      %v6582 = vpop.f32.mrb[0].mxu0
      %v6583 = vpop.f32.mrb[0].mxu0
      %v6584 = vadd.f32 %v6262, %v6583
      %v6585 = vpop.f32.mrb[0].mxu0
      %6586 = vmatprep.mubr.bf16.mxu0 %v5998
      %6587 = vmatmul.mubr.bf16.gmra.mrb[0].mxu0 %v5922
      %v6588 = vpop.f32.mrb[0].mxu0
      %v6589 = vadd.f32 %v6262, %v6588
      %v6590 = vpop.f32.mrb[0].mxu0
      %v6591 = vpop.f32.mrb[0].mxu0
      %v6592 = vadd.f32 %v6262, %v6591
      %v6593 = vpop.f32.mrb[0].mxu0
      %6594 = vmatprep.mubr.bf16.mxu0 %v6002
      %6595 = vmatmul.mubr.bf16.gmra.mrb[0].mxu0 %v5925
      %v6596 = vpop.f32.mrb[0].mxu0
      %v6597 = vadd.f32 %v6262, %v6596
      %v6598 = vpop.f32.mrb[0].mxu0
      %v6599 = vpop.f32.mrb[0].mxu0
      %v6600 = vadd.f32 %v6262, %v6599
      %v6601 = vpop.f32.mrb[0].mxu0
      %6602 = vmatprep.mubr.bf16.mxu0 %v6006
      %6603 = vmatmul.mubr.bf16.gmra.mrb[0].mxu0 %v5928
      %v6604 = vpop.f32.mrb[0].mxu0
      %v6605 = vadd.f32 %v6262, %v6604
      %v6606 = vpop.f32.mrb[0].mxu0
      %v6607 = vpop.f32.mrb[0].mxu0
      %v6608 = vadd.f32 %v6262, %v6607
      %v6609 = vpop.f32.mrb[0].mxu0
      %6610 = vmatprep.mubr.bf16.mxu0 %v6010
      %6611 = vmatmul.mubr.bf16.gmra.mrb[0].mxu0 %v5931
      %v6612 = vpop.f32.mrb[0].mxu0
      %v6613 = vadd.f32 %v6262, %v6612
      %v6614 = vpop.f32.mrb[0].mxu0
      %v6615 = vpop.f32.mrb[0].mxu0
      %v6616 = vadd.f32 %v6262, %v6615
      %v6617 = vpop.f32.mrb[0].mxu0
      %6618 = vmatprep.mubr.bf16.mxu0 %v6014
      %6619 = vmatmul.mubr.bf16.gmra.mrb[0].mxu0 %v5934
      %v6620 = vpop.f32.mrb[0].mxu0
      %v6621 = vadd.f32 %v6262, %v6620
      %v6622 = vpop.f32.mrb[0].mxu0
      %v6623 = vpop.f32.mrb[0].mxu0
      %v6624 = vadd.f32 %v6262, %v6623
      %v6625 = vpop.f32.mrb[0].mxu0
      %6626 = vmatprep.mubr.bf16.mxu0 %v6018
      %6627 = vmatmul.mubr.bf16.gmra.mrb[0].mxu0 %v5937
      %v6628 = vpop.f32.mrb[0].mxu0
      %v6629 = vadd.f32 %v6262, %v6628
      %v6630 = vpop.f32.mrb[0].mxu0
      %v6631 = vpop.f32.mrb[0].mxu0
      %v6632 = vadd.f32 %v6262, %v6631
      %v6633 = vpop.f32.mrb[0].mxu0
      %6634 = vmatprep.mubr.bf16.mxu0 %v6022
      %6635 = vmatmul.mubr.bf16.gmra.mrb[0].mxu0 %v5940
      %v6636 = vpop.f32.mrb[0].mxu0
      %v6637 = vadd.f32 %v6262, %v6636
      %v6638 = vpop.f32.mrb[0].mxu0
      %v6639 = vpop.f32.mrb[0].mxu0
      %v6640 = vadd.f32 %v6262, %v6639
      %v6641 = vpop.f32.mrb[0].mxu0
      %6642 = vmatprep.mubr.bf16.mxu0 %v6026
      %6643 = vmatmul.mubr.bf16.gmra.mrb[0].mxu0 %v5943
      %v6644 = vpop.f32.mrb[0].mxu0
      %v6645 = vadd.f32 %v6262, %v6644
      %v6646 = vpop.f32.mrb[0].mxu0
      %v6647 = vpop.f32.mrb[0].mxu0
      %v6648 = vadd.f32 %v6262, %v6647
      %v6649 = vpop.f32.mrb[0].mxu0
      %6650 = vmatprep.mubr.bf16.mxu0 %v6030
      %6651 = vmatmul.mubr.bf16.gmra.mrb[0].mxu0 %v5946
      %v6652 = vpop.f32.mrb[0].mxu0
      %v6653 = vadd.f32 %v6262, %v6652
      %v6654 = vpop.f32.mrb[0].mxu0
      %v6655 = vpop.f32.mrb[0].mxu0
      %v6656 = vadd.f32 %v6262, %v6655
      %v6657 = vpop.f32.mrb[0].mxu0
      %6658 = vmatprep.mubr.bf16.mxu0 %v6034
      %6659 = vmatmul.mubr.bf16.gmra.mrb[0].mxu0 %v5949
      %v6660 = vpop.f32.mrb[0].mxu0
      %v6661 = vadd.f32 %v6262, %v6660
      %v6662 = vpop.f32.mrb[0].mxu0
      %v6663 = vpop.f32.mrb[0].mxu0
      %v6664 = vadd.f32 %v6262, %v6663
      %v6665 = vpop.f32.mrb[0].mxu0
      %6666 = vmatprep.mubr.bf16.mxu0 %v6038
      %6667 = vmatmul.mubr.bf16.gmra.mrb[0].mxu0 %v5952
      %v6668 = vpop.f32.mrb[0].mxu0
      %v6669 = vadd.f32 %v6262, %v6668
      %v6670 = vpop.f32.mrb[0].mxu0
      %v6671 = vpop.f32.mrb[0].mxu0
      %v6672 = vadd.f32 %v6262, %v6671
      %v6673 = vpop.f32.mrb[0].mxu0
      %6674 = vmatprep.mubr.bf16.mxu0 %v6042
      %6675 = vmatmul.mubr.bf16.gmra.mrb[0].mxu0 %v5955
      %v6676 = vpop.f32.mrb[0].mxu0
      %v6677 = vadd.f32 %v6262, %v6676
      %v6678 = vpop.f32.mrb[0].mxu0
      %v6679 = vpop.f32.mrb[0].mxu0
      %v6680 = vadd.f32 %v6262, %v6679
      %v6681 = vpop.f32.mrb[0].mxu0
      %6682 = vmatprep.mubr.bf16.mxu0 %v6046
      %6683 = vmatmul.mubr.bf16.gmra.mrb[0].mxu0 %v5958
      %v6684 = vpop.f32.mrb[0].mxu0
      %v6685 = vadd.f32 %v6262, %v6684
      %v6686 = vpop.f32.mrb[0].mxu0
      %v6687 = vpop.f32.mrb[0].mxu0
      %v6688 = vadd.f32 %v6262, %v6687
      %v6689 = vpop.f32.mrb[0].mxu0
      %6690 = vmatprep.mubr.bf16.mxu0 %v6050
      %6691 = vmatmul.mubr.bf16.gmra.mrb[0].mxu0 %v5961
      %v6692 = vpop.f32.mrb[0].mxu0
      %v6693 = vadd.f32 %v6262, %v6692
      %v6694 = vpop.f32.mrb[0].mxu0
      %v6695 = vpop.f32.mrb[0].mxu0
      %v6696 = vadd.f32 %v6262, %v6695
      %v6697 = vpop.f32.mrb[0].mxu0
      %6698 = vmatprep.mubr.bf16.mxu0 %v6054
      %6699 = vmatmul.mubr.bf16.gmra.mrb[0].mxu0 %v5964
      %v6700 = vpop.f32.mrb[0].mxu0
      %v6701 = vadd.f32 %v6262, %v6700
      %v6702 = vpop.f32.mrb[0].mxu0
      %v6703 = vpop.f32.mrb[0].mxu0
      %v6704 = vadd.f32 %v6262, %v6703
      %v6705 = vpop.f32.mrb[0].mxu0
      %6706 = vmatprep.mubr.bf16.mxu0 %v6058
      %6707 = vmatmul.mubr.bf16.gmra.mrb[0].mxu0 %v5967
      %v6708 = vpop.f32.mrb[0].mxu0
      %v6709 = vadd.f32 %v6262, %v6708
      %v6710 = vpop.f32.mrb[0].mxu0
      %v6711 = vpop.f32.mrb[0].mxu0
      %v6712 = vadd.f32 %v6262, %v6711
      %v6713 = vpop.f32.mrb[0].mxu0
      %6714 = vmatprep.mubr.bf16.mxu0 %v6062
      %6715 = vmatmul.mubr.bf16.gmra.mrb[0].mxu0 %v5970
      %v6716 = vpop.f32.mrb[0].mxu0
      %v6717 = vadd.f32 %v6262, %v6716
      %v6718 = vpop.f32.mrb[0].mxu0
      %v6719 = vpop.f32.mrb[0].mxu0
      %v6720 = vadd.f32 %v6262, %v6719
      %v6721 = vpop.f32.mrb[0].mxu0
      %6722 = vmatprep.mubr.bf16.mxu0 %v6066
      %6723 = vmatmul.mubr.bf16.gmra.mrb[0].mxu0 %v5973
      %v6724 = vpop.f32.mrb[0].mxu0
      %v6725 = vadd.f32 %v6262, %v6724
      %v6726 = vpop.f32.mrb[0].mxu0
      %v6727 = vpop.f32.mrb[0].mxu0
      %v6728 = vadd.f32 %v6262, %v6727
      %v6729 = vpop.f32.mrb[0].mxu0
      %6730 = vmatprep.mubr.bf16.mxu0 %v6070
      %6731 = vmatmul.mubr.bf16.gmra.mrb[0].mxu0 %v5976
      %v6732 = vpop.f32.mrb[0].mxu0
      %v6733 = vadd.f32 %v6262, %v6732
      %v6734 = vpop.f32.mrb[0].mxu0
      %v6735 = vpop.f32.mrb[0].mxu0
      %v6736 = vadd.f32 %v6262, %v6735
      %v6737 = vpop.f32.mrb[0].mxu0
      %6738 = vmatprep.mubr.bf16.mxu0 %v6074
      %6739 = vmatmul.mubr.bf16.gmra.mrb[0].mxu0 %v5979
      %v6740 = vpop.f32.mrb[0].mxu0
      %v6741 = vadd.f32 %v6262, %v6740
      %v6742 = vpop.f32.mrb[0].mxu0
      %v6743 = vpop.f32.mrb[0].mxu0
      %v6744 = vadd.f32 %v6262, %v6743
      %v6745 = vpop.f32.mrb[0].mxu0
      %6746 = vmatprep.mubr.bf16.mxu0 %v6078
      %6747 = vmatmul.mubr.bf16.gmra.mrb[0].mxu0 %v5982
      %v6748 = vpop.f32.mrb[0].mxu0
      %v6749 = vadd.f32 %v6262, %v6748
      %v6750 = vpop.f32.mrb[0].mxu0
      %v6751 = vpop.f32.mrb[0].mxu0
      %v6752 = vadd.f32 %v6262, %v6751
      %v6753 = vpop.f32.mrb[0].mxu0
      %6754 = vdwg.mxu0
      %6755 = vmatprep.subr.bf16.mxu0 0
      %6756 = vmatpush1.bf16.msra.mxu0 %v6424
      %6757 = vmatprep.subr.bf16.mxu0 0
      %6758 = vmatpush1.bf16.msra.mxu0 %v6425
      %6759 = vmatprep.subr.bf16.mxu0 0
      %6760 = vmatpush1.bf16.msra.mxu0 %v6426
      %6761 = vmatprep.subr.bf16.mxu0 0
      %6762 = vmatpush1.bf16.msra.mxu0 %v6427
      %6763 = vmatprep.subr.bf16.mxu0 0
      %6764 = vmatpush1.bf16.msra.mxu0 %v6428
      %6765 = vmatprep.subr.bf16.mxu0 0
      %6766 = vmatpush1.bf16.msra.mxu0 %v6429
      %6767 = vmatprep.subr.bf16.mxu0 0
      %6768 = vmatpush1.bf16.msra.mxu0 %v6430
      %6769 = vmatprep.subr.bf16.mxu0 0
      %6770 = vmatpush1.bf16.msra.mxu0 %v6431
      %6771 = vmatprep.subr.bf16.mxu0 0
      %6772 = vmatpush1.bf16.msra.mxu0 %v6432
      %6773 = vmatprep.subr.bf16.mxu0 0
      %6774 = vmatpush1.bf16.msra.mxu0 %v6433
      %6775 = vmatprep.subr.bf16.mxu0 0
      %6776 = vmatpush1.bf16.msra.mxu0 %v6434
      %6777 = vmatprep.subr.bf16.mxu0 0
      %6778 = vmatpush1.bf16.msra.mxu0 %v6435
      %6779 = vmatprep.subr.bf16.mxu0 0
      %6780 = vmatpush1.bf16.msra.mxu0 %v6436
      %6781 = vmatprep.subr.bf16.mxu0 0
      %6782 = vmatpush1.bf16.msra.mxu0 %v6437
      %6783 = vmatprep.subr.bf16.mxu0 0
      %6784 = vmatpush1.bf16.msra.mxu0 %v6438
      %6785 = vmatprep.subr.bf16.mxu0 0
      %6786 = vmatpush1.bf16.msra.mxu0 %v6439
      %6787 = vmatprep.mubr.bf16.mxu0 %v5922
      %6788 = vmatmul.mubr.bf16.gmra.mrb[0].mxu0 %v6082
      %v6789 = vpop.f32.mrb[0].mxu0
      %v6790 = vadd.f32 %v6565, %v6789
      %v6791 = vpop.f32.mrb[0].mxu0
      %v6792 = vpop.f32.mrb[0].mxu0
      %v6793 = vadd.f32 %v6568, %v6792
      %v6794 = vpop.f32.mrb[0].mxu0
      %6795 = vmatprep.mubr.bf16.mxu0 %v5925
      %6796 = vmatmul.mubr.bf16.gmra.mrb[0].mxu0 %v6086
      %v6797 = vpop.f32.mrb[0].mxu0
      %v6798 = vadd.f32 %v6573, %v6797
      %v6799 = vpop.f32.mrb[0].mxu0
      %v6800 = vpop.f32.mrb[0].mxu0
      %v6801 = vadd.f32 %v6576, %v6800
      %v6802 = vpop.f32.mrb[0].mxu0
      %6803 = vmatprep.mubr.bf16.mxu0 %v5928
      %6804 = vmatmul.mubr.bf16.gmra.mrb[0].mxu0 %v6090
      %v6805 = vpop.f32.mrb[0].mxu0
      %v6806 = vadd.f32 %v6581, %v6805
      %v6807 = vpop.f32.mrb[0].mxu0
      %v6808 = vpop.f32.mrb[0].mxu0
      %v6809 = vadd.f32 %v6584, %v6808
      %v6810 = vpop.f32.mrb[0].mxu0
      %6811 = vmatprep.mubr.bf16.mxu0 %v5931
      %6812 = vmatmul.mubr.bf16.gmra.mrb[0].mxu0 %v6094
      %v6813 = vpop.f32.mrb[0].mxu0
      %v6814 = vadd.f32 %v6589, %v6813
      %v6815 = vpop.f32.mrb[0].mxu0
      %v6816 = vpop.f32.mrb[0].mxu0
      %v6817 = vadd.f32 %v6592, %v6816
      %v6818 = vpop.f32.mrb[0].mxu0
      %6819 = vmatprep.mubr.bf16.mxu0 %v5934
      %6820 = vmatmul.mubr.bf16.gmra.mrb[0].mxu0 %v6098
      %v6821 = vpop.f32.mrb[0].mxu0
      %v6822 = vadd.f32 %v6597, %v6821
      %v6823 = vpop.f32.mrb[0].mxu0
      %v6824 = vpop.f32.mrb[0].mxu0
      %v6825 = vadd.f32 %v6600, %v6824
      %v6826 = vpop.f32.mrb[0].mxu0
      %6827 = vmatprep.mubr.bf16.mxu0 %v5937
      %6828 = vmatmul.mubr.bf16.gmra.mrb[0].mxu0 %v6102
      %v6829 = vpop.f32.mrb[0].mxu0
      %v6830 = vadd.f32 %v6605, %v6829
      %v6831 = vpop.f32.mrb[0].mxu0
      %v6832 = vpop.f32.mrb[0].mxu0
      %v6833 = vadd.f32 %v6608, %v6832
      %v6834 = vpop.f32.mrb[0].mxu0
      %6835 = vmatprep.mubr.bf16.mxu0 %v5940
      %6836 = vmatmul.mubr.bf16.gmra.mrb[0].mxu0 %v6106
      %v6837 = vpop.f32.mrb[0].mxu0
      %v6838 = vadd.f32 %v6613, %v6837
      %v6839 = vpop.f32.mrb[0].mxu0
      %v6840 = vpop.f32.mrb[0].mxu0
      %v6841 = vadd.f32 %v6616, %v6840
      %v6842 = vpop.f32.mrb[0].mxu0
      %6843 = vmatprep.mubr.bf16.mxu0 %v5943
      %6844 = vmatmul.mubr.bf16.gmra.mrb[0].mxu0 %v6110
      %v6845 = vpop.f32.mrb[0].mxu0
      %v6846 = vadd.f32 %v6621, %v6845
      %v6847 = vpop.f32.mrb[0].mxu0
      %v6848 = vpop.f32.mrb[0].mxu0
      %v6849 = vadd.f32 %v6624, %v6848
      %v6850 = vpop.f32.mrb[0].mxu0
      %6851 = vmatprep.mubr.bf16.mxu0 %v5946
      %6852 = vmatmul.mubr.bf16.gmra.mrb[0].mxu0 %v6114
      %v6853 = vpop.f32.mrb[0].mxu0
      %v6854 = vadd.f32 %v6629, %v6853
      %v6855 = vpop.f32.mrb[0].mxu0
      %v6856 = vpop.f32.mrb[0].mxu0
      %v6857 = vadd.f32 %v6632, %v6856
      %v6858 = vpop.f32.mrb[0].mxu0
      %6859 = vmatprep.mubr.bf16.mxu0 %v5949
      %6860 = vmatmul.mubr.bf16.gmra.mrb[0].mxu0 %v6118
      %v6861 = vpop.f32.mrb[0].mxu0
      %v6862 = vadd.f32 %v6637, %v6861
      %v6863 = vpop.f32.mrb[0].mxu0
      %v6864 = vpop.f32.mrb[0].mxu0
      %v6865 = vadd.f32 %v6640, %v6864
      %v6866 = vpop.f32.mrb[0].mxu0
      %6867 = vmatprep.mubr.bf16.mxu0 %v5952
      %6868 = vmatmul.mubr.bf16.gmra.mrb[0].mxu0 %v6122
      %v6869 = vpop.f32.mrb[0].mxu0
      %v6870 = vadd.f32 %v6645, %v6869
      %v6871 = vpop.f32.mrb[0].mxu0
      %v6872 = vpop.f32.mrb[0].mxu0
      %v6873 = vadd.f32 %v6648, %v6872
      %v6874 = vpop.f32.mrb[0].mxu0
      %6875 = vmatprep.mubr.bf16.mxu0 %v5955
      %6876 = vmatmul.mubr.bf16.gmra.mrb[0].mxu0 %v6126
      %v6877 = vpop.f32.mrb[0].mxu0
      %v6878 = vadd.f32 %v6653, %v6877
      %v6879 = vpop.f32.mrb[0].mxu0
      %v6880 = vpop.f32.mrb[0].mxu0
      %v6881 = vadd.f32 %v6656, %v6880
      %v6882 = vpop.f32.mrb[0].mxu0
      %6883 = vmatprep.mubr.bf16.mxu0 %v5958
      %6884 = vmatmul.mubr.bf16.gmra.mrb[0].mxu0 %v6130
      %v6885 = vpop.f32.mrb[0].mxu0
      %v6886 = vadd.f32 %v6661, %v6885
      %v6887 = vpop.f32.mrb[0].mxu0
      %v6888 = vpop.f32.mrb[0].mxu0
      %v6889 = vadd.f32 %v6664, %v6888
      %v6890 = vpop.f32.mrb[0].mxu0
      %6891 = vmatprep.mubr.bf16.mxu0 %v5961
      %6892 = vmatmul.mubr.bf16.gmra.mrb[0].mxu0 %v6134
      %v6893 = vpop.f32.mrb[0].mxu0
      %v6894 = vadd.f32 %v6669, %v6893
      %v6895 = vpop.f32.mrb[0].mxu0
      %v6896 = vpop.f32.mrb[0].mxu0
      %v6897 = vadd.f32 %v6672, %v6896
      %v6898 = vpop.f32.mrb[0].mxu0
      %6899 = vmatprep.mubr.bf16.mxu0 %v5964
      %6900 = vmatmul.mubr.bf16.gmra.mrb[0].mxu0 %v6138
      %v6901 = vpop.f32.mrb[0].mxu0
      %v6902 = vadd.f32 %v6677, %v6901
      %v6903 = vpop.f32.mrb[0].mxu0
      %v6904 = vpop.f32.mrb[0].mxu0
      %v6905 = vadd.f32 %v6680, %v6904
      %v6906 = vpop.f32.mrb[0].mxu0
      %6907 = vmatprep.mubr.bf16.mxu0 %v5967
      %6908 = vmatmul.mubr.bf16.gmra.mrb[0].mxu0 %v6142
      %v6909 = vpop.f32.mrb[0].mxu0
      %v6910 = vadd.f32 %v6685, %v6909
      %v6911 = vpop.f32.mrb[0].mxu0
      %v6912 = vpop.f32.mrb[0].mxu0
      %v6913 = vadd.f32 %v6688, %v6912
      %v6914 = vpop.f32.mrb[0].mxu0
      %6915 = vmatprep.mubr.bf16.mxu0 %v5970
      %6916 = vmatmul.mubr.bf16.gmra.mrb[0].mxu0 %v6146
      %v6917 = vpop.f32.mrb[0].mxu0
      %v6918 = vadd.f32 %v6693, %v6917
      %v6919 = vpop.f32.mrb[0].mxu0
      %v6920 = vpop.f32.mrb[0].mxu0
      %v6921 = vadd.f32 %v6696, %v6920
      %v6922 = vpop.f32.mrb[0].mxu0
      %6923 = vmatprep.mubr.bf16.mxu0 %v5973
      %6924 = vmatmul.mubr.bf16.gmra.mrb[0].mxu0 %v6150
      %v6925 = vpop.f32.mrb[0].mxu0
      %v6926 = vadd.f32 %v6701, %v6925
      %v6927 = vpop.f32.mrb[0].mxu0
      %v6928 = vpop.f32.mrb[0].mxu0
      %v6929 = vadd.f32 %v6704, %v6928
      %v6930 = vpop.f32.mrb[0].mxu0
      %6931 = vmatprep.mubr.bf16.mxu0 %v5976
      %6932 = vmatmul.mubr.bf16.gmra.mrb[0].mxu0 %v6154
      %v6933 = vpop.f32.mrb[0].mxu0
      %v6934 = vadd.f32 %v6709, %v6933
      %v6935 = vpop.f32.mrb[0].mxu0
      %v6936 = vpop.f32.mrb[0].mxu0
      %v6937 = vadd.f32 %v6712, %v6936
      %v6938 = vpop.f32.mrb[0].mxu0
      %6939 = vmatprep.mubr.bf16.mxu0 %v5979
      %6940 = vmatmul.mubr.bf16.gmra.mrb[0].mxu0 %v6158
      %v6941 = vpop.f32.mrb[0].mxu0
      %v6942 = vadd.f32 %v6717, %v6941
      %v6943 = vpop.f32.mrb[0].mxu0
      %v6944 = vpop.f32.mrb[0].mxu0
      %v6945 = vadd.f32 %v6720, %v6944
      %v6946 = vpop.f32.mrb[0].mxu0
      %6947 = vmatprep.mubr.bf16.mxu0 %v5982
      %6948 = vmatmul.mubr.bf16.gmra.mrb[0].mxu0 %v6162
      %v6949 = vpop.f32.mrb[0].mxu0
      %v6950 = vadd.f32 %v6725, %v6949
      %v6951 = vpop.f32.mrb[0].mxu0
      %v6952 = vpop.f32.mrb[0].mxu0
      %v6953 = vadd.f32 %v6728, %v6952
      %v6954 = vpop.f32.mrb[0].mxu0
      %6955 = vmatprep.mubr.bf16.mxu0 %v6177
      %6956 = vmatmul.mubr.bf16.gmra.mrb[0].mxu0 %v6166
      %v6957 = vpop.f32.mrb[0].mxu0
      %v6958 = vadd.f32 %v6733, %v6957
      %v6959 = vpop.f32.mrb[0].mxu0
      %v6960 = vpop.f32.mrb[0].mxu0
      %v6961 = vadd.f32 %v6736, %v6960
      %v6962 = vpop.f32.mrb[0].mxu0
      %6963 = vmatprep.mubr.bf16.mxu0 %v6180
      %6964 = vmatmul.mubr.bf16.gmra.mrb[0].mxu0 %v6170
      %v6965 = vpop.f32.mrb[0].mxu0
      %v6966 = vadd.f32 %v6741, %v6965
      %v6967 = vpop.f32.mrb[0].mxu0
      %v6968 = vpop.f32.mrb[0].mxu0
      %v6969 = vadd.f32 %v6744, %v6968
      %v6970 = vpop.f32.mrb[0].mxu0
      %6971 = vmatprep.mubr.bf16.mxu0 %v6183
      %6972 = vmatmul.mubr.bf16.gmra.mrb[0].mxu0 %v6174
      %v6973 = vpop.f32.mrb[0].mxu0
      %v6974 = vadd.f32 %v6749, %v6973
      %v6975 = vpop.f32.mrb[0].mxu0
      %v6976 = vpop.f32.mrb[0].mxu0
      %v6977 = vadd.f32 %v6752, %v6976
      %v6978 = vpop.f32.mrb[0].mxu0
      %6979 = vdwg.mxu0
      %6980 = vmatprep.subr.bf16.mxu0 0
      %6981 = vmatpush1.bf16.msra.mxu0 %v6440
      %6982 = vmatprep.subr.bf16.mxu0 0
      %6983 = vmatpush1.bf16.msra.mxu0 %v6441
      %6984 = vmatprep.subr.bf16.mxu0 0
      %6985 = vmatpush1.bf16.msra.mxu0 %v6442
      %6986 = vmatprep.subr.bf16.mxu0 0
      %6987 = vmatpush1.bf16.msra.mxu0 %v6443
      %6988 = vmatprep.subr.bf16.mxu0 0
      %6989 = vmatpush1.bf16.msra.mxu0 0
      %6990 = vmatprep.subr.bf16.mxu0 0
      %6991 = vmatpush1.bf16.msra.mxu0 0
      %6992 = vmatprep.subr.bf16.mxu0 0
      %6993 = vmatpush1.bf16.msra.mxu0 0
      %6994 = vmatprep.subr.bf16.mxu0 0
      %6995 = vmatpush1.bf16.msra.mxu0 0
      %6996 = vmatprep.subr.bf16.mxu0 0
      %6997 = vmatpush1.bf16.msra.mxu0 0
      %6998 = vmatprep.subr.bf16.mxu0 0
      %6999 = vmatpush1.bf16.msra.mxu0 0
      %7000 = vmatprep.subr.bf16.mxu0 0
      %7001 = vmatpush1.bf16.msra.mxu0 0
      %7002 = vmatprep.subr.bf16.mxu0 0
      %7003 = vmatpush1.bf16.msra.mxu0 0
      %7004 = vmatprep.subr.bf16.mxu0 0
      %7005 = vmatpush1.bf16.msra.mxu0 0
      %7006 = vmatprep.subr.bf16.mxu0 0
      %7007 = vmatpush1.bf16.msra.mxu0 0
      %7008 = vmatprep.subr.bf16.mxu0 0
      %7009 = vmatpush1.bf16.msra.mxu0 0
      %7010 = vmatprep.subr.bf16.mxu0 0
      %7011 = vmatpush1.bf16.msra.mxu0 0
      %7012 = vmatprep.mubr.bf16.mxu0 0
      %7013 = vmatmul.mubr.bf16.gmra.mrb[0].mxu0 %v6480
      %v7014 = vpop.f32.mrb[0].mxu0
      %v7015 = vadd.f32 %v6790, %v7014
      %v7016 = vpop.f32.mrb[0].mxu0
      %v7017 = vpop.f32.mrb[0].mxu0
      %v7018 = vadd.f32 %v6793, %v7017
      %v7019 = vpop.f32.mrb[0].mxu0
      %7020 = vmatprep.mubr.bf16.mxu0 0
      %7021 = vmatmul.mubr.bf16.gmra.mrb[0].mxu0 %v6482
      %v7022 = vpop.f32.mrb[0].mxu0
      %v7023 = vadd.f32 %v6798, %v7022
      %v7024 = vpop.f32.mrb[0].mxu0
      %v7025 = vpop.f32.mrb[0].mxu0
      %v7026 = vadd.f32 %v6801, %v7025
      %v7027 = vpop.f32.mrb[0].mxu0
      %7028 = vmatprep.mubr.bf16.mxu0 0
      %7029 = vmatmul.mubr.bf16.gmra.mrb[0].mxu0 %v6484
      %v7030 = vpop.f32.mrb[0].mxu0
      %v7031 = vadd.f32 %v6806, %v7030
      %v7032 = vpop.f32.mrb[0].mxu0
      %v7033 = vpop.f32.mrb[0].mxu0
      %v7034 = vadd.f32 %v6809, %v7033
      %v7035 = vpop.f32.mrb[0].mxu0
      %7036 = vmatprep.mubr.bf16.mxu0 0
      %7037 = vmatmul.mubr.bf16.gmra.mrb[0].mxu0 %v6486
      %v7038 = vpop.f32.mrb[0].mxu0
      %v7039 = vadd.f32 %v6814, %v7038
      %v7040 = vpop.f32.mrb[0].mxu0
      %v7041 = vpop.f32.mrb[0].mxu0
      %v7042 = vadd.f32 %v6817, %v7041
      %v7043 = vpop.f32.mrb[0].mxu0
      %7044 = vmatprep.mubr.bf16.mxu0 0
      %7045 = vmatmul.mubr.bf16.gmra.mrb[0].mxu0 %v6488
      %v7046 = vpop.f32.mrb[0].mxu0
      %v7047 = vadd.f32 %v6822, %v7046
      %v7048 = vpop.f32.mrb[0].mxu0
      %v7049 = vpop.f32.mrb[0].mxu0
      %v7050 = vadd.f32 %v6825, %v7049
      %v7051 = vpop.f32.mrb[0].mxu0
      %7052 = vmatprep.mubr.bf16.mxu0 0
      %7053 = vmatmul.mubr.bf16.gmra.mrb[0].mxu0 %v6490
      %v7054 = vpop.f32.mrb[0].mxu0
      %v7055 = vadd.f32 %v6830, %v7054
      %v7056 = vpop.f32.mrb[0].mxu0
      %v7057 = vpop.f32.mrb[0].mxu0
      %v7058 = vadd.f32 %v6833, %v7057
      %v7059 = vpop.f32.mrb[0].mxu0
      %7060 = vmatprep.mubr.bf16.mxu0 0
      %7061 = vmatmul.mubr.bf16.gmra.mrb[0].mxu0 %v6492
      %v7062 = vpop.f32.mrb[0].mxu0
      %v7063 = vadd.f32 %v6838, %v7062
      %v7064 = vpop.f32.mrb[0].mxu0
      %v7065 = vpop.f32.mrb[0].mxu0
      %v7066 = vadd.f32 %v6841, %v7065
      %v7067 = vpop.f32.mrb[0].mxu0
      %7068 = vmatprep.mubr.bf16.mxu0 0
      %7069 = vmatmul.mubr.bf16.gmra.mrb[0].mxu0 %v6494
      %v7070 = vpop.f32.mrb[0].mxu0
      %v7071 = vadd.f32 %v6846, %v7070
      %v7072 = vpop.f32.mrb[0].mxu0
      %v7073 = vpop.f32.mrb[0].mxu0
      %v7074 = vadd.f32 %v6849, %v7073
      %v7075 = vpop.f32.mrb[0].mxu0
      %7076 = vmatprep.mubr.bf16.mxu0 0
      %7077 = vmatmul.mubr.bf16.gmra.mrb[0].mxu0 %v6496
      %v7078 = vpop.f32.mrb[0].mxu0
      %v7079 = vadd.f32 %v6854, %v7078
      %v7080 = vpop.f32.mrb[0].mxu0
      %v7081 = vpop.f32.mrb[0].mxu0
      %v7082 = vadd.f32 %v6857, %v7081
      %v7083 = vpop.f32.mrb[0].mxu0
      %7084 = vmatprep.mubr.bf16.mxu0 0
      %7085 = vmatmul.mubr.bf16.gmra.mrb[0].mxu0 %v6498
      %v7086 = vpop.f32.mrb[0].mxu0
      %v7087 = vadd.f32 %v6862, %v7086
      %v7088 = vpop.f32.mrb[0].mxu0
      %v7089 = vpop.f32.mrb[0].mxu0
      %v7090 = vadd.f32 %v6865, %v7089
      %v7091 = vpop.f32.mrb[0].mxu0
      %7092 = vmatprep.mubr.bf16.mxu0 0
      %7093 = vmatmul.mubr.bf16.gmra.mrb[0].mxu0 %v6500
      %v7094 = vpop.f32.mrb[0].mxu0
      %v7095 = vadd.f32 %v6870, %v7094
      %v7096 = vpop.f32.mrb[0].mxu0
      %v7097 = vpop.f32.mrb[0].mxu0
      %v7098 = vadd.f32 %v6873, %v7097
      %v7099 = vpop.f32.mrb[0].mxu0
      %7100 = vmatprep.mubr.bf16.mxu0 0
      %7101 = vmatmul.mubr.bf16.gmra.mrb[0].mxu0 %v6502
      %v7102 = vpop.f32.mrb[0].mxu0
      %v7103 = vadd.f32 %v6878, %v7102
      %v7104 = vpop.f32.mrb[0].mxu0
      %v7105 = vpop.f32.mrb[0].mxu0
      %v7106 = vadd.f32 %v6881, %v7105
      %v7107 = vpop.f32.mrb[0].mxu0
      %7108 = vmatprep.mubr.bf16.mxu0 0
      %7109 = vmatmul.mubr.bf16.gmra.mrb[0].mxu0 %v6504
      %v7110 = vpop.f32.mrb[0].mxu0
      %v7111 = vadd.f32 %v6886, %v7110
      %v7112 = vpop.f32.mrb[0].mxu0
      %v7113 = vpop.f32.mrb[0].mxu0
      %v7114 = vadd.f32 %v6889, %v7113
      %v7115 = vpop.f32.mrb[0].mxu0
      %7116 = vmatprep.mubr.bf16.mxu0 0
      %7117 = vmatmul.mubr.bf16.gmra.mrb[0].mxu0 %v6506
      %v7118 = vpop.f32.mrb[0].mxu0
      %v7119 = vadd.f32 %v6894, %v7118
      %v7120 = vpop.f32.mrb[0].mxu0
      %v7121 = vpop.f32.mrb[0].mxu0
      %v7122 = vadd.f32 %v6897, %v7121
      %v7123 = vpop.f32.mrb[0].mxu0
      %7124 = vmatprep.mubr.bf16.mxu0 0
      %7125 = vmatmul.mubr.bf16.gmra.mrb[0].mxu0 %v6508
      %v7126 = vpop.f32.mrb[0].mxu0
      %v7127 = vadd.f32 %v6902, %v7126
      %v7128 = vpop.f32.mrb[0].mxu0
      %v7129 = vpop.f32.mrb[0].mxu0
      %v7130 = vadd.f32 %v6905, %v7129
      %v7131 = vpop.f32.mrb[0].mxu0
      %7132 = vmatprep.mubr.bf16.mxu0 0
      %7133 = vmatmul.mubr.bf16.gmra.mrb[0].mxu0 %v6510
      %v7134 = vpop.f32.mrb[0].mxu0
      %v7135 = vadd.f32 %v6910, %v7134
      %v7136 = vpop.f32.mrb[0].mxu0
      %v7137 = vpop.f32.mrb[0].mxu0
      %v7138 = vadd.f32 %v6913, %v7137
      %v7139 = vpop.f32.mrb[0].mxu0
      %7140 = vmatprep.mubr.bf16.mxu0 0
      %7141 = vmatmul.mubr.bf16.gmra.mrb[0].mxu0 %v6512
      %v7142 = vpop.f32.mrb[0].mxu0
      %v7143 = vadd.f32 %v6918, %v7142
      %v7144 = vpop.f32.mrb[0].mxu0
      %v7145 = vpop.f32.mrb[0].mxu0
      %v7146 = vadd.f32 %v6921, %v7145
      %v7147 = vpop.f32.mrb[0].mxu0
      %7148 = vmatprep.mubr.bf16.mxu0 0
      %7149 = vmatmul.mubr.bf16.gmra.mrb[0].mxu0 %v6514
      %v7150 = vpop.f32.mrb[0].mxu0
      %v7151 = vadd.f32 %v6926, %v7150
      %v7152 = vpop.f32.mrb[0].mxu0
      %v7153 = vpop.f32.mrb[0].mxu0
      %v7154 = vadd.f32 %v6929, %v7153
      %v7155 = vpop.f32.mrb[0].mxu0
      %7156 = vmatprep.mubr.bf16.mxu0 0
      %7157 = vmatmul.mubr.bf16.gmra.mrb[0].mxu0 %v6516
      %v7158 = vpop.f32.mrb[0].mxu0
      %v7159 = vadd.f32 %v6934, %v7158
      %v7160 = vpop.f32.mrb[0].mxu0
      %v7161 = vpop.f32.mrb[0].mxu0
      %v7162 = vadd.f32 %v6937, %v7161
      %v7163 = vpop.f32.mrb[0].mxu0
      %7164 = vmatprep.mubr.bf16.mxu0 0
      %7165 = vmatmul.mubr.bf16.gmra.mrb[0].mxu0 %v6518
      %v7166 = vpop.f32.mrb[0].mxu0
      %v7167 = vadd.f32 %v6942, %v7166
      %v7168 = vpop.f32.mrb[0].mxu0
      %v7169 = vpop.f32.mrb[0].mxu0
      %v7170 = vadd.f32 %v6945, %v7169
      %v7171 = vpop.f32.mrb[0].mxu0
      %7172 = vmatprep.mubr.bf16.mxu0 0
      %7173 = vmatmul.mubr.bf16.gmra.mrb[0].mxu0 %v6520
      %v7174 = vpop.f32.mrb[0].mxu0
      %v7175 = vadd.f32 %v6950, %v7174
      %v7176 = vpop.f32.mrb[0].mxu0
      %v7177 = vpop.f32.mrb[0].mxu0
      %v7178 = vadd.f32 %v6953, %v7177
      %v7179 = vpop.f32.mrb[0].mxu0
      %7180 = vmatprep.mubr.bf16.mxu0 0
      %7181 = vmatmul.mubr.bf16.gmra.mrb[0].mxu0 %v6523
      %v7182 = vpop.f32.mrb[0].mxu0
      %v7183 = vadd.f32 %v6958, %v7182
      %v7184 = vpop.f32.mrb[0].mxu0
      %v7185 = vpop.f32.mrb[0].mxu0
      %v7186 = vadd.f32 %v6961, %v7185
      %v7187 = vpop.f32.mrb[0].mxu0
      %7188 = vmatprep.mubr.bf16.mxu0 0
      %7189 = vmatmul.mubr.bf16.gmra.mrb[0].mxu0 %v6526
      %v7190 = vpop.f32.mrb[0].mxu0
      %v7191 = vadd.f32 %v6966, %v7190
      %v7192 = vpop.f32.mrb[0].mxu0
      %v7193 = vpop.f32.mrb[0].mxu0
      %v7194 = vadd.f32 %v6969, %v7193
      %v7195 = vpop.f32.mrb[0].mxu0
      %7196 = vmatprep.mubr.bf16.mxu0 0
      %7197 = vmatmul.mubr.bf16.gmra.mrb[0].mxu0 %v6528
      %v7198 = vpop.f32.mrb[0].mxu0
      %v7199 = vadd.f32 %v6974, %v7198
      %v7200 = vpop.f32.mrb[0].mxu0
      %v7201 = vpop.f32.mrb[0].mxu0
      %v7202 = vadd.f32 %v6977, %v7201
      %v7203 = vpop.f32.mrb[0].mxu0
      %7204 = vdwg.mxu0
      %vm7205 = vcmp.ge.f32.partialorder %v7015, 0.0
      %vm7206 = vcmp.ge.f32.partialorder %v7018, 0.0
      %vm7207 = vcmp.ge.f32.partialorder %v7023, 0.0
      %vm7208 = vcmp.ge.f32.partialorder %v7026, 0.0
      %vm7209 = vcmp.ge.f32.partialorder %v7031, 0.0
      %vm7210 = vcmp.ge.f32.partialorder %v7034, 0.0
      %vm7211 = vcmp.ge.f32.partialorder %v7039, 0.0
      %vm7212 = vcmp.ge.f32.partialorder %v7042, 0.0
      %vm7213 = vcmp.ge.f32.partialorder %v7047, 0.0
      %vm7214 = vcmp.ge.f32.partialorder %v7050, 0.0
      %vm7215 = vcmp.ge.f32.partialorder %v7055, 0.0
      %vm7216 = vcmp.ge.f32.partialorder %v7058, 0.0
      %vm7217 = vcmp.ge.f32.partialorder %v7063, 0.0
      %vm7218 = vcmp.ge.f32.partialorder %v7066, 0.0
      %vm7219 = vcmp.ge.f32.partialorder %v7071, 0.0
      %vm7220 = vcmp.ge.f32.partialorder %v7074, 0.0
      %vm7221 = vcmp.ge.f32.partialorder %v7079, 0.0
      %vm7222 = vcmp.ge.f32.partialorder %v7082, 0.0
      %vm7223 = vcmp.ge.f32.partialorder %v7087, 0.0
      %vm7224 = vcmp.ge.f32.partialorder %v7090, 0.0
      %vm7225 = vcmp.ge.f32.partialorder %v7095, 0.0
      %vm7226 = vcmp.ge.f32.partialorder %v7098, 0.0
      %vm7227 = vcmp.ge.f32.partialorder %v7103, 0.0
      %vm7228 = vcmp.ge.f32.partialorder %v7106, 0.0
      %vm7229 = vcmp.ge.f32.partialorder %v7111, 0.0
      %vm7230 = vcmp.ge.f32.partialorder %v7114, 0.0
      %vm7231 = vcmp.ge.f32.partialorder %v7119, 0.0
      %vm7232 = vcmp.ge.f32.partialorder %v7122, 0.0
      %vm7233 = vcmp.ge.f32.partialorder %v7127, 0.0
      %vm7234 = vcmp.ge.f32.partialorder %v7130, 0.0
      %vm7235 = vcmp.ge.f32.partialorder %v7135, 0.0
      %vm7236 = vcmp.ge.f32.partialorder %v7138, 0.0
      %vm7237 = vcmp.ge.f32.partialorder %v7143, 0.0
      %vm7238 = vcmp.ge.f32.partialorder %v7146, 0.0
      %vm7239 = vcmp.ge.f32.partialorder %v7151, 0.0
      %vm7240 = vcmp.ge.f32.partialorder %v7154, 0.0
      %vm7241 = vcmp.ge.f32.partialorder %v7159, 0.0
      %vm7242 = vcmp.ge.f32.partialorder %v7162, 0.0
      %vm7243 = vcmp.ge.f32.partialorder %v7167, 0.0
      %vm7244 = vcmp.ge.f32.partialorder %v7170, 0.0
      %vm7245 = vcmp.ge.f32.partialorder %v7175, 0.0
      %vm7246 = vcmp.ge.f32.partialorder %v7178, 0.0
      %vm7247 = vcmp.ge.f32.partialorder %v7183, 0.0
      %vm7248 = vcmp.ge.f32.partialorder %v7186, 0.0
      %vm7249 = vcmp.ge.f32.partialorder %v7191, 0.0
      %vm7250 = vcmp.ge.f32.partialorder %v7194, 0.0
      %vm7251 = vcmp.ge.f32.partialorder %v7199, 0.0
      %vm7252 = vcmp.ge.f32.partialorder %v7202, 0.0
      %v7253 = vmul.f32 %v7015, 0.2
      %v7254 = vmul.f32 %v7018, 0.2
      %v7255 = vmul.f32 %v7023, 0.2
      %v7256 = vmul.f32 %v7026, 0.2
      %v7257 = vmul.f32 %v7031, 0.2
      %v7258 = vmul.f32 %v7034, 0.2
      %v7259 = vmul.f32 %v7039, 0.2
      %v7260 = vmul.f32 %v7042, 0.2
      %v7261 = vmul.f32 %v7047, 0.2
      %v7262 = vmul.f32 %v7050, 0.2
      %v7263 = vmul.f32 %v7055, 0.2
      %v7264 = vmul.f32 %v7058, 0.2
      %v7265 = vmul.f32 %v7063, 0.2
      %v7266 = vmul.f32 %v7066, 0.2
      %v7267 = vmul.f32 %v7071, 0.2
      %v7268 = vmul.f32 %v7074, 0.2
      %v7269 = vmul.f32 %v7079, 0.2
      %v7270 = vmul.f32 %v7082, 0.2
      %v7271 = vmul.f32 %v7087, 0.2
      %v7272 = vmul.f32 %v7090, 0.2
      %v7273 = vmul.f32 %v7095, 0.2
      %v7274 = vmul.f32 %v7098, 0.2
      %v7275 = vmul.f32 %v7103, 0.2
      %v7276 = vmul.f32 %v7106, 0.2
      %v7277 = vmul.f32 %v7111, 0.2
      %v7278 = vmul.f32 %v7114, 0.2
      %v7279 = vmul.f32 %v7119, 0.2
      %v7280 = vmul.f32 %v7122, 0.2
      %v7281 = vmul.f32 %v7127, 0.2
      %v7282 = vmul.f32 %v7130, 0.2
      %v7283 = vmul.f32 %v7135, 0.2
      %v7284 = vmul.f32 %v7138, 0.2
      %v7285 = vmul.f32 %v7143, 0.2
      %v7286 = vmul.f32 %v7146, 0.2
      %v7287 = vmul.f32 %v7151, 0.2
      %v7288 = vmul.f32 %v7154, 0.2
      %v7289 = vmul.f32 %v7159, 0.2
      %v7290 = vmul.f32 %v7162, 0.2
      %v7291 = vmul.f32 %v7167, 0.2
      %v7292 = vmul.f32 %v7170, 0.2
      %v7293 = vmul.f32 %v7175, 0.2
      %v7294 = vmul.f32 %v7178, 0.2
      %v7295 = vmul.f32 %v7183, 0.2
      %v7296 = vmul.f32 %v7186, 0.2
      %v7297 = vmul.f32 %v7191, 0.2
      %v7298 = vmul.f32 %v7194, 0.2
      %v7299 = vmul.f32 %v7199, 0.2
      %v7300 = vmul.f32 %v7202, 0.2
      %v7301 = vsel %vm7205, %v7015, %v7253
      %v7302 = vsel %vm7206, %v7018, %v7254
      %v7303 = vsel %vm7207, %v7023, %v7255
      %v7304 = vsel %vm7208, %v7026, %v7256
      %v7305 = vsel %vm7209, %v7031, %v7257
      %v7306 = vsel %vm7210, %v7034, %v7258
      %v7307 = vsel %vm7211, %v7039, %v7259
      %v7308 = vsel %vm7212, %v7042, %v7260
      %v7309 = vsel %vm7213, %v7047, %v7261
      %v7310 = vsel %vm7214, %v7050, %v7262
      %v7311 = vsel %vm7215, %v7055, %v7263
      %v7312 = vsel %vm7216, %v7058, %v7264
      %v7313 = vsel %vm7217, %v7063, %v7265
      %v7314 = vsel %vm7218, %v7066, %v7266
      %v7315 = vsel %vm7219, %v7071, %v7267
      %v7316 = vsel %vm7220, %v7074, %v7268
      %v7317 = vsel %vm7221, %v7079, %v7269
      %v7318 = vsel %vm7222, %v7082, %v7270
      %v7319 = vsel %vm7223, %v7087, %v7271
      %v7320 = vsel %vm7224, %v7090, %v7272
      %v7321 = vsel %vm7225, %v7095, %v7273
      %v7322 = vsel %vm7226, %v7098, %v7274
      %v7323 = vsel %vm7227, %v7103, %v7275
      %v7324 = vsel %vm7228, %v7106, %v7276
      %v7325 = vsel %vm7229, %v7111, %v7277
      %v7326 = vsel %vm7230, %v7114, %v7278
      %v7327 = vsel %vm7231, %v7119, %v7279
      %v7328 = vsel %vm7232, %v7122, %v7280
      %v7329 = vsel %vm7233, %v7127, %v7281
      %v7330 = vsel %vm7234, %v7130, %v7282
      %v7331 = vsel %vm7235, %v7135, %v7283
      %v7332 = vsel %vm7236, %v7138, %v7284
      %v7333 = vsel %vm7237, %v7143, %v7285
      %v7334 = vsel %vm7238, %v7146, %v7286
      %v7335 = vsel %vm7239, %v7151, %v7287
      %v7336 = vsel %vm7240, %v7154, %v7288
      %v7337 = vsel %vm7241, %v7159, %v7289
      %v7338 = vsel %vm7242, %v7162, %v7290
      %v7339 = vsel %vm7243, %v7167, %v7291
      %v7340 = vsel %vm7244, %v7170, %v7292
      %v7341 = vsel %vm7245, %v7175, %v7293
      %v7342 = vsel %vm7246, %v7178, %v7294
      %v7343 = vsel %vm7247, %v7183, %v7295
      %v7344 = vsel %vm7248, %v7186, %v7296
      %v7345 = vsel %vm7249, %v7191, %v7297
      %v7346 = vsel %vm7250, %v7194, %v7298
      %v7347 = vsel %vm7251, %v7199, %v7299
      %v7348 = vsel %vm7252, %v7202, %v7300
      %v7349 = vmul.f32 %v7301, %v2559
      %v7350 = vmul.f32 %v7302, %v2564
      %v7351 = vmul.f32 %v7303, %v2569
      %v7352 = vmul.f32 %v7304, %v2574
      %v7353 = vmul.f32 %v7305, %v2579
      %v7354 = vmul.f32 %v7306, %v2584
      %v7355 = vmul.f32 %v7307, %v2589
      %v7356 = vmul.f32 %v7308, %v2594
      %v7357 = vmul.f32 %v7309, %v2599
      %v7358 = vmul.f32 %v7310, %v2604
      %v7359 = vmul.f32 %v7311, %v2609
      %v7360 = vmul.f32 %v7312, %v2614
      %v7361 = vmul.f32 %v7313, %v2619
      %v7362 = vmul.f32 %v7314, %v2624
      %v7363 = vmul.f32 %v7315, %v2629
      %v7364 = vmul.f32 %v7316, %v2634
      %v7365 = vmul.f32 %v7317, %v2639
      %v7366 = vmul.f32 %v7318, %v2644
      %v7367 = vmul.f32 %v7319, %v2649
      %v7368 = vmul.f32 %v7320, %v2654
      %v7369 = vmul.f32 %v7321, %v2659
      %v7370 = vmul.f32 %v7322, %v2664
      %v7371 = vmul.f32 %v7323, %v2669
      %v7372 = vmul.f32 %v7324, %v2674
      %v7373 = vmul.f32 %v7325, %v2679
      %v7374 = vmul.f32 %v7326, %v2684
      %v7375 = vmul.f32 %v7327, %v2689
      %v7376 = vmul.f32 %v7328, %v2694
      %v7377 = vmul.f32 %v7329, %v2699
      %v7378 = vmul.f32 %v7330, %v2704
      %v7379 = vmul.f32 %v7331, %v2709
      %v7380 = vmul.f32 %v7332, %v2714
      %v7381 = vmul.f32 %v7333, %v2719
      %v7382 = vmul.f32 %v7334, %v2724
      %v7383 = vmul.f32 %v7335, %v2729
      %v7384 = vmul.f32 %v7336, %v2734
      %v7385 = vmul.f32 %v7337, %v2739
      %v7386 = vmul.f32 %v7338, %v2744
      %v7387 = vmul.f32 %v7339, %v2749
      %v7388 = vmul.f32 %v7340, %v2754
      %v7389 = vmul.f32 %v7341, %v2759
      %v7390 = vmul.f32 %v7342, %v2764
      %v7391 = vmul.f32 %v7343, %v2769
      %v7392 = vmul.f32 %v7344, %v2774
      %v7393 = vmul.f32 %v7345, %v2779
      %v7394 = vmul.f32 %v7346, %v2784
      %v7395 = vmul.f32 %v7347, %v2789
      %v7396 = vmul.f32 %v7348, %v2794
      %7397 = vst.msk [vmem:[%s442] sm:$0xff] %vm3889, %v7361
      %7398 = vst.msk [vmem:[%s442 + $0x8] sm:$0xff] %vm3889, %v7362
      %7399 = vst.msk [vmem:[%s442 + $0x10] sm:$0xff] %vm3889, %v7363
      %7400 = vst.msk [vmem:[%s442 + $0x18] sm:$0xff] %vm3889, %v7364
      %7401 = vst.msk [vmem:[%s442 + $0x20] sm:$0xff] %vm3889, %v7365
      %7402 = vst.msk [vmem:[%s442 + $0x28] sm:$0xff] %vm3889, %v7366
      %7403 = vst.msk [vmem:[%s442 + $0x30] sm:$0xff] %vm3889, %v7367
      %7404 = vst.msk [vmem:[%s442 + $0x38] sm:$0xff] %vm3889, %v7368
      %7405 = vst.msk [vmem:[%s442 + $0x40] sm:$0xff] %vm3889, %v7369
      %7406 = vst.msk [vmem:[%s442 + $0x48] sm:$0xff] %vm3889, %v7370
      %7407 = vst.msk [vmem:[%s442 + $0x50] sm:$0xff] %vm3889, %v7371
      %7408 = vst.msk [vmem:[%s442 + $0x58] sm:$0xff] %vm3889, %v7372
      %7409 = vst.msk [vmem:[%s442 + $0x60] sm:$0xff] %vm3889, %v7373
      %7410 = vst.msk [vmem:[%s442 + $0x68] sm:$0xff] %vm3889, %v7374
      %7411 = vst.msk [vmem:[%s442 + $0x70] sm:$0xff] %vm3889, %v7375
      %7412 = vst.msk [vmem:[%s442 + $0x78] sm:$0xff] %vm3889, %v7376
      %7413 = vst.msk [vmem:[%s442 + $0x80] sm:$0xff] %vm3889, %v7377
      %7414 = vst.msk [vmem:[%s442 + $0x88] sm:$0xff] %vm3889, %v7378
      %7415 = vst.msk [vmem:[%s442 + $0x90] sm:$0xff] %vm3889, %v7379
      %7416 = vst.msk [vmem:[%s442 + $0x98] sm:$0xff] %vm3889, %v7380
      %7417 = vst.msk [vmem:[%s442 + $0xa0] sm:$0xff] %vm3889, %v7381
      %7418 = vst.msk [vmem:[%s442 + $0xa8] sm:$0xff] %vm3889, %v7382
      %7419 = vst.msk [vmem:[%s442 + $0xb0] sm:$0xff] %vm3889, %v7383
      %7420 = vst.msk [vmem:[%s442 + $0xb8] sm:$0xff] %vm3889, %v7384
      %v7421 = vpack.c.bf16 %v7350, %v7349
      %v7422 = vpack.c.bf16 %v7352, %v7351
      %v7423 = vpack.c.bf16 %v7354, %v7353
      %v7424 = vpack.c.bf16 %v7356, %v7355
      %v7425 = vpack.c.bf16 %v7358, %v7357
      %v7426 = vpack.c.bf16 %v7360, %v7359
      %v7427 = vpack.c.bf16 %v7362, %v7361
      %v7428 = vpack.c.bf16 %v7364, %v7363
      %v7429 = vpack.c.bf16 %v7366, %v7365
      %v7430 = vpack.c.bf16 %v7368, %v7367
      %v7431 = vpack.c.bf16 %v7370, %v7369
      %v7432 = vpack.c.bf16 %v7372, %v7371
      %v7433 = vpack.c.bf16 %v7374, %v7373
      %v7434 = vpack.c.bf16 %v7376, %v7375
      %v7435 = vpack.c.bf16 %v7378, %v7377
      %v7436 = vpack.c.bf16 %v7380, %v7379
      %v7437 = vpack.c.bf16 %v7382, %v7381
      %v7438 = vpack.c.bf16 %v7384, %v7383
      %v7439 = vpack.c.bf16 %v7386, %v7385
      %v7440 = vpack.c.bf16 %v7388, %v7387
      %v7441 = vpack.c.bf16 %v7390, %v7389
      %v7442 = vpack.c.bf16 %v7392, %v7391
      %v7443 = vpack.c.bf16 %v7394, %v7393
      %v7444 = vpack.c.bf16 %v7396, %v7395
      %v7446 = vshrl.u32 %v7421, 16
      %v7448 = vrot.slane %v7446, 3
      %v7449 = vshll.u32 %v7421, 16
      %v7451 = vrot.slane %v7449, 4
      %v7452 = vor.u32 %v7448, %v7451
      %v7454 = vshrl.u32 %v7422, 16
      %v7456 = vrot.slane %v7454, 3
      %v7457 = vshll.u32 %v7422, 16
      %v7459 = vrot.slane %v7457, 4
      %v7460 = vor.u32 %v7456, %v7459
      %v7461 = vsel %vm2868, %v7452, %v7460
      %v7463 = vshrl.u32 %v7423, 16
      %v7465 = vrot.slane %v7463, 3
      %v7466 = vshll.u32 %v7423, 16
      %v7468 = vrot.slane %v7466, 4
      %v7469 = vor.u32 %v7465, %v7468
      %v7470 = vsel %vm2868, %v7460, %v7469
      %v7472 = vshrl.u32 %v7424, 16
      %v7474 = vrot.slane %v7472, 3
      %v7475 = vshll.u32 %v7424, 16
      %v7477 = vrot.slane %v7475, 4
      %v7478 = vor.u32 %v7474, %v7477
      %v7479 = vsel %vm2868, %v7469, %v7478
      %v7481 = vshrl.u32 %v7425, 16
      %v7483 = vrot.slane %v7481, 3
      %v7484 = vshll.u32 %v7425, 16
      %v7486 = vrot.slane %v7484, 4
      %v7487 = vor.u32 %v7483, %v7486
      %v7488 = vsel %vm2868, %v7478, %v7487
      %v7490 = vshrl.u32 %v7426, 16
      %v7492 = vrot.slane %v7490, 3
      %v7493 = vshll.u32 %v7426, 16
      %v7495 = vrot.slane %v7493, 4
      %v7496 = vor.u32 %v7492, %v7495
      %v7497 = vsel %vm2868, %v7487, %v7496
      %v7499 = vshrl.u32 %v7427, 16
      %v7501 = vrot.slane %v7499, 3
      %v7502 = vshll.u32 %v7427, 16
      %v7504 = vrot.slane %v7502, 4
      %v7505 = vor.u32 %v7501, %v7504
      %v7506 = vsel %vm2868, %v7496, %v7505
      %v7508 = vshrl.u32 %v7428, 16
      %v7510 = vrot.slane %v7508, 3
      %v7511 = vshll.u32 %v7428, 16
      %v7513 = vrot.slane %v7511, 4
      %v7514 = vor.u32 %v7510, %v7513
      %v7515 = vsel %vm2868, %v7505, %v7514
      %v7517 = vshrl.u32 %v7429, 16
      %v7519 = vrot.slane %v7517, 3
      %v7520 = vshll.u32 %v7429, 16
      %v7522 = vrot.slane %v7520, 4
      %v7523 = vor.u32 %v7519, %v7522
      %v7524 = vsel %vm2868, %v7514, %v7523
      %v7526 = vshrl.u32 %v7430, 16
      %v7528 = vrot.slane %v7526, 3
      %v7529 = vshll.u32 %v7430, 16
      %v7531 = vrot.slane %v7529, 4
      %v7532 = vor.u32 %v7528, %v7531
      %v7533 = vsel %vm2868, %v7523, %v7532
      %v7535 = vshrl.u32 %v7431, 16
      %v7537 = vrot.slane %v7535, 3
      %v7538 = vshll.u32 %v7431, 16
      %v7540 = vrot.slane %v7538, 4
      %v7541 = vor.u32 %v7537, %v7540
      %v7542 = vsel %vm2868, %v7532, %v7541
      %v7544 = vshrl.u32 %v7432, 16
      %v7546 = vrot.slane %v7544, 3
      %v7547 = vshll.u32 %v7432, 16
      %v7549 = vrot.slane %v7547, 4
      %v7550 = vor.u32 %v7546, %v7549
      %v7551 = vsel %vm2868, %v7541, %v7550
      %v7553 = vshrl.u32 %v7433, 16
      %v7555 = vrot.slane %v7553, 3
      %v7556 = vshll.u32 %v7433, 16
      %v7558 = vrot.slane %v7556, 4
      %v7559 = vor.u32 %v7555, %v7558
      %v7560 = vsel %vm2868, %v7550, %v7559
      %v7562 = vshrl.u32 %v7434, 16
      %v7564 = vrot.slane %v7562, 3
      %v7565 = vshll.u32 %v7434, 16
      %v7567 = vrot.slane %v7565, 4
      %v7568 = vor.u32 %v7564, %v7567
      %v7569 = vsel %vm2868, %v7559, %v7568
      %v7571 = vshrl.u32 %v7435, 16
      %v7573 = vrot.slane %v7571, 3
      %v7574 = vshll.u32 %v7435, 16
      %v7576 = vrot.slane %v7574, 4
      %v7577 = vor.u32 %v7573, %v7576
      %v7578 = vsel %vm2868, %v7568, %v7577
      %v7580 = vshrl.u32 %v7436, 16
      %v7582 = vrot.slane %v7580, 3
      %v7583 = vshll.u32 %v7436, 16
      %v7585 = vrot.slane %v7583, 4
      %v7586 = vor.u32 %v7582, %v7585
      %v7587 = vsel %vm2868, %v7577, %v7586
      %v7589 = vshrl.u32 %v7437, 16
      %v7591 = vrot.slane %v7589, 3
      %v7592 = vshll.u32 %v7437, 16
      %v7594 = vrot.slane %v7592, 4
      %v7595 = vor.u32 %v7591, %v7594
      %v7596 = vsel %vm2868, %v7586, %v7595
      %v7598 = vshrl.u32 %v7438, 16
      %v7600 = vrot.slane %v7598, 3
      %v7601 = vshll.u32 %v7438, 16
      %v7603 = vrot.slane %v7601, 4
      %v7604 = vor.u32 %v7600, %v7603
      %v7605 = vsel %vm2868, %v7595, %v7604
      %v7607 = vshrl.u32 %v7439, 16
      %v7609 = vrot.slane %v7607, 3
      %v7610 = vshll.u32 %v7439, 16
      %v7612 = vrot.slane %v7610, 4
      %v7613 = vor.u32 %v7609, %v7612
      %v7614 = vsel %vm2868, %v7604, %v7613
      %v7616 = vshrl.u32 %v7440, 16
      %v7618 = vrot.slane %v7616, 3
      %v7619 = vshll.u32 %v7440, 16
      %v7621 = vrot.slane %v7619, 4
      %v7622 = vor.u32 %v7618, %v7621
      %v7623 = vsel %vm2868, %v7613, %v7622
      %v7625 = vshrl.u32 %v7441, 16
      %v7627 = vrot.slane %v7625, 3
      %v7628 = vshll.u32 %v7441, 16
      %v7630 = vrot.slane %v7628, 4
      %v7631 = vor.u32 %v7627, %v7630
      %v7632 = vsel %vm2868, %v7622, %v7631
      %v7634 = vshrl.u32 %v7442, 16
      %v7636 = vrot.slane %v7634, 3
      %v7637 = vshll.u32 %v7442, 16
      %v7639 = vrot.slane %v7637, 4
      %v7640 = vor.u32 %v7636, %v7639
      %v7641 = vsel %vm2868, %v7631, %v7640
      %v7643 = vshrl.u32 %v7443, 16
      %v7645 = vrot.slane %v7643, 3
      %v7646 = vshll.u32 %v7443, 16
      %v7648 = vrot.slane %v7646, 4
      %v7649 = vor.u32 %v7645, %v7648
      %v7650 = vsel %vm2868, %v7640, %v7649
      %v7652 = vshrl.u32 %v7444, 16
      %v7654 = vrot.slane %v7652, 3
      %v7655 = vshll.u32 %v7444, 16
      %v7657 = vrot.slane %v7655, 4
      %v7658 = vor.u32 %v7654, %v7657
      %v7659 = vsel %vm2868, %v7649, %v7658
      %v7662 = vsel %vm3087, 0, %v7452
      %v7663 = vsel %vm3087, %v7658, 0
      %v7665 = vshll.u32 %v7662, 16
      %v7667 = vrot.slane %v7665, 1
      %v7668 = vsel %vm588, %v3096, %v7667
      %v7669 = vshrl.u32 %v7662, 16
      %v7671 = vor.u32 %v7669, %v7667
      %v7673 = vshll.u32 %v7461, 16
      %v7675 = vrot.slane %v7673, 1
      %v7676 = vsel %vm588, %v7671, %v7675
      %v7677 = vshrl.u32 %v7461, 16
      %v7679 = vor.u32 %v7677, %v7675
      %v7681 = vshll.u32 %v7470, 16
      %v7683 = vrot.slane %v7681, 1
      %v7684 = vsel %vm588, %v7679, %v7683
      %v7685 = vshrl.u32 %v7470, 16
      %v7687 = vor.u32 %v7685, %v7683
      %v7689 = vshll.u32 %v7479, 16
      %v7691 = vrot.slane %v7689, 1
      %v7692 = vsel %vm588, %v7687, %v7691
      %v7693 = vshrl.u32 %v7479, 16
      %v7695 = vor.u32 %v7693, %v7691
      %v7697 = vshll.u32 %v7488, 16
      %v7699 = vrot.slane %v7697, 1
      %v7700 = vsel %vm588, %v7695, %v7699
      %v7701 = vshrl.u32 %v7488, 16
      %v7703 = vor.u32 %v7701, %v7699
      %v7705 = vshll.u32 %v7497, 16
      %v7707 = vrot.slane %v7705, 1
      %v7708 = vsel %vm588, %v7703, %v7707
      %v7709 = vshrl.u32 %v7497, 16
      %v7711 = vor.u32 %v7709, %v7707
      %v7713 = vshll.u32 %v7506, 16
      %v7715 = vrot.slane %v7713, 1
      %v7716 = vsel %vm588, %v7711, %v7715
      %v7717 = vshrl.u32 %v7506, 16
      %v7719 = vor.u32 %v7717, %v7715
      %v7721 = vshll.u32 %v7515, 16
      %v7723 = vrot.slane %v7721, 1
      %v7724 = vsel %vm588, %v7719, %v7723
      %v7725 = vshrl.u32 %v7515, 16
      %v7727 = vor.u32 %v7725, %v7723
      %v7729 = vshll.u32 %v7524, 16
      %v7731 = vrot.slane %v7729, 1
      %v7732 = vsel %vm588, %v7727, %v7731
      %v7733 = vshrl.u32 %v7524, 16
      %v7735 = vor.u32 %v7733, %v7731
      %v7737 = vshll.u32 %v7533, 16
      %v7739 = vrot.slane %v7737, 1
      %v7740 = vsel %vm588, %v7735, %v7739
      %v7741 = vshrl.u32 %v7533, 16
      %v7743 = vor.u32 %v7741, %v7739
      %v7745 = vshll.u32 %v7542, 16
      %v7747 = vrot.slane %v7745, 1
      %v7748 = vsel %vm588, %v7743, %v7747
      %v7749 = vshrl.u32 %v7542, 16
      %v7751 = vor.u32 %v7749, %v7747
      %v7753 = vshll.u32 %v7551, 16
      %v7755 = vrot.slane %v7753, 1
      %v7756 = vsel %vm588, %v7751, %v7755
      %v7757 = vshrl.u32 %v7551, 16
      %v7759 = vor.u32 %v7757, %v7755
      %v7761 = vshll.u32 %v7560, 16
      %v7763 = vrot.slane %v7761, 1
      %v7764 = vsel %vm588, %v7759, %v7763
      %v7765 = vshrl.u32 %v7560, 16
      %v7767 = vor.u32 %v7765, %v7763
      %v7769 = vshll.u32 %v7569, 16
      %v7771 = vrot.slane %v7769, 1
      %v7772 = vsel %vm588, %v7767, %v7771
      %v7773 = vshrl.u32 %v7569, 16
      %v7775 = vor.u32 %v7773, %v7771
      %v7777 = vshll.u32 %v7578, 16
      %v7779 = vrot.slane %v7777, 1
      %v7780 = vsel %vm588, %v7775, %v7779
      %v7781 = vshrl.u32 %v7578, 16
      %v7783 = vor.u32 %v7781, %v7779
      %v7785 = vshll.u32 %v7587, 16
      %v7787 = vrot.slane %v7785, 1
      %v7788 = vsel %vm588, %v7783, %v7787
      %v7789 = vshrl.u32 %v7587, 16
      %v7791 = vor.u32 %v7789, %v7787
      %v7793 = vshll.u32 %v7596, 16
      %v7795 = vrot.slane %v7793, 1
      %v7796 = vsel %vm588, %v7791, %v7795
      %v7797 = vshrl.u32 %v7596, 16
      %v7799 = vor.u32 %v7797, %v7795
      %v7801 = vshll.u32 %v7605, 16
      %v7803 = vrot.slane %v7801, 1
      %v7804 = vsel %vm588, %v7799, %v7803
      %v7805 = vshrl.u32 %v7605, 16
      %v7807 = vor.u32 %v7805, %v7803
      %v7809 = vshll.u32 %v7614, 16
      %v7811 = vrot.slane %v7809, 1
      %v7812 = vsel %vm588, %v7807, %v7811
      %v7813 = vshrl.u32 %v7614, 16
      %v7815 = vor.u32 %v7813, %v7811
      %v7817 = vshll.u32 %v7623, 16
      %v7819 = vrot.slane %v7817, 1
      %v7820 = vsel %vm588, %v7815, %v7819
      %v7821 = vshrl.u32 %v7623, 16
      %v7823 = vor.u32 %v7821, %v7819
      %v7825 = vshll.u32 %v7632, 16
      %v7827 = vrot.slane %v7825, 1
      %v7828 = vsel %vm588, %v7823, %v7827
      %v7829 = vshrl.u32 %v7632, 16
      %v7831 = vor.u32 %v7829, %v7827
      %v7833 = vshll.u32 %v7641, 16
      %v7835 = vrot.slane %v7833, 1
      %v7836 = vsel %vm588, %v7831, %v7835
      %v7837 = vshrl.u32 %v7641, 16
      %v7839 = vor.u32 %v7837, %v7835
      %v7841 = vshll.u32 %v7650, 16
      %v7843 = vrot.slane %v7841, 1
      %v7844 = vsel %vm588, %v7839, %v7843
      %v7845 = vshrl.u32 %v7650, 16
      %v7847 = vor.u32 %v7845, %v7843
      %v7849 = vshll.u32 %v7659, 16
      %v7851 = vrot.slane %v7849, 1
      %v7852 = vsel %vm588, %v7847, %v7851
      %7853 = vrot.lane.b32.xlu0 %v7668, 64
      %v7854 = vpop.permute.xlu0 %7853
      %7855 = vrot.lane.b32.xlu0 %v7676, 64
      %v7856 = vpop.permute.xlu0 %7855
      %7857 = vrot.lane.b32.xlu0 %v7684, 64
      %v7858 = vpop.permute.xlu0 %7857
      %7859 = vrot.lane.b32.xlu0 %v7692, 64
      %v7860 = vpop.permute.xlu0 %7859
      %7861 = vrot.lane.b32.xlu0 %v7700, 64
      %v7862 = vpop.permute.xlu0 %7861
      %7863 = vrot.lane.b32.xlu0 %v7708, 64
      %v7864 = vpop.permute.xlu0 %7863
      %7865 = vrot.lane.b32.xlu0 %v7716, 64
      %v7866 = vpop.permute.xlu0 %7865
      %7867 = vrot.lane.b32.xlu0 %v7724, 64
      %v7868 = vpop.permute.xlu0 %7867
      %7869 = vrot.lane.b32.xlu0 %v7732, 64
      %v7870 = vpop.permute.xlu0 %7869
      %7871 = vrot.lane.b32.xlu0 %v7740, 64
      %v7872 = vpop.permute.xlu0 %7871
      %7873 = vrot.lane.b32.xlu0 %v7748, 64
      %v7874 = vpop.permute.xlu0 %7873
      %7875 = vrot.lane.b32.xlu0 %v7756, 64
      %v7876 = vpop.permute.xlu0 %7875
      %7877 = vrot.lane.b32.xlu0 %v7764, 64
      %v7878 = vpop.permute.xlu0 %7877
      %7879 = vrot.lane.b32.xlu0 %v7772, 64
      %v7880 = vpop.permute.xlu0 %7879
      %7881 = vrot.lane.b32.xlu0 %v7780, 64
      %v7882 = vpop.permute.xlu0 %7881
      %7883 = vrot.lane.b32.xlu0 %v7788, 64
      %v7884 = vpop.permute.xlu0 %7883
      %7885 = vrot.lane.b32.xlu0 %v7796, 64
      %v7886 = vpop.permute.xlu0 %7885
      %7887 = vrot.lane.b32.xlu0 %v7804, 64
      %v7888 = vpop.permute.xlu0 %7887
      %7889 = vrot.lane.b32.xlu0 %v7812, 64
      %v7890 = vpop.permute.xlu0 %7889
      %7891 = vrot.lane.b32.xlu0 %v7820, 64
      %v7892 = vpop.permute.xlu0 %7891
      %7893 = vrot.lane.b32.xlu0 %v7828, 64
      %v7894 = vpop.permute.xlu0 %7893
      %7895 = vrot.lane.b32.xlu0 %v7836, 64
      %v7896 = vpop.permute.xlu0 %7895
      %7897 = vrot.lane.b32.xlu0 %v7844, 64
      %v7898 = vpop.permute.xlu0 %7897
      %7899 = vrot.lane.b32.xlu0 %v7852, 64
      %v7900 = vpop.permute.xlu0 %7899
      %v7902 = vrot.slane %v7662, 1
      %v7903 = vsel %vm858, %v3336, %v7902
      %v7904 = vrot.slane %v7461, 1
      %v7905 = vsel %vm858, %v7902, %v7904
      %v7906 = vrot.slane %v7470, 1
      %v7907 = vsel %vm858, %v7904, %v7906
      %v7908 = vrot.slane %v7479, 1
      %v7909 = vsel %vm858, %v7906, %v7908
      %v7910 = vrot.slane %v7488, 1
      %v7911 = vsel %vm858, %v7908, %v7910
      %v7912 = vrot.slane %v7497, 1
      %v7913 = vsel %vm858, %v7910, %v7912
      %v7914 = vrot.slane %v7506, 1
      %v7915 = vsel %vm858, %v7912, %v7914
      %v7916 = vrot.slane %v7515, 1
      %v7917 = vsel %vm858, %v7914, %v7916
      %v7918 = vrot.slane %v7524, 1
      %v7919 = vsel %vm858, %v7916, %v7918
      %v7920 = vrot.slane %v7533, 1
      %v7921 = vsel %vm858, %v7918, %v7920
      %v7922 = vrot.slane %v7542, 1
      %v7923 = vsel %vm858, %v7920, %v7922
      %v7924 = vrot.slane %v7551, 1
      %v7925 = vsel %vm858, %v7922, %v7924
      %v7926 = vrot.slane %v7560, 1
      %v7927 = vsel %vm858, %v7924, %v7926
      %v7928 = vrot.slane %v7569, 1
      %v7929 = vsel %vm858, %v7926, %v7928
      %v7930 = vrot.slane %v7578, 1
      %v7931 = vsel %vm858, %v7928, %v7930
      %v7932 = vrot.slane %v7587, 1
      %v7933 = vsel %vm858, %v7930, %v7932
      %v7934 = vrot.slane %v7596, 1
      %v7935 = vsel %vm858, %v7932, %v7934
      %v7936 = vrot.slane %v7605, 1
      %v7937 = vsel %vm858, %v7934, %v7936
      %v7938 = vrot.slane %v7614, 1
      %v7939 = vsel %vm858, %v7936, %v7938
      %v7940 = vrot.slane %v7623, 1
      %v7941 = vsel %vm858, %v7938, %v7940
      %v7942 = vrot.slane %v7632, 1
      %v7943 = vsel %vm858, %v7940, %v7942
      %v7944 = vrot.slane %v7641, 1
      %v7945 = vsel %vm858, %v7942, %v7944
      %v7946 = vrot.slane %v7650, 1
      %v7947 = vsel %vm858, %v7944, %v7946
      %v7948 = vrot.slane %v7659, 1
      %v7949 = vsel %vm858, %v7946, %v7948
      %v7951 = vrot.slane %v7662, 4
      %v7952 = vrot.slane %v7461, 4
      %v7953 = vsel %vm957, %v7951, %v7952
      %v7954 = vrot.slane %v7470, 4
      %v7955 = vsel %vm957, %v7952, %v7954
      %v7956 = vrot.slane %v7479, 4
      %v7957 = vsel %vm957, %v7954, %v7956
      %v7958 = vrot.slane %v7488, 4
      %v7959 = vsel %vm957, %v7956, %v7958
      %v7960 = vrot.slane %v7497, 4
      %v7961 = vsel %vm957, %v7958, %v7960
      %v7962 = vrot.slane %v7506, 4
      %v7963 = vsel %vm957, %v7960, %v7962
      %v7964 = vrot.slane %v7515, 4
      %v7965 = vsel %vm957, %v7962, %v7964
      %v7966 = vrot.slane %v7524, 4
      %v7967 = vsel %vm957, %v7964, %v7966
      %v7968 = vrot.slane %v7533, 4
      %v7969 = vsel %vm957, %v7966, %v7968
      %v7970 = vrot.slane %v7542, 4
      %v7971 = vsel %vm957, %v7968, %v7970
      %v7972 = vrot.slane %v7551, 4
      %v7973 = vsel %vm957, %v7970, %v7972
      %v7974 = vrot.slane %v7560, 4
      %v7975 = vsel %vm957, %v7972, %v7974
      %v7976 = vrot.slane %v7569, 4
      %v7977 = vsel %vm957, %v7974, %v7976
      %v7978 = vrot.slane %v7578, 4
      %v7979 = vsel %vm957, %v7976, %v7978
      %v7980 = vrot.slane %v7587, 4
      %v7981 = vsel %vm957, %v7978, %v7980
      %v7982 = vrot.slane %v7596, 4
      %v7983 = vsel %vm957, %v7980, %v7982
      %v7984 = vrot.slane %v7605, 4
      %v7985 = vsel %vm957, %v7982, %v7984
      %v7986 = vrot.slane %v7614, 4
      %v7987 = vsel %vm957, %v7984, %v7986
      %v7988 = vrot.slane %v7623, 4
      %v7989 = vsel %vm957, %v7986, %v7988
      %v7990 = vrot.slane %v7632, 4
      %v7991 = vsel %vm957, %v7988, %v7990
      %v7992 = vrot.slane %v7641, 4
      %v7993 = vsel %vm957, %v7990, %v7992
      %v7994 = vrot.slane %v7650, 4
      %v7995 = vsel %vm957, %v7992, %v7994
      %v7996 = vrot.slane %v7659, 4
      %v7997 = vsel %vm957, %v7994, %v7996
      %v7998 = vrot.slane %v7663, 4
      %v7999 = vsel %vm957, %v7996, %v7998
      %8000 = vrot.lane.b32.xlu0 %v7953, 64
      %v8001 = vpop.permute.xlu0 %8000
      %8002 = vrot.lane.b32.xlu0 %v7955, 64
      %v8003 = vpop.permute.xlu0 %8002
      %8004 = vrot.lane.b32.xlu0 %v7957, 64
      %v8005 = vpop.permute.xlu0 %8004
      %8006 = vrot.lane.b32.xlu0 %v7959, 64
      %v8007 = vpop.permute.xlu0 %8006
      %8008 = vrot.lane.b32.xlu0 %v7961, 64
      %v8009 = vpop.permute.xlu0 %8008
      %8010 = vrot.lane.b32.xlu0 %v7963, 64
      %v8011 = vpop.permute.xlu0 %8010
      %8012 = vrot.lane.b32.xlu0 %v7965, 64
      %v8013 = vpop.permute.xlu0 %8012
      %8014 = vrot.lane.b32.xlu0 %v7967, 64
      %v8015 = vpop.permute.xlu0 %8014
      %8016 = vrot.lane.b32.xlu0 %v7969, 64
      %v8017 = vpop.permute.xlu0 %8016
      %8018 = vrot.lane.b32.xlu0 %v7971, 64
      %v8019 = vpop.permute.xlu0 %8018
      %8020 = vrot.lane.b32.xlu0 %v7973, 64
      %v8021 = vpop.permute.xlu0 %8020
      %8022 = vrot.lane.b32.xlu0 %v7975, 64
      %v8023 = vpop.permute.xlu0 %8022
      %8024 = vrot.lane.b32.xlu0 %v7977, 64
      %v8025 = vpop.permute.xlu0 %8024
      %8026 = vrot.lane.b32.xlu0 %v7979, 64
      %v8027 = vpop.permute.xlu0 %8026
      %8028 = vrot.lane.b32.xlu0 %v7981, 64
      %v8029 = vpop.permute.xlu0 %8028
      %8030 = vrot.lane.b32.xlu0 %v7983, 64
      %v8031 = vpop.permute.xlu0 %8030
      %8032 = vrot.lane.b32.xlu0 %v7985, 64
      %v8033 = vpop.permute.xlu0 %8032
      %8034 = vrot.lane.b32.xlu0 %v7987, 64
      %v8035 = vpop.permute.xlu0 %8034
      %8036 = vrot.lane.b32.xlu0 %v7989, 64
      %v8037 = vpop.permute.xlu0 %8036
      %8038 = vrot.lane.b32.xlu0 %v7991, 64
      %v8039 = vpop.permute.xlu0 %8038
      %8040 = vrot.lane.b32.xlu0 %v7993, 64
      %v8041 = vpop.permute.xlu0 %8040
      %8042 = vrot.lane.b32.xlu0 %v7995, 64
      %v8043 = vpop.permute.xlu0 %8042
      %8044 = vrot.lane.b32.xlu0 %v7997, 64
      %v8045 = vpop.permute.xlu0 %8044
      %8046 = vrot.lane.b32.xlu0 %v7999, 64
      %v8047 = vpop.permute.xlu0 %8046
      %v8048 = vrot.slane %v7669, 4
      %v8049 = vrot.slane %v7665, 5
      %v8050 = vor.u32 %v8048, %v8049
      %v8051 = vrot.slane %v7677, 4
      %v8052 = vrot.slane %v7673, 5
      %v8053 = vor.u32 %v8051, %v8052
      %v8054 = vsel %vm1055, %v8050, %v8053
      %v8055 = vrot.slane %v7685, 4
      %v8056 = vrot.slane %v7681, 5
      %v8057 = vor.u32 %v8055, %v8056
      %v8058 = vsel %vm1055, %v8053, %v8057
      %v8059 = vrot.slane %v7693, 4
      %v8060 = vrot.slane %v7689, 5
      %v8061 = vor.u32 %v8059, %v8060
      %v8062 = vsel %vm1055, %v8057, %v8061
      %v8063 = vrot.slane %v7701, 4
      %v8064 = vrot.slane %v7697, 5
      %v8065 = vor.u32 %v8063, %v8064
      %v8066 = vsel %vm1055, %v8061, %v8065
      %v8067 = vrot.slane %v7709, 4
      %v8068 = vrot.slane %v7705, 5
      %v8069 = vor.u32 %v8067, %v8068
      %v8070 = vsel %vm1055, %v8065, %v8069
      %v8071 = vrot.slane %v7717, 4
      %v8072 = vrot.slane %v7713, 5
      %v8073 = vor.u32 %v8071, %v8072
      %v8074 = vsel %vm1055, %v8069, %v8073
      %v8075 = vrot.slane %v7725, 4
      %v8076 = vrot.slane %v7721, 5
      %v8077 = vor.u32 %v8075, %v8076
      %v8078 = vsel %vm1055, %v8073, %v8077
      %v8079 = vrot.slane %v7733, 4
      %v8080 = vrot.slane %v7729, 5
      %v8081 = vor.u32 %v8079, %v8080
      %v8082 = vsel %vm1055, %v8077, %v8081
      %v8083 = vrot.slane %v7741, 4
      %v8084 = vrot.slane %v7737, 5
      %v8085 = vor.u32 %v8083, %v8084
      %v8086 = vsel %vm1055, %v8081, %v8085
      %v8087 = vrot.slane %v7749, 4
      %v8088 = vrot.slane %v7745, 5
      %v8089 = vor.u32 %v8087, %v8088
      %v8090 = vsel %vm1055, %v8085, %v8089
      %v8091 = vrot.slane %v7757, 4
      %v8092 = vrot.slane %v7753, 5
      %v8093 = vor.u32 %v8091, %v8092
      %v8094 = vsel %vm1055, %v8089, %v8093
      %v8095 = vrot.slane %v7765, 4
      %v8096 = vrot.slane %v7761, 5
      %v8097 = vor.u32 %v8095, %v8096
      %v8098 = vsel %vm1055, %v8093, %v8097
      %v8099 = vrot.slane %v7773, 4
      %v8100 = vrot.slane %v7769, 5
      %v8101 = vor.u32 %v8099, %v8100
      %v8102 = vsel %vm1055, %v8097, %v8101
      %v8103 = vrot.slane %v7781, 4
      %v8104 = vrot.slane %v7777, 5
      %v8105 = vor.u32 %v8103, %v8104
      %v8106 = vsel %vm1055, %v8101, %v8105
      %v8107 = vrot.slane %v7789, 4
      %v8108 = vrot.slane %v7785, 5
      %v8109 = vor.u32 %v8107, %v8108
      %v8110 = vsel %vm1055, %v8105, %v8109
      %v8111 = vrot.slane %v7797, 4
      %v8112 = vrot.slane %v7793, 5
      %v8113 = vor.u32 %v8111, %v8112
      %v8114 = vsel %vm1055, %v8109, %v8113
      %v8115 = vrot.slane %v7805, 4
      %v8116 = vrot.slane %v7801, 5
      %v8117 = vor.u32 %v8115, %v8116
      %v8118 = vsel %vm1055, %v8113, %v8117
      %v8119 = vrot.slane %v7813, 4
      %v8120 = vrot.slane %v7809, 5
      %v8121 = vor.u32 %v8119, %v8120
      %v8122 = vsel %vm1055, %v8117, %v8121
      %v8123 = vrot.slane %v7821, 4
      %v8124 = vrot.slane %v7817, 5
      %v8125 = vor.u32 %v8123, %v8124
      %v8126 = vsel %vm1055, %v8121, %v8125
      %v8127 = vrot.slane %v7829, 4
      %v8128 = vrot.slane %v7825, 5
      %v8129 = vor.u32 %v8127, %v8128
      %v8130 = vsel %vm1055, %v8125, %v8129
      %v8131 = vrot.slane %v7837, 4
      %v8132 = vrot.slane %v7833, 5
      %v8133 = vor.u32 %v8131, %v8132
      %v8134 = vsel %vm1055, %v8129, %v8133
      %v8135 = vrot.slane %v7845, 4
      %v8136 = vrot.slane %v7841, 5
      %v8137 = vor.u32 %v8135, %v8136
      %v8138 = vsel %vm1055, %v8133, %v8137
      %v8139 = vshrl.u32 %v7659, 16
      %v8141 = vrot.slane %v8139, 4
      %v8142 = vrot.slane %v7849, 5
      %v8143 = vor.u32 %v8141, %v8142
      %v8144 = vsel %vm1055, %v8137, %v8143
      %v8146 = vshrl.u32 %v7663, 16
      %v8148 = vrot.slane %v8146, 4
      %v8149 = vshll.u32 %v7663, 16
      %v8151 = vrot.slane %v8149, 5
      %v8152 = vor.u32 %v8148, %v8151
      %v8153 = vsel %vm1055, %v8143, %v8152
      %v8154 = vrot.slane %v7662, 5
      %v8155 = vrot.slane %v7461, 5
      %v8156 = vsel %vm1210, %v8154, %v8155
      %v8157 = vrot.slane %v7470, 5
      %v8158 = vsel %vm1210, %v8155, %v8157
      %v8159 = vrot.slane %v7479, 5
      %v8160 = vsel %vm1210, %v8157, %v8159
      %v8161 = vrot.slane %v7488, 5
      %v8162 = vsel %vm1210, %v8159, %v8161
      %v8163 = vrot.slane %v7497, 5
      %v8164 = vsel %vm1210, %v8161, %v8163
      %v8165 = vrot.slane %v7506, 5
      %v8166 = vsel %vm1210, %v8163, %v8165
      %v8167 = vrot.slane %v7515, 5
      %v8168 = vsel %vm1210, %v8165, %v8167
      %v8169 = vrot.slane %v7524, 5
      %v8170 = vsel %vm1210, %v8167, %v8169
      %v8171 = vrot.slane %v7533, 5
      %v8172 = vsel %vm1210, %v8169, %v8171
      %v8173 = vrot.slane %v7542, 5
      %v8174 = vsel %vm1210, %v8171, %v8173
      %v8175 = vrot.slane %v7551, 5
      %v8176 = vsel %vm1210, %v8173, %v8175
      %v8177 = vrot.slane %v7560, 5
      %v8178 = vsel %vm1210, %v8175, %v8177
      %v8179 = vrot.slane %v7569, 5
      %v8180 = vsel %vm1210, %v8177, %v8179
      %v8181 = vrot.slane %v7578, 5
      %v8182 = vsel %vm1210, %v8179, %v8181
      %v8183 = vrot.slane %v7587, 5
      %v8184 = vsel %vm1210, %v8181, %v8183
      %v8185 = vrot.slane %v7596, 5
      %v8186 = vsel %vm1210, %v8183, %v8185
      %v8187 = vrot.slane %v7605, 5
      %v8188 = vsel %vm1210, %v8185, %v8187
      %v8189 = vrot.slane %v7614, 5
      %v8190 = vsel %vm1210, %v8187, %v8189
      %v8191 = vrot.slane %v7623, 5
      %v8192 = vsel %vm1210, %v8189, %v8191
      %v8193 = vrot.slane %v7632, 5
      %v8194 = vsel %vm1210, %v8191, %v8193
      %v8195 = vrot.slane %v7641, 5
      %v8196 = vsel %vm1210, %v8193, %v8195
      %v8197 = vrot.slane %v7650, 5
      %v8198 = vsel %vm1210, %v8195, %v8197
      %v8199 = vrot.slane %v7659, 5
      %v8200 = vsel %vm1210, %v8197, %v8199
      %v8201 = vrot.slane %v7663, 5
      %v8202 = vsel %vm1210, %v8199, %v8201
      %8203 = vrot.lane.b32.xlu0 %v8156, 64
      %v8204 = vpop.permute.xlu0 %8203
      %8205 = vrot.lane.b32.xlu0 %v8158, 64
      %v8206 = vpop.permute.xlu0 %8205
      %8207 = vrot.lane.b32.xlu0 %v8160, 64
      %v8208 = vpop.permute.xlu0 %8207
      %8209 = vrot.lane.b32.xlu0 %v8162, 64
      %v8210 = vpop.permute.xlu0 %8209
      %8211 = vrot.lane.b32.xlu0 %v8164, 64
      %v8212 = vpop.permute.xlu0 %8211
      %8213 = vrot.lane.b32.xlu0 %v8166, 64
      %v8214 = vpop.permute.xlu0 %8213
      %8215 = vrot.lane.b32.xlu0 %v8168, 64
      %v8216 = vpop.permute.xlu0 %8215
      %8217 = vrot.lane.b32.xlu0 %v8170, 64
      %v8218 = vpop.permute.xlu0 %8217
      %8219 = vrot.lane.b32.xlu0 %v8172, 64
      %v8220 = vpop.permute.xlu0 %8219
      %8221 = vrot.lane.b32.xlu0 %v8174, 64
      %v8222 = vpop.permute.xlu0 %8221
      %8223 = vrot.lane.b32.xlu0 %v8176, 64
      %v8224 = vpop.permute.xlu0 %8223
      %8225 = vrot.lane.b32.xlu0 %v8178, 64
      %v8226 = vpop.permute.xlu0 %8225
      %8227 = vrot.lane.b32.xlu0 %v8180, 64
      %v8228 = vpop.permute.xlu0 %8227
      %8229 = vrot.lane.b32.xlu0 %v8182, 64
      %v8230 = vpop.permute.xlu0 %8229
      %8231 = vrot.lane.b32.xlu0 %v8184, 64
      %v8232 = vpop.permute.xlu0 %8231
      %8233 = vrot.lane.b32.xlu0 %v8186, 64
      %v8234 = vpop.permute.xlu0 %8233
      %8235 = vrot.lane.b32.xlu0 %v8188, 64
      %v8236 = vpop.permute.xlu0 %8235
      %8237 = vrot.lane.b32.xlu0 %v8190, 64
      %v8238 = vpop.permute.xlu0 %8237
      %8239 = vrot.lane.b32.xlu0 %v8192, 64
      %v8240 = vpop.permute.xlu0 %8239
      %8241 = vrot.lane.b32.xlu0 %v8194, 64
      %v8242 = vpop.permute.xlu0 %8241
      %8243 = vrot.lane.b32.xlu0 %v8196, 64
      %v8244 = vpop.permute.xlu0 %8243
      %8245 = vrot.lane.b32.xlu0 %v8198, 64
      %v8246 = vpop.permute.xlu0 %8245
      %8247 = vrot.lane.b32.xlu0 %v8200, 64
      %v8248 = vpop.permute.xlu0 %8247
      %8249 = vrot.lane.b32.xlu0 %v8202, 64
      %v8250 = vpop.permute.xlu0 %8249
      %v8251 = vor.u32 %v8139, %v7851
      %v8252 = vrot.slane %v8149, 1
      %v8253 = vsel %vm588, %v8251, %v8252
      %v8254 = vor.u32 %v8146, %v8252
      %v8255 = vsel %vm588, %v8254, %v3095
      %8256 = vrot.lane.b32.xlu0 %v8253, 64
      %v8257 = vpop.permute.xlu0 %8256
      %8258 = vrot.lane.b32.xlu0 %v8255, 64
      %v8259 = vpop.permute.xlu0 %8258
      %v8260 = vrot.slane %v7663, 1
      %v8261 = vsel %vm858, %v7948, %v8260
      %v8262 = vsel %vm858, %v8260, %v3336
      %v8264 = vsel %vm3889, 0, %v7854
      %v8267 = vsel %vm3889, %v7662, %v7856
      %v8270 = vsel %vm3889, %v7461, %v7858
      %v8273 = vsel %vm3889, %v7470, %v7860
      %v8276 = vsel %vm3889, %v7479, %v7862
      %v8279 = vsel %vm3889, %v7488, %v7864
      %v8282 = vsel %vm3889, %v7497, %v7866
      %v8285 = vsel %vm3889, %v7506, %v7868
      %v8288 = vsel %vm3889, %v7515, %v7870
      %v8291 = vsel %vm3889, %v7524, %v7872
      %v8294 = vsel %vm3889, %v7533, %v7874
      %v8297 = vsel %vm3889, %v7542, %v7876
      %v8300 = vsel %vm3889, %v7551, %v7878
      %v8303 = vsel %vm3889, %v7560, %v7880
      %v8306 = vsel %vm3889, %v7569, %v7882
      %v8309 = vsel %vm3889, %v7578, %v7884
      %v8312 = vsel %vm3889, %v7587, %v7886
      %v8315 = vsel %vm3889, %v7596, %v7888
      %v8318 = vsel %vm3889, %v7605, %v7890
      %v8321 = vsel %vm3889, %v7614, %v7892
      %v8324 = vsel %vm3889, %v7623, %v7894
      %v8327 = vsel %vm3889, %v7632, %v7896
      %v8330 = vsel %vm3889, %v7641, %v7898
      %v8333 = vsel %vm3889, %v7650, %v7900
      %v8337 = vsel %vm3889, %v7903, %v8001
      %v8341 = vsel %vm3889, %v7905, %v8003
      %v8345 = vsel %vm3889, %v7907, %v8005
      %v8349 = vsel %vm3889, %v7909, %v8007
      %v8353 = vsel %vm3889, %v7911, %v8009
      %v8357 = vsel %vm3889, %v7913, %v8011
      %v8361 = vsel %vm3889, %v7915, %v8013
      %v8365 = vsel %vm3889, %v7917, %v8015
      %v8369 = vsel %vm3889, %v7919, %v8017
      %v8373 = vsel %vm3889, %v7921, %v8019
      %v8377 = vsel %vm3889, %v7923, %v8021
      %v8381 = vsel %vm3889, %v7925, %v8023
      %v8385 = vsel %vm3889, %v7927, %v8025
      %v8389 = vsel %vm3889, %v7929, %v8027
      %v8393 = vsel %vm3889, %v7931, %v8029
      %v8397 = vsel %vm3889, %v7933, %v8031
      %v8401 = vsel %vm3889, %v7935, %v8033
      %v8405 = vsel %vm3889, %v7937, %v8035
      %v8409 = vsel %vm3889, %v7939, %v8037
      %v8413 = vsel %vm3889, %v7941, %v8039
      %v8417 = vsel %vm3889, %v7943, %v8041
      %v8421 = vsel %vm3889, %v7945, %v8043
      %v8425 = vsel %vm3889, %v7947, %v8045
      %v8429 = vsel %vm3889, %v7949, %v8047
      %v8433 = vsel %vm3889, %v8054, %v8204
      %v8437 = vsel %vm3889, %v8058, %v8206
      %v8441 = vsel %vm3889, %v8062, %v8208
      %v8445 = vsel %vm3889, %v8066, %v8210
      %v8449 = vsel %vm3889, %v8070, %v8212
      %v8453 = vsel %vm3889, %v8074, %v8214
      %v8457 = vsel %vm3889, %v8078, %v8216
      %v8461 = vsel %vm3889, %v8082, %v8218
      %v8465 = vsel %vm3889, %v8086, %v8220
      %v8469 = vsel %vm3889, %v8090, %v8222
      %v8473 = vsel %vm3889, %v8094, %v8224
      %v8477 = vsel %vm3889, %v8098, %v8226
      %v8481 = vsel %vm3889, %v8102, %v8228
      %v8485 = vsel %vm3889, %v8106, %v8230
      %v8489 = vsel %vm3889, %v8110, %v8232
      %v8493 = vsel %vm3889, %v8114, %v8234
      %v8497 = vsel %vm3889, %v8118, %v8236
      %v8501 = vsel %vm3889, %v8122, %v8238
      %v8505 = vsel %vm3889, %v8126, %v8240
      %v8509 = vsel %vm3889, %v8130, %v8242
      %v8513 = vsel %vm3889, %v8134, %v8244
      %v8517 = vsel %vm3889, %v8138, %v8246
      %v8521 = vsel %vm3889, %v8144, %v8248
      %v8525 = vsel %vm3889, %v8153, %v8250
      %v8528 = vsel %vm3889, %v7659, %v8257
      %v8531 = vsel %vm3889, %v7663, %v8259
      %v8533 = vld [vmem:[%s8] sm:$0xf]
      %v8534 = vld [vmem:[%s8 + $0x4] sm:$0xf]
      %v8535 = vld [vmem:[%s8 + $0x8] sm:$0xf]
      %v8536 = vld [vmem:[%s8 + $0xc] sm:$0xf]
      %v8537 = vld [vmem:[%s8 + $0x10] sm:$0xf]
      %v8538 = vld [vmem:[%s8 + $0x14] sm:$0xf]
      %v8539 = vld [vmem:[%s8 + $0x18] sm:$0xf]
      %v8540 = vld [vmem:[%s8 + $0x1c] sm:$0xf]
      %v8541 = vld [vmem:[%s8 + $0x20] sm:$0xf]
      %v8542 = vld [vmem:[%s8 + $0x24] sm:$0xf]
      %v8543 = vld [vmem:[%s8 + $0x28] sm:$0xf]
      %v8544 = vld [vmem:[%s8 + $0x2c] sm:$0xf]
      %v8545 = vld [vmem:[%s8 + $0x30] sm:$0xf]
      %v8546 = vld [vmem:[%s8 + $0x34] sm:$0xf]
      %v8547 = vld [vmem:[%s8 + $0x38] sm:$0xf]
      %v8548 = vld [vmem:[%s8 + $0x3c] sm:$0xf]
      %v8549 = vld [vmem:[%s8 + $0x40] sm:$0xf]
      %v8550 = vld [vmem:[%s8 + $0x44] sm:$0xf]
      %v8551 = vld [vmem:[%s8 + $0x48] sm:$0xf]
      %v8552 = vld [vmem:[%s8 + $0x4c] sm:$0xf]
      %v8553 = vld [vmem:[%s8 + $0x50] sm:$0xf]
      %v8554 = vld [vmem:[%s8 + $0x54] sm:$0xf]
      %v8555 = vld [vmem:[%s8 + $0x58] sm:$0xf]
      %v8556 = vld [vmem:[%s8 + $0x5c] sm:$0xf]
      %v8557 = vld [vmem:[%s8 + $0x60] sm:$0xf]
      %v8558 = vld [vmem:[%s8 + $0x64] sm:$0xf]
      %v8559 = vld [vmem:[%s8 + $0x68] sm:$0xf]
      %v8560 = vld [vmem:[%s8 + $0x6c] sm:$0xf]
      %v8561 = vld [vmem:[%s8 + $0x70] sm:$0xf]
      %v8562 = vld [vmem:[%s8 + $0x74] sm:$0xf]
      %v8563 = vld [vmem:[%s8 + $0x78] sm:$0xf]
      %v8564 = vld [vmem:[%s8 + $0x7c] sm:$0xf]
      %v8565 = vld [vmem:[%s8 + $0x80] sm:$0xf]
      %v8566 = vld [vmem:[%s8 + $0x84] sm:$0xf]
      %v8567 = vld [vmem:[%s8 + $0x88] sm:$0xf]
      %v8568 = vld [vmem:[%s8 + $0x8c] sm:$0xf]
      %v8569 = vld [vmem:[%s8 + $0x90] sm:$0xf]
      %v8570 = vld [vmem:[%s8 + $0x94] sm:$0xf]
      %v8571 = vld [vmem:[%s8 + $0x98] sm:$0xf]
      %v8572 = vld [vmem:[%s8 + $0x9c] sm:$0xf]
      %v8573 = vld [vmem:[%s8 + $0xa0] sm:$0xf]
      %v8574 = vld [vmem:[%s8 + $0xa4] sm:$0xf]
      %v8575 = vld [vmem:[%s8 + $0xa8] sm:$0xf]
      %v8576 = vld [vmem:[%s8 + $0xac] sm:$0xf]
      %v8577 = vld [vmem:[%s8 + $0xb0] sm:$0xf]
      %v8578 = vld [vmem:[%s8 + $0xb4] sm:$0xf]
      %v8579 = vld [vmem:[%s8 + $0xb8] sm:$0xf]
      %v8580 = vld [vmem:[%s8 + $0xbc] sm:$0xf]
      %v8581 = vld [vmem:[%s8 + $0xc0] sm:$0xf]
      %v8582 = vld [vmem:[%s8 + $0xc4] sm:$0xf]
      %v8583 = vld [vmem:[%s8 + $0xc8] sm:$0xf]
      %v8584 = vld [vmem:[%s8 + $0xcc] sm:$0xf]
      %v8585 = vld [vmem:[%s8 + $0xd0] sm:$0xf]
      %v8586 = vld [vmem:[%s8 + $0xd4] sm:$0xf]
      %v8587 = vld [vmem:[%s8 + $0xd8] sm:$0xf]
      %v8588 = vld [vmem:[%s8 + $0xdc] sm:$0xf]
      %v8589 = vld [vmem:[%s8 + $0xe0] sm:$0xf]
      %v8590 = vld [vmem:[%s8 + $0xe4] sm:$0xf]
      %v8591 = vld [vmem:[%s8 + $0xe8] sm:$0xf]
      %v8592 = vld [vmem:[%s8 + $0xec] sm:$0xf]
      %v8593 = vld [vmem:[%s8 + $0xf0] sm:$0xf]
      %v8594 = vld [vmem:[%s8 + $0xf4] sm:$0xf]
      %v8595 = vld [vmem:[%s8 + $0xf8] sm:$0xf]
      %v8596 = vld [vmem:[%s8 + $0xfc] sm:$0xf]
      %v8597 = vld [vmem:[%s8 + $0x100] sm:$0xf]
      %v8598 = vld [vmem:[%s8 + $0x104] sm:$0xf]
      %v8599 = vld [vmem:[%s8 + $0x108] sm:$0xf]
      %v8600 = vld [vmem:[%s8 + $0x10c] sm:$0xf]
      %v8601 = vld [vmem:[%s8 + $0x110] sm:$0xf]
      %v8602 = vld [vmem:[%s8 + $0x114] sm:$0xf]
      %v8603 = vld [vmem:[%s8 + $0x118] sm:$0xf]
      %v8604 = vld [vmem:[%s8 + $0x11c] sm:$0xf]
      %v8605 = vld [vmem:[%s9] sm:$0x1]
      %v8607 = vlaneseq
      %v8608 = vshrl.u32 %v8607, 7
      %v8609 = vsub.s32 0, %v8608
      %v8610 = vrot.slane %v8605, %v8609
      %v8684 = vunpack.c.l.b16 %v8533
      %v8685 = vunpack.c.l.b16 %v8534
      %v8686 = vunpack.c.l.b16 %v8535
      %v8687 = vunpack.c.l.b16 %v8536
      %v8688 = vunpack.c.l.b16 %v8537
      %v8689 = vunpack.c.l.b16 %v8538
      %v8690 = vunpack.c.l.b16 %v8539
      %v8691 = vunpack.c.l.b16 %v8540
      %v8692 = vunpack.c.l.b16 %v8541
      %v8693 = vunpack.c.l.b16 %v8542
      %v8694 = vunpack.c.l.b16 %v8543
      %v8695 = vunpack.c.l.b16 %v8544
      %v8696 = vunpack.c.l.b16 %v8545
      %v8697 = vunpack.c.l.b16 %v8546
      %v8698 = vunpack.c.l.b16 %v8547
      %v8699 = vunpack.c.l.b16 %v8548
      %v8700 = vunpack.c.l.b16 %v8549
      %v8701 = vunpack.c.l.b16 %v8550
      %v8702 = vunpack.c.l.b16 %v8551
      %v8703 = vunpack.c.l.b16 %v8552
      %v8704 = vunpack.c.l.b16 %v8553
      %v8705 = vunpack.c.l.b16 %v8554
      %v8706 = vunpack.c.l.b16 %v8555
      %v8707 = vunpack.c.l.b16 %v8556
      %v8708 = vunpack.c.l.b16 %v8557
      %v8709 = vunpack.c.l.b16 %v8558
      %v8710 = vunpack.c.l.b16 %v8559
      %v8711 = vunpack.c.l.b16 %v8560
      %v8712 = vunpack.c.l.b16 %v8561
      %v8713 = vunpack.c.l.b16 %v8562
      %v8714 = vunpack.c.l.b16 %v8563
      %v8715 = vunpack.c.l.b16 %v8564
      %v8716 = vunpack.c.l.b16 %v8565
      %v8717 = vunpack.c.l.b16 %v8566
      %v8718 = vunpack.c.l.b16 %v8567
      %v8719 = vunpack.c.l.b16 %v8568
      %v8720 = vunpack.c.l.b16 %v8569
      %v8721 = vunpack.c.l.b16 %v8570
      %v8722 = vunpack.c.l.b16 %v8571
      %v8723 = vunpack.c.l.b16 %v8572
      %v8724 = vunpack.c.l.b16 %v8573
      %v8725 = vunpack.c.l.b16 %v8574
      %v8726 = vunpack.c.l.b16 %v8575
      %v8727 = vunpack.c.l.b16 %v8576
      %v8728 = vunpack.c.l.b16 %v8577
      %v8729 = vunpack.c.l.b16 %v8578
      %v8730 = vunpack.c.l.b16 %v8579
      %v8731 = vunpack.c.l.b16 %v8580
      %v8732 = vunpack.c.l.b16 %v8581
      %v8733 = vunpack.c.l.b16 %v8582
      %v8734 = vunpack.c.l.b16 %v8583
      %v8735 = vunpack.c.l.b16 %v8584
      %v8736 = vunpack.c.l.b16 %v8585
      %v8737 = vunpack.c.l.b16 %v8586
      %v8738 = vunpack.c.l.b16 %v8587
      %v8739 = vunpack.c.l.b16 %v8588
      %v8740 = vunpack.c.l.b16 %v8589
      %v8741 = vunpack.c.l.b16 %v8590
      %v8742 = vunpack.c.l.b16 %v8591
      %v8743 = vunpack.c.l.b16 %v8592
      %v8744 = vunpack.c.l.b16 %v8593
      %v8745 = vunpack.c.l.b16 %v8594
      %v8746 = vunpack.c.l.b16 %v8595
      %v8747 = vunpack.c.l.b16 %v8596
      %v8748 = vunpack.c.l.b16 %v8597
      %v8749 = vunpack.c.l.b16 %v8598
      %v8750 = vunpack.c.l.b16 %v8599
      %v8751 = vunpack.c.l.b16 %v8600
      %v8752 = vunpack.c.l.b16 %v8601
      %v8753 = vunpack.c.l.b16 %v8602
      %v8754 = vunpack.c.l.b16 %v8603
      %v8755 = vunpack.c.l.b16 %v8604
      %v8756 = vpack.c.b16 %v8685, %v8684
      %v8757 = vpack.c.b16 %v8687, %v8686
      %v8758 = vpack.c.b16 %v8689, %v8688
      %v8759 = vpack.c.b16 %v8691, %v8690
      %v8760 = vpack.c.b16 %v8693, %v8692
      %v8761 = vpack.c.b16 %v8695, %v8694
      %v8762 = vpack.c.b16 %v8697, %v8696
      %v8763 = vpack.c.b16 %v8699, %v8698
      %v8764 = vpack.c.b16 %v8701, %v8700
      %v8765 = vpack.c.b16 %v8703, %v8702
      %v8766 = vpack.c.b16 %v8705, %v8704
      %v8767 = vpack.c.b16 %v8707, %v8706
      %v8768 = vpack.c.b16 %v8709, %v8708
      %v8769 = vpack.c.b16 %v8711, %v8710
      %v8770 = vpack.c.b16 %v8713, %v8712
      %v8771 = vpack.c.b16 %v8715, %v8714
      %v8772 = vpack.c.b16 %v8717, %v8716
      %v8773 = vpack.c.b16 %v8719, %v8718
      %v8774 = vpack.c.b16 %v8721, %v8720
      %v8775 = vpack.c.b16 %v8723, %v8722
      %v8776 = vpack.c.b16 %v8725, %v8724
      %v8777 = vpack.c.b16 %v8727, %v8726
      %v8778 = vpack.c.b16 %v8729, %v8728
      %v8779 = vpack.c.b16 %v8731, %v8730
      %v8780 = vpack.c.b16 %v8733, %v8732
      %v8781 = vpack.c.b16 %v8735, %v8734
      %v8782 = vpack.c.b16 %v8737, %v8736
      %v8783 = vpack.c.b16 %v8739, %v8738
      %v8784 = vpack.c.b16 %v8741, %v8740
      %v8785 = vpack.c.b16 %v8743, %v8742
      %v8786 = vpack.c.b16 %v8745, %v8744
      %v8787 = vpack.c.b16 %v8747, %v8746
      %v8788 = vpack.c.b16 %v8749, %v8748
      %v8789 = vpack.c.b16 %v8751, %v8750
      %v8790 = vpack.c.b16 %v8753, %v8752
      %v8791 = vpack.c.b16 %v8755, %v8754
      %v8828 = vsel %vm3889, %v7909, 0
      %v8830 = vsel %vm3889, %v7911, 0
      %v8832 = vsel %vm3889, %v7913, 0
      %v8834 = vsel %vm3889, %v7915, 0
      %v8836 = vsel %vm3889, %v7917, 0
      %v8838 = vsel %vm3889, %v7919, 0
      %v8840 = vsel %vm3889, %v7921, 0
      %v8842 = vsel %vm3889, %v7923, 0
      %v8844 = vsel %vm3889, %v7925, 0
      %v8846 = vsel %vm3889, %v7927, 0
      %v8848 = vsel %vm3889, %v7929, 0
      %v8850 = vsel %vm3889, %v7931, 0
      %v8852 = vsel %vm3889, %v7933, 0
      %v8854 = vsel %vm3889, %v7935, 0
      %v8856 = vsel %vm3889, %v7937, 0
      %v8858 = vsel %vm3889, %v7939, 0
      %v8860 = vsel %vm3889, %v7941, 0
      %v8862 = vsel %vm3889, %v7943, 0
      %v8864 = vsel %vm3889, %v7945, 0
      %v8866 = vsel %vm3889, %v7947, 0
      %v8868 = vsel %vm3889, %v7949, 0
      %v8871 = vsel %vm3889, %v8261, 0
      %v8874 = vsel %vm3889, %v8262, 0
      %8876 = vmatprep.subr.bf16.mxu0 0
      %8877 = vmatpush1.bf16.msra.mxu0 %v8756
      %8878 = vmatprep.subr.bf16.mxu0 0
      %8879 = vmatpush1.bf16.msra.mxu0 %v8757
      %8880 = vmatprep.subr.bf16.mxu0 0
      %8881 = vmatpush1.bf16.msra.mxu0 %v8758
      %8882 = vmatprep.subr.bf16.mxu0 0
      %8883 = vmatpush1.bf16.msra.mxu0 %v8759
      %8884 = vmatprep.subr.bf16.mxu0 0
      %8885 = vmatpush1.bf16.msra.mxu0 %v8760
      %8886 = vmatprep.subr.bf16.mxu0 0
      %8887 = vmatpush1.bf16.msra.mxu0 %v8761
      %8888 = vmatprep.subr.bf16.mxu0 0
      %8889 = vmatpush1.bf16.msra.mxu0 %v8762
      %8890 = vmatprep.subr.bf16.mxu0 0
      %8891 = vmatpush1.bf16.msra.mxu0 %v8763
      %8892 = vmatprep.subr.bf16.mxu0 0
      %8893 = vmatpush1.bf16.msra.mxu0 %v8764
      %8894 = vmatprep.subr.bf16.mxu0 0
      %8895 = vmatpush1.bf16.msra.mxu0 %v8765
      %8896 = vmatprep.subr.bf16.mxu0 0
      %8897 = vmatpush1.bf16.msra.mxu0 %v8766
      %8898 = vmatprep.subr.bf16.mxu0 0
      %8899 = vmatpush1.bf16.msra.mxu0 %v8767
      %8900 = vmatprep.subr.bf16.mxu0 0
      %8901 = vmatpush1.bf16.msra.mxu0 %v8768
      %8902 = vmatprep.subr.bf16.mxu0 0
      %8903 = vmatpush1.bf16.msra.mxu0 %v8769
      %8904 = vmatprep.subr.bf16.mxu0 0
      %8905 = vmatpush1.bf16.msra.mxu0 %v8770
      %8906 = vmatprep.subr.bf16.mxu0 0
      %8907 = vmatpush1.bf16.msra.mxu0 %v8771
      %8908 = vmatprep.mubr.bf16.mxu0 %v8337
      %8909 = vmatmul.mubr.bf16.gmra.mrb[0].mxu0 %v8264
      %v8910 = vpop.f32.mrb[0].mxu0
      %v8911 = vpop.f32.mrb[0].mxu0
      %v8912 = vpop.f32.mrb[0].mxu0
      %v8913 = vpop.f32.mrb[0].mxu0
      %8914 = vmatprep.mubr.bf16.mxu0 %v8341
      %8915 = vmatmul.mubr.bf16.gmra.mrb[0].mxu0 %v8267
      %v8916 = vpop.f32.mrb[0].mxu0
      %v8917 = vpop.f32.mrb[0].mxu0
      %v8918 = vpop.f32.mrb[0].mxu0
      %v8919 = vpop.f32.mrb[0].mxu0
      %8920 = vmatprep.mubr.bf16.mxu0 %v8345
      %8921 = vmatmul.mubr.bf16.gmra.mrb[0].mxu0 %v8270
      %v8922 = vpop.f32.mrb[0].mxu0
      %v8923 = vpop.f32.mrb[0].mxu0
      %v8924 = vpop.f32.mrb[0].mxu0
      %v8925 = vpop.f32.mrb[0].mxu0
      %8926 = vmatprep.mubr.bf16.mxu0 %v8349
      %8927 = vmatmul.mubr.bf16.gmra.mrb[0].mxu0 %v8273
      %v8928 = vpop.f32.mrb[0].mxu0
      %v8929 = vpop.f32.mrb[0].mxu0
      %v8930 = vpop.f32.mrb[0].mxu0
      %v8931 = vpop.f32.mrb[0].mxu0
      %8932 = vmatprep.mubr.bf16.mxu0 %v8353
      %8933 = vmatmul.mubr.bf16.gmra.mrb[0].mxu0 %v8276
      %v8934 = vpop.f32.mrb[0].mxu0
      %v8935 = vpop.f32.mrb[0].mxu0
      %v8936 = vpop.f32.mrb[0].mxu0
      %v8937 = vpop.f32.mrb[0].mxu0
      %8938 = vmatprep.mubr.bf16.mxu0 %v8357
      %8939 = vmatmul.mubr.bf16.gmra.mrb[0].mxu0 %v8279
      %v8940 = vpop.f32.mrb[0].mxu0
      %v8941 = vpop.f32.mrb[0].mxu0
      %v8942 = vpop.f32.mrb[0].mxu0
      %v8943 = vpop.f32.mrb[0].mxu0
      %8944 = vmatprep.mubr.bf16.mxu0 %v8361
      %8945 = vmatmul.mubr.bf16.gmra.mrb[0].mxu0 %v8282
      %v8946 = vpop.f32.mrb[0].mxu0
      %v8947 = vadd.f32 %v8610, %v8946
      %v8948 = vpop.f32.mrb[0].mxu0
      %v8949 = vpop.f32.mrb[0].mxu0
      %v8950 = vadd.f32 %v8610, %v8949
      %v8951 = vpop.f32.mrb[0].mxu0
      %8952 = vmatprep.mubr.bf16.mxu0 %v8365
      %8953 = vmatmul.mubr.bf16.gmra.mrb[0].mxu0 %v8285
      %v8954 = vpop.f32.mrb[0].mxu0
      %v8955 = vadd.f32 %v8610, %v8954
      %v8956 = vpop.f32.mrb[0].mxu0
      %v8957 = vpop.f32.mrb[0].mxu0
      %v8958 = vadd.f32 %v8610, %v8957
      %v8959 = vpop.f32.mrb[0].mxu0
      %8960 = vmatprep.mubr.bf16.mxu0 %v8369
      %8961 = vmatmul.mubr.bf16.gmra.mrb[0].mxu0 %v8288
      %v8962 = vpop.f32.mrb[0].mxu0
      %v8963 = vadd.f32 %v8610, %v8962
      %v8964 = vpop.f32.mrb[0].mxu0
      %v8965 = vpop.f32.mrb[0].mxu0
      %v8966 = vadd.f32 %v8610, %v8965
      %v8967 = vpop.f32.mrb[0].mxu0
      %8968 = vmatprep.mubr.bf16.mxu0 %v8373
      %8969 = vmatmul.mubr.bf16.gmra.mrb[0].mxu0 %v8291
      %v8970 = vpop.f32.mrb[0].mxu0
      %v8971 = vadd.f32 %v8610, %v8970
      %v8972 = vpop.f32.mrb[0].mxu0
      %v8973 = vpop.f32.mrb[0].mxu0
      %v8974 = vadd.f32 %v8610, %v8973
      %v8975 = vpop.f32.mrb[0].mxu0
      %8976 = vmatprep.mubr.bf16.mxu0 %v8377
      %8977 = vmatmul.mubr.bf16.gmra.mrb[0].mxu0 %v8294
      %v8978 = vpop.f32.mrb[0].mxu0
      %v8979 = vadd.f32 %v8610, %v8978
      %v8980 = vpop.f32.mrb[0].mxu0
      %v8981 = vpop.f32.mrb[0].mxu0
      %v8982 = vadd.f32 %v8610, %v8981
      %v8983 = vpop.f32.mrb[0].mxu0
      %8984 = vmatprep.mubr.bf16.mxu0 %v8381
      %8985 = vmatmul.mubr.bf16.gmra.mrb[0].mxu0 %v8297
      %v8986 = vpop.f32.mrb[0].mxu0
      %v8987 = vadd.f32 %v8610, %v8986
      %v8988 = vpop.f32.mrb[0].mxu0
      %v8989 = vpop.f32.mrb[0].mxu0
      %v8990 = vadd.f32 %v8610, %v8989
      %v8991 = vpop.f32.mrb[0].mxu0
      %8992 = vmatprep.mubr.bf16.mxu0 %v8385
      %8993 = vmatmul.mubr.bf16.gmra.mrb[0].mxu0 %v8300
      %v8994 = vpop.f32.mrb[0].mxu0
      %v8995 = vadd.f32 %v8610, %v8994
      %v8996 = vpop.f32.mrb[0].mxu0
      %v8997 = vpop.f32.mrb[0].mxu0
      %v8998 = vadd.f32 %v8610, %v8997
      %v8999 = vpop.f32.mrb[0].mxu0
      %9000 = vmatprep.mubr.bf16.mxu0 %v8389
      %9001 = vmatmul.mubr.bf16.gmra.mrb[0].mxu0 %v8303
      %v9002 = vpop.f32.mrb[0].mxu0
      %v9003 = vadd.f32 %v8610, %v9002
      %v9004 = vpop.f32.mrb[0].mxu0
      %v9005 = vpop.f32.mrb[0].mxu0
      %v9006 = vadd.f32 %v8610, %v9005
      %v9007 = vpop.f32.mrb[0].mxu0
      %9008 = vmatprep.mubr.bf16.mxu0 %v8393
      %9009 = vmatmul.mubr.bf16.gmra.mrb[0].mxu0 %v8306
      %v9010 = vpop.f32.mrb[0].mxu0
      %v9011 = vadd.f32 %v8610, %v9010
      %v9012 = vpop.f32.mrb[0].mxu0
      %v9013 = vpop.f32.mrb[0].mxu0
      %v9014 = vadd.f32 %v8610, %v9013
      %v9015 = vpop.f32.mrb[0].mxu0
      %9016 = vmatprep.mubr.bf16.mxu0 %v8397
      %9017 = vmatmul.mubr.bf16.gmra.mrb[0].mxu0 %v8309
      %v9018 = vpop.f32.mrb[0].mxu0
      %v9019 = vadd.f32 %v8610, %v9018
      %v9020 = vpop.f32.mrb[0].mxu0
      %v9021 = vpop.f32.mrb[0].mxu0
      %v9022 = vadd.f32 %v8610, %v9021
      %v9023 = vpop.f32.mrb[0].mxu0
      %9024 = vmatprep.mubr.bf16.mxu0 %v8401
      %9025 = vmatmul.mubr.bf16.gmra.mrb[0].mxu0 %v8312
      %v9026 = vpop.f32.mrb[0].mxu0
      %v9027 = vadd.f32 %v8610, %v9026
      %v9028 = vpop.f32.mrb[0].mxu0
      %v9029 = vpop.f32.mrb[0].mxu0
      %v9030 = vadd.f32 %v8610, %v9029
      %v9031 = vpop.f32.mrb[0].mxu0
      %9032 = vmatprep.mubr.bf16.mxu0 %v8405
      %9033 = vmatmul.mubr.bf16.gmra.mrb[0].mxu0 %v8315
      %v9034 = vpop.f32.mrb[0].mxu0
      %v9035 = vadd.f32 %v8610, %v9034
      %v9036 = vpop.f32.mrb[0].mxu0
      %v9037 = vpop.f32.mrb[0].mxu0
      %v9038 = vadd.f32 %v8610, %v9037
      %v9039 = vpop.f32.mrb[0].mxu0
      %9040 = vmatprep.mubr.bf16.mxu0 %v8409
      %9041 = vmatmul.mubr.bf16.gmra.mrb[0].mxu0 %v8318
      %v9042 = vpop.f32.mrb[0].mxu0
      %v9043 = vpop.f32.mrb[0].mxu0
      %v9044 = vpop.f32.mrb[0].mxu0
      %v9045 = vpop.f32.mrb[0].mxu0
      %9046 = vmatprep.mubr.bf16.mxu0 %v8413
      %9047 = vmatmul.mubr.bf16.gmra.mrb[0].mxu0 %v8321
      %v9048 = vpop.f32.mrb[0].mxu0
      %v9049 = vpop.f32.mrb[0].mxu0
      %v9050 = vpop.f32.mrb[0].mxu0
      %v9051 = vpop.f32.mrb[0].mxu0
      %9052 = vmatprep.mubr.bf16.mxu0 %v8417
      %9053 = vmatmul.mubr.bf16.gmra.mrb[0].mxu0 %v8324
      %v9054 = vpop.f32.mrb[0].mxu0
      %v9055 = vpop.f32.mrb[0].mxu0
      %v9056 = vpop.f32.mrb[0].mxu0
      %v9057 = vpop.f32.mrb[0].mxu0
      %9058 = vmatprep.mubr.bf16.mxu0 %v8421
      %9059 = vmatmul.mubr.bf16.gmra.mrb[0].mxu0 %v8327
      %v9060 = vpop.f32.mrb[0].mxu0
      %v9061 = vpop.f32.mrb[0].mxu0
      %v9062 = vpop.f32.mrb[0].mxu0
      %v9063 = vpop.f32.mrb[0].mxu0
      %9064 = vmatprep.mubr.bf16.mxu0 %v8425
      %9065 = vmatmul.mubr.bf16.gmra.mrb[0].mxu0 %v8330
      %v9066 = vpop.f32.mrb[0].mxu0
      %v9067 = vpop.f32.mrb[0].mxu0
      %v9068 = vpop.f32.mrb[0].mxu0
      %v9069 = vpop.f32.mrb[0].mxu0
      %9070 = vmatprep.mubr.bf16.mxu0 %v8429
      %9071 = vmatmul.mubr.bf16.gmra.mrb[0].mxu0 %v8333
      %v9072 = vpop.f32.mrb[0].mxu0
      %v9073 = vpop.f32.mrb[0].mxu0
      %v9074 = vpop.f32.mrb[0].mxu0
      %v9075 = vpop.f32.mrb[0].mxu0
      %9076 = vdwg.mxu0
      %9077 = vmatprep.subr.bf16.mxu0 0
      %9078 = vmatpush1.bf16.msra.mxu0 %v8772
      %9079 = vmatprep.subr.bf16.mxu0 0
      %9080 = vmatpush1.bf16.msra.mxu0 %v8773
      %9081 = vmatprep.subr.bf16.mxu0 0
      %9082 = vmatpush1.bf16.msra.mxu0 %v8774
      %9083 = vmatprep.subr.bf16.mxu0 0
      %9084 = vmatpush1.bf16.msra.mxu0 %v8775
      %9085 = vmatprep.subr.bf16.mxu0 0
      %9086 = vmatpush1.bf16.msra.mxu0 %v8776
      %9087 = vmatprep.subr.bf16.mxu0 0
      %9088 = vmatpush1.bf16.msra.mxu0 %v8777
      %9089 = vmatprep.subr.bf16.mxu0 0
      %9090 = vmatpush1.bf16.msra.mxu0 %v8778
      %9091 = vmatprep.subr.bf16.mxu0 0
      %9092 = vmatpush1.bf16.msra.mxu0 %v8779
      %9093 = vmatprep.subr.bf16.mxu0 0
      %9094 = vmatpush1.bf16.msra.mxu0 %v8780
      %9095 = vmatprep.subr.bf16.mxu0 0
      %9096 = vmatpush1.bf16.msra.mxu0 %v8781
      %9097 = vmatprep.subr.bf16.mxu0 0
      %9098 = vmatpush1.bf16.msra.mxu0 %v8782
      %9099 = vmatprep.subr.bf16.mxu0 0
      %9100 = vmatpush1.bf16.msra.mxu0 %v8783
      %9101 = vmatprep.subr.bf16.mxu0 0
      %9102 = vmatpush1.bf16.msra.mxu0 %v8784
      %9103 = vmatprep.subr.bf16.mxu0 0
      %9104 = vmatpush1.bf16.msra.mxu0 %v8785
      %9105 = vmatprep.subr.bf16.mxu0 0
      %9106 = vmatpush1.bf16.msra.mxu0 %v8786
      %9107 = vmatprep.subr.bf16.mxu0 0
      %9108 = vmatpush1.bf16.msra.mxu0 %v8787
      %9109 = vmatprep.mubr.bf16.mxu0 %v8273
      %9110 = vmatmul.mubr.bf16.gmra.mrb[0].mxu0 %v8433
      %v9111 = vpop.f32.mrb[0].mxu0
      %v9112 = vpop.f32.mrb[0].mxu0
      %v9113 = vpop.f32.mrb[0].mxu0
      %v9114 = vpop.f32.mrb[0].mxu0
      %9115 = vmatprep.mubr.bf16.mxu0 %v8276
      %9116 = vmatmul.mubr.bf16.gmra.mrb[0].mxu0 %v8437
      %v9117 = vpop.f32.mrb[0].mxu0
      %v9118 = vpop.f32.mrb[0].mxu0
      %v9119 = vpop.f32.mrb[0].mxu0
      %v9120 = vpop.f32.mrb[0].mxu0
      %9121 = vmatprep.mubr.bf16.mxu0 %v8279
      %9122 = vmatmul.mubr.bf16.gmra.mrb[0].mxu0 %v8441
      %v9123 = vpop.f32.mrb[0].mxu0
      %v9124 = vpop.f32.mrb[0].mxu0
      %v9125 = vpop.f32.mrb[0].mxu0
      %v9126 = vpop.f32.mrb[0].mxu0
      %9127 = vmatprep.mubr.bf16.mxu0 %v8282
      %9128 = vmatmul.mubr.bf16.gmra.mrb[0].mxu0 %v8445
      %v9129 = vpop.f32.mrb[0].mxu0
      %v9130 = vpop.f32.mrb[0].mxu0
      %v9131 = vpop.f32.mrb[0].mxu0
      %v9132 = vpop.f32.mrb[0].mxu0
      %9133 = vmatprep.mubr.bf16.mxu0 %v8285
      %9134 = vmatmul.mubr.bf16.gmra.mrb[0].mxu0 %v8449
      %v9135 = vpop.f32.mrb[0].mxu0
      %v9136 = vpop.f32.mrb[0].mxu0
      %v9137 = vpop.f32.mrb[0].mxu0
      %v9138 = vpop.f32.mrb[0].mxu0
      %9139 = vmatprep.mubr.bf16.mxu0 %v8288
      %9140 = vmatmul.mubr.bf16.gmra.mrb[0].mxu0 %v8453
      %v9141 = vpop.f32.mrb[0].mxu0
      %v9142 = vpop.f32.mrb[0].mxu0
      %v9143 = vpop.f32.mrb[0].mxu0
      %v9144 = vpop.f32.mrb[0].mxu0
      %9145 = vmatprep.mubr.bf16.mxu0 %v8291
      %9146 = vmatmul.mubr.bf16.gmra.mrb[0].mxu0 %v8457
      %v9147 = vpop.f32.mrb[0].mxu0
      %v9148 = vadd.f32 %v8947, %v9147
      %v9149 = vpop.f32.mrb[0].mxu0
      %v9150 = vpop.f32.mrb[0].mxu0
      %v9151 = vadd.f32 %v8950, %v9150
      %v9152 = vpop.f32.mrb[0].mxu0
      %9153 = vmatprep.mubr.bf16.mxu0 %v8294
      %9154 = vmatmul.mubr.bf16.gmra.mrb[0].mxu0 %v8461
      %v9155 = vpop.f32.mrb[0].mxu0
      %v9156 = vadd.f32 %v8955, %v9155
      %v9157 = vpop.f32.mrb[0].mxu0
      %v9158 = vpop.f32.mrb[0].mxu0
      %v9159 = vadd.f32 %v8958, %v9158
      %v9160 = vpop.f32.mrb[0].mxu0
      %9161 = vmatprep.mubr.bf16.mxu0 %v8297
      %9162 = vmatmul.mubr.bf16.gmra.mrb[0].mxu0 %v8465
      %v9163 = vpop.f32.mrb[0].mxu0
      %v9164 = vadd.f32 %v8963, %v9163
      %v9165 = vpop.f32.mrb[0].mxu0
      %v9166 = vpop.f32.mrb[0].mxu0
      %v9167 = vadd.f32 %v8966, %v9166
      %v9168 = vpop.f32.mrb[0].mxu0
      %9169 = vmatprep.mubr.bf16.mxu0 %v8300
      %9170 = vmatmul.mubr.bf16.gmra.mrb[0].mxu0 %v8469
      %v9171 = vpop.f32.mrb[0].mxu0
      %v9172 = vadd.f32 %v8971, %v9171
      %v9173 = vpop.f32.mrb[0].mxu0
      %v9174 = vpop.f32.mrb[0].mxu0
      %v9175 = vadd.f32 %v8974, %v9174
      %v9176 = vpop.f32.mrb[0].mxu0
      %9177 = vmatprep.mubr.bf16.mxu0 %v8303
      %9178 = vmatmul.mubr.bf16.gmra.mrb[0].mxu0 %v8473
      %v9179 = vpop.f32.mrb[0].mxu0
      %v9180 = vadd.f32 %v8979, %v9179
      %v9181 = vpop.f32.mrb[0].mxu0
      %v9182 = vpop.f32.mrb[0].mxu0
      %v9183 = vadd.f32 %v8982, %v9182
      %v9184 = vpop.f32.mrb[0].mxu0
      %9185 = vmatprep.mubr.bf16.mxu0 %v8306
      %9186 = vmatmul.mubr.bf16.gmra.mrb[0].mxu0 %v8477
      %v9187 = vpop.f32.mrb[0].mxu0
      %v9188 = vadd.f32 %v8987, %v9187
      %v9189 = vpop.f32.mrb[0].mxu0
      %v9190 = vpop.f32.mrb[0].mxu0
      %v9191 = vadd.f32 %v8990, %v9190
      %v9192 = vpop.f32.mrb[0].mxu0
      %9193 = vmatprep.mubr.bf16.mxu0 %v8309
      %9194 = vmatmul.mubr.bf16.gmra.mrb[0].mxu0 %v8481
      %v9195 = vpop.f32.mrb[0].mxu0
      %v9196 = vadd.f32 %v8995, %v9195
      %v9197 = vpop.f32.mrb[0].mxu0
      %v9198 = vpop.f32.mrb[0].mxu0
      %v9199 = vadd.f32 %v8998, %v9198
      %v9200 = vpop.f32.mrb[0].mxu0
      %9201 = vmatprep.mubr.bf16.mxu0 %v8312
      %9202 = vmatmul.mubr.bf16.gmra.mrb[0].mxu0 %v8485
      %v9203 = vpop.f32.mrb[0].mxu0
      %v9204 = vadd.f32 %v9003, %v9203
      %v9205 = vpop.f32.mrb[0].mxu0
      %v9206 = vpop.f32.mrb[0].mxu0
      %v9207 = vadd.f32 %v9006, %v9206
      %v9208 = vpop.f32.mrb[0].mxu0
      %9209 = vmatprep.mubr.bf16.mxu0 %v8315
      %9210 = vmatmul.mubr.bf16.gmra.mrb[0].mxu0 %v8489
      %v9211 = vpop.f32.mrb[0].mxu0
      %v9212 = vadd.f32 %v9011, %v9211
      %v9213 = vpop.f32.mrb[0].mxu0
      %v9214 = vpop.f32.mrb[0].mxu0
      %v9215 = vadd.f32 %v9014, %v9214
      %v9216 = vpop.f32.mrb[0].mxu0
      %9217 = vmatprep.mubr.bf16.mxu0 %v8318
      %9218 = vmatmul.mubr.bf16.gmra.mrb[0].mxu0 %v8493
      %v9219 = vpop.f32.mrb[0].mxu0
      %v9220 = vadd.f32 %v9019, %v9219
      %v9221 = vpop.f32.mrb[0].mxu0
      %v9222 = vpop.f32.mrb[0].mxu0
      %v9223 = vadd.f32 %v9022, %v9222
      %v9224 = vpop.f32.mrb[0].mxu0
      %9225 = vmatprep.mubr.bf16.mxu0 %v8321
      %9226 = vmatmul.mubr.bf16.gmra.mrb[0].mxu0 %v8497
      %v9227 = vpop.f32.mrb[0].mxu0
      %v9228 = vadd.f32 %v9027, %v9227
      %v9229 = vpop.f32.mrb[0].mxu0
      %v9230 = vpop.f32.mrb[0].mxu0
      %v9231 = vadd.f32 %v9030, %v9230
      %v9232 = vpop.f32.mrb[0].mxu0
      %9233 = vmatprep.mubr.bf16.mxu0 %v8324
      %9234 = vmatmul.mubr.bf16.gmra.mrb[0].mxu0 %v8501
      %v9235 = vpop.f32.mrb[0].mxu0
      %v9236 = vadd.f32 %v9035, %v9235
      %v9237 = vpop.f32.mrb[0].mxu0
      %v9238 = vpop.f32.mrb[0].mxu0
      %v9239 = vadd.f32 %v9038, %v9238
      %v9240 = vpop.f32.mrb[0].mxu0
      %9241 = vmatprep.mubr.bf16.mxu0 %v8327
      %9242 = vmatmul.mubr.bf16.gmra.mrb[0].mxu0 %v8505
      %v9243 = vpop.f32.mrb[0].mxu0
      %v9244 = vpop.f32.mrb[0].mxu0
      %v9245 = vpop.f32.mrb[0].mxu0
      %v9246 = vpop.f32.mrb[0].mxu0
      %9247 = vmatprep.mubr.bf16.mxu0 %v8330
      %9248 = vmatmul.mubr.bf16.gmra.mrb[0].mxu0 %v8509
      %v9249 = vpop.f32.mrb[0].mxu0
      %v9250 = vpop.f32.mrb[0].mxu0
      %v9251 = vpop.f32.mrb[0].mxu0
      %v9252 = vpop.f32.mrb[0].mxu0
      %9253 = vmatprep.mubr.bf16.mxu0 %v8333
      %9254 = vmatmul.mubr.bf16.gmra.mrb[0].mxu0 %v8513
      %v9255 = vpop.f32.mrb[0].mxu0
      %v9256 = vpop.f32.mrb[0].mxu0
      %v9257 = vpop.f32.mrb[0].mxu0
      %v9258 = vpop.f32.mrb[0].mxu0
      %9259 = vmatprep.mubr.bf16.mxu0 %v8528
      %9260 = vmatmul.mubr.bf16.gmra.mrb[0].mxu0 %v8517
      %v9261 = vpop.f32.mrb[0].mxu0
      %v9262 = vpop.f32.mrb[0].mxu0
      %v9263 = vpop.f32.mrb[0].mxu0
      %v9264 = vpop.f32.mrb[0].mxu0
      %9265 = vmatprep.mubr.bf16.mxu0 %v8531
      %9266 = vmatmul.mubr.bf16.gmra.mrb[0].mxu0 %v8521
      %v9267 = vpop.f32.mrb[0].mxu0
      %v9268 = vpop.f32.mrb[0].mxu0
      %v9269 = vpop.f32.mrb[0].mxu0
      %v9270 = vpop.f32.mrb[0].mxu0
      %9271 = vmatprep.mubr.bf16.mxu0 %v6183
      %9272 = vmatmul.mubr.bf16.gmra.mrb[0].mxu0 %v8525
      %v9273 = vpop.f32.mrb[0].mxu0
      %v9274 = vpop.f32.mrb[0].mxu0
      %v9275 = vpop.f32.mrb[0].mxu0
      %v9276 = vpop.f32.mrb[0].mxu0
      %9277 = vdwg.mxu0
      %9278 = vmatprep.subr.bf16.mxu0 0
      %9279 = vmatpush1.bf16.msra.mxu0 %v8788
      %9280 = vmatprep.subr.bf16.mxu0 0
      %9281 = vmatpush1.bf16.msra.mxu0 %v8789
      %9282 = vmatprep.subr.bf16.mxu0 0
      %9283 = vmatpush1.bf16.msra.mxu0 %v8790
      %9284 = vmatprep.subr.bf16.mxu0 0
      %9285 = vmatpush1.bf16.msra.mxu0 %v8791
      %9286 = vmatprep.subr.bf16.mxu0 0
      %9287 = vmatpush1.bf16.msra.mxu0 0
      %9288 = vmatprep.subr.bf16.mxu0 0
      %9289 = vmatpush1.bf16.msra.mxu0 0
      %9290 = vmatprep.subr.bf16.mxu0 0
      %9291 = vmatpush1.bf16.msra.mxu0 0
      %9292 = vmatprep.subr.bf16.mxu0 0
      %9293 = vmatpush1.bf16.msra.mxu0 0
      %9294 = vmatprep.subr.bf16.mxu0 0
      %9295 = vmatpush1.bf16.msra.mxu0 0
      %9296 = vmatprep.subr.bf16.mxu0 0
      %9297 = vmatpush1.bf16.msra.mxu0 0
      %9298 = vmatprep.subr.bf16.mxu0 0
      %9299 = vmatpush1.bf16.msra.mxu0 0
      %9300 = vmatprep.subr.bf16.mxu0 0
      %9301 = vmatpush1.bf16.msra.mxu0 0
      %9302 = vmatprep.subr.bf16.mxu0 0
      %9303 = vmatpush1.bf16.msra.mxu0 0
      %9304 = vmatprep.subr.bf16.mxu0 0
      %9305 = vmatpush1.bf16.msra.mxu0 0
      %9306 = vmatprep.subr.bf16.mxu0 0
      %9307 = vmatpush1.bf16.msra.mxu0 0
      %9308 = vmatprep.subr.bf16.mxu0 0
      %9309 = vmatpush1.bf16.msra.mxu0 0
      %9310 = vmatprep.mubr.bf16.mxu0 0
      %9311 = vmatmul.mubr.bf16.gmra.mrb[0].mxu0 %v8828
      %v9312 = vpop.f32.mrb[0].mxu0
      %v9313 = vpop.f32.mrb[0].mxu0
      %v9314 = vpop.f32.mrb[0].mxu0
      %v9315 = vpop.f32.mrb[0].mxu0
      %9316 = vmatprep.mubr.bf16.mxu0 0
      %9317 = vmatmul.mubr.bf16.gmra.mrb[0].mxu0 %v8830
      %v9318 = vpop.f32.mrb[0].mxu0
      %v9319 = vpop.f32.mrb[0].mxu0
      %v9320 = vpop.f32.mrb[0].mxu0
      %v9321 = vpop.f32.mrb[0].mxu0
      %9322 = vmatprep.mubr.bf16.mxu0 0
      %9323 = vmatmul.mubr.bf16.gmra.mrb[0].mxu0 %v8832
      %v9324 = vpop.f32.mrb[0].mxu0
      %v9325 = vpop.f32.mrb[0].mxu0
      %v9326 = vpop.f32.mrb[0].mxu0
      %v9327 = vpop.f32.mrb[0].mxu0
      %9328 = vmatprep.mubr.bf16.mxu0 0
      %9329 = vmatmul.mubr.bf16.gmra.mrb[0].mxu0 %v8834
      %v9330 = vpop.f32.mrb[0].mxu0
      %v9331 = vpop.f32.mrb[0].mxu0
      %v9332 = vpop.f32.mrb[0].mxu0
      %v9333 = vpop.f32.mrb[0].mxu0
      %9334 = vmatprep.mubr.bf16.mxu0 0
      %9335 = vmatmul.mubr.bf16.gmra.mrb[0].mxu0 %v8836
      %v9336 = vpop.f32.mrb[0].mxu0
      %v9337 = vpop.f32.mrb[0].mxu0
      %v9338 = vpop.f32.mrb[0].mxu0
      %v9339 = vpop.f32.mrb[0].mxu0
      %9340 = vmatprep.mubr.bf16.mxu0 0
      %9341 = vmatmul.mubr.bf16.gmra.mrb[0].mxu0 %v8838
      %v9342 = vpop.f32.mrb[0].mxu0
      %v9343 = vpop.f32.mrb[0].mxu0
      %v9344 = vpop.f32.mrb[0].mxu0
      %v9345 = vpop.f32.mrb[0].mxu0
      %9346 = vmatprep.mubr.bf16.mxu0 0
      %9347 = vmatmul.mubr.bf16.gmra.mrb[0].mxu0 %v8840
      %v9348 = vpop.f32.mrb[0].mxu0
      %v9349 = vadd.f32 %v9148, %v9348
      %v9350 = vpop.f32.mrb[0].mxu0
      %v9351 = vpop.f32.mrb[0].mxu0
      %v9352 = vadd.f32 %v9151, %v9351
      %v9353 = vpop.f32.mrb[0].mxu0
      %9354 = vmatprep.mubr.bf16.mxu0 0
      %9355 = vmatmul.mubr.bf16.gmra.mrb[0].mxu0 %v8842
      %v9356 = vpop.f32.mrb[0].mxu0
      %v9357 = vadd.f32 %v9156, %v9356
      %v9358 = vpop.f32.mrb[0].mxu0
      %v9359 = vpop.f32.mrb[0].mxu0
      %v9360 = vadd.f32 %v9159, %v9359
      %v9361 = vpop.f32.mrb[0].mxu0
      %9362 = vmatprep.mubr.bf16.mxu0 0
      %9363 = vmatmul.mubr.bf16.gmra.mrb[0].mxu0 %v8844
      %v9364 = vpop.f32.mrb[0].mxu0
      %v9365 = vadd.f32 %v9164, %v9364
      %v9366 = vpop.f32.mrb[0].mxu0
      %v9367 = vpop.f32.mrb[0].mxu0
      %v9368 = vadd.f32 %v9167, %v9367
      %v9369 = vpop.f32.mrb[0].mxu0
      %9370 = vmatprep.mubr.bf16.mxu0 0
      %9371 = vmatmul.mubr.bf16.gmra.mrb[0].mxu0 %v8846
      %v9372 = vpop.f32.mrb[0].mxu0
      %v9373 = vadd.f32 %v9172, %v9372
      %v9374 = vpop.f32.mrb[0].mxu0
      %v9375 = vpop.f32.mrb[0].mxu0
      %v9376 = vadd.f32 %v9175, %v9375
      %v9377 = vpop.f32.mrb[0].mxu0
      %9378 = vmatprep.mubr.bf16.mxu0 0
      %9379 = vmatmul.mubr.bf16.gmra.mrb[0].mxu0 %v8848
      %v9380 = vpop.f32.mrb[0].mxu0
      %v9381 = vadd.f32 %v9180, %v9380
      %v9382 = vpop.f32.mrb[0].mxu0
      %v9383 = vpop.f32.mrb[0].mxu0
      %v9384 = vadd.f32 %v9183, %v9383
      %v9385 = vpop.f32.mrb[0].mxu0
      %9386 = vmatprep.mubr.bf16.mxu0 0
      %9387 = vmatmul.mubr.bf16.gmra.mrb[0].mxu0 %v8850
      %v9388 = vpop.f32.mrb[0].mxu0
      %v9389 = vadd.f32 %v9188, %v9388
      %v9390 = vpop.f32.mrb[0].mxu0
      %v9391 = vpop.f32.mrb[0].mxu0
      %v9392 = vadd.f32 %v9191, %v9391
      %v9393 = vpop.f32.mrb[0].mxu0
      %9394 = vmatprep.mubr.bf16.mxu0 0
      %9395 = vmatmul.mubr.bf16.gmra.mrb[0].mxu0 %v8852
      %v9396 = vpop.f32.mrb[0].mxu0
      %v9397 = vadd.f32 %v9196, %v9396
      %v9398 = vpop.f32.mrb[0].mxu0
      %v9399 = vpop.f32.mrb[0].mxu0
      %v9400 = vadd.f32 %v9199, %v9399
      %v9401 = vpop.f32.mrb[0].mxu0
      %9402 = vmatprep.mubr.bf16.mxu0 0
      %9403 = vmatmul.mubr.bf16.gmra.mrb[0].mxu0 %v8854
      %v9404 = vpop.f32.mrb[0].mxu0
      %v9405 = vadd.f32 %v9204, %v9404
      %v9406 = vpop.f32.mrb[0].mxu0
      %v9407 = vpop.f32.mrb[0].mxu0
      %v9408 = vadd.f32 %v9207, %v9407
      %v9409 = vpop.f32.mrb[0].mxu0
      %9410 = vmatprep.mubr.bf16.mxu0 0
      %9411 = vmatmul.mubr.bf16.gmra.mrb[0].mxu0 %v8856
      %v9412 = vpop.f32.mrb[0].mxu0
      %v9413 = vadd.f32 %v9212, %v9412
      %v9414 = vpop.f32.mrb[0].mxu0
      %v9415 = vpop.f32.mrb[0].mxu0
      %v9416 = vadd.f32 %v9215, %v9415
      %v9417 = vpop.f32.mrb[0].mxu0
      %9418 = vmatprep.mubr.bf16.mxu0 0
      %9419 = vmatmul.mubr.bf16.gmra.mrb[0].mxu0 %v8858
      %v9420 = vpop.f32.mrb[0].mxu0
      %v9421 = vadd.f32 %v9220, %v9420
      %v9422 = vpop.f32.mrb[0].mxu0
      %v9423 = vpop.f32.mrb[0].mxu0
      %v9424 = vadd.f32 %v9223, %v9423
      %v9425 = vpop.f32.mrb[0].mxu0
      %9426 = vmatprep.mubr.bf16.mxu0 0
      %9427 = vmatmul.mubr.bf16.gmra.mrb[0].mxu0 %v8860
      %v9428 = vpop.f32.mrb[0].mxu0
      %v9429 = vadd.f32 %v9228, %v9428
      %v9430 = vpop.f32.mrb[0].mxu0
      %v9431 = vpop.f32.mrb[0].mxu0
      %v9432 = vadd.f32 %v9231, %v9431
      %v9433 = vpop.f32.mrb[0].mxu0
      %9434 = vmatprep.mubr.bf16.mxu0 0
      %9435 = vmatmul.mubr.bf16.gmra.mrb[0].mxu0 %v8862
      %v9436 = vpop.f32.mrb[0].mxu0
      %v9437 = vadd.f32 %v9236, %v9436
      %v9438 = vpop.f32.mrb[0].mxu0
      %v9439 = vpop.f32.mrb[0].mxu0
      %v9440 = vadd.f32 %v9239, %v9439
      %v9441 = vpop.f32.mrb[0].mxu0
      %9442 = vmatprep.mubr.bf16.mxu0 0
      %9443 = vmatmul.mubr.bf16.gmra.mrb[0].mxu0 %v8864
      %v9444 = vpop.f32.mrb[0].mxu0
      %v9445 = vpop.f32.mrb[0].mxu0
      %v9446 = vpop.f32.mrb[0].mxu0
      %v9447 = vpop.f32.mrb[0].mxu0
      %9448 = vmatprep.mubr.bf16.mxu0 0
      %9449 = vmatmul.mubr.bf16.gmra.mrb[0].mxu0 %v8866
      %v9450 = vpop.f32.mrb[0].mxu0
      %v9451 = vpop.f32.mrb[0].mxu0
      %v9452 = vpop.f32.mrb[0].mxu0
      %v9453 = vpop.f32.mrb[0].mxu0
      %9454 = vmatprep.mubr.bf16.mxu0 0
      %9455 = vmatmul.mubr.bf16.gmra.mrb[0].mxu0 %v8868
      %v9456 = vpop.f32.mrb[0].mxu0
      %v9457 = vpop.f32.mrb[0].mxu0
      %v9458 = vpop.f32.mrb[0].mxu0
      %v9459 = vpop.f32.mrb[0].mxu0
      %9460 = vmatprep.mubr.bf16.mxu0 0
      %9461 = vmatmul.mubr.bf16.gmra.mrb[0].mxu0 %v8871
      %v9462 = vpop.f32.mrb[0].mxu0
      %v9463 = vpop.f32.mrb[0].mxu0
      %v9464 = vpop.f32.mrb[0].mxu0
      %v9465 = vpop.f32.mrb[0].mxu0
      %9466 = vmatprep.mubr.bf16.mxu0 0
      %9467 = vmatmul.mubr.bf16.gmra.mrb[0].mxu0 %v8874
      %v9468 = vpop.f32.mrb[0].mxu0
      %v9469 = vpop.f32.mrb[0].mxu0
      %v9470 = vpop.f32.mrb[0].mxu0
      %v9471 = vpop.f32.mrb[0].mxu0
      %9472 = vmatprep.mubr.bf16.mxu0 0
      %9473 = vmatmul.mubr.bf16.gmra.mrb[0].mxu0 %v6528
      %v9474 = vpop.f32.mrb[0].mxu0
      %v9475 = vpop.f32.mrb[0].mxu0
      %v9476 = vpop.f32.mrb[0].mxu0
      %v9477 = vpop.f32.mrb[0].mxu0
      %9478 = vdwg.mxu0
      %vm9479 = vcmask 64512
      %9480 = vst.msk [vmem:[%s452] sm:$0xff] %vm9479, %v9349
      %9481 = vst.msk [vmem:[%s452 + $0x8] sm:$0xff] %vm9479, %v9352
      %9482 = vst.msk [vmem:[%s452 + $0x10] sm:$0xff] %vm9479, %v9357
      %9483 = vst.msk [vmem:[%s452 + $0x18] sm:$0xff] %vm9479, %v9360
      %9484 = vst.msk [vmem:[%s452 + $0x20] sm:$0xff] %vm9479, %v9365
      %9485 = vst.msk [vmem:[%s452 + $0x28] sm:$0xff] %vm9479, %v9368
      %9486 = vst.msk [vmem:[%s452 + $0x30] sm:$0xff] %vm9479, %v9373
      %9487 = vst.msk [vmem:[%s452 + $0x38] sm:$0xff] %vm9479, %v9376
      %9488 = vst.msk [vmem:[%s452 + $0x40] sm:$0xff] %vm9479, %v9381
      %9489 = vst.msk [vmem:[%s452 + $0x48] sm:$0xff] %vm9479, %v9384
      %9490 = vst.msk [vmem:[%s452 + $0x50] sm:$0xff] %vm9479, %v9389
      %9491 = vst.msk [vmem:[%s452 + $0x58] sm:$0xff] %vm9479, %v9392
      %9492 = vst.msk [vmem:[%s452 + $0x60] sm:$0xff] %vm9479, %v9397
      %9493 = vst.msk [vmem:[%s452 + $0x68] sm:$0xff] %vm9479, %v9400
      %9494 = vst.msk [vmem:[%s452 + $0x70] sm:$0xff] %vm9479, %v9405
      %9495 = vst.msk [vmem:[%s452 + $0x78] sm:$0xff] %vm9479, %v9408
      %9496 = vst.msk [vmem:[%s452 + $0x80] sm:$0xff] %vm9479, %v9413
      %9497 = vst.msk [vmem:[%s452 + $0x88] sm:$0xff] %vm9479, %v9416
      %9498 = vst.msk [vmem:[%s452 + $0x90] sm:$0xff] %vm9479, %v9421
      %9499 = vst.msk [vmem:[%s452 + $0x98] sm:$0xff] %vm9479, %v9424
      %9500 = vst.msk [vmem:[%s452 + $0xa0] sm:$0xff] %vm9479, %v9429
      %9501 = vst.msk [vmem:[%s452 + $0xa8] sm:$0xff] %vm9479, %v9432
      %9502 = vst.msk [vmem:[%s452 + $0xb0] sm:$0xff] %vm9479, %v9437
      %9503 = vst.msk [vmem:[%s452 + $0xb8] sm:$0xff] %vm9479, %v9440
      %s9504 = smul.u32 24, %s28
      %p9505 = scmp.lt.s32.totalorder %s27, 1
      %s9506 = scalar_select %p9505, %s27, 1
      %p9507 = scmp.lt.s32.totalorder %s9504, 47
      %s9508 = scalar_select %p9507, %s9504, 47
      %s9509 = smul.addr %s9506, 48
      %s9510 = sadd.s32 %s9508, %s9509
      %s9511 = smul.addr %s9510, 8
      %s9512 = scalar_lea.vmem %s10, %s9511
      %s9513 = smul.u32 24, %s28
      %p9514 = scmp.lt.s32.totalorder %s27, 1
      %s9515 = scalar_select %p9514, %s27, 1
      %p9516 = scmp.lt.s32.totalorder %s9513, 47
      %s9517 = scalar_select %p9516, %s9513, 47
      %s9518 = smul.addr %s9515, 48
      %s9519 = sadd.s32 %s9517, %s9518
      %s9520 = smul.addr %s9519, 8
      %s9521 = scalar_lea.vmem %s11, %s9520
      // Predicated region
      $region61: #{res_module_forward.1} parent=59 // pred_check
        %p9522 = pneg %p275
      $region62: #{res_module_forward.1} parent=59 // pred_check_branch
        %9524 = sbr.rel (%p9522) target = $region64
      $region63: #{res_module_forward.1} parent=59 // pred_region
        %s9525 = smul.u32 24, %s28
      $region64: #{res_module_forward.1} parent=59 // pred_fallthru
        _
      // Predicated region
      $region65: #{res_module_forward.1} parent=59 // pred_check
        %p9526 = pneg %p303
      $region66: #{res_module_forward.1} parent=59 // pred_check_branch
        %9528 = sbr.rel (%p9526) target = $region68
      $region67: #{res_module_forward.1} parent=59 // pred_region
        %s9529 = smul.u32 24, %s28
      $region68: #{res_module_forward.1} parent=59 // pred_fallthru
        _
    $region60: #{res_module_forward.1} parent=5 // pred_fallthru
      _
    %p9530 = scmp.le.s32.totalorder 2, %s18
    // Predicated region
    $region69: #{res_module_forward.1} parent=5 // pred_check
      %p9531 = pneg %p9530
    $region70: #{res_module_forward.1} parent=5 // pred_check_branch
      %9533 = sbr.rel (%p9531) target = $region72
    $region71: #{res_module_forward.1} parent=5 // pred_region
      %s9534 = ssub.s32 %s18, 2
      // Predicated region
      $region73: #{res_module_forward.1} parent=71 // pred_check
        %p9535 = pneg %p281
      $region74: #{res_module_forward.1} parent=71 // pred_check_branch
        %9537 = sbr.rel (%p9535) target = $region76
      $region75: #{res_module_forward.1} parent=71 // pred_region
        %s9538 = smul.u32 24, %s30
        %p9539 = scmp.lt.s32.totalorder %s29, 1
        %s9540 = scalar_select %p9539, %s29, 1
        %p9541 = scmp.lt.s32.totalorder %s9538, 47
        %s9542 = scalar_select %p9541, %s9538, 47
        %s9543 = smul.addr %s9540, 48
        %s9544 = sadd.s32 %s9542, %s9543
        %s9545 = smul.addr %s9544, 8
        %s9546 = scalar_lea.vmem %s10, %s9545
      $region76: #{res_module_forward.1} parent=71 // pred_fallthru
        _
      // Predicated region
      $region77: #{res_module_forward.1} parent=71 // pred_check
        %p9547 = pneg %p309
      $region78: #{res_module_forward.1} parent=71 // pred_check_branch
        %9549 = sbr.rel (%p9547) target = $region80
      $region79: #{res_module_forward.1} parent=71 // pred_region
        %s9550 = smul.u32 24, %s30
        %p9551 = scmp.lt.s32.totalorder %s29, 1
        %s9552 = scalar_select %p9551, %s29, 1
        %p9553 = scmp.lt.s32.totalorder %s9550, 47
        %s9554 = scalar_select %p9553, %s9550, 47
        %s9555 = smul.addr %s9552, 48
        %s9556 = sadd.s32 %s9554, %s9555
        %s9557 = smul.addr %s9556, 8
        %s9558 = scalar_lea.vmem %s11, %s9557
      $region80: #{res_module_forward.1} parent=71 // pred_fallthru
        _
    $region72: #{res_module_forward.1} parent=5 // pred_fallthru
      _
  $region6: #{res_module_forward.1} parent=0 // loop_footer
    %s22 = sadd.s32 1, %s18
  $region7: #{res_module_forward.1} parent=0 // loop_footer_branch
    %17 = sbr.rel target = $region3
  $region8: #{res_module_forward.1} parent=0 // loop_exit
    _

</llo_original>
